<compile_context>
chip_gen: v7x
topology: tpu7x:2x2x1
jax: 0.10.0
libtpu: 0.0.40
codegen_flags: <defaults>
</compile_context>

<pallas_src>
import numpy as np
import jax
import jax.numpy as jnp
from jax.experimental import pallas as pl
from jax.experimental.pallas import tpu as pltpu


def _round_up(x, m):
    return ((x + m - 1) // m) * m


def _cdiv(a, b):
    return (a + b - 1) // b


def _select_tiling():
    """Per-generation tile sizes / VMEM budget (guarded HW query with safe fallback)."""
    vmem_bytes = 64 * 1024 * 1024                     # conservative (v7x-sized) fallback
    try:
        info = pltpu.get_tpu_info()
        vmem_bytes = int(getattr(info, "vmem_capacity_bytes", vmem_bytes))
    except Exception:
        pass
    if vmem_bytes >= 100 * 1024 * 1024:               # v5e / v6e: 128 MiB physical VMEM
        return dict(batch_tile=256, k_tile=2048, stream_bufs=3,
                    vmem_limit_bytes=96 * 1024 * 1024)
    # 64-MiB parts (v7x): smaller scoped budget, default streamed-buffer depth.
    return dict(batch_tile=256, k_tile=1024, stream_bufs=2,
                vmem_limit_bytes=44 * 1024 * 1024)


# ----------------------------- kernel 1: the two encoders -----------------------------
def encoder_kernel(scale_ref, img_ref, emb_ref,
                   w1v_ref, b1v_ref, w2v_ref, b2v_ref, w3v_ref, b3v_ref,
                   w1t_ref, b1t_ref, w2t_ref, b2t_ref, w3t_ref, b3t_ref,
                   v_ref, tT_ref, acc_ref):
    """Grid = (batch tiles, image-K tiles).  The first vision matmul is K-accumulated
    into acc_ref; everything else runs once per batch tile on the last K step."""
    f32, bf16 = jnp.float32, jnp.bfloat16
    k = pl.program_id(1)

    @pl.when(k == 0)
    def _():
        acc_ref[...] = jnp.zeros_like(acc_ref)

    # K-tiled first vision matmul: bf16 x bf16 on the MXU, f32 accumulation in VMEM.
    acc_ref[...] += jnp.dot(img_ref[...], w1v_ref[...], preferred_element_type=f32)

    @pl.when(k == pl.num_programs(1) - 1)
    def _():
        # ---- vision encoder tail: ReLU -> Linear -> ReLU -> Linear ----
        h = jnp.maximum(acc_ref[...] + b1v_ref[...], 0.0).astype(bf16)
        h = jnp.maximum(jnp.dot(h, w2v_ref[...], preferred_element_type=f32)
                        + b2v_ref[...], 0.0).astype(bf16)
        v = jnp.dot(h, w3v_ref[...], preferred_element_type=f32) + b3v_ref[...]

        # ---- text encoder (seq-mean already folded into the wrapper gather) ----
        g = jnp.maximum(jnp.dot(emb_ref[...], w1t_ref[...], preferred_element_type=f32)
                        + b1t_ref[...], 0.0).astype(bf16)
        g = jnp.maximum(jnp.dot(g, w2t_ref[...], preferred_element_type=f32)
                        + b2t_ref[...], 0.0).astype(bf16)
        t = jnp.dot(g, w3t_ref[...], preferred_element_type=f32) + b3t_ref[...]

        # ---- L2 normalize in f32 via rsqrt (EUP); equals x / max(||x||, 1e-12) ----
        v = v * jax.lax.rsqrt(jnp.maximum(jnp.sum(v * v, axis=-1, keepdims=True), 1e-24))
        t = t * jax.lax.rsqrt(jnp.maximum(jnp.sum(t * t, axis=-1, keepdims=True), 1e-24))

        # Fold exp(temperature) (SMEM scalar) into the text features and emit them
        # already transposed (E, TB) so the logits kernel is a plain MXU matmul.
        v_ref[...] = v.astype(v_ref.dtype)
        tT_ref[...] = (t * scale_ref[0]).T.astype(tT_ref.dtype)


# ----------------------------- kernel 2: contrastive logits ---------------------------
def logits_kernel(v_ref, tT_ref, out_ref):
    # RHS arrives pre-transposed as (E, TB): plain MXU matmul, no in-kernel transpose.
    out_ref[...] = jnp.dot(v_ref[...], tT_ref[...], preferred_element_type=jnp.float32)


# ----------------------------------- parameters ---------------------------------------
def make_params(key, vocab_size, image_dim, embed_dim, vision_hidden,
                text_hidden, text_embed_dim):
    """Deterministic init mirroring the torch module's parameter shapes.
    Linear weights are stored transposed vs. nn.Linear: (in_features, out_features)."""
    keys = jax.random.split(key, 16)

    def linear(kw, kb, fan_in, fan_out):
        bound = 1.0 / np.sqrt(fan_in)
        w = jax.random.uniform(kw, (fan_in, fan_out), jnp.float32, -bound, bound)
        b = jax.random.uniform(kb, (1, fan_out), jnp.float32, -bound, bound)
        return w, b

    p = {}
    p["w1v"], p["b1v"] = linear(keys[0], keys[1], image_dim, vision_hidden)
    p["w2v"], p["b2v"] = linear(keys[2], keys[3], vision_hidden, vision_hidden)
    p["w3v"], p["b3v"] = linear(keys[4], keys[5], vision_hidden, embed_dim)
    p["embedding"] = jax.random.normal(keys[6], (vocab_size, text_embed_dim), jnp.float32)
    p["w1t"], p["b1t"] = linear(keys[7], keys[8], text_embed_dim, text_hidden)
    p["w2t"], p["b2t"] = linear(keys[9], keys[10], text_hidden, text_hidden)
    p["w3t"], p["b3t"] = linear(keys[11], keys[12], text_hidden, embed_dim)
    p["temperature"] = jnp.asarray(np.log(1.0 / 0.07), jnp.float32)
    return p


def prepare_params(params, *, image_dim, k_tile):
    """One-time (per model) weight prep, hoisted out of the per-call path:
    bf16 cast of all MXU weights, zero-pad w1v along K to the tile grid, and
    precompute exp(temperature).  TK is chosen so DP has minimal padding."""
    bf16, f32 = jnp.bfloat16, jnp.float32
    Din = int(image_dim)
    nk = max(1, _cdiv(Din, k_tile))
    TK = _round_up(_cdiv(Din, nk), 128)               # K tile; DP padding minimized
    DP = nk * TK
    HV = params["w2v"].shape[0]

    w1v = params["w1v"].astype(bf16)
    if DP != Din:
        w1v = jnp.zeros((DP, HV), bf16).at[:Din].set(w1v)

    prepped = {
        "scale": jnp.exp(params["temperature"]).reshape(1).astype(f32),
        "w1v": w1v, "b1v": params["b1v"].astype(f32),
        "w2v": params["w2v"].astype(bf16), "b2v": params["b2v"].astype(f32),
        "w3v": params["w3v"].astype(bf16), "b3v": params["b3v"].astype(f32),
        "w1t": params["w1t"].astype(bf16), "b1t": params["b1t"].astype(f32),
        "w2t": params["w2t"].astype(bf16), "b2t": params["b2t"].astype(f32),
        "w3t": params["w3t"].astype(bf16), "b3t": params["b3t"].astype(f32),
        "embedding": params["embedding"].astype(f32),
    }
    meta = {"Din": Din, "TK": TK, "DP": DP}
    return prepped, meta


# ------------------------------------ wrapper -----------------------------------------
def _bspec(shape, index_map, mode):
    if mode is None:
        return pl.BlockSpec(shape, index_map)
    return pl.BlockSpec(shape, index_map, pipeline_mode=mode)


def _call_encoder(enc_args, dims, cfg, use_pipeline_mode):
    f32, bf16 = jnp.float32, jnp.bfloat16
    TB, TK, BP, DP = dims["TB"], dims["TK"], dims["BP"], dims["DP"]
    HV, HT, E, E_txt = dims["HV"], dims["HT"], dims["E"], dims["E_txt"]

    res = pl.Buffered(1) if use_pipeline_mode else None            # resident: 1 buffer
    stm = pl.Buffered(cfg["stream_bufs"]) if use_pipeline_mode else None

    in_specs = [
        pl.BlockSpec(memory_space=pltpu.MemorySpace.SMEM),          # exp(temperature)
        _bspec((TB, TK), lambda b, k: (b, k), stm),                 # image tile (streamed)
        _bspec((TB, E_txt), lambda b, k: (b, 0), None),             # text-mean tile
        _bspec((TK, HV), lambda b, k: (k, 0), stm),                 # w1v K-tile (streamed)
        _bspec((1, HV), lambda b, k: (0, 0), res),                  # b1v
        _bspec((HV, HV), lambda b, k: (0, 0), res),                 # w2v
        _bspec((1, HV), lambda b, k: (0, 0), res),                  # b2v
        _bspec((HV, E), lambda b, k: (0, 0), res),                  # w3v
        _bspec((1, E), lambda b, k: (0, 0), res),                   # b3v
        _bspec((E_txt, HT), lambda b, k: (0, 0), res),              # w1t
        _bspec((1, HT), lambda b, k: (0, 0), res),                  # b1t
        _bspec((HT, HT), lambda b, k: (0, 0), res),                 # w2t
        _bspec((1, HT), lambda b, k: (0, 0), res),                  # b2t
        _bspec((HT, E), lambda b, k: (0, 0), res),                  # w3t
        _bspec((1, E), lambda b, k: (0, 0), res),                   # b3t
    ]
    out_specs = [pl.BlockSpec((TB, E), lambda b, k: (b, 0)),        # vision feats (BP, E)
                 pl.BlockSpec((E, TB), lambda b, k: (0, b))]        # scaled text^T (E, BP)

    w_elems = DP * HV + HV * HV + HV * E + E_txt * HT + HT * HT + HT * E
    enc_flops = 2 * BP * w_elems
    enc_bytes = 2 * (BP * DP + BP * E_txt + w_elems + 2 * BP * E)

    return pl.pallas_call(
        encoder_kernel,
        out_shape=(jax.ShapeDtypeStruct((BP, E), bf16),
                   jax.ShapeDtypeStruct((E, BP), bf16)),
        grid_spec=pltpu.PrefetchScalarGridSpec(
            num_scalar_prefetch=0, grid=(BP // TB, DP // TK),
            in_specs=in_specs, out_specs=out_specs,
            scratch_shapes=[pltpu.VMEM((TB, HV), f32)]),            # f32 acc, K-resident
        compiler_params=pltpu.CompilerParams(
            dimension_semantics=("parallel", "arbitrary"),
            vmem_limit_bytes=cfg["vmem_limit_bytes"]),
        cost_estimate=pl.CostEstimate(flops=enc_flops, transcendentals=2 * BP,
                                      bytes_accessed=enc_bytes),
    )(*enc_args)


def simple_vlm_forward(images, texts, prepped, meta, cfg):
    """images: (B, 3, H, W) f32, texts: (B, S) int32 -> (B, B) similarity logits (f32)."""
    f32, bf16 = jnp.float32, jnp.bfloat16
    B = images.shape[0]
    Din, TK, DP = meta["Din"], meta["TK"], meta["DP"]
    HV = prepped["w2v"].shape[0]
    HT = prepped["w2t"].shape[0]
    E = prepped["w3v"].shape[1]
    E_txt = prepped["w1t"].shape[0]

    TB = min(cfg["batch_tile"], _round_up(B, 128))    # MXU-friendly M tile (>= 128 rows)
    BP = _round_up(B, TB)                             # padded batch
    # TODO(synk): on v7x, batches <= 128 leave the second TensorCore idle (only one
    #             tile on the "parallel" batch axis).

    # Per-call glue (XLA): flatten (torch .view order), embedding gather fused with the
    # sequence mean, bf16 cast + zero-pad of *activations only* (weights pre-prepped).
    img = images.reshape(B, -1)
    emb_mean = jnp.take(prepped["embedding"], texts, axis=0).mean(axis=1)   # (B, E_txt)
    img_p = jnp.zeros((BP, DP), bf16).at[:B, :Din].set(img.astype(bf16))
    emb_p = jnp.zeros((BP, E_txt), bf16).at[:B].set(emb_mean.astype(bf16))

    enc_args = (prepped["scale"], img_p, emb_p,
                prepped["w1v"], prepped["b1v"], prepped["w2v"], prepped["b2v"],
                prepped["w3v"], prepped["b3v"],
                prepped["w1t"], prepped["b1t"], prepped["w2t"], prepped["b2t"],
                prepped["w3t"], prepped["b3t"])
    dims = dict(TB=TB, TK=TK, BP=BP, DP=DP, HV=HV, HT=HT, E=E, E_txt=E_txt)

    try:
        # Preferred path: single-buffered resident weights, deeper streamed buffering.
        v_feat, tT_feat = _call_encoder(enc_args, dims, cfg, use_pipeline_mode=True)
    except Exception:
        # Fallback if this jax/libtpu combination rejects BlockSpec.pipeline_mode.
        v_feat, tT_feat = _call_encoder(enc_args, dims, cfg, use_pipeline_mode=False)

    # Cross-batch logits: v @ t.T; t arrives pre-transposed (and pre-scaled) from the
    # encoder so this is a plain MXU matmul with a lane-dense (BP, BP) output.
    logits_p = pl.pallas_call(
        logits_kernel,
        out_shape=jax.ShapeDtypeStruct((BP, BP), f32),
        grid_spec=pltpu.PrefetchScalarGridSpec(
            num_scalar_prefetch=0, grid=(BP // TB, BP // TB),
            in_specs=[pl.BlockSpec((TB, E), lambda i, j: (i, 0)),
                      pl.BlockSpec((E, TB), lambda i, j: (0, j))],
            out_specs=pl.BlockSpec((TB, TB), lambda i, j: (i, j))),
        compiler_params=pltpu.CompilerParams(
            dimension_semantics=("parallel", "parallel"),
            vmem_limit_bytes=cfg["vmem_limit_bytes"]),
        cost_estimate=pl.CostEstimate(flops=2 * BP * BP * E, transcendentals=0,
                                      bytes_accessed=2 * BP * E * 2 + BP * BP * 4),
    )(v_feat, tT_feat)

    return logits_p[:B, :B]


# ----------------------------------- references ---------------------------------------
def reference_forward_f32(images, texts, params):
    """Pure-JAX f32 reference with the PyTorch module's semantics (eval-mode dropout)."""
    B = images.shape[0]
    x = images.reshape(B, -1).astype(jnp.float32)
    h = jnp.maximum(x @ params["w1v"] + params["b1v"], 0.0)
    h = jnp.maximum(h @ params["w2v"] + params["b2v"], 0.0)
    v = h @ params["w3v"] + params["b3v"]
    e = jnp.take(params["embedding"], texts, axis=0).mean(axis=1)
    g = jnp.maximum(e @ params["w1t"] + params["b1t"], 0.0)
    g = jnp.maximum(g @ params["w2t"] + params["b2t"], 0.0)
    t = g @ params["w3t"] + params["b3t"]
    v = v / jnp.maximum(jnp.linalg.norm(v, axis=-1, keepdims=True), 1e-12)
    t = t / jnp.maximum(jnp.linalg.norm(t, axis=-1, keepdims=True), 1e-12)
    return (v @ t.T) * jnp.exp(params["temperature"])


def reference_forward_bf16(images, texts, params):
    """Pure-JAX reference mirroring the kernel's dtype strategy (bf16 MXU, f32 accum)."""
    f32, bf16 = jnp.float32, jnp.bfloat16
    B = images.shape[0]
    lin = lambda x, w, b: jnp.dot(x.astype(bf16), w.astype(bf16),
                                  preferred_element_type=f32) + b
    x = images.reshape(B, -1).astype(f32)
    h = jnp.maximum(lin(x, params["w1v"], params["b1v"]), 0.0)
    h = jnp.maximum(lin(h, params["w2v"], params["b2v"]), 0.0)
    v = lin(h, params["w3v"], params["b3v"])
    e = jnp.take(params["embedding"], texts, axis=0).mean(axis=1)
    g = jnp.maximum(lin(e, params["w1t"], params["b1t"]), 0.0)
    g = jnp.maximum(lin(g, params["w2t"], params["b2t"]), 0.0)
    t = lin(g, params["w3t"], params["b3t"])
    v = v * jax.lax.rsqrt(jnp.maximum(jnp.sum(v * v, axis=-1, keepdims=True), 1e-24))
    t = t * jax.lax.rsqrt(jnp.maximum(jnp.sum(t * t, axis=-1, keepdims=True), 1e-24))
    t = t * jnp.exp(params["temperature"])
    return jnp.dot(v.astype(bf16), t.T.astype(bf16), preferred_element_type=f32)


if __name__ == "__main__":
    # Small shapes consistent with the module (scaled-down image, default hidden ratios).
    B, C, H, W = 2, 3, 16, 16
    SEQ_LEN = 8
    VOCAB = 64
    IMAGE_DIM = C * H * W          # 768
    EMBED_DIM = 256                # shared embedding space
    VISION_HIDDEN = 256
    TEXT_HIDDEN = 256
    TEXT_EMBED_DIM = 128           # hardcoded in SimpleVLM.__init__

    root = jax.random.PRNGKey(0)
    k_img, k_txt, k_param = jax.random.split(root, 3)

    images = jax.random.normal(k_img, (B, C, H, W), jnp.float32)
    texts = jax.random.randint(k_txt, (B, SEQ_LEN), 0, VOCAB, dtype=jnp.int32)
    params = make_params(k_param, VOCAB, IMAGE_DIM, EMBED_DIM,
                         VISION_HIDDEN, TEXT_HIDDEN, TEXT_EMBED_DIM)

    cfg = _select_tiling()
    # One-time weight prep (bf16 cast + K padding + exp(temperature)), hoisted out of
    # the per-forward path.
    prepped, meta = prepare_params(params, image_dim=IMAGE_DIM, k_tile=cfg["k_tile"])

    logits = jax.block_until_ready(simple_vlm_forward(images, texts, prepped, meta, cfg))
    assert logits.shape == (B, B), logits.shape

    # Tight check vs a dtype-matched pure-JAX reference (validates the kernel mechanics).
    ref_b = jax.block_until_ready(reference_forward_bf16(images, texts, params))
    np.testing.assert_allclose(np.asarray(logits), np.asarray(ref_b), rtol=1e-2, atol=1e-2)

    # Looser check vs the full-f32 module semantics (tolerance for bf16 MXU inputs).
    ref_f = jax.block_until_ready(reference_forward_f32(images, texts, params))
    np.testing.assert_allclose(np.asarray(logits), np.asarray(ref_f), rtol=5e-2, atol=1e-1)

    print("KERNEL_OK")
</pallas_src>

<mosaic_0001>
module attributes {stable_mosaic.version = 11 : i64} {
  func.func @encoder_kernel(%arg0: i32, %arg1: i32, %arg2: memref<1xf32, #tpu.memory_space<smem>>, %arg3: memref<128x768xbf16, #tpu.memory_space<vmem>>, %arg4: memref<128x128xbf16, #tpu.memory_space<vmem>>, %arg5: memref<768x256xbf16, #tpu.memory_space<vmem>>, %arg6: memref<1x256xf32, #tpu.memory_space<vmem>>, %arg7: memref<256x256xbf16, #tpu.memory_space<vmem>>, %arg8: memref<1x256xf32, #tpu.memory_space<vmem>>, %arg9: memref<256x256xbf16, #tpu.memory_space<vmem>>, %arg10: memref<1x256xf32, #tpu.memory_space<vmem>>, %arg11: memref<128x256xbf16, #tpu.memory_space<vmem>>, %arg12: memref<1x256xf32, #tpu.memory_space<vmem>>, %arg13: memref<256x256xbf16, #tpu.memory_space<vmem>>, %arg14: memref<1x256xf32, #tpu.memory_space<vmem>>, %arg15: memref<256x256xbf16, #tpu.memory_space<vmem>>, %arg16: memref<1x256xf32, #tpu.memory_space<vmem>>, %arg17: memref<128x256xbf16, #tpu.memory_space<vmem>>, %arg18: memref<256x128xbf16, #tpu.memory_space<vmem>>, %arg19: memref<128x256xf32, #tpu.memory_space<vmem>>) attributes {dimension_semantics = [#tpu.dimension_semantics<parallel>, #tpu.dimension_semantics<arbitrary>], iteration_bounds = array<i64: 1, 1>, scalar_prefetch = 0 : i64, scratch_operands = 1 : i64, tpu.core_type = #tpu.core_type<tc>, window_params = [{transform_indices = @transform_0, window_bounds = array<i64: 1>}, {pipeline_mode = #tpu.pipeline_mode<double_buffered>, transform_indices = @transform_1, window_bounds = array<i64: 128, 768>}, {transform_indices = @transform_2, window_bounds = array<i64: 128, 128>}, {pipeline_mode = #tpu.pipeline_mode<double_buffered>, transform_indices = @transform_3, window_bounds = array<i64: 768, 256>}, {pipeline_mode = #tpu.pipeline_mode<synchronous>, transform_indices = @transform_4, window_bounds = array<i64: 1, 256>}, {pipeline_mode = #tpu.pipeline_mode<synchronous>, transform_indices = @transform_5, window_bounds = array<i64: 256, 256>}, {pipeline_mode = #tpu.pipeline_mode<synchronous>, transform_indices = @transform_6, window_bounds = array<i64: 1, 256>}, {pipeline_mode = #tpu.pipeline_mode<synchronous>, transform_indices = @transform_7, window_bounds = array<i64: 256, 256>}, {pipeline_mode = #tpu.pipeline_mode<synchronous>, transform_indices = @transform_8, window_bounds = array<i64: 1, 256>}, {pipeline_mode = #tpu.pipeline_mode<synchronous>, transform_indices = @transform_9, window_bounds = array<i64: 128, 256>}, {pipeline_mode = #tpu.pipeline_mode<synchronous>, transform_indices = @transform_10, window_bounds = array<i64: 1, 256>}, {pipeline_mode = #tpu.pipeline_mode<synchronous>, transform_indices = @transform_11, window_bounds = array<i64: 256, 256>}, {pipeline_mode = #tpu.pipeline_mode<synchronous>, transform_indices = @transform_12, window_bounds = array<i64: 1, 256>}, {pipeline_mode = #tpu.pipeline_mode<synchronous>, transform_indices = @transform_13, window_bounds = array<i64: 256, 256>}, {pipeline_mode = #tpu.pipeline_mode<synchronous>, transform_indices = @transform_14, window_bounds = array<i64: 1, 256>}, {transform_indices = @transform_15, window_bounds = array<i64: 128, 256>}, {transform_indices = @transform_16, window_bounds = array<i64: 256, 128>}]} {
    %c0_i32 = arith.constant 0 : i32
    %0 = arith.cmpi eq, %arg1, %c0_i32 : i32
    %1 = arith.extui %0 : i1 to i32
    %c0_i32_0 = arith.constant 0 : i32
    %2 = arith.cmpi ne, %1, %c0_i32_0 : i32
    scf.if %2 {
      %cst_10 = arith.constant 0.000000e+00 : f32
      %12 = vector.broadcast %cst_10 : f32 to vector<128x256xf32>
      %c0_11 = arith.constant 0 : index
      %c0_12 = arith.constant 0 : index
      %13 = vector.load %arg19[%c0_11, %c0_12] : memref<128x256xf32, #tpu.memory_space<vmem>>, vector<128x256xf32>
      tpu.vector_store %arg19[%c0_11, %c0_12], %12 {strides = array<i32>} : memref<128x256xf32, #tpu.memory_space<vmem>>, vector<128x256xf32>,
    } else {
    }
    %c0 = arith.constant 0 : index
    %c0_1 = arith.constant 0 : index
    %3 = vector.load %arg19[%c0, %c0_1] : memref<128x256xf32, #tpu.memory_space<vmem>>, vector<128x256xf32>
    %c0_2 = arith.constant 0 : index
    %c0_3 = arith.constant 0 : index
    %4 = vector.load %arg3[%c0_2, %c0_3] : memref<128x768xbf16, #tpu.memory_space<vmem>>, vector<128x768xbf16>
    %c0_4 = arith.constant 0 : index
    %c0_5 = arith.constant 0 : index
    %5 = vector.load %arg5[%c0_4, %c0_5] : memref<768x256xbf16, #tpu.memory_space<vmem>>, vector<768x256xbf16>
    %cst = arith.constant dense<0.000000e+00> : vector<128x256xf32>
    %6 = tpu.matmul %4, %5, %cst {dimension_numbers = #tpu.dot_dimension_numbers<[1], [0], [0], [1], [0, 0, 1, 1], [], []>} : vector<128x768xbf16>, vector<768x256xbf16>, vector<128x256xf32> -> vector<128x256xf32>
    %7 = arith.addf %3, %6 : vector<128x256xf32>
    %c0_6 = arith.constant 0 : index
    %c0_7 = arith.constant 0 : index
    %8 = vector.load %arg19[%c0_6, %c0_7] : memref<128x256xf32, #tpu.memory_space<vmem>>, vector<128x256xf32>
    tpu.vector_store %arg19[%c0_6, %c0_7], %7 {strides = array<i32>} : memref<128x256xf32, #tpu.memory_space<vmem>>, vector<128x256xf32>,
    %c0_i32_8 = arith.constant 0 : i32
    %9 = arith.cmpi eq, %arg1, %c0_i32_8 : i32
    %10 = arith.extui %9 : i1 to i32
    %c0_i32_9 = arith.constant 0 : i32
    %11 = arith.cmpi ne, %10, %c0_i32_9 : i32
    scf.if %11 {
      %c0_10 = arith.constant 0 : index
      %c0_11 = arith.constant 0 : index
      %12 = vector.load %arg19[%c0_10, %c0_11] : memref<128x256xf32, #tpu.memory_space<vmem>>, vector<128x256xf32>
      %c0_12 = arith.constant 0 : index
      %c0_13 = arith.constant 0 : index
      %13 = vector.load %arg6[%c0_12, %c0_13] : memref<1x256xf32, #tpu.memory_space<vmem>>, vector<1x256xf32>
      %14 = vector.broadcast %13 : vector<1x256xf32> to vector<128x256xf32>
      %15 = arith.addf %12, %14 : vector<128x256xf32>
      %cst_14 = arith.constant 0.000000e+00 : f32
      %16 = vector.broadcast %cst_14 : f32 to vector<128x256xf32>
      %17 = arith.maximumf %15, %16 : vector<128x256xf32>
      %18 = arith.truncf %17 : vector<128x256xf32> to vector<128x256xbf16>
      %c0_15 = arith.constant 0 : index
      %c0_16 = arith.constant 0 : index
      %19 = vector.load %arg7[%c0_15, %c0_16] : memref<256x256xbf16, #tpu.memory_space<vmem>>, vector<256x256xbf16>
      %cst_17 = arith.constant dense<0.000000e+00> : vector<128x256xf32>
      %20 = tpu.matmul %18, %19, %cst_17 {dimension_numbers = #tpu.dot_dimension_numbers<[1], [0], [0], [1], [0, 0, 1, 1], [], []>} : vector<128x256xbf16>, vector<256x256xbf16>, vector<128x256xf32> -> vector<128x256xf32>
      %c0_18 = arith.constant 0 : index
      %c0_19 = arith.constant 0 : index
      %21 = vector.load %arg8[%c0_18, %c0_19] : memref<1x256xf32, #tpu.memory_space<vmem>>, vector<1x256xf32>
      %22 = vector.broadcast %21 : vector<1x256xf32> to vector<128x256xf32>
      %23 = arith.addf %20, %22 : vector<128x256xf32>
      %cst_20 = arith.constant 0.000000e+00 : f32
      %24 = vector.broadcast %cst_20 : f32 to vector<128x256xf32>
      %25 = arith.maximumf %23, %24 : vector<128x256xf32>
      %26 = arith.truncf %25 : vector<128x256xf32> to vector<128x256xbf16>
      %c0_21 = arith.constant 0 : index
      %c0_22 = arith.constant 0 : index
      %27 = vector.load %arg9[%c0_21, %c0_22] : memref<256x256xbf16, #tpu.memory_space<vmem>>, vector<256x256xbf16>
      %cst_23 = arith.constant dense<0.000000e+00> : vector<128x256xf32>
      %28 = tpu.matmul %26, %27, %cst_23 {dimension_numbers = #tpu.dot_dimension_numbers<[1], [0], [0], [1], [0, 0, 1, 1], [], []>} : vector<128x256xbf16>, vector<256x256xbf16>, vector<128x256xf32> -> vector<128x256xf32>
      %c0_24 = arith.constant 0 : index
      %c0_25 = arith.constant 0 : index
      %29 = vector.load %arg10[%c0_24, %c0_25] : memref<1x256xf32, #tpu.memory_space<vmem>>, vector<1x256xf32>
      %30 = vector.broadcast %29 : vector<1x256xf32> to vector<128x256xf32>
      %31 = arith.addf %28, %30 : vector<128x256xf32>
      %c0_26 = arith.constant 0 : index
      %c0_27 = arith.constant 0 : index
      %32 = vector.load %arg4[%c0_26, %c0_27] : memref<128x128xbf16, #tpu.memory_space<vmem>>, vector<128x128xbf16>
      %c0_28 = arith.constant 0 : index
      %c0_29 = arith.constant 0 : index
      %33 = vector.load %arg11[%c0_28, %c0_29] : memref<128x256xbf16, #tpu.memory_space<vmem>>, vector<128x256xbf16>
      %cst_30 = arith.constant dense<0.000000e+00> : vector<128x256xf32>
      %34 = tpu.matmul %32, %33, %cst_30 {dimension_numbers = #tpu.dot_dimension_numbers<[1], [0], [0], [1], [0, 0, 1, 1], [], []>} : vector<128x128xbf16>, vector<128x256xbf16>, vector<128x256xf32> -> vector<128x256xf32>
      %c0_31 = arith.constant 0 : index
      %c0_32 = arith.constant 0 : index
      %35 = vector.load %arg12[%c0_31, %c0_32] : memref<1x256xf32, #tpu.memory_space<vmem>>, vector<1x256xf32>
      %36 = vector.broadcast %35 : vector<1x256xf32> to vector<128x256xf32>
      %37 = arith.addf %34, %36 : vector<128x256xf32>
      %cst_33 = arith.constant 0.000000e+00 : f32
      %38 = vector.broadcast %cst_33 : f32 to vector<128x256xf32>
      %39 = arith.maximumf %37, %38 : vector<128x256xf32>
      %40 = arith.truncf %39 : vector<128x256xf32> to vector<128x256xbf16>
      %c0_34 = arith.constant 0 : index
      %c0_35 = arith.constant 0 : index
      %41 = vector.load %arg13[%c0_34, %c0_35] : memref<256x256xbf16, #tpu.memory_space<vmem>>, vector<256x256xbf16>
      %cst_36 = arith.constant dense<0.000000e+00> : vector<128x256xf32>
      %42 = tpu.matmul %40, %41, %cst_36 {dimension_numbers = #tpu.dot_dimension_numbers<[1], [0], [0], [1], [0, 0, 1, 1], [], []>} : vector<128x256xbf16>, vector<256x256xbf16>, vector<128x256xf32> -> vector<128x256xf32>
      %c0_37 = arith.constant 0 : index
      %c0_38 = arith.constant 0 : index
      %43 = vector.load %arg14[%c0_37, %c0_38] : memref<1x256xf32, #tpu.memory_space<vmem>>, vector<1x256xf32>
      %44 = vector.broadcast %43 : vector<1x256xf32> to vector<128x256xf32>
      %45 = arith.addf %42, %44 : vector<128x256xf32>
      %cst_39 = arith.constant 0.000000e+00 : f32
      %46 = vector.broadcast %cst_39 : f32 to vector<128x256xf32>
      %47 = arith.maximumf %45, %46 : vector<128x256xf32>
      %48 = arith.truncf %47 : vector<128x256xf32> to vector<128x256xbf16>
      %c0_40 = arith.constant 0 : index
      %c0_41 = arith.constant 0 : index
      %49 = vector.load %arg15[%c0_40, %c0_41] : memref<256x256xbf16, #tpu.memory_space<vmem>>, vector<256x256xbf16>
      %cst_42 = arith.constant dense<0.000000e+00> : vector<128x256xf32>
      %50 = tpu.matmul %48, %49, %cst_42 {dimension_numbers = #tpu.dot_dimension_numbers<[1], [0], [0], [1], [0, 0, 1, 1], [], []>} : vector<128x256xbf16>, vector<256x256xbf16>, vector<128x256xf32> -> vector<128x256xf32>
      %c0_43 = arith.constant 0 : index
      %c0_44 = arith.constant 0 : index
      %51 = vector.load %arg16[%c0_43, %c0_44] : memref<1x256xf32, #tpu.memory_space<vmem>>, vector<1x256xf32>
      %52 = vector.broadcast %51 : vector<1x256xf32> to vector<128x256xf32>
      %53 = arith.addf %50, %52 : vector<128x256xf32>
      %54 = arith.mulf %31, %31 : vector<128x256xf32>
      %cst_45 = arith.constant dense<0.000000e+00> : vector<128xf32>
      %55 = vector.multi_reduction <add>, %54, %cst_45 [1] : vector<128x256xf32> to vector<128xf32>
      %56 = vector.shape_cast %55 : vector<128xf32> to vector<128x1xf32>
      %cst_46 = arith.constant 1.000000e-24 : f32
      %57 = vector.broadcast %cst_46 : f32 to vector<128x1xf32>
      %58 = arith.maximumf %56, %57 : vector<128x1xf32>
      %59 = math.rsqrt %58 : vector<128x1xf32>
      %60 = vector.broadcast %59 : vector<128x1xf32> to vector<128x256xf32>
      %61 = arith.mulf %31, %60 : vector<128x256xf32>
      %62 = arith.mulf %53, %53 : vector<128x256xf32>
      %cst_47 = arith.constant dense<0.000000e+00> : vector<128xf32>
      %63 = vector.multi_reduction <add>, %62, %cst_47 [1] : vector<128x256xf32> to vector<128xf32>
      %64 = vector.shape_cast %63 : vector<128xf32> to vector<128x1xf32>
      %cst_48 = arith.constant 1.000000e-24 : f32
      %65 = vector.broadcast %cst_48 : f32 to vector<128x1xf32>
      %66 = arith.maximumf %64, %65 : vector<128x1xf32>
      %67 = math.rsqrt %66 : vector<128x1xf32>
      %68 = vector.broadcast %67 : vector<128x1xf32> to vector<128x256xf32>
      %69 = arith.mulf %53, %68 : vector<128x256xf32>
      %70 = arith.truncf %61 : vector<128x256xf32> to vector<128x256xbf16>
      %c0_49 = arith.constant 0 : index
      %c0_50 = arith.constant 0 : index
      %71 = vector.load %arg17[%c0_49, %c0_50] : memref<128x256xbf16, #tpu.memory_space<vmem>>, vector<128x256xbf16>
      tpu.vector_store %arg17[%c0_49, %c0_50], %70 {strides = array<i32>} : memref<128x256xbf16, #tpu.memory_space<vmem>>, vector<128x256xbf16>,
      %c0_51 = arith.constant 0 : index
      %72 = memref.load %arg2[%c0_51] : memref<1xf32, #tpu.memory_space<smem>>
      %73 = vector.broadcast %72 : f32 to vector<128x256xf32>
      %74 = arith.mulf %69, %73 : vector<128x256xf32>
      %75 = tpu.transpose %74, [1, 0] : vector<128x256xf32> -> vector<256x128xf32>
      %76 = arith.truncf %75 : vector<256x128xf32> to vector<256x128xbf16>
      %c0_52 = arith.constant 0 : index
      %c0_53 = arith.constant 0 : index
      %77 = vector.load %arg18[%c0_52, %c0_53] : memref<256x128xbf16, #tpu.memory_space<vmem>>, vector<256x128xbf16>
      tpu.vector_store %arg18[%c0_52, %c0_53], %76 {strides = array<i32>} : memref<256x128xbf16, #tpu.memory_space<vmem>>, vector<256x128xbf16>,
    } else {
    }
    return
  }
  func.func @transform_0(%arg0: i32, %arg1: i32) -> i32 {
    %c0_i32 = arith.constant 0 : i32
    %c0_i32_0 = arith.constant 0 : i32
    return %c0_i32 : i32
  }
  func.func @transform_1(%arg0: i32, %arg1: i32) -> (i32, i32) {
    %c0_i32 = arith.constant 0 : i32
    return %arg0, %arg1 : i32, i32
  }
  func.func @transform_2(%arg0: i32, %arg1: i32) -> (i32, i32) {
    %c0_i32 = arith.constant 0 : i32
    %c0_i32_0 = arith.constant 0 : i32
    return %arg0, %c0_i32 : i32, i32
  }
  func.func @transform_3(%arg0: i32, %arg1: i32) -> (i32, i32) {
    %c0_i32 = arith.constant 0 : i32
    %c0_i32_0 = arith.constant 0 : i32
    return %arg1, %c0_i32 : i32, i32
  }
  func.func @transform_4(%arg0: i32, %arg1: i32) -> (i32, i32) {
    %c0_i32 = arith.constant 0 : i32
    %c0_i32_0 = arith.constant 0 : i32
    %c0_i32_1 = arith.constant 0 : i32
    return %c0_i32, %c0_i32_0 : i32, i32
  }
  func.func @transform_5(%arg0: i32, %arg1: i32) -> (i32, i32) {
    %c0_i32 = arith.constant 0 : i32
    %c0_i32_0 = arith.constant 0 : i32
    %c0_i32_1 = arith.constant 0 : i32
    return %c0_i32, %c0_i32_0 : i32, i32
  }
  func.func @transform_6(%arg0: i32, %arg1: i32) -> (i32, i32) {
    %c0_i32 = arith.constant 0 : i32
    %c0_i32_0 = arith.constant 0 : i32
    %c0_i32_1 = arith.constant 0 : i32
    return %c0_i32, %c0_i32_0 : i32, i32
  }
  func.func @transform_7(%arg0: i32, %arg1: i32) -> (i32, i32) {
    %c0_i32 = arith.constant 0 : i32
    %c0_i32_0 = arith.constant 0 : i32
    %c0_i32_1 = arith.constant 0 : i32
    return %c0_i32, %c0_i32_0 : i32, i32
  }
  func.func @transform_8(%arg0: i32, %arg1: i32) -> (i32, i32) {
    %c0_i32 = arith.constant 0 : i32
    %c0_i32_0 = arith.constant 0 : i32
    %c0_i32_1 = arith.constant 0 : i32
    return %c0_i32, %c0_i32_0 : i32, i32
  }
  func.func @transform_9(%arg0: i32, %arg1: i32) -> (i32, i32) {
    %c0_i32 = arith.constant 0 : i32
    %c0_i32_0 = arith.constant 0 : i32
    %c0_i32_1 = arith.constant 0 : i32
    return %c0_i32, %c0_i32_0 : i32, i32
  }
  func.func @transform_10(%arg0: i32, %arg1: i32) -> (i32, i32) {
    %c0_i32 = arith.constant 0 : i32
    %c0_i32_0 = arith.constant 0 : i32
    %c0_i32_1 = arith.constant 0 : i32
    return %c0_i32, %c0_i32_0 : i32, i32
  }
  func.func @transform_11(%arg0: i32, %arg1: i32) -> (i32, i32) {
    %c0_i32 = arith.constant 0 : i32
    %c0_i32_0 = arith.constant 0 : i32
    %c0_i32_1 = arith.constant 0 : i32
    return %c0_i32, %c0_i32_0 : i32, i32
  }
  func.func @transform_12(%arg0: i32, %arg1: i32) -> (i32, i32) {
    %c0_i32 = arith.constant 0 : i32
    %c0_i32_0 = arith.constant 0 : i32
    %c0_i32_1 = arith.constant 0 : i32
    return %c0_i32, %c0_i32_0 : i32, i32
  }
  func.func @transform_13(%arg0: i32, %arg1: i32) -> (i32, i32) {
    %c0_i32 = arith.constant 0 : i32
    %c0_i32_0 = arith.constant 0 : i32
    %c0_i32_1 = arith.constant 0 : i32
    return %c0_i32, %c0_i32_0 : i32, i32
  }
  func.func @transform_14(%arg0: i32, %arg1: i32) -> (i32, i32) {
    %c0_i32 = arith.constant 0 : i32
    %c0_i32_0 = arith.constant 0 : i32
    %c0_i32_1 = arith.constant 0 : i32
    return %c0_i32, %c0_i32_0 : i32, i32
  }
  func.func @transform_15(%arg0: i32, %arg1: i32) -> (i32, i32) {
    %c0_i32 = arith.constant 0 : i32
    %c0_i32_0 = arith.constant 0 : i32
    return %arg0, %c0_i32 : i32, i32
  }
  func.func @transform_16(%arg0: i32, %arg1: i32) -> (i32, i32) {
    %c0_i32 = arith.constant 0 : i32
    %c0_i32_0 = arith.constant 0 : i32
    return %c0_i32, %arg0 : i32, i32
  }
}

module attributes {stable_mosaic.version = 11 : i64} {
  func.func @encoder_kernel(%arg0: i32, %arg1: i32, %arg2: memref<1xf32, #tpu.memory_space<smem>>, %arg3: memref<128x768xbf16, #tpu.memory_space<vmem>>, %arg4: memref<128x128xbf16, #tpu.memory_space<vmem>>, %arg5: memref<768x256xbf16, #tpu.memory_space<vmem>>, %arg6: memref<1x256xf32, #tpu.memory_space<vmem>>, %arg7: memref<256x256xbf16, #tpu.memory_space<vmem>>, %arg8: memref<1x256xf32, #tpu.memory_space<vmem>>, %arg9: memref<256x256xbf16, #tpu.memory_space<vmem>>, %arg10: memref<1x256xf32, #tpu.memory_space<vmem>>, %arg11: memref<128x256xbf16, #tpu.memory_space<vmem>>, %arg12: memref<1x256xf32, #tpu.memory_space<vmem>>, %arg13: memref<256x256xbf16, #tpu.memory_space<vmem>>, %arg14: memref<1x256xf32, #tpu.memory_space<vmem>>, %arg15: memref<256x256xbf16, #tpu.memory_space<vmem>>, %arg16: memref<1x256xf32, #tpu.memory_space<vmem>>, %arg17: memref<128x256xbf16, #tpu.memory_space<vmem>>, %arg18: memref<256x128xbf16, #tpu.memory_space<vmem>>, %arg19: memref<128x256xf32, #tpu.memory_space<vmem>>) attributes {dimension_semantics = [#tpu.dimension_semantics<parallel>, #tpu.dimension_semantics<arbitrary>], iteration_bounds = array<i64: 1, 1>, scalar_prefetch = 0 : i64, scratch_operands = 1 : i64, tpu.core_type = #tpu.core_type<tc>, window_params = [{transform_indices = @transform_0, window_bounds = array<i64: 1>}, {transform_indices = @transform_1, window_bounds = array<i64: 128, 768>}, {transform_indices = @transform_2, window_bounds = array<i64: 128, 128>}, {transform_indices = @transform_3, window_bounds = array<i64: 768, 256>}, {pipeline_mode = #tpu.pipeline_mode<synchronous>, transform_indices = @transform_4, window_bounds = array<i64: 1, 256>}, {pipeline_mode = #tpu.pipeline_mode<synchronous>, transform_indices = @transform_5, window_bounds = array<i64: 256, 256>}, {pipeline_mode = #tpu.pipeline_mode<synchronous>, transform_indices = @transform_6, window_bounds = array<i64: 1, 256>}, {pipeline_mode = #tpu.pipeline_mode<synchronous>, transform_indices = @transform_7, window_bounds = array<i64: 256, 256>}, {pipeline_mode = #tpu.pipeline_mode<synchronous>, transform_indices = @transform_8, window_bounds = array<i64: 1, 256>}, {pipeline_mode = #tpu.pipeline_mode<synchronous>, transform_indices = @transform_9, window_bounds = array<i64: 128, 256>}, {pipeline_mode = #tpu.pipeline_mode<synchronous>, transform_indices = @transform_10, window_bounds = array<i64: 1, 256>}, {pipeline_mode = #tpu.pipeline_mode<synchronous>, transform_indices = @transform_11, window_bounds = array<i64: 256, 256>}, {pipeline_mode = #tpu.pipeline_mode<synchronous>, transform_indices = @transform_12, window_bounds = array<i64: 1, 256>}, {pipeline_mode = #tpu.pipeline_mode<synchronous>, transform_indices = @transform_13, window_bounds = array<i64: 256, 256>}, {pipeline_mode = #tpu.pipeline_mode<synchronous>, transform_indices = @transform_14, window_bounds = array<i64: 1, 256>}, {transform_indices = @transform_15, window_bounds = array<i64: 128, 256>}, {transform_indices = @transform_16, window_bounds = array<i64: 256, 128>}]} {
    %c0_i32 = arith.constant 0 : i32
    %0 = arith.cmpi eq, %arg1, %c0_i32 : i32
    %1 = arith.extui %0 : i1 to i32
    %c0_i32_0 = arith.constant 0 : i32
    %2 = arith.cmpi ne, %1, %c0_i32_0 : i32
    scf.if %2 {
      %cst_10 = arith.constant 0.000000e+00 : f32
      %12 = vector.broadcast %cst_10 : f32 to vector<128x256xf32>
      %c0_11 = arith.constant 0 : index
      %c0_12 = arith.constant 0 : index
      %13 = vector.load %arg19[%c0_11, %c0_12] : memref<128x256xf32, #tpu.memory_space<vmem>>, vector<128x256xf32>
      tpu.vector_store %arg19[%c0_11, %c0_12], %12 {strides = array<i32>} : memref<128x256xf32, #tpu.memory_space<vmem>>, vector<128x256xf32>,
    } else {
    }
    %c0 = arith.constant 0 : index
    %c0_1 = arith.constant 0 : index
    %3 = vector.load %arg19[%c0, %c0_1] : memref<128x256xf32, #tpu.memory_space<vmem>>, vector<128x256xf32>
    %c0_2 = arith.constant 0 : index
    %c0_3 = arith.constant 0 : index
    %4 = vector.load %arg3[%c0_2, %c0_3] : memref<128x768xbf16, #tpu.memory_space<vmem>>, vector<128x768xbf16>
    %c0_4 = arith.constant 0 : index
    %c0_5 = arith.constant 0 : index
    %5 = vector.load %arg5[%c0_4, %c0_5] : memref<768x256xbf16, #tpu.memory_space<vmem>>, vector<768x256xbf16>
    %cst = arith.constant dense<0.000000e+00> : vector<128x256xf32>
    %6 = tpu.matmul %4, %5, %cst {dimension_numbers = #tpu.dot_dimension_numbers<[1], [0], [0], [1], [0, 0, 1, 1], [], []>} : vector<128x768xbf16>, vector<768x256xbf16>, vector<128x256xf32> -> vector<128x256xf32>
    %7 = arith.addf %3, %6 : vector<128x256xf32>
    %c0_6 = arith.constant 0 : index
    %c0_7 = arith.constant 0 : index
    %8 = vector.load %arg19[%c0_6, %c0_7] : memref<128x256xf32, #tpu.memory_space<vmem>>, vector<128x256xf32>
    tpu.vector_store %arg19[%c0_6, %c0_7], %7 {strides = array<i32>} : memref<128x256xf32, #tpu.memory_space<vmem>>, vector<128x256xf32>,
    %c0_i32_8 = arith.constant 0 : i32
    %9 = arith.cmpi eq, %arg1, %c0_i32_8 : i32
    %10 = arith.extui %9 : i1 to i32
    %c0_i32_9 = arith.constant 0 : i32
    %11 = arith.cmpi ne, %10, %c0_i32_9 : i32
    scf.if %11 {
      %c0_10 = arith.constant 0 : index
      %c0_11 = arith.constant 0 : index
      %12 = vector.load %arg19[%c0_10, %c0_11] : memref<128x256xf32, #tpu.memory_space<vmem>>, vector<128x256xf32>
      %c0_12 = arith.constant 0 : index
      %c0_13 = arith.constant 0 : index
      %13 = vector.load %arg6[%c0_12, %c0_13] : memref<1x256xf32, #tpu.memory_space<vmem>>, vector<1x256xf32>
      %14 = vector.broadcast %13 : vector<1x256xf32> to vector<128x256xf32>
      %15 = arith.addf %12, %14 : vector<128x256xf32>
      %cst_14 = arith.constant 0.000000e+00 : f32
      %16 = vector.broadcast %cst_14 : f32 to vector<128x256xf32>
      %17 = arith.maximumf %15, %16 : vector<128x256xf32>
      %18 = arith.truncf %17 : vector<128x256xf32> to vector<128x256xbf16>
      %c0_15 = arith.constant 0 : index
      %c0_16 = arith.constant 0 : index
      %19 = vector.load %arg7[%c0_15, %c0_16] : memref<256x256xbf16, #tpu.memory_space<vmem>>, vector<256x256xbf16>
      %cst_17 = arith.constant dense<0.000000e+00> : vector<128x256xf32>
      %20 = tpu.matmul %18, %19, %cst_17 {dimension_numbers = #tpu.dot_dimension_numbers<[1], [0], [0], [1], [0, 0, 1, 1], [], []>} : vector<128x256xbf16>, vector<256x256xbf16>, vector<128x256xf32> -> vector<128x256xf32>
      %c0_18 = arith.constant 0 : index
      %c0_19 = arith.constant 0 : index
      %21 = vector.load %arg8[%c0_18, %c0_19] : memref<1x256xf32, #tpu.memory_space<vmem>>, vector<1x256xf32>
      %22 = vector.broadcast %21 : vector<1x256xf32> to vector<128x256xf32>
      %23 = arith.addf %20, %22 : vector<128x256xf32>
      %cst_20 = arith.constant 0.000000e+00 : f32
      %24 = vector.broadcast %cst_20 : f32 to vector<128x256xf32>
      %25 = arith.maximumf %23, %24 : vector<128x256xf32>
      %26 = arith.truncf %25 : vector<128x256xf32> to vector<128x256xbf16>
      %c0_21 = arith.constant 0 : index
      %c0_22 = arith.constant 0 : index
      %27 = vector.load %arg9[%c0_21, %c0_22] : memref<256x256xbf16, #tpu.memory_space<vmem>>, vector<256x256xbf16>
      %cst_23 = arith.constant dense<0.000000e+00> : vector<128x256xf32>
      %28 = tpu.matmul %26, %27, %cst_23 {dimension_numbers = #tpu.dot_dimension_numbers<[1], [0], [0], [1], [0, 0, 1, 1], [], []>} : vector<128x256xbf16>, vector<256x256xbf16>, vector<128x256xf32> -> vector<128x256xf32>
      %c0_24 = arith.constant 0 : index
      %c0_25 = arith.constant 0 : index
      %29 = vector.load %arg10[%c0_24, %c0_25] : memref<1x256xf32, #tpu.memory_space<vmem>>, vector<1x256xf32>
      %30 = vector.broadcast %29 : vector<1x256xf32> to vector<128x256xf32>
      %31 = arith.addf %28, %30 : vector<128x256xf32>
      %c0_26 = arith.constant 0 : index
      %c0_27 = arith.constant 0 : index
      %32 = vector.load %arg4[%c0_26, %c0_27] : memref<128x128xbf16, #tpu.memory_space<vmem>>, vector<128x128xbf16>
      %c0_28 = arith.constant 0 : index
      %c0_29 = arith.constant 0 : index
      %33 = vector.load %arg11[%c0_28, %c0_29] : memref<128x256xbf16, #tpu.memory_space<vmem>>, vector<128x256xbf16>
      %cst_30 = arith.constant dense<0.000000e+00> : vector<128x256xf32>
      %34 = tpu.matmul %32, %33, %cst_30 {dimension_numbers = #tpu.dot_dimension_numbers<[1], [0], [0], [1], [0, 0, 1, 1], [], []>} : vector<128x128xbf16>, vector<128x256xbf16>, vector<128x256xf32> -> vector<128x256xf32>
      %c0_31 = arith.constant 0 : index
      %c0_32 = arith.constant 0 : index
      %35 = vector.load %arg12[%c0_31, %c0_32] : memref<1x256xf32, #tpu.memory_space<vmem>>, vector<1x256xf32>
      %36 = vector.broadcast %35 : vector<1x256xf32> to vector<128x256xf32>
      %37 = arith.addf %34, %36 : vector<128x256xf32>
      %cst_33 = arith.constant 0.000000e+00 : f32
      %38 = vector.broadcast %cst_33 : f32 to vector<128x256xf32>
      %39 = arith.maximumf %37, %38 : vector<128x256xf32>
      %40 = arith.truncf %39 : vector<128x256xf32> to vector<128x256xbf16>
      %c0_34 = arith.constant 0 : index
      %c0_35 = arith.constant 0 : index
      %41 = vector.load %arg13[%c0_34, %c0_35] : memref<256x256xbf16, #tpu.memory_space<vmem>>, vector<256x256xbf16>
      %cst_36 = arith.constant dense<0.000000e+00> : vector<128x256xf32>
      %42 = tpu.matmul %40, %41, %cst_36 {dimension_numbers = #tpu.dot_dimension_numbers<[1], [0], [0], [1], [0, 0, 1, 1], [], []>} : vector<128x256xbf16>, vector<256x256xbf16>, vector<128x256xf32> -> vector<128x256xf32>
      %c0_37 = arith.constant 0 : index
      %c0_38 = arith.constant 0 : index
      %43 = vector.load %arg14[%c0_37, %c0_38] : memref<1x256xf32, #tpu.memory_space<vmem>>, vector<1x256xf32>
      %44 = vector.broadcast %43 : vector<1x256xf32> to vector<128x256xf32>
      %45 = arith.addf %42, %44 : vector<128x256xf32>
      %cst_39 = arith.constant 0.000000e+00 : f32
      %46 = vector.broadcast %cst_39 : f32 to vector<128x256xf32>
      %47 = arith.maximumf %45, %46 : vector<128x256xf32>
      %48 = arith.truncf %47 : vector<128x256xf32> to vector<128x256xbf16>
      %c0_40 = arith.constant 0 : index
      %c0_41 = arith.constant 0 : index
      %49 = vector.load %arg15[%c0_40, %c0_41] : memref<256x256xbf16, #tpu.memory_space<vmem>>, vector<256x256xbf16>
      %cst_42 = arith.constant dense<0.000000e+00> : vector<128x256xf32>
      %50 = tpu.matmul %48, %49, %cst_42 {dimension_numbers = #tpu.dot_dimension_numbers<[1], [0], [0], [1], [0, 0, 1, 1], [], []>} : vector<128x256xbf16>, vector<256x256xbf16>, vector<128x256xf32> -> vector<128x256xf32>
      %c0_43 = arith.constant 0 : index
      %c0_44 = arith.constant 0 : index
      %51 = vector.load %arg16[%c0_43, %c0_44] : memref<1x256xf32, #tpu.memory_space<vmem>>, vector<1x256xf32>
      %52 = vector.broadcast %51 : vector<1x256xf32> to vector<128x256xf32>
      %53 = arith.addf %50, %52 : vector<128x256xf32>
      %54 = arith.mulf %31, %31 : vector<128x256xf32>
      %cst_45 = arith.constant dense<0.000000e+00> : vector<128xf32>
      %55 = vector.multi_reduction <add>, %54, %cst_45 [1] : vector<128x256xf32> to vector<128xf32>
      %56 = vector.shape_cast %55 : vector<128xf32> to vector<128x1xf32>
      %cst_46 = arith.constant 1.000000e-24 : f32
      %57 = vector.broadcast %cst_46 : f32 to vector<128x1xf32>
      %58 = arith.maximumf %56, %57 : vector<128x1xf32>
      %59 = math.rsqrt %58 : vector<128x1xf32>
      %60 = vector.broadcast %59 : vector<128x1xf32> to vector<128x256xf32>
      %61 = arith.mulf %31, %60 : vector<128x256xf32>
      %62 = arith.mulf %53, %53 : vector<128x256xf32>
      %cst_47 = arith.constant dense<0.000000e+00> : vector<128xf32>
      %63 = vector.multi_reduction <add>, %62, %cst_47 [1] : vector<128x256xf32> to vector<128xf32>
      %64 = vector.shape_cast %63 : vector<128xf32> to vector<128x1xf32>
      %cst_48 = arith.constant 1.000000e-24 : f32
      %65 = vector.broadcast %cst_48 : f32 to vector<128x1xf32>
      %66 = arith.maximumf %64, %65 : vector<128x1xf32>
      %67 = math.rsqrt %66 : vector<128x1xf32>
      %68 = vector.broadcast %67 : vector<128x1xf32> to vector<128x256xf32>
      %69 = arith.mulf %53, %68 : vector<128x256xf32>
      %70 = arith.truncf %61 : vector<128x256xf32> to vector<128x256xbf16>
      %c0_49 = arith.constant 0 : index
      %c0_50 = arith.constant 0 : index
      %71 = vector.load %arg17[%c0_49, %c0_50] : memref<128x256xbf16, #tpu.memory_space<vmem>>, vector<128x256xbf16>
      tpu.vector_store %arg17[%c0_49, %c0_50], %70 {strides = array<i32>} : memref<128x256xbf16, #tpu.memory_space<vmem>>, vector<128x256xbf16>,
      %c0_51 = arith.constant 0 : index
      %72 = memref.load %arg2[%c0_51] : memref<1xf32, #tpu.memory_space<smem>>
      %73 = vector.broadcast %72 : f32 to vector<128x256xf32>
      %74 = arith.mulf %69, %73 : vector<128x256xf32>
      %75 = tpu.transpose %74, [1, 0] : vector<128x256xf32> -> vector<256x128xf32>
      %76 = arith.truncf %75 : vector<256x128xf32> to vector<256x128xbf16>
      %c0_52 = arith.constant 0 : index
      %c0_53 = arith.constant 0 : index
      %77 = vector.load %arg18[%c0_52, %c0_53] : memref<256x128xbf16, #tpu.memory_space<vmem>>, vector<256x128xbf16>
      tpu.vector_store %arg18[%c0_52, %c0_53], %76 {strides = array<i32>} : memref<256x128xbf16, #tpu.memory_space<vmem>>, vector<256x128xbf16>,
    } else {
    }
    return
  }
  func.func @transform_0(%arg0: i32, %arg1: i32) -> i32 {
    %c0_i32 = arith.constant 0 : i32
    %c0_i32_0 = arith.constant 0 : i32
    return %c0_i32 : i32
  }
  func.func @transform_1(%arg0: i32, %arg1: i32) -> (i32, i32) {
    %c0_i32 = arith.constant 0 : i32
    return %arg0, %arg1 : i32, i32
  }
  func.func @transform_2(%arg0: i32, %arg1: i32) -> (i32, i32) {
    %c0_i32 = arith.constant 0 : i32
    %c0_i32_0 = arith.constant 0 : i32
    return %arg0, %c0_i32 : i32, i32
  }
  func.func @transform_3(%arg0: i32, %arg1: i32) -> (i32, i32) {
    %c0_i32 = arith.constant 0 : i32
    %c0_i32_0 = arith.constant 0 : i32
    return %arg1, %c0_i32 : i32, i32
  }
  func.func @transform_4(%arg0: i32, %arg1: i32) -> (i32, i32) {
    %c0_i32 = arith.constant 0 : i32
    %c0_i32_0 = arith.constant 0 : i32
    %c0_i32_1 = arith.constant 0 : i32
    return %c0_i32, %c0_i32_0 : i32, i32
  }
  func.func @transform_5(%arg0: i32, %arg1: i32) -> (i32, i32) {
    %c0_i32 = arith.constant 0 : i32
    %c0_i32_0 = arith.constant 0 : i32
    %c0_i32_1 = arith.constant 0 : i32
    return %c0_i32, %c0_i32_0 : i32, i32
  }
  func.func @transform_6(%arg0: i32, %arg1: i32) -> (i32, i32) {
    %c0_i32 = arith.constant 0 : i32
    %c0_i32_0 = arith.constant 0 : i32
    %c0_i32_1 = arith.constant 0 : i32
    return %c0_i32, %c0_i32_0 : i32, i32
  }
  func.func @transform_7(%arg0: i32, %arg1: i32) -> (i32, i32) {
    %c0_i32 = arith.constant 0 : i32
    %c0_i32_0 = arith.constant 0 : i32
    %c0_i32_1 = arith.constant 0 : i32
    return %c0_i32, %c0_i32_0 : i32, i32
  }
  func.func @transform_8(%arg0: i32, %arg1: i32) -> (i32, i32) {
    %c0_i32 = arith.constant 0 : i32
    %c0_i32_0 = arith.constant 0 : i32
    %c0_i32_1 = arith.constant 0 : i32
    return %c0_i32, %c0_i32_0 : i32, i32
  }
  func.func @transform_9(%arg0: i32, %arg1: i32) -> (i32, i32) {
    %c0_i32 = arith.constant 0 : i32
    %c0_i32_0 = arith.constant 0 : i32
    %c0_i32_1 = arith.constant 0 : i32
    return %c0_i32, %c0_i32_0 : i32, i32
  }
  func.func @transform_10(%arg0: i32, %arg1: i32) -> (i32, i32) {
    %c0_i32 = arith.constant 0 : i32
    %c0_i32_0 = arith.constant 0 : i32
    %c0_i32_1 = arith.constant 0 : i32
    return %c0_i32, %c0_i32_0 : i32, i32
  }
  func.func @transform_11(%arg0: i32, %arg1: i32) -> (i32, i32) {
    %c0_i32 = arith.constant 0 : i32
    %c0_i32_0 = arith.constant 0 : i32
    %c0_i32_1 = arith.constant 0 : i32
    return %c0_i32, %c0_i32_0 : i32, i32
  }
  func.func @transform_12(%arg0: i32, %arg1: i32) -> (i32, i32) {
    %c0_i32 = arith.constant 0 : i32
    %c0_i32_0 = arith.constant 0 : i32
    %c0_i32_1 = arith.constant 0 : i32
    return %c0_i32, %c0_i32_0 : i32, i32
  }
  func.func @transform_13(%arg0: i32, %arg1: i32) -> (i32, i32) {
    %c0_i32 = arith.constant 0 : i32
    %c0_i32_0 = arith.constant 0 : i32
    %c0_i32_1 = arith.constant 0 : i32
    return %c0_i32, %c0_i32_0 : i32, i32
  }
  func.func @transform_14(%arg0: i32, %arg1: i32) -> (i32, i32) {
    %c0_i32 = arith.constant 0 : i32
    %c0_i32_0 = arith.constant 0 : i32
    %c0_i32_1 = arith.constant 0 : i32
    return %c0_i32, %c0_i32_0 : i32, i32
  }
  func.func @transform_15(%arg0: i32, %arg1: i32) -> (i32, i32) {
    %c0_i32 = arith.constant 0 : i32
    %c0_i32_0 = arith.constant 0 : i32
    return %arg0, %c0_i32 : i32, i32
  }
  func.func @transform_16(%arg0: i32, %arg1: i32) -> (i32, i32) {
    %c0_i32 = arith.constant 0 : i32
    %c0_i32_0 = arith.constant 0 : i32
    return %c0_i32, %arg0 : i32, i32
  }
}

</mosaic_0001>

<llo_original>
// kernel: tpu_custom_call.1
$region0: #{tpu_custom_call.1}
  #allocation0 [shape = 'u32[]', space=smem, size = 0x4, offset = 0x4, fixed_abs, tag = 'smem constant byte address 0x4 - core index']
  #allocation1 [shape = 'u32[144,128]{1,0:T(1,128)}', space=vmem, size = 0x12000, scoped, tag = 'internal scratch']
  #allocation2 [shape = 'f32[128,256]{1,0:T(8,128)}', space=vmem, size = 0x20000, scoped, tag = 'scratch operand']
  #allocation3 [shape = 'f32[1]{0:T(128)S(6)}', space=smem, size = 0x200, scoped, tag = 'scoped memory for tpu_custom_call.1']
  %s0 = inlined_call_operand.<no memory space> [shape: f32[1], index: 0, kind: input, shape index: {}]
  %s1 = inlined_call_operand.hbm [shape: bf16[128,768], index: 1, kind: input, shape index: {}]
  %s2 = inlined_call_operand.hbm [shape: bf16[128,128], index: 2, kind: input, shape index: {}]
  %s3 = inlined_call_operand.hbm [shape: bf16[768,256], index: 3, kind: input, shape index: {}]
  %s4 = inlined_call_operand.vmem [shape: f32[1,256], index: 4, kind: input, shape index: {}]
  %s5 = inlined_call_operand.hbm [shape: bf16[256,256], index: 5, kind: input, shape index: {}]
  %s6 = inlined_call_operand.vmem [shape: f32[1,256], index: 6, kind: input, shape index: {}]
  %s7 = inlined_call_operand.hbm [shape: bf16[256,256], index: 7, kind: input, shape index: {}]
  %s8 = inlined_call_operand.vmem [shape: f32[1,256], index: 8, kind: input, shape index: {}]
  %s9 = inlined_call_operand.hbm [shape: bf16[128,256], index: 9, kind: input, shape index: {}]
  %s10 = inlined_call_operand.vmem [shape: f32[1,256], index: 10, kind: input, shape index: {}]
  %s11 = inlined_call_operand.hbm [shape: bf16[256,256], index: 11, kind: input, shape index: {}]
  %s12 = inlined_call_operand.vmem [shape: f32[1,256], index: 12, kind: input, shape index: {}]
  %s13 = inlined_call_operand.hbm [shape: bf16[256,256], index: 13, kind: input, shape index: {}]
  %s14 = inlined_call_operand.vmem [shape: f32[1,256], index: 14, kind: input, shape index: {}]
  %s15 = inlined_call_operand.hbm [shape: bf16[128,256], index: 15, kind: output, shape index: {0}]
  %s16 = inlined_call_operand.hbm [shape: bf16[256,128], index: 16, kind: output, shape index: {1}]
  %17 = xla_tuple %s15, %s16
  %s18 = sld [smem:[#allocation0]]
  $region118: #{tpu_custom_call.1} parent=0
    _
  %s20 = ssub.s32 1, %s18
  %s21 = scalar_select 0, %s20, %s18
  %22 = sst [smem:[#allocation3]] %s0
  $region1: #{tpu_custom_call.1} parent=0
    #allocation4 [shape = 'u8[196608]{0}', space=vmem, size = 0x30000, scoped, tag = 'input window, operand 1, single buffered']
    #allocation5 [shape = 's32[1]{0}', space=sflag, size = 0x4, scoped, tag = 'scoped memory for tpu_custom_call.1']
    #allocation6 [shape = 's32[1]{0}', space=sflag, size = 0x4, scoped, tag = 'scoped memory for tpu_custom_call.1']
    #allocation7 [shape = 'u8[32768]{0}', space=vmem, size = 0x8000, scoped, tag = 'input window, operand 2, single buffered']
    #allocation8 [shape = 's32[1]{0}', space=sflag, size = 0x4, scoped, tag = 'scoped memory for tpu_custom_call.1']
    #allocation9 [shape = 'u8[393216]{0}', space=vmem, size = 0x60000, scoped, tag = 'input window, operand 3, single buffered']
    #allocation10 [shape = 'u8[131072]{0}', space=vmem, size = 0x20000, scoped, tag = 'input window, operand 5, single buffered']
    #allocation11 [shape = 's32[1]{0}', space=sflag, size = 0x4, scoped, tag = 'scoped memory for tpu_custom_call.1']
    #allocation12 [shape = 'u8[131072]{0}', space=vmem, size = 0x20000, scoped, tag = 'input window, operand 7, single buffered']
    #allocation13 [shape = 'u8[65536]{0}', space=vmem, size = 0x10000, scoped, tag = 'input window, operand 9, single buffered']
    #allocation14 [shape = 's32[1]{0}', space=sflag, size = 0x4, scoped, tag = 'scoped memory for tpu_custom_call.1']
    #allocation15 [shape = 'u8[131072]{0}', space=vmem, size = 0x20000, scoped, tag = 'input window, operand 11, single buffered']
    #allocation16 [shape = 'u8[131072]{0}', space=vmem, size = 0x20000, scoped, tag = 'input window, operand 13, single buffered']
    #allocation17 [shape = 's32[1]{0}', space=sflag, size = 0x4, scoped, tag = 'scoped memory for tpu_custom_call.1']
    #allocation18 [shape = 'u8[65536]{0}', space=vmem, size = 0x10000, scoped, tag = 'output window, operand 0, single buffered']
    #allocation19 [shape = 'u8[65536]{0}', space=vmem, size = 0x10000, scoped, tag = 'output window, operand 1, single buffered']
    #allocation20 [shape = 's32[1]{0}', space=sflag, size = 0x4, scoped, tag = 'scoped memory for tpu_custom_call.1']
    %23 = vsyncpa [#allocation5], 0
    %24 = vsyncpa [#allocation8], 0
    %25 = vsyncpa [#allocation11], 0
    %26 = vsyncpa [#allocation14], 0
    %27 = vsyncpa [#allocation17], 0
    %28 = vsyncpa [#allocation6], 0
    %29 = vsyncpa [#allocation20], 0
    // Predicated region
    $region2: #{tpu_custom_call.1} parent=1 // pred_check
      _
    $region3: #{tpu_custom_call.1} parent=1 // pred_check_branch
      %31 = sbr.rel (0) target = $region5
    $region4: #{tpu_custom_call.1} parent=1 // pred_region
      _
    $region5: #{tpu_custom_call.1} parent=1 // pred_fallthru
      _
    // Predicated region
    $region6: #{tpu_custom_call.1} parent=1 // pred_check
      _
    $region7: #{tpu_custom_call.1} parent=1 // pred_check_branch
      %33 = sbr.rel (0) target = $region9
    $region8: #{tpu_custom_call.1} parent=1 // pred_region
      %s35 = ssub.s32 6144, 6144
      %36 = vsyncadd [#allocation5], %s35
      %s37 = sshll.u32 [#allocation4], 4
      %s38 = int_to_ptr.vmem [resolvable:$true] %s37
      %43 = dma.hbm_to_vmem [thread:$0]  %s1, 6144, %s38, [#allocation5], 384, 384, 24
    $region9: #{tpu_custom_call.1} parent=1 // pred_fallthru
      _
    // Predicated region
    $region10: #{tpu_custom_call.1} parent=1 // pred_check
      _
    $region11: #{tpu_custom_call.1} parent=1 // pred_check_branch
      %45 = sbr.rel (0) target = $region13
    $region12: #{tpu_custom_call.1} parent=1 // pred_region
      %s47 = ssub.s32 1024, 1024
      %48 = vsyncadd [#allocation8], %s47
      %s49 = sshll.u32 [#allocation7], 4
      %s50 = int_to_ptr.vmem [resolvable:$true] %s49
      %55 = dma.hbm_to_vmem [thread:$0]  %s2, 1024, %s50, [#allocation8], 64, 64, 4
    $region13: #{tpu_custom_call.1} parent=1 // pred_fallthru
      _
    // Predicated region
    $region14: #{tpu_custom_call.1} parent=1 // pred_check
      _
    $region15: #{tpu_custom_call.1} parent=1 // pred_check_branch
      %57 = sbr.rel (0) target = $region17
    $region16: #{tpu_custom_call.1} parent=1 // pred_region
      %s59 = ssub.s32 12288, 12288
      %60 = vsyncadd [#allocation8], %s59
      %s61 = sshll.u32 [#allocation9], 4
      %s62 = int_to_ptr.vmem [resolvable:$true] %s61
      %67 = dma.hbm_to_vmem [thread:$0]  %s3, 12288, %s62, [#allocation8], 128, 128, 8
    $region17: #{tpu_custom_call.1} parent=1 // pred_fallthru
      _
    // Predicated region
    $region18: #{tpu_custom_call.1} parent=1 // pred_check
      _
    $region19: #{tpu_custom_call.1} parent=1 // pred_check_branch
      %69 = sbr.rel (0) target = $region21
    $region20: #{tpu_custom_call.1} parent=1 // pred_region
      _
    $region21: #{tpu_custom_call.1} parent=1 // pred_fallthru
      _
    // Predicated region
    $region22: #{tpu_custom_call.1} parent=1 // pred_check
      _
    $region23: #{tpu_custom_call.1} parent=1 // pred_check_branch
      %71 = sbr.rel (0) target = $region25
    $region24: #{tpu_custom_call.1} parent=1 // pred_region
      %s73 = ssub.s32 4096, 4096
      %74 = vsyncadd [#allocation11], %s73
      %s75 = sshll.u32 [#allocation10], 4
      %s76 = int_to_ptr.vmem [resolvable:$true] %s75
      %81 = dma.hbm_to_vmem [thread:$0]  %s5, 4096, %s76, [#allocation11], 128, 128, 8
    $region25: #{tpu_custom_call.1} parent=1 // pred_fallthru
      _
    // Predicated region
    $region26: #{tpu_custom_call.1} parent=1 // pred_check
      _
    $region27: #{tpu_custom_call.1} parent=1 // pred_check_branch
      %83 = sbr.rel (0) target = $region29
    $region28: #{tpu_custom_call.1} parent=1 // pred_region
      _
    $region29: #{tpu_custom_call.1} parent=1 // pred_fallthru
      _
    // Predicated region
    $region30: #{tpu_custom_call.1} parent=1 // pred_check
      _
    $region31: #{tpu_custom_call.1} parent=1 // pred_check_branch
      %85 = sbr.rel (0) target = $region33
    $region32: #{tpu_custom_call.1} parent=1 // pred_region
      %s87 = ssub.s32 4096, 4096
      %88 = vsyncadd [#allocation11], %s87
      %s89 = sshll.u32 [#allocation12], 4
      %s90 = int_to_ptr.vmem [resolvable:$true] %s89
      %95 = dma.hbm_to_vmem [thread:$0]  %s7, 4096, %s90, [#allocation11], 128, 128, 8
    $region33: #{tpu_custom_call.1} parent=1 // pred_fallthru
      _
    // Predicated region
    $region34: #{tpu_custom_call.1} parent=1 // pred_check
      _
    $region35: #{tpu_custom_call.1} parent=1 // pred_check_branch
      %97 = sbr.rel (0) target = $region37
    $region36: #{tpu_custom_call.1} parent=1 // pred_region
      _
    $region37: #{tpu_custom_call.1} parent=1 // pred_fallthru
      _
    // Predicated region
    $region38: #{tpu_custom_call.1} parent=1 // pred_check
      _
    $region39: #{tpu_custom_call.1} parent=1 // pred_check_branch
      %99 = sbr.rel (0) target = $region41
    $region40: #{tpu_custom_call.1} parent=1 // pred_region
      %s101 = ssub.s32 2048, 2048
      %102 = vsyncadd [#allocation14], %s101
      %s103 = sshll.u32 [#allocation13], 4
      %s104 = int_to_ptr.vmem [resolvable:$true] %s103
      %109 = dma.hbm_to_vmem [thread:$0]  %s9, 2048, %s104, [#allocation14], 128, 128, 8
    $region41: #{tpu_custom_call.1} parent=1 // pred_fallthru
      _
    // Predicated region
    $region42: #{tpu_custom_call.1} parent=1 // pred_check
      _
    $region43: #{tpu_custom_call.1} parent=1 // pred_check_branch
      %111 = sbr.rel (0) target = $region45
    $region44: #{tpu_custom_call.1} parent=1 // pred_region
      _
    $region45: #{tpu_custom_call.1} parent=1 // pred_fallthru
      _
    // Predicated region
    $region46: #{tpu_custom_call.1} parent=1 // pred_check
      _
    $region47: #{tpu_custom_call.1} parent=1 // pred_check_branch
      %113 = sbr.rel (0) target = $region49
    $region48: #{tpu_custom_call.1} parent=1 // pred_region
      %s115 = ssub.s32 4096, 4096
      %116 = vsyncadd [#allocation14], %s115
      %s117 = sshll.u32 [#allocation15], 4
      %s118 = int_to_ptr.vmem [resolvable:$true] %s117
      %123 = dma.hbm_to_vmem [thread:$0]  %s11, 4096, %s118, [#allocation14], 128, 128, 8
    $region49: #{tpu_custom_call.1} parent=1 // pred_fallthru
      _
    // Predicated region
    $region50: #{tpu_custom_call.1} parent=1 // pred_check
      _
    $region51: #{tpu_custom_call.1} parent=1 // pred_check_branch
      %125 = sbr.rel (0) target = $region53
    $region52: #{tpu_custom_call.1} parent=1 // pred_region
      _
    $region53: #{tpu_custom_call.1} parent=1 // pred_fallthru
      _
    // Predicated region
    $region54: #{tpu_custom_call.1} parent=1 // pred_check
      _
    $region55: #{tpu_custom_call.1} parent=1 // pred_check_branch
      %127 = sbr.rel (0) target = $region57
    $region56: #{tpu_custom_call.1} parent=1 // pred_region
      %s129 = ssub.s32 4096, 4096
      %130 = vsyncadd [#allocation17], %s129
      %s131 = sshll.u32 [#allocation16], 4
      %s132 = int_to_ptr.vmem [resolvable:$true] %s131
      %137 = dma.hbm_to_vmem [thread:$0]  %s13, 4096, %s132, [#allocation17], 128, 128, 8
    $region57: #{tpu_custom_call.1} parent=1 // pred_fallthru
      _
    // Predicated region
    $region58: #{tpu_custom_call.1} parent=1 // pred_check
      _
    $region59: #{tpu_custom_call.1} parent=1 // pred_check_branch
      %139 = sbr.rel (0) target = $region61
    $region60: #{tpu_custom_call.1} parent=1 // pred_region
      _
    $region61: #{tpu_custom_call.1} parent=1 // pred_fallthru
      _
    // Predicated region
    $region62: #{tpu_custom_call.1} parent=1 // pred_check
      _
    $region63: #{tpu_custom_call.1} parent=1 // pred_check_branch
      %141 = sbr.rel (0) target = $region65
    $region64: #{tpu_custom_call.1} parent=1 // pred_region
      %142 = dma.done [#allocation5], 6144
    $region65: #{tpu_custom_call.1} parent=1 // pred_fallthru
      _
    // Predicated region
    $region66: #{tpu_custom_call.1} parent=1 // pred_check
      _
    $region67: #{tpu_custom_call.1} parent=1 // pred_check_branch
      %144 = sbr.rel (0) target = $region69
    $region68: #{tpu_custom_call.1} parent=1 // pred_region
      %145 = dma.done [#allocation8], 1024
    $region69: #{tpu_custom_call.1} parent=1 // pred_fallthru
      _
    // Predicated region
    $region70: #{tpu_custom_call.1} parent=1 // pred_check
      _
    $region71: #{tpu_custom_call.1} parent=1 // pred_check_branch
      %147 = sbr.rel (0) target = $region73
    $region72: #{tpu_custom_call.1} parent=1 // pred_region
      %148 = dma.done [#allocation8], 12288
    $region73: #{tpu_custom_call.1} parent=1 // pred_fallthru
      _
    // Predicated region
    $region74: #{tpu_custom_call.1} parent=1 // pred_check
      _
    $region75: #{tpu_custom_call.1} parent=1 // pred_check_branch
      %150 = sbr.rel (0) target = $region77
    $region76: #{tpu_custom_call.1} parent=1 // pred_region
      %151 = dma.done [#allocation11], 4096
    $region77: #{tpu_custom_call.1} parent=1 // pred_fallthru
      _
    // Predicated region
    $region78: #{tpu_custom_call.1} parent=1 // pred_check
      _
    $region79: #{tpu_custom_call.1} parent=1 // pred_check_branch
      %153 = sbr.rel (0) target = $region81
    $region80: #{tpu_custom_call.1} parent=1 // pred_region
      %154 = dma.done [#allocation11], 4096
    $region81: #{tpu_custom_call.1} parent=1 // pred_fallthru
      _
    // Predicated region
    $region82: #{tpu_custom_call.1} parent=1 // pred_check
      _
    $region83: #{tpu_custom_call.1} parent=1 // pred_check_branch
      %156 = sbr.rel (0) target = $region85
    $region84: #{tpu_custom_call.1} parent=1 // pred_region
      %157 = dma.done [#allocation14], 2048
    $region85: #{tpu_custom_call.1} parent=1 // pred_fallthru
      _
    // Predicated region
    $region86: #{tpu_custom_call.1} parent=1 // pred_check
      _
    $region87: #{tpu_custom_call.1} parent=1 // pred_check_branch
      %159 = sbr.rel (0) target = $region89
    $region88: #{tpu_custom_call.1} parent=1 // pred_region
      %160 = dma.done [#allocation14], 4096
    $region89: #{tpu_custom_call.1} parent=1 // pred_fallthru
      _
    // Predicated region
    $region90: #{tpu_custom_call.1} parent=1 // pred_check
      _
    $region91: #{tpu_custom_call.1} parent=1 // pred_check_branch
      %162 = sbr.rel (0) target = $region93
    $region92: #{tpu_custom_call.1} parent=1 // pred_region
      %163 = dma.done [#allocation17], 4096
    $region93: #{tpu_custom_call.1} parent=1 // pred_fallthru
      _
    %p165 = scmp.eq.s32.totalorder 0, 0
    // Predicated region
    $region94: #{tpu_custom_call.1} parent=1 // pred_check
      %p166 = pneg %p165
    $region95: #{tpu_custom_call.1} parent=1 // pred_check_branch
      %168 = sbr.rel (%p166) target = $region97
    $region96: #{tpu_custom_call.1} parent=1 // pred_region
      %169 = vst [vmem:[#allocation2] sm:$0xff] 0.0
      %170 = vst [vmem:[#allocation2 + $0x8] sm:$0xff] 0.0
      %171 = vst [vmem:[#allocation2 + $0x10] sm:$0xff] 0.0
      %172 = vst [vmem:[#allocation2 + $0x18] sm:$0xff] 0.0
      %173 = vst [vmem:[#allocation2 + $0x20] sm:$0xff] 0.0
      %174 = vst [vmem:[#allocation2 + $0x28] sm:$0xff] 0.0
      %175 = vst [vmem:[#allocation2 + $0x30] sm:$0xff] 0.0
      %176 = vst [vmem:[#allocation2 + $0x38] sm:$0xff] 0.0
      %177 = vst [vmem:[#allocation2 + $0x40] sm:$0xff] 0.0
      %178 = vst [vmem:[#allocation2 + $0x48] sm:$0xff] 0.0
      %179 = vst [vmem:[#allocation2 + $0x50] sm:$0xff] 0.0
      %180 = vst [vmem:[#allocation2 + $0x58] sm:$0xff] 0.0
      %181 = vst [vmem:[#allocation2 + $0x60] sm:$0xff] 0.0
      %182 = vst [vmem:[#allocation2 + $0x68] sm:$0xff] 0.0
      %183 = vst [vmem:[#allocation2 + $0x70] sm:$0xff] 0.0
      %184 = vst [vmem:[#allocation2 + $0x78] sm:$0xff] 0.0
      %185 = vst [vmem:[#allocation2 + $0x80] sm:$0xff] 0.0
      %186 = vst [vmem:[#allocation2 + $0x88] sm:$0xff] 0.0
      %187 = vst [vmem:[#allocation2 + $0x90] sm:$0xff] 0.0
      %188 = vst [vmem:[#allocation2 + $0x98] sm:$0xff] 0.0
      %189 = vst [vmem:[#allocation2 + $0xa0] sm:$0xff] 0.0
      %190 = vst [vmem:[#allocation2 + $0xa8] sm:$0xff] 0.0
      %191 = vst [vmem:[#allocation2 + $0xb0] sm:$0xff] 0.0
      %192 = vst [vmem:[#allocation2 + $0xb8] sm:$0xff] 0.0
      %193 = vst [vmem:[#allocation2 + $0xc0] sm:$0xff] 0.0
      %194 = vst [vmem:[#allocation2 + $0xc8] sm:$0xff] 0.0
      %195 = vst [vmem:[#allocation2 + $0xd0] sm:$0xff] 0.0
      %196 = vst [vmem:[#allocation2 + $0xd8] sm:$0xff] 0.0
      %197 = vst [vmem:[#allocation2 + $0xe0] sm:$0xff] 0.0
      %198 = vst [vmem:[#allocation2 + $0xe8] sm:$0xff] 0.0
      %199 = vst [vmem:[#allocation2 + $0xf0] sm:$0xff] 0.0
      %200 = vst [vmem:[#allocation2 + $0xf8] sm:$0xff] 0.0
    $region97: #{tpu_custom_call.1} parent=1 // pred_fallthru
      _
    %v201 = vld [vmem:[#allocation2] sm:$0xff]
    %v202 = vld [vmem:[#allocation2 + $0x8] sm:$0xff]
    %v203 = vld [vmem:[#allocation2 + $0x10] sm:$0xff]
    %v204 = vld [vmem:[#allocation2 + $0x18] sm:$0xff]
    %v205 = vld [vmem:[#allocation2 + $0x20] sm:$0xff]
    %v206 = vld [vmem:[#allocation2 + $0x28] sm:$0xff]
    %v207 = vld [vmem:[#allocation2 + $0x30] sm:$0xff]
    %v208 = vld [vmem:[#allocation2 + $0x38] sm:$0xff]
    %v209 = vld [vmem:[#allocation2 + $0x40] sm:$0xff]
    %v210 = vld [vmem:[#allocation2 + $0x48] sm:$0xff]
    %v211 = vld [vmem:[#allocation2 + $0x50] sm:$0xff]
    %v212 = vld [vmem:[#allocation2 + $0x58] sm:$0xff]
    %v213 = vld [vmem:[#allocation2 + $0x60] sm:$0xff]
    %v214 = vld [vmem:[#allocation2 + $0x68] sm:$0xff]
    %v215 = vld [vmem:[#allocation2 + $0x70] sm:$0xff]
    %v216 = vld [vmem:[#allocation2 + $0x78] sm:$0xff]
    %v217 = vld [vmem:[#allocation2 + $0x80] sm:$0xff]
    %v218 = vld [vmem:[#allocation2 + $0x88] sm:$0xff]
    %v219 = vld [vmem:[#allocation2 + $0x90] sm:$0xff]
    %v220 = vld [vmem:[#allocation2 + $0x98] sm:$0xff]
    %v221 = vld [vmem:[#allocation2 + $0xa0] sm:$0xff]
    %v222 = vld [vmem:[#allocation2 + $0xa8] sm:$0xff]
    %v223 = vld [vmem:[#allocation2 + $0xb0] sm:$0xff]
    %v224 = vld [vmem:[#allocation2 + $0xb8] sm:$0xff]
    %v225 = vld [vmem:[#allocation2 + $0xc0] sm:$0xff]
    %v226 = vld [vmem:[#allocation2 + $0xc8] sm:$0xff]
    %v227 = vld [vmem:[#allocation2 + $0xd0] sm:$0xff]
    %v228 = vld [vmem:[#allocation2 + $0xd8] sm:$0xff]
    %v229 = vld [vmem:[#allocation2 + $0xe0] sm:$0xff]
    %v230 = vld [vmem:[#allocation2 + $0xe8] sm:$0xff]
    %v231 = vld [vmem:[#allocation2 + $0xf0] sm:$0xff]
    %v232 = vld [vmem:[#allocation2 + $0xf8] sm:$0xff]
    %v233 = vld [vmem:[#allocation4] sm:$0xff]
    %v234 = vld [vmem:[#allocation4 + $0x8] sm:$0xff]
    %v235 = vld [vmem:[#allocation4 + $0x10] sm:$0xff]
    %v236 = vld [vmem:[#allocation4 + $0x18] sm:$0xff]
    %v237 = vld [vmem:[#allocation4 + $0x20] sm:$0xff]
    %v238 = vld [vmem:[#allocation4 + $0x28] sm:$0xff]
    %v239 = vld [vmem:[#allocation4 + $0x30] sm:$0xff]
    %v240 = vld [vmem:[#allocation4 + $0x38] sm:$0xff]
    %v241 = vld [vmem:[#allocation4 + $0x40] sm:$0xff]
    %v242 = vld [vmem:[#allocation4 + $0x48] sm:$0xff]
    %v243 = vld [vmem:[#allocation4 + $0x50] sm:$0xff]
    %v244 = vld [vmem:[#allocation4 + $0x58] sm:$0xff]
    %v245 = vld [vmem:[#allocation4 + $0x60] sm:$0xff]
    %v246 = vld [vmem:[#allocation4 + $0x68] sm:$0xff]
    %v247 = vld [vmem:[#allocation4 + $0x70] sm:$0xff]
    %v248 = vld [vmem:[#allocation4 + $0x78] sm:$0xff]
    %v249 = vld [vmem:[#allocation4 + $0x80] sm:$0xff]
    %v250 = vld [vmem:[#allocation4 + $0x88] sm:$0xff]
    %v251 = vld [vmem:[#allocation4 + $0x90] sm:$0xff]
    %v252 = vld [vmem:[#allocation4 + $0x98] sm:$0xff]
    %v253 = vld [vmem:[#allocation4 + $0xa0] sm:$0xff]
    %v254 = vld [vmem:[#allocation4 + $0xa8] sm:$0xff]
    %v255 = vld [vmem:[#allocation4 + $0xb0] sm:$0xff]
    %v256 = vld [vmem:[#allocation4 + $0xb8] sm:$0xff]
    %v257 = vld [vmem:[#allocation4 + $0xc0] sm:$0xff]
    %v258 = vld [vmem:[#allocation4 + $0xc8] sm:$0xff]
    %v259 = vld [vmem:[#allocation4 + $0xd0] sm:$0xff]
    %v260 = vld [vmem:[#allocation4 + $0xd8] sm:$0xff]
    %v261 = vld [vmem:[#allocation4 + $0xe0] sm:$0xff]
    %v262 = vld [vmem:[#allocation4 + $0xe8] sm:$0xff]
    %v263 = vld [vmem:[#allocation4 + $0xf0] sm:$0xff]
    %v264 = vld [vmem:[#allocation4 + $0xf8] sm:$0xff]
    %v265 = vld [vmem:[#allocation4 + $0x100] sm:$0xff]
    %v266 = vld [vmem:[#allocation4 + $0x108] sm:$0xff]
    %v267 = vld [vmem:[#allocation4 + $0x110] sm:$0xff]
    %v268 = vld [vmem:[#allocation4 + $0x118] sm:$0xff]
    %v269 = vld [vmem:[#allocation4 + $0x120] sm:$0xff]
    %v270 = vld [vmem:[#allocation4 + $0x128] sm:$0xff]
    %v271 = vld [vmem:[#allocation4 + $0x130] sm:$0xff]
    %v272 = vld [vmem:[#allocation4 + $0x138] sm:$0xff]
    %v273 = vld [vmem:[#allocation4 + $0x140] sm:$0xff]
    %v274 = vld [vmem:[#allocation4 + $0x148] sm:$0xff]
    %v275 = vld [vmem:[#allocation4 + $0x150] sm:$0xff]
    %v276 = vld [vmem:[#allocation4 + $0x158] sm:$0xff]
    %v277 = vld [vmem:[#allocation4 + $0x160] sm:$0xff]
    %v278 = vld [vmem:[#allocation4 + $0x168] sm:$0xff]
    %v279 = vld [vmem:[#allocation4 + $0x170] sm:$0xff]
    %v280 = vld [vmem:[#allocation4 + $0x178] sm:$0xff]
    %v281 = vld [vmem:[#allocation9] sm:$0xff]
    %v282 = vld [vmem:[#allocation9 + $0x8] sm:$0xff]
    %v283 = vld [vmem:[#allocation9 + $0x10] sm:$0xff]
    %v284 = vld [vmem:[#allocation9 + $0x18] sm:$0xff]
    %v285 = vld [vmem:[#allocation9 + $0x20] sm:$0xff]
    %v286 = vld [vmem:[#allocation9 + $0x28] sm:$0xff]
    %v287 = vld [vmem:[#allocation9 + $0x30] sm:$0xff]
    %v288 = vld [vmem:[#allocation9 + $0x38] sm:$0xff]
    %v289 = vld [vmem:[#allocation9 + $0x40] sm:$0xff]
    %v290 = vld [vmem:[#allocation9 + $0x48] sm:$0xff]
    %v291 = vld [vmem:[#allocation9 + $0x50] sm:$0xff]
    %v292 = vld [vmem:[#allocation9 + $0x58] sm:$0xff]
    %v293 = vld [vmem:[#allocation9 + $0x60] sm:$0xff]
    %v294 = vld [vmem:[#allocation9 + $0x68] sm:$0xff]
    %v295 = vld [vmem:[#allocation9 + $0x70] sm:$0xff]
    %v296 = vld [vmem:[#allocation9 + $0x78] sm:$0xff]
    %v297 = vld [vmem:[#allocation9 + $0x80] sm:$0xff]
    %v298 = vld [vmem:[#allocation9 + $0x88] sm:$0xff]
    %v299 = vld [vmem:[#allocation9 + $0x90] sm:$0xff]
    %v300 = vld [vmem:[#allocation9 + $0x98] sm:$0xff]
    %v301 = vld [vmem:[#allocation9 + $0xa0] sm:$0xff]
    %v302 = vld [vmem:[#allocation9 + $0xa8] sm:$0xff]
    %v303 = vld [vmem:[#allocation9 + $0xb0] sm:$0xff]
    %v304 = vld [vmem:[#allocation9 + $0xb8] sm:$0xff]
    %v305 = vld [vmem:[#allocation9 + $0xc0] sm:$0xff]
    %v306 = vld [vmem:[#allocation9 + $0xc8] sm:$0xff]
    %v307 = vld [vmem:[#allocation9 + $0xd0] sm:$0xff]
    %v308 = vld [vmem:[#allocation9 + $0xd8] sm:$0xff]
    %v309 = vld [vmem:[#allocation9 + $0xe0] sm:$0xff]
    %v310 = vld [vmem:[#allocation9 + $0xe8] sm:$0xff]
    %v311 = vld [vmem:[#allocation9 + $0xf0] sm:$0xff]
    %v312 = vld [vmem:[#allocation9 + $0xf8] sm:$0xff]
    %v313 = vld [vmem:[#allocation9 + $0x100] sm:$0xff]
    %v314 = vld [vmem:[#allocation9 + $0x108] sm:$0xff]
    %v315 = vld [vmem:[#allocation9 + $0x110] sm:$0xff]
    %v316 = vld [vmem:[#allocation9 + $0x118] sm:$0xff]
    %v317 = vld [vmem:[#allocation9 + $0x120] sm:$0xff]
    %v318 = vld [vmem:[#allocation9 + $0x128] sm:$0xff]
    %v319 = vld [vmem:[#allocation9 + $0x130] sm:$0xff]
    %v320 = vld [vmem:[#allocation9 + $0x138] sm:$0xff]
    %v321 = vld [vmem:[#allocation9 + $0x140] sm:$0xff]
    %v322 = vld [vmem:[#allocation9 + $0x148] sm:$0xff]
    %v323 = vld [vmem:[#allocation9 + $0x150] sm:$0xff]
    %v324 = vld [vmem:[#allocation9 + $0x158] sm:$0xff]
    %v325 = vld [vmem:[#allocation9 + $0x160] sm:$0xff]
    %v326 = vld [vmem:[#allocation9 + $0x168] sm:$0xff]
    %v327 = vld [vmem:[#allocation9 + $0x170] sm:$0xff]
    %v328 = vld [vmem:[#allocation9 + $0x178] sm:$0xff]
    %v329 = vld [vmem:[#allocation9 + $0x180] sm:$0xff]
    %v330 = vld [vmem:[#allocation9 + $0x188] sm:$0xff]
    %v331 = vld [vmem:[#allocation9 + $0x190] sm:$0xff]
    %v332 = vld [vmem:[#allocation9 + $0x198] sm:$0xff]
    %v333 = vld [vmem:[#allocation9 + $0x1a0] sm:$0xff]
    %v334 = vld [vmem:[#allocation9 + $0x1a8] sm:$0xff]
    %v335 = vld [vmem:[#allocation9 + $0x1b0] sm:$0xff]
    %v336 = vld [vmem:[#allocation9 + $0x1b8] sm:$0xff]
    %v337 = vld [vmem:[#allocation9 + $0x1c0] sm:$0xff]
    %v338 = vld [vmem:[#allocation9 + $0x1c8] sm:$0xff]
    %v339 = vld [vmem:[#allocation9 + $0x1d0] sm:$0xff]
    %v340 = vld [vmem:[#allocation9 + $0x1d8] sm:$0xff]
    %v341 = vld [vmem:[#allocation9 + $0x1e0] sm:$0xff]
    %v342 = vld [vmem:[#allocation9 + $0x1e8] sm:$0xff]
    %v343 = vld [vmem:[#allocation9 + $0x1f0] sm:$0xff]
    %v344 = vld [vmem:[#allocation9 + $0x1f8] sm:$0xff]
    %v345 = vld [vmem:[#allocation9 + $0x200] sm:$0xff]
    %v346 = vld [vmem:[#allocation9 + $0x208] sm:$0xff]
    %v347 = vld [vmem:[#allocation9 + $0x210] sm:$0xff]
    %v348 = vld [vmem:[#allocation9 + $0x218] sm:$0xff]
    %v349 = vld [vmem:[#allocation9 + $0x220] sm:$0xff]
    %v350 = vld [vmem:[#allocation9 + $0x228] sm:$0xff]
    %v351 = vld [vmem:[#allocation9 + $0x230] sm:$0xff]
    %v352 = vld [vmem:[#allocation9 + $0x238] sm:$0xff]
    %v353 = vld [vmem:[#allocation9 + $0x240] sm:$0xff]
    %v354 = vld [vmem:[#allocation9 + $0x248] sm:$0xff]
    %v355 = vld [vmem:[#allocation9 + $0x250] sm:$0xff]
    %v356 = vld [vmem:[#allocation9 + $0x258] sm:$0xff]
    %v357 = vld [vmem:[#allocation9 + $0x260] sm:$0xff]
    %v358 = vld [vmem:[#allocation9 + $0x268] sm:$0xff]
    %v359 = vld [vmem:[#allocation9 + $0x270] sm:$0xff]
    %v360 = vld [vmem:[#allocation9 + $0x278] sm:$0xff]
    %v361 = vld [vmem:[#allocation9 + $0x280] sm:$0xff]
    %v362 = vld [vmem:[#allocation9 + $0x288] sm:$0xff]
    %v363 = vld [vmem:[#allocation9 + $0x290] sm:$0xff]
    %v364 = vld [vmem:[#allocation9 + $0x298] sm:$0xff]
    %v365 = vld [vmem:[#allocation9 + $0x2a0] sm:$0xff]
    %v366 = vld [vmem:[#allocation9 + $0x2a8] sm:$0xff]
    %v367 = vld [vmem:[#allocation9 + $0x2b0] sm:$0xff]
    %v368 = vld [vmem:[#allocation9 + $0x2b8] sm:$0xff]
    %v369 = vld [vmem:[#allocation9 + $0x2c0] sm:$0xff]
    %v370 = vld [vmem:[#allocation9 + $0x2c8] sm:$0xff]
    %v371 = vld [vmem:[#allocation9 + $0x2d0] sm:$0xff]
    %v372 = vld [vmem:[#allocation9 + $0x2d8] sm:$0xff]
    %v373 = vld [vmem:[#allocation9 + $0x2e0] sm:$0xff]
    %v374 = vld [vmem:[#allocation9 + $0x2e8] sm:$0xff]
    %v375 = vld [vmem:[#allocation9 + $0x2f0] sm:$0xff]
    %v376 = vld [vmem:[#allocation9 + $0x2f8] sm:$0xff]
    %v425 = vunpack.c.l.b16 %v233
    %v426 = vunpack.c.h.b16 %v233
    %v427 = vunpack.c.l.b16 %v234
    %v428 = vunpack.c.h.b16 %v234
    %v429 = vunpack.c.l.b16 %v235
    %v430 = vunpack.c.h.b16 %v235
    %v431 = vunpack.c.l.b16 %v236
    %v432 = vunpack.c.h.b16 %v236
    %v433 = vunpack.c.l.b16 %v237
    %v434 = vunpack.c.h.b16 %v237
    %v435 = vunpack.c.l.b16 %v238
    %v436 = vunpack.c.h.b16 %v238
    %v437 = vunpack.c.l.b16 %v239
    %v438 = vunpack.c.h.b16 %v239
    %v439 = vunpack.c.l.b16 %v240
    %v440 = vunpack.c.h.b16 %v240
    %v441 = vunpack.c.l.b16 %v241
    %v442 = vunpack.c.h.b16 %v241
    %v443 = vunpack.c.l.b16 %v242
    %v444 = vunpack.c.h.b16 %v242
    %v445 = vunpack.c.l.b16 %v243
    %v446 = vunpack.c.h.b16 %v243
    %v447 = vunpack.c.l.b16 %v244
    %v448 = vunpack.c.h.b16 %v244
    %v449 = vunpack.c.l.b16 %v245
    %v450 = vunpack.c.h.b16 %v245
    %v451 = vunpack.c.l.b16 %v246
    %v452 = vunpack.c.h.b16 %v246
    %v453 = vunpack.c.l.b16 %v247
    %v454 = vunpack.c.h.b16 %v247
    %v455 = vunpack.c.l.b16 %v248
    %v456 = vunpack.c.h.b16 %v248
    %v457 = vunpack.c.l.b16 %v249
    %v458 = vunpack.c.h.b16 %v249
    %v459 = vunpack.c.l.b16 %v250
    %v460 = vunpack.c.h.b16 %v250
    %v461 = vunpack.c.l.b16 %v251
    %v462 = vunpack.c.h.b16 %v251
    %v463 = vunpack.c.l.b16 %v252
    %v464 = vunpack.c.h.b16 %v252
    %v465 = vunpack.c.l.b16 %v253
    %v466 = vunpack.c.h.b16 %v253
    %v467 = vunpack.c.l.b16 %v254
    %v468 = vunpack.c.h.b16 %v254
    %v469 = vunpack.c.l.b16 %v255
    %v470 = vunpack.c.h.b16 %v255
    %v471 = vunpack.c.l.b16 %v256
    %v472 = vunpack.c.h.b16 %v256
    %v473 = vunpack.c.l.b16 %v257
    %v474 = vunpack.c.h.b16 %v257
    %v475 = vunpack.c.l.b16 %v258
    %v476 = vunpack.c.h.b16 %v258
    %v477 = vunpack.c.l.b16 %v259
    %v478 = vunpack.c.h.b16 %v259
    %v479 = vunpack.c.l.b16 %v260
    %v480 = vunpack.c.h.b16 %v260
    %v481 = vunpack.c.l.b16 %v261
    %v482 = vunpack.c.h.b16 %v261
    %v483 = vunpack.c.l.b16 %v262
    %v484 = vunpack.c.h.b16 %v262
    %v485 = vunpack.c.l.b16 %v263
    %v486 = vunpack.c.h.b16 %v263
    %v487 = vunpack.c.l.b16 %v264
    %v488 = vunpack.c.h.b16 %v264
    %v489 = vunpack.c.l.b16 %v265
    %v490 = vunpack.c.h.b16 %v265
    %v491 = vunpack.c.l.b16 %v266
    %v492 = vunpack.c.h.b16 %v266
    %v493 = vunpack.c.l.b16 %v267
    %v494 = vunpack.c.h.b16 %v267
    %v495 = vunpack.c.l.b16 %v268
    %v496 = vunpack.c.h.b16 %v268
    %v497 = vunpack.c.l.b16 %v269
    %v498 = vunpack.c.h.b16 %v269
    %v499 = vunpack.c.l.b16 %v270
    %v500 = vunpack.c.h.b16 %v270
    %v501 = vunpack.c.l.b16 %v271
    %v502 = vunpack.c.h.b16 %v271
    %v503 = vunpack.c.l.b16 %v272
    %v504 = vunpack.c.h.b16 %v272
    %v505 = vunpack.c.l.b16 %v273
    %v506 = vunpack.c.h.b16 %v273
    %v507 = vunpack.c.l.b16 %v274
    %v508 = vunpack.c.h.b16 %v274
    %v509 = vunpack.c.l.b16 %v275
    %v510 = vunpack.c.h.b16 %v275
    %v511 = vunpack.c.l.b16 %v276
    %v512 = vunpack.c.h.b16 %v276
    %v513 = vunpack.c.l.b16 %v277
    %v514 = vunpack.c.h.b16 %v277
    %v515 = vunpack.c.l.b16 %v278
    %v516 = vunpack.c.h.b16 %v278
    %v517 = vunpack.c.l.b16 %v279
    %v518 = vunpack.c.h.b16 %v279
    %v519 = vunpack.c.l.b16 %v280
    %v520 = vunpack.c.h.b16 %v280
    %v521 = vpack.c.b16 %v431, %v425
    %v522 = vpack.c.b16 %v432, %v426
    %v523 = vpack.c.b16 %v433, %v427
    %v524 = vpack.c.b16 %v434, %v428
    %v525 = vpack.c.b16 %v435, %v429
    %v526 = vpack.c.b16 %v436, %v430
    %v527 = vpack.c.b16 %v443, %v437
    %v528 = vpack.c.b16 %v444, %v438
    %v529 = vpack.c.b16 %v445, %v439
    %v530 = vpack.c.b16 %v446, %v440
    %v531 = vpack.c.b16 %v447, %v441
    %v532 = vpack.c.b16 %v448, %v442
    %v533 = vpack.c.b16 %v455, %v449
    %v534 = vpack.c.b16 %v456, %v450
    %v535 = vpack.c.b16 %v457, %v451
    %v536 = vpack.c.b16 %v458, %v452
    %v537 = vpack.c.b16 %v459, %v453
    %v538 = vpack.c.b16 %v460, %v454
    %v539 = vpack.c.b16 %v467, %v461
    %v540 = vpack.c.b16 %v468, %v462
    %v541 = vpack.c.b16 %v469, %v463
    %v542 = vpack.c.b16 %v470, %v464
    %v543 = vpack.c.b16 %v471, %v465
    %v544 = vpack.c.b16 %v472, %v466
    %v545 = vpack.c.b16 %v479, %v473
    %v546 = vpack.c.b16 %v480, %v474
    %v547 = vpack.c.b16 %v481, %v475
    %v548 = vpack.c.b16 %v482, %v476
    %v549 = vpack.c.b16 %v483, %v477
    %v550 = vpack.c.b16 %v484, %v478
    %v551 = vpack.c.b16 %v491, %v485
    %v552 = vpack.c.b16 %v492, %v486
    %v553 = vpack.c.b16 %v493, %v487
    %v554 = vpack.c.b16 %v494, %v488
    %v555 = vpack.c.b16 %v495, %v489
    %v556 = vpack.c.b16 %v496, %v490
    %v557 = vpack.c.b16 %v503, %v497
    %v558 = vpack.c.b16 %v504, %v498
    %v559 = vpack.c.b16 %v505, %v499
    %v560 = vpack.c.b16 %v506, %v500
    %v561 = vpack.c.b16 %v507, %v501
    %v562 = vpack.c.b16 %v508, %v502
    %v563 = vpack.c.b16 %v515, %v509
    %v564 = vpack.c.b16 %v516, %v510
    %v565 = vpack.c.b16 %v517, %v511
    %v566 = vpack.c.b16 %v518, %v512
    %v567 = vpack.c.b16 %v519, %v513
    %v568 = vpack.c.b16 %v520, %v514
    %v713 = vunpack.c.l.b16 %v281
    %v714 = vunpack.c.h.b16 %v281
    %v715 = vunpack.c.l.b16 %v282
    %v716 = vunpack.c.h.b16 %v282
    %v717 = vunpack.c.l.b16 %v283
    %v718 = vunpack.c.h.b16 %v283
    %v719 = vunpack.c.l.b16 %v284
    %v720 = vunpack.c.h.b16 %v284
    %v721 = vunpack.c.l.b16 %v285
    %v722 = vunpack.c.h.b16 %v285
    %v723 = vunpack.c.l.b16 %v286
    %v724 = vunpack.c.h.b16 %v286
    %v725 = vunpack.c.l.b16 %v287
    %v726 = vunpack.c.h.b16 %v287
    %v727 = vunpack.c.l.b16 %v288
    %v728 = vunpack.c.h.b16 %v288
    %v729 = vunpack.c.l.b16 %v289
    %v730 = vunpack.c.h.b16 %v289
    %v731 = vunpack.c.l.b16 %v290
    %v732 = vunpack.c.h.b16 %v290
    %v733 = vunpack.c.l.b16 %v291
    %v734 = vunpack.c.h.b16 %v291
    %v735 = vunpack.c.l.b16 %v292
    %v736 = vunpack.c.h.b16 %v292
    %v737 = vunpack.c.l.b16 %v293
    %v738 = vunpack.c.h.b16 %v293
    %v739 = vunpack.c.l.b16 %v294
    %v740 = vunpack.c.h.b16 %v294
    %v741 = vunpack.c.l.b16 %v295
    %v742 = vunpack.c.h.b16 %v295
    %v743 = vunpack.c.l.b16 %v296
    %v744 = vunpack.c.h.b16 %v296
    %v745 = vunpack.c.l.b16 %v297
    %v746 = vunpack.c.h.b16 %v297
    %v747 = vunpack.c.l.b16 %v298
    %v748 = vunpack.c.h.b16 %v298
    %v749 = vunpack.c.l.b16 %v299
    %v750 = vunpack.c.h.b16 %v299
    %v751 = vunpack.c.l.b16 %v300
    %v752 = vunpack.c.h.b16 %v300
    %v753 = vunpack.c.l.b16 %v301
    %v754 = vunpack.c.h.b16 %v301
    %v755 = vunpack.c.l.b16 %v302
    %v756 = vunpack.c.h.b16 %v302
    %v757 = vunpack.c.l.b16 %v303
    %v758 = vunpack.c.h.b16 %v303
    %v759 = vunpack.c.l.b16 %v304
    %v760 = vunpack.c.h.b16 %v304
    %v761 = vunpack.c.l.b16 %v305
    %v762 = vunpack.c.h.b16 %v305
    %v763 = vunpack.c.l.b16 %v306
    %v764 = vunpack.c.h.b16 %v306
    %v765 = vunpack.c.l.b16 %v307
    %v766 = vunpack.c.h.b16 %v307
    %v767 = vunpack.c.l.b16 %v308
    %v768 = vunpack.c.h.b16 %v308
    %v769 = vunpack.c.l.b16 %v309
    %v770 = vunpack.c.h.b16 %v309
    %v771 = vunpack.c.l.b16 %v310
    %v772 = vunpack.c.h.b16 %v310
    %v773 = vunpack.c.l.b16 %v311
    %v774 = vunpack.c.h.b16 %v311
    %v775 = vunpack.c.l.b16 %v312
    %v776 = vunpack.c.h.b16 %v312
    %v777 = vunpack.c.l.b16 %v313
    %v778 = vunpack.c.h.b16 %v313
    %v779 = vunpack.c.l.b16 %v314
    %v780 = vunpack.c.h.b16 %v314
    %v781 = vunpack.c.l.b16 %v315
    %v782 = vunpack.c.h.b16 %v315
    %v783 = vunpack.c.l.b16 %v316
    %v784 = vunpack.c.h.b16 %v316
    %v785 = vunpack.c.l.b16 %v317
    %v786 = vunpack.c.h.b16 %v317
    %v787 = vunpack.c.l.b16 %v318
    %v788 = vunpack.c.h.b16 %v318
    %v789 = vunpack.c.l.b16 %v319
    %v790 = vunpack.c.h.b16 %v319
    %v791 = vunpack.c.l.b16 %v320
    %v792 = vunpack.c.h.b16 %v320
    %v793 = vunpack.c.l.b16 %v321
    %v794 = vunpack.c.h.b16 %v321
    %v795 = vunpack.c.l.b16 %v322
    %v796 = vunpack.c.h.b16 %v322
    %v797 = vunpack.c.l.b16 %v323
    %v798 = vunpack.c.h.b16 %v323
    %v799 = vunpack.c.l.b16 %v324
    %v800 = vunpack.c.h.b16 %v324
    %v801 = vunpack.c.l.b16 %v325
    %v802 = vunpack.c.h.b16 %v325
    %v803 = vunpack.c.l.b16 %v326
    %v804 = vunpack.c.h.b16 %v326
    %v805 = vunpack.c.l.b16 %v327
    %v806 = vunpack.c.h.b16 %v327
    %v807 = vunpack.c.l.b16 %v328
    %v808 = vunpack.c.h.b16 %v328
    %v809 = vunpack.c.l.b16 %v329
    %v810 = vunpack.c.h.b16 %v329
    %v811 = vunpack.c.l.b16 %v330
    %v812 = vunpack.c.h.b16 %v330
    %v813 = vunpack.c.l.b16 %v331
    %v814 = vunpack.c.h.b16 %v331
    %v815 = vunpack.c.l.b16 %v332
    %v816 = vunpack.c.h.b16 %v332
    %v817 = vunpack.c.l.b16 %v333
    %v818 = vunpack.c.h.b16 %v333
    %v819 = vunpack.c.l.b16 %v334
    %v820 = vunpack.c.h.b16 %v334
    %v821 = vunpack.c.l.b16 %v335
    %v822 = vunpack.c.h.b16 %v335
    %v823 = vunpack.c.l.b16 %v336
    %v824 = vunpack.c.h.b16 %v336
    %v825 = vunpack.c.l.b16 %v337
    %v826 = vunpack.c.h.b16 %v337
    %v827 = vunpack.c.l.b16 %v338
    %v828 = vunpack.c.h.b16 %v338
    %v829 = vunpack.c.l.b16 %v339
    %v830 = vunpack.c.h.b16 %v339
    %v831 = vunpack.c.l.b16 %v340
    %v832 = vunpack.c.h.b16 %v340
    %v833 = vunpack.c.l.b16 %v341
    %v834 = vunpack.c.h.b16 %v341
    %v835 = vunpack.c.l.b16 %v342
    %v836 = vunpack.c.h.b16 %v342
    %v837 = vunpack.c.l.b16 %v343
    %v838 = vunpack.c.h.b16 %v343
    %v839 = vunpack.c.l.b16 %v344
    %v840 = vunpack.c.h.b16 %v344
    %v841 = vunpack.c.l.b16 %v345
    %v842 = vunpack.c.h.b16 %v345
    %v843 = vunpack.c.l.b16 %v346
    %v844 = vunpack.c.h.b16 %v346
    %v845 = vunpack.c.l.b16 %v347
    %v846 = vunpack.c.h.b16 %v347
    %v847 = vunpack.c.l.b16 %v348
    %v848 = vunpack.c.h.b16 %v348
    %v849 = vunpack.c.l.b16 %v349
    %v850 = vunpack.c.h.b16 %v349
    %v851 = vunpack.c.l.b16 %v350
    %v852 = vunpack.c.h.b16 %v350
    %v853 = vunpack.c.l.b16 %v351
    %v854 = vunpack.c.h.b16 %v351
    %v855 = vunpack.c.l.b16 %v352
    %v856 = vunpack.c.h.b16 %v352
    %v857 = vunpack.c.l.b16 %v353
    %v858 = vunpack.c.h.b16 %v353
    %v859 = vunpack.c.l.b16 %v354
    %v860 = vunpack.c.h.b16 %v354
    %v861 = vunpack.c.l.b16 %v355
    %v862 = vunpack.c.h.b16 %v355
    %v863 = vunpack.c.l.b16 %v356
    %v864 = vunpack.c.h.b16 %v356
    %v865 = vunpack.c.l.b16 %v357
    %v866 = vunpack.c.h.b16 %v357
    %v867 = vunpack.c.l.b16 %v358
    %v868 = vunpack.c.h.b16 %v358
    %v869 = vunpack.c.l.b16 %v359
    %v870 = vunpack.c.h.b16 %v359
    %v871 = vunpack.c.l.b16 %v360
    %v872 = vunpack.c.h.b16 %v360
    %v873 = vunpack.c.l.b16 %v361
    %v874 = vunpack.c.h.b16 %v361
    %v875 = vunpack.c.l.b16 %v362
    %v876 = vunpack.c.h.b16 %v362
    %v877 = vunpack.c.l.b16 %v363
    %v878 = vunpack.c.h.b16 %v363
    %v879 = vunpack.c.l.b16 %v364
    %v880 = vunpack.c.h.b16 %v364
    %v881 = vunpack.c.l.b16 %v365
    %v882 = vunpack.c.h.b16 %v365
    %v883 = vunpack.c.l.b16 %v366
    %v884 = vunpack.c.h.b16 %v366
    %v885 = vunpack.c.l.b16 %v367
    %v886 = vunpack.c.h.b16 %v367
    %v887 = vunpack.c.l.b16 %v368
    %v888 = vunpack.c.h.b16 %v368
    %v889 = vunpack.c.l.b16 %v369
    %v890 = vunpack.c.h.b16 %v369
    %v891 = vunpack.c.l.b16 %v370
    %v892 = vunpack.c.h.b16 %v370
    %v893 = vunpack.c.l.b16 %v371
    %v894 = vunpack.c.h.b16 %v371
    %v895 = vunpack.c.l.b16 %v372
    %v896 = vunpack.c.h.b16 %v372
    %v897 = vunpack.c.l.b16 %v373
    %v898 = vunpack.c.h.b16 %v373
    %v899 = vunpack.c.l.b16 %v374
    %v900 = vunpack.c.h.b16 %v374
    %v901 = vunpack.c.l.b16 %v375
    %v902 = vunpack.c.h.b16 %v375
    %v903 = vunpack.c.l.b16 %v376
    %v904 = vunpack.c.h.b16 %v376
    %v905 = vpack.c.b16 %v715, %v713
    %v906 = vpack.c.b16 %v716, %v714
    %v907 = vpack.c.b16 %v719, %v717
    %v908 = vpack.c.b16 %v720, %v718
    %v909 = vpack.c.b16 %v723, %v721
    %v910 = vpack.c.b16 %v724, %v722
    %v911 = vpack.c.b16 %v727, %v725
    %v912 = vpack.c.b16 %v728, %v726
    %v913 = vpack.c.b16 %v731, %v729
    %v914 = vpack.c.b16 %v732, %v730
    %v915 = vpack.c.b16 %v735, %v733
    %v916 = vpack.c.b16 %v736, %v734
    %v917 = vpack.c.b16 %v739, %v737
    %v918 = vpack.c.b16 %v740, %v738
    %v919 = vpack.c.b16 %v743, %v741
    %v920 = vpack.c.b16 %v744, %v742
    %v921 = vpack.c.b16 %v747, %v745
    %v922 = vpack.c.b16 %v748, %v746
    %v923 = vpack.c.b16 %v751, %v749
    %v924 = vpack.c.b16 %v752, %v750
    %v925 = vpack.c.b16 %v755, %v753
    %v926 = vpack.c.b16 %v756, %v754
    %v927 = vpack.c.b16 %v759, %v757
    %v928 = vpack.c.b16 %v760, %v758
    %v929 = vpack.c.b16 %v763, %v761
    %v930 = vpack.c.b16 %v764, %v762
    %v931 = vpack.c.b16 %v767, %v765
    %v932 = vpack.c.b16 %v768, %v766
    %v933 = vpack.c.b16 %v771, %v769
    %v934 = vpack.c.b16 %v772, %v770
    %v935 = vpack.c.b16 %v775, %v773
    %v936 = vpack.c.b16 %v776, %v774
    %v937 = vpack.c.b16 %v779, %v777
    %v938 = vpack.c.b16 %v780, %v778
    %v939 = vpack.c.b16 %v783, %v781
    %v940 = vpack.c.b16 %v784, %v782
    %v941 = vpack.c.b16 %v787, %v785
    %v942 = vpack.c.b16 %v788, %v786
    %v943 = vpack.c.b16 %v791, %v789
    %v944 = vpack.c.b16 %v792, %v790
    %v945 = vpack.c.b16 %v795, %v793
    %v946 = vpack.c.b16 %v796, %v794
    %v947 = vpack.c.b16 %v799, %v797
    %v948 = vpack.c.b16 %v800, %v798
    %v949 = vpack.c.b16 %v803, %v801
    %v950 = vpack.c.b16 %v804, %v802
    %v951 = vpack.c.b16 %v807, %v805
    %v952 = vpack.c.b16 %v808, %v806
    %v953 = vpack.c.b16 %v811, %v809
    %v954 = vpack.c.b16 %v812, %v810
    %v955 = vpack.c.b16 %v815, %v813
    %v956 = vpack.c.b16 %v816, %v814
    %v957 = vpack.c.b16 %v819, %v817
    %v958 = vpack.c.b16 %v820, %v818
    %v959 = vpack.c.b16 %v823, %v821
    %v960 = vpack.c.b16 %v824, %v822
    %v961 = vpack.c.b16 %v827, %v825
    %v962 = vpack.c.b16 %v828, %v826
    %v963 = vpack.c.b16 %v831, %v829
    %v964 = vpack.c.b16 %v832, %v830
    %v965 = vpack.c.b16 %v835, %v833
    %v966 = vpack.c.b16 %v836, %v834
    %v967 = vpack.c.b16 %v839, %v837
    %v968 = vpack.c.b16 %v840, %v838
    %v969 = vpack.c.b16 %v843, %v841
    %v970 = vpack.c.b16 %v844, %v842
    %v971 = vpack.c.b16 %v847, %v845
    %v972 = vpack.c.b16 %v848, %v846
    %v973 = vpack.c.b16 %v851, %v849
    %v974 = vpack.c.b16 %v852, %v850
    %v975 = vpack.c.b16 %v855, %v853
    %v976 = vpack.c.b16 %v856, %v854
    %v977 = vpack.c.b16 %v859, %v857
    %v978 = vpack.c.b16 %v860, %v858
    %v979 = vpack.c.b16 %v863, %v861
    %v980 = vpack.c.b16 %v864, %v862
    %v981 = vpack.c.b16 %v867, %v865
    %v982 = vpack.c.b16 %v868, %v866
    %v983 = vpack.c.b16 %v871, %v869
    %v984 = vpack.c.b16 %v872, %v870
    %v985 = vpack.c.b16 %v875, %v873
    %v986 = vpack.c.b16 %v876, %v874
    %v987 = vpack.c.b16 %v879, %v877
    %v988 = vpack.c.b16 %v880, %v878
    %v989 = vpack.c.b16 %v883, %v881
    %v990 = vpack.c.b16 %v884, %v882
    %v991 = vpack.c.b16 %v887, %v885
    %v992 = vpack.c.b16 %v888, %v886
    %v993 = vpack.c.b16 %v891, %v889
    %v994 = vpack.c.b16 %v892, %v890
    %v995 = vpack.c.b16 %v895, %v893
    %v996 = vpack.c.b16 %v896, %v894
    %v997 = vpack.c.b16 %v899, %v897
    %v998 = vpack.c.b16 %v900, %v898
    %v999 = vpack.c.b16 %v903, %v901
    %v1000 = vpack.c.b16 %v904, %v902
    %1097 = vmatprep.subr.bf16.mxu0 %v906
    %1098 = vmatpush1.bf16.msra.mxu0 %v905
    %1099 = vmatprep.subr.bf16.mxu0 %v908
    %1100 = vmatpush1.bf16.msra.mxu0 %v907
    %1101 = vmatprep.subr.bf16.mxu0 %v910
    %1102 = vmatpush1.bf16.msra.mxu0 %v909
    %1103 = vmatprep.subr.bf16.mxu0 %v912
    %1104 = vmatpush1.bf16.msra.mxu0 %v911
    %1105 = vmatprep.subr.bf16.mxu0 %v914
    %1106 = vmatpush1.bf16.msra.mxu0 %v913
    %1107 = vmatprep.subr.bf16.mxu0 %v916
    %1108 = vmatpush1.bf16.msra.mxu0 %v915
    %1109 = vmatprep.subr.bf16.mxu0 %v918
    %1110 = vmatpush1.bf16.msra.mxu0 %v917
    %1111 = vmatprep.subr.bf16.mxu0 %v920
    %1112 = vmatpush1.bf16.msra.mxu0 %v919
    %1113 = vmatprep.subr.bf16.mxu0 %v922
    %1114 = vmatpush1.bf16.msra.mxu0 %v921
    %1115 = vmatprep.subr.bf16.mxu0 %v924
    %1116 = vmatpush1.bf16.msra.mxu0 %v923
    %1117 = vmatprep.subr.bf16.mxu0 %v926
    %1118 = vmatpush1.bf16.msra.mxu0 %v925
    %1119 = vmatprep.subr.bf16.mxu0 %v928
    %1120 = vmatpush1.bf16.msra.mxu0 %v927
    %1121 = vmatprep.subr.bf16.mxu0 %v930
    %1122 = vmatpush1.bf16.msra.mxu0 %v929
    %1123 = vmatprep.subr.bf16.mxu0 %v932
    %1124 = vmatpush1.bf16.msra.mxu0 %v931
    %1125 = vmatprep.subr.bf16.mxu0 %v934
    %1126 = vmatpush1.bf16.msra.mxu0 %v933
    %1127 = vmatprep.subr.bf16.mxu0 %v936
    %1128 = vmatpush1.bf16.msra.mxu0 %v935
    %1129 = vmatprep.mubr.bf16.mxu0 %v522
    %1130 = vmatmul.mubr.bf16.gmra.mrb[0].mxu0 %v521
    %v1131 = vpop.f32.mrb[0].mxu0
    %v1132 = vadd.f32 0.0, %v1131
    %v1133 = vpop.f32.mrb[0].mxu0
    %v1134 = vadd.f32 0.0, %v1133
    %v1135 = vpop.f32.mrb[0].mxu0
    %v1136 = vadd.f32 0.0, %v1135
    %v1137 = vpop.f32.mrb[0].mxu0
    %v1138 = vadd.f32 0.0, %v1137
    %1139 = vmatprep.mubr.bf16.mxu0 %v528
    %1140 = vmatmul.mubr.bf16.gmra.mrb[0].mxu0 %v527
    %v1141 = vpop.f32.mrb[0].mxu0
    %v1142 = vadd.f32 0.0, %v1141
    %v1143 = vpop.f32.mrb[0].mxu0
    %v1144 = vadd.f32 0.0, %v1143
    %v1145 = vpop.f32.mrb[0].mxu0
    %v1146 = vadd.f32 0.0, %v1145
    %v1147 = vpop.f32.mrb[0].mxu0
    %v1148 = vadd.f32 0.0, %v1147
    %1149 = vmatprep.mubr.bf16.mxu0 %v534
    %1150 = vmatmul.mubr.bf16.gmra.mrb[0].mxu0 %v533
    %v1151 = vpop.f32.mrb[0].mxu0
    %v1152 = vadd.f32 0.0, %v1151
    %v1153 = vpop.f32.mrb[0].mxu0
    %v1154 = vadd.f32 0.0, %v1153
    %v1155 = vpop.f32.mrb[0].mxu0
    %v1156 = vadd.f32 0.0, %v1155
    %v1157 = vpop.f32.mrb[0].mxu0
    %v1158 = vadd.f32 0.0, %v1157
    %1159 = vmatprep.mubr.bf16.mxu0 %v540
    %1160 = vmatmul.mubr.bf16.gmra.mrb[0].mxu0 %v539
    %v1161 = vpop.f32.mrb[0].mxu0
    %v1162 = vadd.f32 0.0, %v1161
    %v1163 = vpop.f32.mrb[0].mxu0
    %v1164 = vadd.f32 0.0, %v1163
    %v1165 = vpop.f32.mrb[0].mxu0
    %v1166 = vadd.f32 0.0, %v1165
    %v1167 = vpop.f32.mrb[0].mxu0
    %v1168 = vadd.f32 0.0, %v1167
    %1169 = vmatprep.mubr.bf16.mxu0 %v546
    %1170 = vmatmul.mubr.bf16.gmra.mrb[0].mxu0 %v545
    %v1171 = vpop.f32.mrb[0].mxu0
    %v1172 = vadd.f32 0.0, %v1171
    %v1173 = vpop.f32.mrb[0].mxu0
    %v1174 = vadd.f32 0.0, %v1173
    %v1175 = vpop.f32.mrb[0].mxu0
    %v1176 = vadd.f32 0.0, %v1175
    %v1177 = vpop.f32.mrb[0].mxu0
    %v1178 = vadd.f32 0.0, %v1177
    %1179 = vmatprep.mubr.bf16.mxu0 %v552
    %1180 = vmatmul.mubr.bf16.gmra.mrb[0].mxu0 %v551
    %v1181 = vpop.f32.mrb[0].mxu0
    %v1182 = vadd.f32 0.0, %v1181
    %v1183 = vpop.f32.mrb[0].mxu0
    %v1184 = vadd.f32 0.0, %v1183
    %v1185 = vpop.f32.mrb[0].mxu0
    %v1186 = vadd.f32 0.0, %v1185
    %v1187 = vpop.f32.mrb[0].mxu0
    %v1188 = vadd.f32 0.0, %v1187
    %1189 = vmatprep.mubr.bf16.mxu0 %v558
    %1190 = vmatmul.mubr.bf16.gmra.mrb[0].mxu0 %v557
    %v1191 = vpop.f32.mrb[0].mxu0
    %v1192 = vadd.f32 0.0, %v1191
    %v1193 = vpop.f32.mrb[0].mxu0
    %v1194 = vadd.f32 0.0, %v1193
    %v1195 = vpop.f32.mrb[0].mxu0
    %v1196 = vadd.f32 0.0, %v1195
    %v1197 = vpop.f32.mrb[0].mxu0
    %v1198 = vadd.f32 0.0, %v1197
    %1199 = vmatprep.mubr.bf16.mxu0 %v564
    %1200 = vmatmul.mubr.bf16.gmra.mrb[0].mxu0 %v563
    %v1201 = vpop.f32.mrb[0].mxu0
    %v1202 = vadd.f32 0.0, %v1201
    %v1203 = vpop.f32.mrb[0].mxu0
    %v1204 = vadd.f32 0.0, %v1203
    %v1205 = vpop.f32.mrb[0].mxu0
    %v1206 = vadd.f32 0.0, %v1205
    %v1207 = vpop.f32.mrb[0].mxu0
    %v1208 = vadd.f32 0.0, %v1207
    %1209 = vdwg.mxu0
    %1210 = vmatprep.subr.bf16.mxu0 %v938
    %1211 = vmatpush1.bf16.msra.mxu0 %v937
    %1212 = vmatprep.subr.bf16.mxu0 %v940
    %1213 = vmatpush1.bf16.msra.mxu0 %v939
    %1214 = vmatprep.subr.bf16.mxu0 %v942
    %1215 = vmatpush1.bf16.msra.mxu0 %v941
    %1216 = vmatprep.subr.bf16.mxu0 %v944
    %1217 = vmatpush1.bf16.msra.mxu0 %v943
    %1218 = vmatprep.subr.bf16.mxu0 %v946
    %1219 = vmatpush1.bf16.msra.mxu0 %v945
    %1220 = vmatprep.subr.bf16.mxu0 %v948
    %1221 = vmatpush1.bf16.msra.mxu0 %v947
    %1222 = vmatprep.subr.bf16.mxu0 %v950
    %1223 = vmatpush1.bf16.msra.mxu0 %v949
    %1224 = vmatprep.subr.bf16.mxu0 %v952
    %1225 = vmatpush1.bf16.msra.mxu0 %v951
    %1226 = vmatprep.subr.bf16.mxu0 %v954
    %1227 = vmatpush1.bf16.msra.mxu0 %v953
    %1228 = vmatprep.subr.bf16.mxu0 %v956
    %1229 = vmatpush1.bf16.msra.mxu0 %v955
    %1230 = vmatprep.subr.bf16.mxu0 %v958
    %1231 = vmatpush1.bf16.msra.mxu0 %v957
    %1232 = vmatprep.subr.bf16.mxu0 %v960
    %1233 = vmatpush1.bf16.msra.mxu0 %v959
    %1234 = vmatprep.subr.bf16.mxu0 %v962
    %1235 = vmatpush1.bf16.msra.mxu0 %v961
    %1236 = vmatprep.subr.bf16.mxu0 %v964
    %1237 = vmatpush1.bf16.msra.mxu0 %v963
    %1238 = vmatprep.subr.bf16.mxu0 %v966
    %1239 = vmatpush1.bf16.msra.mxu0 %v965
    %1240 = vmatprep.subr.bf16.mxu0 %v968
    %1241 = vmatpush1.bf16.msra.mxu0 %v967
    %1242 = vmatprep.mubr.bf16.mxu0 %v524
    %1243 = vmatmul.mubr.bf16.gmra.mrb[0].mxu0 %v523
    %v1244 = vpop.f32.mrb[0].mxu0
    %v1245 = vadd.f32 %v1132, %v1244
    %v1246 = vpop.f32.mrb[0].mxu0
    %v1247 = vadd.f32 %v1134, %v1246
    %v1248 = vpop.f32.mrb[0].mxu0
    %v1249 = vadd.f32 %v1136, %v1248
    %v1250 = vpop.f32.mrb[0].mxu0
    %v1251 = vadd.f32 %v1138, %v1250
    %1252 = vmatprep.mubr.bf16.mxu0 %v530
    %1253 = vmatmul.mubr.bf16.gmra.mrb[0].mxu0 %v529
    %v1254 = vpop.f32.mrb[0].mxu0
    %v1255 = vadd.f32 %v1142, %v1254
    %v1256 = vpop.f32.mrb[0].mxu0
    %v1257 = vadd.f32 %v1144, %v1256
    %v1258 = vpop.f32.mrb[0].mxu0
    %v1259 = vadd.f32 %v1146, %v1258
    %v1260 = vpop.f32.mrb[0].mxu0
    %v1261 = vadd.f32 %v1148, %v1260
    %1262 = vmatprep.mubr.bf16.mxu0 %v536
    %1263 = vmatmul.mubr.bf16.gmra.mrb[0].mxu0 %v535
    %v1264 = vpop.f32.mrb[0].mxu0
    %v1265 = vadd.f32 %v1152, %v1264
    %v1266 = vpop.f32.mrb[0].mxu0
    %v1267 = vadd.f32 %v1154, %v1266
    %v1268 = vpop.f32.mrb[0].mxu0
    %v1269 = vadd.f32 %v1156, %v1268
    %v1270 = vpop.f32.mrb[0].mxu0
    %v1271 = vadd.f32 %v1158, %v1270
    %1272 = vmatprep.mubr.bf16.mxu0 %v542
    %1273 = vmatmul.mubr.bf16.gmra.mrb[0].mxu0 %v541
    %v1274 = vpop.f32.mrb[0].mxu0
    %v1275 = vadd.f32 %v1162, %v1274
    %v1276 = vpop.f32.mrb[0].mxu0
    %v1277 = vadd.f32 %v1164, %v1276
    %v1278 = vpop.f32.mrb[0].mxu0
    %v1279 = vadd.f32 %v1166, %v1278
    %v1280 = vpop.f32.mrb[0].mxu0
    %v1281 = vadd.f32 %v1168, %v1280
    %1282 = vmatprep.mubr.bf16.mxu0 %v548
    %1283 = vmatmul.mubr.bf16.gmra.mrb[0].mxu0 %v547
    %v1284 = vpop.f32.mrb[0].mxu0
    %v1285 = vadd.f32 %v1172, %v1284
    %v1286 = vpop.f32.mrb[0].mxu0
    %v1287 = vadd.f32 %v1174, %v1286
    %v1288 = vpop.f32.mrb[0].mxu0
    %v1289 = vadd.f32 %v1176, %v1288
    %v1290 = vpop.f32.mrb[0].mxu0
    %v1291 = vadd.f32 %v1178, %v1290
    %1292 = vmatprep.mubr.bf16.mxu0 %v554
    %1293 = vmatmul.mubr.bf16.gmra.mrb[0].mxu0 %v553
    %v1294 = vpop.f32.mrb[0].mxu0
    %v1295 = vadd.f32 %v1182, %v1294
    %v1296 = vpop.f32.mrb[0].mxu0
    %v1297 = vadd.f32 %v1184, %v1296
    %v1298 = vpop.f32.mrb[0].mxu0
    %v1299 = vadd.f32 %v1186, %v1298
    %v1300 = vpop.f32.mrb[0].mxu0
    %v1301 = vadd.f32 %v1188, %v1300
    %1302 = vmatprep.mubr.bf16.mxu0 %v560
    %1303 = vmatmul.mubr.bf16.gmra.mrb[0].mxu0 %v559
    %v1304 = vpop.f32.mrb[0].mxu0
    %v1305 = vadd.f32 %v1192, %v1304
    %v1306 = vpop.f32.mrb[0].mxu0
    %v1307 = vadd.f32 %v1194, %v1306
    %v1308 = vpop.f32.mrb[0].mxu0
    %v1309 = vadd.f32 %v1196, %v1308
    %v1310 = vpop.f32.mrb[0].mxu0
    %v1311 = vadd.f32 %v1198, %v1310
    %1312 = vmatprep.mubr.bf16.mxu0 %v566
    %1313 = vmatmul.mubr.bf16.gmra.mrb[0].mxu0 %v565
    %v1314 = vpop.f32.mrb[0].mxu0
    %v1315 = vadd.f32 %v1202, %v1314
    %v1316 = vpop.f32.mrb[0].mxu0
    %v1317 = vadd.f32 %v1204, %v1316
    %v1318 = vpop.f32.mrb[0].mxu0
    %v1319 = vadd.f32 %v1206, %v1318
    %v1320 = vpop.f32.mrb[0].mxu0
    %v1321 = vadd.f32 %v1208, %v1320
    %1322 = vdwg.mxu0
    %1323 = vmatprep.subr.bf16.mxu0 %v970
    %1324 = vmatpush1.bf16.msra.mxu0 %v969
    %1325 = vmatprep.subr.bf16.mxu0 %v972
    %1326 = vmatpush1.bf16.msra.mxu0 %v971
    %1327 = vmatprep.subr.bf16.mxu0 %v974
    %1328 = vmatpush1.bf16.msra.mxu0 %v973
    %1329 = vmatprep.subr.bf16.mxu0 %v976
    %1330 = vmatpush1.bf16.msra.mxu0 %v975
    %1331 = vmatprep.subr.bf16.mxu0 %v978
    %1332 = vmatpush1.bf16.msra.mxu0 %v977
    %1333 = vmatprep.subr.bf16.mxu0 %v980
    %1334 = vmatpush1.bf16.msra.mxu0 %v979
    %1335 = vmatprep.subr.bf16.mxu0 %v982
    %1336 = vmatpush1.bf16.msra.mxu0 %v981
    %1337 = vmatprep.subr.bf16.mxu0 %v984
    %1338 = vmatpush1.bf16.msra.mxu0 %v983
    %1339 = vmatprep.subr.bf16.mxu0 %v986
    %1340 = vmatpush1.bf16.msra.mxu0 %v985
    %1341 = vmatprep.subr.bf16.mxu0 %v988
    %1342 = vmatpush1.bf16.msra.mxu0 %v987
    %1343 = vmatprep.subr.bf16.mxu0 %v990
    %1344 = vmatpush1.bf16.msra.mxu0 %v989
    %1345 = vmatprep.subr.bf16.mxu0 %v992
    %1346 = vmatpush1.bf16.msra.mxu0 %v991
    %1347 = vmatprep.subr.bf16.mxu0 %v994
    %1348 = vmatpush1.bf16.msra.mxu0 %v993
    %1349 = vmatprep.subr.bf16.mxu0 %v996
    %1350 = vmatpush1.bf16.msra.mxu0 %v995
    %1351 = vmatprep.subr.bf16.mxu0 %v998
    %1352 = vmatpush1.bf16.msra.mxu0 %v997
    %1353 = vmatprep.subr.bf16.mxu0 %v1000
    %1354 = vmatpush1.bf16.msra.mxu0 %v999
    %1355 = vmatprep.mubr.bf16.mxu0 %v526
    %1356 = vmatmul.mubr.bf16.gmra.mrb[0].mxu0 %v525
    %v1357 = vpop.f32.mrb[0].mxu0
    %v1358 = vadd.f32 %v1245, %v1357
    %v1359 = vpop.f32.mrb[0].mxu0
    %v1360 = vadd.f32 %v1247, %v1359
    %v1361 = vpop.f32.mrb[0].mxu0
    %v1362 = vadd.f32 %v1249, %v1361
    %v1363 = vpop.f32.mrb[0].mxu0
    %v1364 = vadd.f32 %v1251, %v1363
    %1365 = vmatprep.mubr.bf16.mxu0 %v532
    %1366 = vmatmul.mubr.bf16.gmra.mrb[0].mxu0 %v531
    %v1367 = vpop.f32.mrb[0].mxu0
    %v1368 = vadd.f32 %v1255, %v1367
    %v1369 = vpop.f32.mrb[0].mxu0
    %v1370 = vadd.f32 %v1257, %v1369
    %v1371 = vpop.f32.mrb[0].mxu0
    %v1372 = vadd.f32 %v1259, %v1371
    %v1373 = vpop.f32.mrb[0].mxu0
    %v1374 = vadd.f32 %v1261, %v1373
    %1375 = vmatprep.mubr.bf16.mxu0 %v538
    %1376 = vmatmul.mubr.bf16.gmra.mrb[0].mxu0 %v537
    %v1377 = vpop.f32.mrb[0].mxu0
    %v1378 = vadd.f32 %v1265, %v1377
    %v1379 = vpop.f32.mrb[0].mxu0
    %v1380 = vadd.f32 %v1267, %v1379
    %v1381 = vpop.f32.mrb[0].mxu0
    %v1382 = vadd.f32 %v1269, %v1381
    %v1383 = vpop.f32.mrb[0].mxu0
    %v1384 = vadd.f32 %v1271, %v1383
    %1385 = vmatprep.mubr.bf16.mxu0 %v544
    %1386 = vmatmul.mubr.bf16.gmra.mrb[0].mxu0 %v543
    %v1387 = vpop.f32.mrb[0].mxu0
    %v1388 = vadd.f32 %v1275, %v1387
    %v1389 = vpop.f32.mrb[0].mxu0
    %v1390 = vadd.f32 %v1277, %v1389
    %v1391 = vpop.f32.mrb[0].mxu0
    %v1392 = vadd.f32 %v1279, %v1391
    %v1393 = vpop.f32.mrb[0].mxu0
    %v1394 = vadd.f32 %v1281, %v1393
    %1395 = vmatprep.mubr.bf16.mxu0 %v550
    %1396 = vmatmul.mubr.bf16.gmra.mrb[0].mxu0 %v549
    %v1397 = vpop.f32.mrb[0].mxu0
    %v1398 = vadd.f32 %v1285, %v1397
    %v1399 = vpop.f32.mrb[0].mxu0
    %v1400 = vadd.f32 %v1287, %v1399
    %v1401 = vpop.f32.mrb[0].mxu0
    %v1402 = vadd.f32 %v1289, %v1401
    %v1403 = vpop.f32.mrb[0].mxu0
    %v1404 = vadd.f32 %v1291, %v1403
    %1405 = vmatprep.mubr.bf16.mxu0 %v556
    %1406 = vmatmul.mubr.bf16.gmra.mrb[0].mxu0 %v555
    %v1407 = vpop.f32.mrb[0].mxu0
    %v1408 = vadd.f32 %v1295, %v1407
    %v1409 = vpop.f32.mrb[0].mxu0
    %v1410 = vadd.f32 %v1297, %v1409
    %v1411 = vpop.f32.mrb[0].mxu0
    %v1412 = vadd.f32 %v1299, %v1411
    %v1413 = vpop.f32.mrb[0].mxu0
    %v1414 = vadd.f32 %v1301, %v1413
    %1415 = vmatprep.mubr.bf16.mxu0 %v562
    %1416 = vmatmul.mubr.bf16.gmra.mrb[0].mxu0 %v561
    %v1417 = vpop.f32.mrb[0].mxu0
    %v1418 = vadd.f32 %v1305, %v1417
    %v1419 = vpop.f32.mrb[0].mxu0
    %v1420 = vadd.f32 %v1307, %v1419
    %v1421 = vpop.f32.mrb[0].mxu0
    %v1422 = vadd.f32 %v1309, %v1421
    %v1423 = vpop.f32.mrb[0].mxu0
    %v1424 = vadd.f32 %v1311, %v1423
    %1425 = vmatprep.mubr.bf16.mxu0 %v568
    %1426 = vmatmul.mubr.bf16.gmra.mrb[0].mxu0 %v567
    %v1427 = vpop.f32.mrb[0].mxu0
    %v1428 = vadd.f32 %v1315, %v1427
    %v1429 = vpop.f32.mrb[0].mxu0
    %v1430 = vadd.f32 %v1317, %v1429
    %v1431 = vpop.f32.mrb[0].mxu0
    %v1432 = vadd.f32 %v1319, %v1431
    %v1433 = vpop.f32.mrb[0].mxu0
    %v1434 = vadd.f32 %v1321, %v1433
    %1435 = vdwg.mxu0
    %v1436 = vadd.f32 %v201, %v1358
    %v1437 = vadd.f32 %v202, %v1360
    %v1438 = vadd.f32 %v203, %v1362
    %v1439 = vadd.f32 %v204, %v1364
    %v1440 = vadd.f32 %v205, %v1368
    %v1441 = vadd.f32 %v206, %v1370
    %v1442 = vadd.f32 %v207, %v1372
    %v1443 = vadd.f32 %v208, %v1374
    %v1444 = vadd.f32 %v209, %v1378
    %v1445 = vadd.f32 %v210, %v1380
    %v1446 = vadd.f32 %v211, %v1382
    %v1447 = vadd.f32 %v212, %v1384
    %v1448 = vadd.f32 %v213, %v1388
    %v1449 = vadd.f32 %v214, %v1390
    %v1450 = vadd.f32 %v215, %v1392
    %v1451 = vadd.f32 %v216, %v1394
    %v1452 = vadd.f32 %v217, %v1398
    %v1453 = vadd.f32 %v218, %v1400
    %v1454 = vadd.f32 %v219, %v1402
    %v1455 = vadd.f32 %v220, %v1404
    %v1456 = vadd.f32 %v221, %v1408
    %v1457 = vadd.f32 %v222, %v1410
    %v1458 = vadd.f32 %v223, %v1412
    %v1459 = vadd.f32 %v224, %v1414
    %v1460 = vadd.f32 %v225, %v1418
    %v1461 = vadd.f32 %v226, %v1420
    %v1462 = vadd.f32 %v227, %v1422
    %v1463 = vadd.f32 %v228, %v1424
    %v1464 = vadd.f32 %v229, %v1428
    %v1465 = vadd.f32 %v230, %v1430
    %v1466 = vadd.f32 %v231, %v1432
    %v1467 = vadd.f32 %v232, %v1434
    %1468 = vst [vmem:[#allocation2] sm:$0xff] %v1436
    %1469 = vst [vmem:[#allocation2 + $0x8] sm:$0xff] %v1437
    %1470 = vst [vmem:[#allocation2 + $0x10] sm:$0xff] %v1438
    %1471 = vst [vmem:[#allocation2 + $0x18] sm:$0xff] %v1439
    %1472 = vst [vmem:[#allocation2 + $0x20] sm:$0xff] %v1440
    %1473 = vst [vmem:[#allocation2 + $0x28] sm:$0xff] %v1441
    %1474 = vst [vmem:[#allocation2 + $0x30] sm:$0xff] %v1442
    %1475 = vst [vmem:[#allocation2 + $0x38] sm:$0xff] %v1443
    %1476 = vst [vmem:[#allocation2 + $0x40] sm:$0xff] %v1444
    %1477 = vst [vmem:[#allocation2 + $0x48] sm:$0xff] %v1445
    %1478 = vst [vmem:[#allocation2 + $0x50] sm:$0xff] %v1446
    %1479 = vst [vmem:[#allocation2 + $0x58] sm:$0xff] %v1447
    %1480 = vst [vmem:[#allocation2 + $0x60] sm:$0xff] %v1448
    %1481 = vst [vmem:[#allocation2 + $0x68] sm:$0xff] %v1449
    %1482 = vst [vmem:[#allocation2 + $0x70] sm:$0xff] %v1450
    %1483 = vst [vmem:[#allocation2 + $0x78] sm:$0xff] %v1451
    %1484 = vst [vmem:[#allocation2 + $0x80] sm:$0xff] %v1452
    %1485 = vst [vmem:[#allocation2 + $0x88] sm:$0xff] %v1453
    %1486 = vst [vmem:[#allocation2 + $0x90] sm:$0xff] %v1454
    %1487 = vst [vmem:[#allocation2 + $0x98] sm:$0xff] %v1455
    %1488 = vst [vmem:[#allocation2 + $0xa0] sm:$0xff] %v1456
    %1489 = vst [vmem:[#allocation2 + $0xa8] sm:$0xff] %v1457
    %1490 = vst [vmem:[#allocation2 + $0xb0] sm:$0xff] %v1458
    %1491 = vst [vmem:[#allocation2 + $0xb8] sm:$0xff] %v1459
    %1492 = vst [vmem:[#allocation2 + $0xc0] sm:$0xff] %v1460
    %1493 = vst [vmem:[#allocation2 + $0xc8] sm:$0xff] %v1461
    %1494 = vst [vmem:[#allocation2 + $0xd0] sm:$0xff] %v1462
    %1495 = vst [vmem:[#allocation2 + $0xd8] sm:$0xff] %v1463
    %1496 = vst [vmem:[#allocation2 + $0xe0] sm:$0xff] %v1464
    %1497 = vst [vmem:[#allocation2 + $0xe8] sm:$0xff] %v1465
    %1498 = vst [vmem:[#allocation2 + $0xf0] sm:$0xff] %v1466
    %1499 = vst [vmem:[#allocation2 + $0xf8] sm:$0xff] %v1467
    // Predicated region
    $region98: #{tpu_custom_call.1} parent=1 // pred_check
      %p1500 = pneg %p165
    $region99: #{tpu_custom_call.1} parent=1 // pred_check_branch
      %1502 = sbr.rel (%p1500) target = $region101
    $region100: #{tpu_custom_call.1} parent=1 // pred_region
      %v1503 = vld [vmem:[#allocation2] sm:$0xff]
      %v1504 = vld [vmem:[#allocation2 + $0x8] sm:$0xff]
      %v1505 = vld [vmem:[#allocation2 + $0x10] sm:$0xff]
      %v1506 = vld [vmem:[#allocation2 + $0x18] sm:$0xff]
      %v1507 = vld [vmem:[#allocation2 + $0x20] sm:$0xff]
      %v1508 = vld [vmem:[#allocation2 + $0x28] sm:$0xff]
      %v1509 = vld [vmem:[#allocation2 + $0x30] sm:$0xff]
      %v1510 = vld [vmem:[#allocation2 + $0x38] sm:$0xff]
      %v1511 = vld [vmem:[#allocation2 + $0x40] sm:$0xff]
      %v1512 = vld [vmem:[#allocation2 + $0x48] sm:$0xff]
      %v1513 = vld [vmem:[#allocation2 + $0x50] sm:$0xff]
      %v1514 = vld [vmem:[#allocation2 + $0x58] sm:$0xff]
      %v1515 = vld [vmem:[#allocation2 + $0x60] sm:$0xff]
      %v1516 = vld [vmem:[#allocation2 + $0x68] sm:$0xff]
      %v1517 = vld [vmem:[#allocation2 + $0x70] sm:$0xff]
      %v1518 = vld [vmem:[#allocation2 + $0x78] sm:$0xff]
      %v1519 = vld [vmem:[#allocation2 + $0x80] sm:$0xff]
      %v1520 = vld [vmem:[#allocation2 + $0x88] sm:$0xff]
      %v1521 = vld [vmem:[#allocation2 + $0x90] sm:$0xff]
      %v1522 = vld [vmem:[#allocation2 + $0x98] sm:$0xff]
      %v1523 = vld [vmem:[#allocation2 + $0xa0] sm:$0xff]
      %v1524 = vld [vmem:[#allocation2 + $0xa8] sm:$0xff]
      %v1525 = vld [vmem:[#allocation2 + $0xb0] sm:$0xff]
      %v1526 = vld [vmem:[#allocation2 + $0xb8] sm:$0xff]
      %v1527 = vld [vmem:[#allocation2 + $0xc0] sm:$0xff]
      %v1528 = vld [vmem:[#allocation2 + $0xc8] sm:$0xff]
      %v1529 = vld [vmem:[#allocation2 + $0xd0] sm:$0xff]
      %v1530 = vld [vmem:[#allocation2 + $0xd8] sm:$0xff]
      %v1531 = vld [vmem:[#allocation2 + $0xe0] sm:$0xff]
      %v1532 = vld [vmem:[#allocation2 + $0xe8] sm:$0xff]
      %v1533 = vld [vmem:[#allocation2 + $0xf0] sm:$0xff]
      %v1534 = vld [vmem:[#allocation2 + $0xf8] sm:$0xff]
      %v1535 = vld [vmem:[%s4] sm:$0x3]
      %v1537 = vlaneseq
      %v1538 = vshrl.u32 %v1537, 7
      %v1539 = vsub.s32 0, %v1538
      %v1540 = vrot.slane %v1535, %v1539
      %v1541 = vlaneseq
      %v1542 = vshrl.u32 %v1541, 7
      %v1543 = vsub.s32 1, %v1542
      %v1544 = vrot.slane %v1535, %v1543
      %v1547 = vadd.f32 %v1503, %v1540
      %v1548 = vadd.f32 %v1504, %v1544
      %v1549 = vadd.f32 %v1505, %v1540
      %v1550 = vadd.f32 %v1506, %v1544
      %v1551 = vadd.f32 %v1507, %v1540
      %v1552 = vadd.f32 %v1508, %v1544
      %v1553 = vadd.f32 %v1509, %v1540
      %v1554 = vadd.f32 %v1510, %v1544
      %v1555 = vadd.f32 %v1511, %v1540
      %v1556 = vadd.f32 %v1512, %v1544
      %v1557 = vadd.f32 %v1513, %v1540
      %v1558 = vadd.f32 %v1514, %v1544
      %v1559 = vadd.f32 %v1515, %v1540
      %v1560 = vadd.f32 %v1516, %v1544
      %v1561 = vadd.f32 %v1517, %v1540
      %v1562 = vadd.f32 %v1518, %v1544
      %v1563 = vadd.f32 %v1519, %v1540
      %v1564 = vadd.f32 %v1520, %v1544
      %v1565 = vadd.f32 %v1521, %v1540
      %v1566 = vadd.f32 %v1522, %v1544
      %v1567 = vadd.f32 %v1523, %v1540
      %v1568 = vadd.f32 %v1524, %v1544
      %v1569 = vadd.f32 %v1525, %v1540
      %v1570 = vadd.f32 %v1526, %v1544
      %v1571 = vadd.f32 %v1527, %v1540
      %v1572 = vadd.f32 %v1528, %v1544
      %v1573 = vadd.f32 %v1529, %v1540
      %v1574 = vadd.f32 %v1530, %v1544
      %v1575 = vadd.f32 %v1531, %v1540
      %v1576 = vadd.f32 %v1532, %v1544
      %v1577 = vadd.f32 %v1533, %v1540
      %v1578 = vadd.f32 %v1534, %v1544
      %v1579 = vmax.f32 %v1547, 0.0
      %v1580 = vmax.f32 %v1548, 0.0
      %v1581 = vmax.f32 %v1549, 0.0
      %v1582 = vmax.f32 %v1550, 0.0
      %v1583 = vmax.f32 %v1551, 0.0
      %v1584 = vmax.f32 %v1552, 0.0
      %v1585 = vmax.f32 %v1553, 0.0
      %v1586 = vmax.f32 %v1554, 0.0
      %v1587 = vmax.f32 %v1555, 0.0
      %v1588 = vmax.f32 %v1556, 0.0
      %v1589 = vmax.f32 %v1557, 0.0
      %v1590 = vmax.f32 %v1558, 0.0
      %v1591 = vmax.f32 %v1559, 0.0
      %v1592 = vmax.f32 %v1560, 0.0
      %v1593 = vmax.f32 %v1561, 0.0
      %v1594 = vmax.f32 %v1562, 0.0
      %v1595 = vmax.f32 %v1563, 0.0
      %v1596 = vmax.f32 %v1564, 0.0
      %v1597 = vmax.f32 %v1565, 0.0
      %v1598 = vmax.f32 %v1566, 0.0
      %v1599 = vmax.f32 %v1567, 0.0
      %v1600 = vmax.f32 %v1568, 0.0
      %v1601 = vmax.f32 %v1569, 0.0
      %v1602 = vmax.f32 %v1570, 0.0
      %v1603 = vmax.f32 %v1571, 0.0
      %v1604 = vmax.f32 %v1572, 0.0
      %v1605 = vmax.f32 %v1573, 0.0
      %v1606 = vmax.f32 %v1574, 0.0
      %v1607 = vmax.f32 %v1575, 0.0
      %v1608 = vmax.f32 %v1576, 0.0
      %v1609 = vmax.f32 %v1577, 0.0
      %v1610 = vmax.f32 %v1578, 0.0
      %v1611 = vpack.c.bf16 %v1581, %v1579
      %v1612 = vpack.c.bf16 %v1582, %v1580
      %v1613 = vpack.c.bf16 %v1585, %v1583
      %v1614 = vpack.c.bf16 %v1586, %v1584
      %v1615 = vpack.c.bf16 %v1589, %v1587
      %v1616 = vpack.c.bf16 %v1590, %v1588
      %v1617 = vpack.c.bf16 %v1593, %v1591
      %v1618 = vpack.c.bf16 %v1594, %v1592
      %v1619 = vpack.c.bf16 %v1597, %v1595
      %v1620 = vpack.c.bf16 %v1598, %v1596
      %v1621 = vpack.c.bf16 %v1601, %v1599
      %v1622 = vpack.c.bf16 %v1602, %v1600
      %v1623 = vpack.c.bf16 %v1605, %v1603
      %v1624 = vpack.c.bf16 %v1606, %v1604
      %v1625 = vpack.c.bf16 %v1609, %v1607
      %v1626 = vpack.c.bf16 %v1610, %v1608
      %v1627 = vld [vmem:[#allocation10] sm:$0xff]
      %v1628 = vld [vmem:[#allocation10 + $0x8] sm:$0xff]
      %v1629 = vld [vmem:[#allocation10 + $0x10] sm:$0xff]
      %v1630 = vld [vmem:[#allocation10 + $0x18] sm:$0xff]
      %v1631 = vld [vmem:[#allocation10 + $0x20] sm:$0xff]
      %v1632 = vld [vmem:[#allocation10 + $0x28] sm:$0xff]
      %v1633 = vld [vmem:[#allocation10 + $0x30] sm:$0xff]
      %v1634 = vld [vmem:[#allocation10 + $0x38] sm:$0xff]
      %v1635 = vld [vmem:[#allocation10 + $0x40] sm:$0xff]
      %v1636 = vld [vmem:[#allocation10 + $0x48] sm:$0xff]
      %v1637 = vld [vmem:[#allocation10 + $0x50] sm:$0xff]
      %v1638 = vld [vmem:[#allocation10 + $0x58] sm:$0xff]
      %v1639 = vld [vmem:[#allocation10 + $0x60] sm:$0xff]
      %v1640 = vld [vmem:[#allocation10 + $0x68] sm:$0xff]
      %v1641 = vld [vmem:[#allocation10 + $0x70] sm:$0xff]
      %v1642 = vld [vmem:[#allocation10 + $0x78] sm:$0xff]
      %v1643 = vld [vmem:[#allocation10 + $0x80] sm:$0xff]
      %v1644 = vld [vmem:[#allocation10 + $0x88] sm:$0xff]
      %v1645 = vld [vmem:[#allocation10 + $0x90] sm:$0xff]
      %v1646 = vld [vmem:[#allocation10 + $0x98] sm:$0xff]
      %v1647 = vld [vmem:[#allocation10 + $0xa0] sm:$0xff]
      %v1648 = vld [vmem:[#allocation10 + $0xa8] sm:$0xff]
      %v1649 = vld [vmem:[#allocation10 + $0xb0] sm:$0xff]
      %v1650 = vld [vmem:[#allocation10 + $0xb8] sm:$0xff]
      %v1651 = vld [vmem:[#allocation10 + $0xc0] sm:$0xff]
      %v1652 = vld [vmem:[#allocation10 + $0xc8] sm:$0xff]
      %v1653 = vld [vmem:[#allocation10 + $0xd0] sm:$0xff]
      %v1654 = vld [vmem:[#allocation10 + $0xd8] sm:$0xff]
      %v1655 = vld [vmem:[#allocation10 + $0xe0] sm:$0xff]
      %v1656 = vld [vmem:[#allocation10 + $0xe8] sm:$0xff]
      %v1657 = vld [vmem:[#allocation10 + $0xf0] sm:$0xff]
      %v1658 = vld [vmem:[#allocation10 + $0xf8] sm:$0xff]
      %v1659 = vld [vmem:[%s6] sm:$0x3]
      %v1661 = vlaneseq
      %v1662 = vshrl.u32 %v1661, 7
      %v1663 = vsub.s32 0, %v1662
      %v1664 = vrot.slane %v1659, %v1663
      %v1665 = vlaneseq
      %v1666 = vshrl.u32 %v1665, 7
      %v1667 = vsub.s32 1, %v1666
      %v1668 = vrot.slane %v1659, %v1667
      %v1703 = vunpack.c.l.b16 %v1627
      %v1704 = vunpack.c.h.b16 %v1627
      %v1705 = vunpack.c.l.b16 %v1628
      %v1706 = vunpack.c.h.b16 %v1628
      %v1707 = vunpack.c.l.b16 %v1629
      %v1708 = vunpack.c.h.b16 %v1629
      %v1709 = vunpack.c.l.b16 %v1630
      %v1710 = vunpack.c.h.b16 %v1630
      %v1711 = vunpack.c.l.b16 %v1631
      %v1712 = vunpack.c.h.b16 %v1631
      %v1713 = vunpack.c.l.b16 %v1632
      %v1714 = vunpack.c.h.b16 %v1632
      %v1715 = vunpack.c.l.b16 %v1633
      %v1716 = vunpack.c.h.b16 %v1633
      %v1717 = vunpack.c.l.b16 %v1634
      %v1718 = vunpack.c.h.b16 %v1634
      %v1719 = vunpack.c.l.b16 %v1635
      %v1720 = vunpack.c.h.b16 %v1635
      %v1721 = vunpack.c.l.b16 %v1636
      %v1722 = vunpack.c.h.b16 %v1636
      %v1723 = vunpack.c.l.b16 %v1637
      %v1724 = vunpack.c.h.b16 %v1637
      %v1725 = vunpack.c.l.b16 %v1638
      %v1726 = vunpack.c.h.b16 %v1638
      %v1727 = vunpack.c.l.b16 %v1639
      %v1728 = vunpack.c.h.b16 %v1639
      %v1729 = vunpack.c.l.b16 %v1640
      %v1730 = vunpack.c.h.b16 %v1640
      %v1731 = vunpack.c.l.b16 %v1641
      %v1732 = vunpack.c.h.b16 %v1641
      %v1733 = vunpack.c.l.b16 %v1642
      %v1734 = vunpack.c.h.b16 %v1642
      %v1735 = vunpack.c.l.b16 %v1643
      %v1736 = vunpack.c.h.b16 %v1643
      %v1737 = vunpack.c.l.b16 %v1644
      %v1738 = vunpack.c.h.b16 %v1644
      %v1739 = vunpack.c.l.b16 %v1645
      %v1740 = vunpack.c.h.b16 %v1645
      %v1741 = vunpack.c.l.b16 %v1646
      %v1742 = vunpack.c.h.b16 %v1646
      %v1743 = vunpack.c.l.b16 %v1647
      %v1744 = vunpack.c.h.b16 %v1647
      %v1745 = vunpack.c.l.b16 %v1648
      %v1746 = vunpack.c.h.b16 %v1648
      %v1747 = vunpack.c.l.b16 %v1649
      %v1748 = vunpack.c.h.b16 %v1649
      %v1749 = vunpack.c.l.b16 %v1650
      %v1750 = vunpack.c.h.b16 %v1650
      %v1751 = vunpack.c.l.b16 %v1651
      %v1752 = vunpack.c.h.b16 %v1651
      %v1753 = vunpack.c.l.b16 %v1652
      %v1754 = vunpack.c.h.b16 %v1652
      %v1755 = vunpack.c.l.b16 %v1653
      %v1756 = vunpack.c.h.b16 %v1653
      %v1757 = vunpack.c.l.b16 %v1654
      %v1758 = vunpack.c.h.b16 %v1654
      %v1759 = vunpack.c.l.b16 %v1655
      %v1760 = vunpack.c.h.b16 %v1655
      %v1761 = vunpack.c.l.b16 %v1656
      %v1762 = vunpack.c.h.b16 %v1656
      %v1763 = vunpack.c.l.b16 %v1657
      %v1764 = vunpack.c.h.b16 %v1657
      %v1765 = vunpack.c.l.b16 %v1658
      %v1766 = vunpack.c.h.b16 %v1658
      %v1767 = vpack.c.b16 %v1705, %v1703
      %v1768 = vpack.c.b16 %v1706, %v1704
      %v1769 = vpack.c.b16 %v1709, %v1707
      %v1770 = vpack.c.b16 %v1710, %v1708
      %v1771 = vpack.c.b16 %v1713, %v1711
      %v1772 = vpack.c.b16 %v1714, %v1712
      %v1773 = vpack.c.b16 %v1717, %v1715
      %v1774 = vpack.c.b16 %v1718, %v1716
      %v1775 = vpack.c.b16 %v1721, %v1719
      %v1776 = vpack.c.b16 %v1722, %v1720
      %v1777 = vpack.c.b16 %v1725, %v1723
      %v1778 = vpack.c.b16 %v1726, %v1724
      %v1779 = vpack.c.b16 %v1729, %v1727
      %v1780 = vpack.c.b16 %v1730, %v1728
      %v1781 = vpack.c.b16 %v1733, %v1731
      %v1782 = vpack.c.b16 %v1734, %v1732
      %v1783 = vpack.c.b16 %v1737, %v1735
      %v1784 = vpack.c.b16 %v1738, %v1736
      %v1785 = vpack.c.b16 %v1741, %v1739
      %v1786 = vpack.c.b16 %v1742, %v1740
      %v1787 = vpack.c.b16 %v1745, %v1743
      %v1788 = vpack.c.b16 %v1746, %v1744
      %v1789 = vpack.c.b16 %v1749, %v1747
      %v1790 = vpack.c.b16 %v1750, %v1748
      %v1791 = vpack.c.b16 %v1753, %v1751
      %v1792 = vpack.c.b16 %v1754, %v1752
      %v1793 = vpack.c.b16 %v1757, %v1755
      %v1794 = vpack.c.b16 %v1758, %v1756
      %v1795 = vpack.c.b16 %v1761, %v1759
      %v1796 = vpack.c.b16 %v1762, %v1760
      %v1797 = vpack.c.b16 %v1765, %v1763
      %v1798 = vpack.c.b16 %v1766, %v1764
      %1831 = vmatprep.subr.bf16.mxu0 %v1768
      %1832 = vmatpush1.bf16.msra.mxu0 %v1767
      %1833 = vmatprep.subr.bf16.mxu0 %v1770
      %1834 = vmatpush1.bf16.msra.mxu0 %v1769
      %1835 = vmatprep.subr.bf16.mxu0 %v1772
      %1836 = vmatpush1.bf16.msra.mxu0 %v1771
      %1837 = vmatprep.subr.bf16.mxu0 %v1774
      %1838 = vmatpush1.bf16.msra.mxu0 %v1773
      %1839 = vmatprep.subr.bf16.mxu0 %v1776
      %1840 = vmatpush1.bf16.msra.mxu0 %v1775
      %1841 = vmatprep.subr.bf16.mxu0 %v1778
      %1842 = vmatpush1.bf16.msra.mxu0 %v1777
      %1843 = vmatprep.subr.bf16.mxu0 %v1780
      %1844 = vmatpush1.bf16.msra.mxu0 %v1779
      %1845 = vmatprep.subr.bf16.mxu0 %v1782
      %1846 = vmatpush1.bf16.msra.mxu0 %v1781
      %1847 = vmatprep.subr.bf16.mxu0 %v1784
      %1848 = vmatpush1.bf16.msra.mxu0 %v1783
      %1849 = vmatprep.subr.bf16.mxu0 %v1786
      %1850 = vmatpush1.bf16.msra.mxu0 %v1785
      %1851 = vmatprep.subr.bf16.mxu0 %v1788
      %1852 = vmatpush1.bf16.msra.mxu0 %v1787
      %1853 = vmatprep.subr.bf16.mxu0 %v1790
      %1854 = vmatpush1.bf16.msra.mxu0 %v1789
      %1855 = vmatprep.subr.bf16.mxu0 %v1792
      %1856 = vmatpush1.bf16.msra.mxu0 %v1791
      %1857 = vmatprep.subr.bf16.mxu0 %v1794
      %1858 = vmatpush1.bf16.msra.mxu0 %v1793
      %1859 = vmatprep.subr.bf16.mxu0 %v1796
      %1860 = vmatpush1.bf16.msra.mxu0 %v1795
      %1861 = vmatprep.subr.bf16.mxu0 %v1798
      %1862 = vmatpush1.bf16.msra.mxu0 %v1797
      %1863 = vmatprep.mubr.bf16.mxu0 %v1612
      %1864 = vmatmul.mubr.bf16.gmra.mrb[0].mxu0 %v1611
      %v1865 = vpop.f32.mrb[0].mxu0
      %v1866 = vadd.f32 %v1664, %v1865
      %v1867 = vpop.f32.mrb[0].mxu0
      %v1868 = vadd.f32 %v1668, %v1867
      %v1869 = vpop.f32.mrb[0].mxu0
      %v1870 = vadd.f32 %v1664, %v1869
      %v1871 = vpop.f32.mrb[0].mxu0
      %v1872 = vadd.f32 %v1668, %v1871
      %1873 = vmatprep.mubr.bf16.mxu0 %v1614
      %1874 = vmatmul.mubr.bf16.gmra.mrb[0].mxu0 %v1613
      %v1875 = vpop.f32.mrb[0].mxu0
      %v1876 = vadd.f32 %v1664, %v1875
      %v1877 = vpop.f32.mrb[0].mxu0
      %v1878 = vadd.f32 %v1668, %v1877
      %v1879 = vpop.f32.mrb[0].mxu0
      %v1880 = vadd.f32 %v1664, %v1879
      %v1881 = vpop.f32.mrb[0].mxu0
      %v1882 = vadd.f32 %v1668, %v1881
      %1883 = vmatprep.mubr.bf16.mxu0 %v1616
      %1884 = vmatmul.mubr.bf16.gmra.mrb[0].mxu0 %v1615
      %v1885 = vpop.f32.mrb[0].mxu0
      %v1886 = vadd.f32 %v1664, %v1885
      %v1887 = vpop.f32.mrb[0].mxu0
      %v1888 = vadd.f32 %v1668, %v1887
      %v1889 = vpop.f32.mrb[0].mxu0
      %v1890 = vadd.f32 %v1664, %v1889
      %v1891 = vpop.f32.mrb[0].mxu0
      %v1892 = vadd.f32 %v1668, %v1891
      %1893 = vmatprep.mubr.bf16.mxu0 %v1618
      %1894 = vmatmul.mubr.bf16.gmra.mrb[0].mxu0 %v1617
      %v1895 = vpop.f32.mrb[0].mxu0
      %v1896 = vadd.f32 %v1664, %v1895
      %v1897 = vpop.f32.mrb[0].mxu0
      %v1898 = vadd.f32 %v1668, %v1897
      %v1899 = vpop.f32.mrb[0].mxu0
      %v1900 = vadd.f32 %v1664, %v1899
      %v1901 = vpop.f32.mrb[0].mxu0
      %v1902 = vadd.f32 %v1668, %v1901
      %1903 = vmatprep.mubr.bf16.mxu0 %v1620
      %1904 = vmatmul.mubr.bf16.gmra.mrb[0].mxu0 %v1619
      %v1905 = vpop.f32.mrb[0].mxu0
      %v1906 = vadd.f32 %v1664, %v1905
      %v1907 = vpop.f32.mrb[0].mxu0
      %v1908 = vadd.f32 %v1668, %v1907
      %v1909 = vpop.f32.mrb[0].mxu0
      %v1910 = vadd.f32 %v1664, %v1909
      %v1911 = vpop.f32.mrb[0].mxu0
      %v1912 = vadd.f32 %v1668, %v1911
      %1913 = vmatprep.mubr.bf16.mxu0 %v1622
      %1914 = vmatmul.mubr.bf16.gmra.mrb[0].mxu0 %v1621
      %v1915 = vpop.f32.mrb[0].mxu0
      %v1916 = vadd.f32 %v1664, %v1915
      %v1917 = vpop.f32.mrb[0].mxu0
      %v1918 = vadd.f32 %v1668, %v1917
      %v1919 = vpop.f32.mrb[0].mxu0
      %v1920 = vadd.f32 %v1664, %v1919
      %v1921 = vpop.f32.mrb[0].mxu0
      %v1922 = vadd.f32 %v1668, %v1921
      %1923 = vmatprep.mubr.bf16.mxu0 %v1624
      %1924 = vmatmul.mubr.bf16.gmra.mrb[0].mxu0 %v1623
      %v1925 = vpop.f32.mrb[0].mxu0
      %v1926 = vadd.f32 %v1664, %v1925
      %v1927 = vpop.f32.mrb[0].mxu0
      %v1928 = vadd.f32 %v1668, %v1927
      %v1929 = vpop.f32.mrb[0].mxu0
      %v1930 = vadd.f32 %v1664, %v1929
      %v1931 = vpop.f32.mrb[0].mxu0
      %v1932 = vadd.f32 %v1668, %v1931
      %1933 = vmatprep.mubr.bf16.mxu0 %v1626
      %1934 = vmatmul.mubr.bf16.gmra.mrb[0].mxu0 %v1625
      %v1935 = vpop.f32.mrb[0].mxu0
      %v1936 = vadd.f32 %v1664, %v1935
      %v1937 = vpop.f32.mrb[0].mxu0
      %v1938 = vadd.f32 %v1668, %v1937
      %v1939 = vpop.f32.mrb[0].mxu0
      %v1940 = vadd.f32 %v1664, %v1939
      %v1941 = vpop.f32.mrb[0].mxu0
      %v1942 = vadd.f32 %v1668, %v1941
      %1943 = vdwg.mxu0
      %v1944 = vmax.f32 %v1866, 0.0
      %v1945 = vmax.f32 %v1868, 0.0
      %v1946 = vmax.f32 %v1870, 0.0
      %v1947 = vmax.f32 %v1872, 0.0
      %v1948 = vmax.f32 %v1876, 0.0
      %v1949 = vmax.f32 %v1878, 0.0
      %v1950 = vmax.f32 %v1880, 0.0
      %v1951 = vmax.f32 %v1882, 0.0
      %v1952 = vmax.f32 %v1886, 0.0
      %v1953 = vmax.f32 %v1888, 0.0
      %v1954 = vmax.f32 %v1890, 0.0
      %v1955 = vmax.f32 %v1892, 0.0
      %v1956 = vmax.f32 %v1896, 0.0
      %v1957 = vmax.f32 %v1898, 0.0
      %v1958 = vmax.f32 %v1900, 0.0
      %v1959 = vmax.f32 %v1902, 0.0
      %v1960 = vmax.f32 %v1906, 0.0
      %v1961 = vmax.f32 %v1908, 0.0
      %v1962 = vmax.f32 %v1910, 0.0
      %v1963 = vmax.f32 %v1912, 0.0
      %v1964 = vmax.f32 %v1916, 0.0
      %v1965 = vmax.f32 %v1918, 0.0
      %v1966 = vmax.f32 %v1920, 0.0
      %v1967 = vmax.f32 %v1922, 0.0
      %v1968 = vmax.f32 %v1926, 0.0
      %v1969 = vmax.f32 %v1928, 0.0
      %v1970 = vmax.f32 %v1930, 0.0
      %v1971 = vmax.f32 %v1932, 0.0
      %v1972 = vmax.f32 %v1936, 0.0
      %v1973 = vmax.f32 %v1938, 0.0
      %v1974 = vmax.f32 %v1940, 0.0
      %v1975 = vmax.f32 %v1942, 0.0
      %v1976 = vpack.c.bf16 %v1946, %v1944
      %v1977 = vpack.c.bf16 %v1947, %v1945
      %v1978 = vpack.c.bf16 %v1950, %v1948
      %v1979 = vpack.c.bf16 %v1951, %v1949
      %v1980 = vpack.c.bf16 %v1954, %v1952
      %v1981 = vpack.c.bf16 %v1955, %v1953
      %v1982 = vpack.c.bf16 %v1958, %v1956
      %v1983 = vpack.c.bf16 %v1959, %v1957
      %v1984 = vpack.c.bf16 %v1962, %v1960
      %v1985 = vpack.c.bf16 %v1963, %v1961
      %v1986 = vpack.c.bf16 %v1966, %v1964
      %v1987 = vpack.c.bf16 %v1967, %v1965
      %v1988 = vpack.c.bf16 %v1970, %v1968
      %v1989 = vpack.c.bf16 %v1971, %v1969
      %v1990 = vpack.c.bf16 %v1974, %v1972
      %v1991 = vpack.c.bf16 %v1975, %v1973
      %v1992 = vld [vmem:[#allocation12] sm:$0xff]
      %v1993 = vld [vmem:[#allocation12 + $0x8] sm:$0xff]
      %v1994 = vld [vmem:[#allocation12 + $0x10] sm:$0xff]
      %v1995 = vld [vmem:[#allocation12 + $0x18] sm:$0xff]
      %v1996 = vld [vmem:[#allocation12 + $0x20] sm:$0xff]
      %v1997 = vld [vmem:[#allocation12 + $0x28] sm:$0xff]
      %v1998 = vld [vmem:[#allocation12 + $0x30] sm:$0xff]
      %v1999 = vld [vmem:[#allocation12 + $0x38] sm:$0xff]
      %v2000 = vld [vmem:[#allocation12 + $0x40] sm:$0xff]
      %v2001 = vld [vmem:[#allocation12 + $0x48] sm:$0xff]
      %v2002 = vld [vmem:[#allocation12 + $0x50] sm:$0xff]
      %v2003 = vld [vmem:[#allocation12 + $0x58] sm:$0xff]
      %v2004 = vld [vmem:[#allocation12 + $0x60] sm:$0xff]
      %v2005 = vld [vmem:[#allocation12 + $0x68] sm:$0xff]
      %v2006 = vld [vmem:[#allocation12 + $0x70] sm:$0xff]
      %v2007 = vld [vmem:[#allocation12 + $0x78] sm:$0xff]
      %v2008 = vld [vmem:[#allocation12 + $0x80] sm:$0xff]
      %v2009 = vld [vmem:[#allocation12 + $0x88] sm:$0xff]
      %v2010 = vld [vmem:[#allocation12 + $0x90] sm:$0xff]
      %v2011 = vld [vmem:[#allocation12 + $0x98] sm:$0xff]
      %v2012 = vld [vmem:[#allocation12 + $0xa0] sm:$0xff]
      %v2013 = vld [vmem:[#allocation12 + $0xa8] sm:$0xff]
      %v2014 = vld [vmem:[#allocation12 + $0xb0] sm:$0xff]
      %v2015 = vld [vmem:[#allocation12 + $0xb8] sm:$0xff]
      %v2016 = vld [vmem:[#allocation12 + $0xc0] sm:$0xff]
      %v2017 = vld [vmem:[#allocation12 + $0xc8] sm:$0xff]
      %v2018 = vld [vmem:[#allocation12 + $0xd0] sm:$0xff]
      %v2019 = vld [vmem:[#allocation12 + $0xd8] sm:$0xff]
      %v2020 = vld [vmem:[#allocation12 + $0xe0] sm:$0xff]
      %v2021 = vld [vmem:[#allocation12 + $0xe8] sm:$0xff]
      %v2022 = vld [vmem:[#allocation12 + $0xf0] sm:$0xff]
      %v2023 = vld [vmem:[#allocation12 + $0xf8] sm:$0xff]
      %v2024 = vld [vmem:[%s8] sm:$0x3]
      %v2026 = vlaneseq
      %v2027 = vshrl.u32 %v2026, 7
      %v2028 = vsub.s32 0, %v2027
      %v2029 = vrot.slane %v2024, %v2028
      %v2030 = vlaneseq
      %v2031 = vshrl.u32 %v2030, 7
      %v2032 = vsub.s32 1, %v2031
      %v2033 = vrot.slane %v2024, %v2032
      %v2068 = vunpack.c.l.b16 %v1992
      %v2069 = vunpack.c.h.b16 %v1992
      %v2070 = vunpack.c.l.b16 %v1993
      %v2071 = vunpack.c.h.b16 %v1993
      %v2072 = vunpack.c.l.b16 %v1994
      %v2073 = vunpack.c.h.b16 %v1994
      %v2074 = vunpack.c.l.b16 %v1995
      %v2075 = vunpack.c.h.b16 %v1995
      %v2076 = vunpack.c.l.b16 %v1996
      %v2077 = vunpack.c.h.b16 %v1996
      %v2078 = vunpack.c.l.b16 %v1997
      %v2079 = vunpack.c.h.b16 %v1997
      %v2080 = vunpack.c.l.b16 %v1998
      %v2081 = vunpack.c.h.b16 %v1998
      %v2082 = vunpack.c.l.b16 %v1999
      %v2083 = vunpack.c.h.b16 %v1999
      %v2084 = vunpack.c.l.b16 %v2000
      %v2085 = vunpack.c.h.b16 %v2000
      %v2086 = vunpack.c.l.b16 %v2001
      %v2087 = vunpack.c.h.b16 %v2001
      %v2088 = vunpack.c.l.b16 %v2002
      %v2089 = vunpack.c.h.b16 %v2002
      %v2090 = vunpack.c.l.b16 %v2003
      %v2091 = vunpack.c.h.b16 %v2003
      %v2092 = vunpack.c.l.b16 %v2004
      %v2093 = vunpack.c.h.b16 %v2004
      %v2094 = vunpack.c.l.b16 %v2005
      %v2095 = vunpack.c.h.b16 %v2005
      %v2096 = vunpack.c.l.b16 %v2006
      %v2097 = vunpack.c.h.b16 %v2006
      %v2098 = vunpack.c.l.b16 %v2007
      %v2099 = vunpack.c.h.b16 %v2007
      %v2100 = vunpack.c.l.b16 %v2008
      %v2101 = vunpack.c.h.b16 %v2008
      %v2102 = vunpack.c.l.b16 %v2009
      %v2103 = vunpack.c.h.b16 %v2009
      %v2104 = vunpack.c.l.b16 %v2010
      %v2105 = vunpack.c.h.b16 %v2010
      %v2106 = vunpack.c.l.b16 %v2011
      %v2107 = vunpack.c.h.b16 %v2011
      %v2108 = vunpack.c.l.b16 %v2012
      %v2109 = vunpack.c.h.b16 %v2012
      %v2110 = vunpack.c.l.b16 %v2013
      %v2111 = vunpack.c.h.b16 %v2013
      %v2112 = vunpack.c.l.b16 %v2014
      %v2113 = vunpack.c.h.b16 %v2014
      %v2114 = vunpack.c.l.b16 %v2015
      %v2115 = vunpack.c.h.b16 %v2015
      %v2116 = vunpack.c.l.b16 %v2016
      %v2117 = vunpack.c.h.b16 %v2016
      %v2118 = vunpack.c.l.b16 %v2017
      %v2119 = vunpack.c.h.b16 %v2017
      %v2120 = vunpack.c.l.b16 %v2018
      %v2121 = vunpack.c.h.b16 %v2018
      %v2122 = vunpack.c.l.b16 %v2019
      %v2123 = vunpack.c.h.b16 %v2019
      %v2124 = vunpack.c.l.b16 %v2020
      %v2125 = vunpack.c.h.b16 %v2020
      %v2126 = vunpack.c.l.b16 %v2021
      %v2127 = vunpack.c.h.b16 %v2021
      %v2128 = vunpack.c.l.b16 %v2022
      %v2129 = vunpack.c.h.b16 %v2022
      %v2130 = vunpack.c.l.b16 %v2023
      %v2131 = vunpack.c.h.b16 %v2023
      %v2132 = vpack.c.b16 %v2070, %v2068
      %v2133 = vpack.c.b16 %v2071, %v2069
      %v2134 = vpack.c.b16 %v2074, %v2072
      %v2135 = vpack.c.b16 %v2075, %v2073
      %v2136 = vpack.c.b16 %v2078, %v2076
      %v2137 = vpack.c.b16 %v2079, %v2077
      %v2138 = vpack.c.b16 %v2082, %v2080
      %v2139 = vpack.c.b16 %v2083, %v2081
      %v2140 = vpack.c.b16 %v2086, %v2084
      %v2141 = vpack.c.b16 %v2087, %v2085
      %v2142 = vpack.c.b16 %v2090, %v2088
      %v2143 = vpack.c.b16 %v2091, %v2089
      %v2144 = vpack.c.b16 %v2094, %v2092
      %v2145 = vpack.c.b16 %v2095, %v2093
      %v2146 = vpack.c.b16 %v2098, %v2096
      %v2147 = vpack.c.b16 %v2099, %v2097
      %v2148 = vpack.c.b16 %v2102, %v2100
      %v2149 = vpack.c.b16 %v2103, %v2101
      %v2150 = vpack.c.b16 %v2106, %v2104
      %v2151 = vpack.c.b16 %v2107, %v2105
      %v2152 = vpack.c.b16 %v2110, %v2108
      %v2153 = vpack.c.b16 %v2111, %v2109
      %v2154 = vpack.c.b16 %v2114, %v2112
      %v2155 = vpack.c.b16 %v2115, %v2113
      %v2156 = vpack.c.b16 %v2118, %v2116
      %v2157 = vpack.c.b16 %v2119, %v2117
      %v2158 = vpack.c.b16 %v2122, %v2120
      %v2159 = vpack.c.b16 %v2123, %v2121
      %v2160 = vpack.c.b16 %v2126, %v2124
      %v2161 = vpack.c.b16 %v2127, %v2125
      %v2162 = vpack.c.b16 %v2130, %v2128
      %v2163 = vpack.c.b16 %v2131, %v2129
      %2196 = vmatprep.subr.bf16.mxu0 %v2133
      %2197 = vmatpush1.bf16.msra.mxu0 %v2132
      %2198 = vmatprep.subr.bf16.mxu0 %v2135
      %2199 = vmatpush1.bf16.msra.mxu0 %v2134
      %2200 = vmatprep.subr.bf16.mxu0 %v2137
      %2201 = vmatpush1.bf16.msra.mxu0 %v2136
      %2202 = vmatprep.subr.bf16.mxu0 %v2139
      %2203 = vmatpush1.bf16.msra.mxu0 %v2138
      %2204 = vmatprep.subr.bf16.mxu0 %v2141
      %2205 = vmatpush1.bf16.msra.mxu0 %v2140
      %2206 = vmatprep.subr.bf16.mxu0 %v2143
      %2207 = vmatpush1.bf16.msra.mxu0 %v2142
      %2208 = vmatprep.subr.bf16.mxu0 %v2145
      %2209 = vmatpush1.bf16.msra.mxu0 %v2144
      %2210 = vmatprep.subr.bf16.mxu0 %v2147
      %2211 = vmatpush1.bf16.msra.mxu0 %v2146
      %2212 = vmatprep.subr.bf16.mxu0 %v2149
      %2213 = vmatpush1.bf16.msra.mxu0 %v2148
      %2214 = vmatprep.subr.bf16.mxu0 %v2151
      %2215 = vmatpush1.bf16.msra.mxu0 %v2150
      %2216 = vmatprep.subr.bf16.mxu0 %v2153
      %2217 = vmatpush1.bf16.msra.mxu0 %v2152
      %2218 = vmatprep.subr.bf16.mxu0 %v2155
      %2219 = vmatpush1.bf16.msra.mxu0 %v2154
      %2220 = vmatprep.subr.bf16.mxu0 %v2157
      %2221 = vmatpush1.bf16.msra.mxu0 %v2156
      %2222 = vmatprep.subr.bf16.mxu0 %v2159
      %2223 = vmatpush1.bf16.msra.mxu0 %v2158
      %2224 = vmatprep.subr.bf16.mxu0 %v2161
      %2225 = vmatpush1.bf16.msra.mxu0 %v2160
      %2226 = vmatprep.subr.bf16.mxu0 %v2163
      %2227 = vmatpush1.bf16.msra.mxu0 %v2162
      %2228 = vmatprep.mubr.bf16.mxu0 %v1977
      %2229 = vmatmul.mubr.bf16.gmra.mrb[0].mxu0 %v1976
      %v2230 = vpop.f32.mrb[0].mxu0
      %v2231 = vadd.f32 %v2029, %v2230
      %v2232 = vpop.f32.mrb[0].mxu0
      %v2233 = vadd.f32 %v2033, %v2232
      %v2234 = vpop.f32.mrb[0].mxu0
      %v2235 = vadd.f32 %v2029, %v2234
      %v2236 = vpop.f32.mrb[0].mxu0
      %v2237 = vadd.f32 %v2033, %v2236
      %2238 = vmatprep.mubr.bf16.mxu0 %v1979
      %2239 = vmatmul.mubr.bf16.gmra.mrb[0].mxu0 %v1978
      %v2240 = vpop.f32.mrb[0].mxu0
      %v2241 = vadd.f32 %v2029, %v2240
      %v2242 = vpop.f32.mrb[0].mxu0
      %v2243 = vadd.f32 %v2033, %v2242
      %v2244 = vpop.f32.mrb[0].mxu0
      %v2245 = vadd.f32 %v2029, %v2244
      %v2246 = vpop.f32.mrb[0].mxu0
      %v2247 = vadd.f32 %v2033, %v2246
      %2248 = vmatprep.mubr.bf16.mxu0 %v1981
      %2249 = vmatmul.mubr.bf16.gmra.mrb[0].mxu0 %v1980
      %v2250 = vpop.f32.mrb[0].mxu0
      %v2251 = vadd.f32 %v2029, %v2250
      %v2252 = vpop.f32.mrb[0].mxu0
      %v2253 = vadd.f32 %v2033, %v2252
      %v2254 = vpop.f32.mrb[0].mxu0
      %v2255 = vadd.f32 %v2029, %v2254
      %v2256 = vpop.f32.mrb[0].mxu0
      %v2257 = vadd.f32 %v2033, %v2256
      %2258 = vmatprep.mubr.bf16.mxu0 %v1983
      %2259 = vmatmul.mubr.bf16.gmra.mrb[0].mxu0 %v1982
      %v2260 = vpop.f32.mrb[0].mxu0
      %v2261 = vadd.f32 %v2029, %v2260
      %v2262 = vpop.f32.mrb[0].mxu0
      %v2263 = vadd.f32 %v2033, %v2262
      %v2264 = vpop.f32.mrb[0].mxu0
      %v2265 = vadd.f32 %v2029, %v2264
      %v2266 = vpop.f32.mrb[0].mxu0
      %v2267 = vadd.f32 %v2033, %v2266
      %2268 = vmatprep.mubr.bf16.mxu0 %v1985
      %2269 = vmatmul.mubr.bf16.gmra.mrb[0].mxu0 %v1984
      %v2270 = vpop.f32.mrb[0].mxu0
      %v2271 = vadd.f32 %v2029, %v2270
      %v2272 = vpop.f32.mrb[0].mxu0
      %v2273 = vadd.f32 %v2033, %v2272
      %v2274 = vpop.f32.mrb[0].mxu0
      %v2275 = vadd.f32 %v2029, %v2274
      %v2276 = vpop.f32.mrb[0].mxu0
      %v2277 = vadd.f32 %v2033, %v2276
      %2278 = vmatprep.mubr.bf16.mxu0 %v1987
      %2279 = vmatmul.mubr.bf16.gmra.mrb[0].mxu0 %v1986
      %v2280 = vpop.f32.mrb[0].mxu0
      %v2281 = vadd.f32 %v2029, %v2280
      %v2282 = vpop.f32.mrb[0].mxu0
      %v2283 = vadd.f32 %v2033, %v2282
      %v2284 = vpop.f32.mrb[0].mxu0
      %v2285 = vadd.f32 %v2029, %v2284
      %v2286 = vpop.f32.mrb[0].mxu0
      %v2287 = vadd.f32 %v2033, %v2286
      %2288 = vmatprep.mubr.bf16.mxu0 %v1989
      %2289 = vmatmul.mubr.bf16.gmra.mrb[0].mxu0 %v1988
      %v2290 = vpop.f32.mrb[0].mxu0
      %v2291 = vadd.f32 %v2029, %v2290
      %v2292 = vpop.f32.mrb[0].mxu0
      %v2293 = vadd.f32 %v2033, %v2292
      %v2294 = vpop.f32.mrb[0].mxu0
      %v2295 = vadd.f32 %v2029, %v2294
      %v2296 = vpop.f32.mrb[0].mxu0
      %v2297 = vadd.f32 %v2033, %v2296
      %2298 = vmatprep.mubr.bf16.mxu0 %v1991
      %2299 = vmatmul.mubr.bf16.gmra.mrb[0].mxu0 %v1990
      %v2300 = vpop.f32.mrb[0].mxu0
      %v2301 = vadd.f32 %v2029, %v2300
      %v2302 = vpop.f32.mrb[0].mxu0
      %v2303 = vadd.f32 %v2033, %v2302
      %v2304 = vpop.f32.mrb[0].mxu0
      %v2305 = vadd.f32 %v2029, %v2304
      %v2306 = vpop.f32.mrb[0].mxu0
      %v2307 = vadd.f32 %v2033, %v2306
      %2308 = vdwg.mxu0
      %v2309 = vld [vmem:[#allocation7] sm:$0xf]
      %v2310 = vld [vmem:[#allocation7 + $0x4] sm:$0xf]
      %v2311 = vld [vmem:[#allocation7 + $0x8] sm:$0xf]
      %v2312 = vld [vmem:[#allocation7 + $0xc] sm:$0xf]
      %v2313 = vld [vmem:[#allocation7 + $0x10] sm:$0xf]
      %v2314 = vld [vmem:[#allocation7 + $0x14] sm:$0xf]
      %v2315 = vld [vmem:[#allocation7 + $0x18] sm:$0xf]
      %v2316 = vld [vmem:[#allocation7 + $0x1c] sm:$0xf]
      %v2317 = vld [vmem:[#allocation7 + $0x20] sm:$0xf]
      %v2318 = vld [vmem:[#allocation7 + $0x24] sm:$0xf]
      %v2319 = vld [vmem:[#allocation7 + $0x28] sm:$0xf]
      %v2320 = vld [vmem:[#allocation7 + $0x2c] sm:$0xf]
      %v2321 = vld [vmem:[#allocation7 + $0x30] sm:$0xf]
      %v2322 = vld [vmem:[#allocation7 + $0x34] sm:$0xf]
      %v2323 = vld [vmem:[#allocation7 + $0x38] sm:$0xf]
      %v2324 = vld [vmem:[#allocation7 + $0x3c] sm:$0xf]
      %v2325 = vld [vmem:[#allocation13] sm:$0xff]
      %v2326 = vld [vmem:[#allocation13 + $0x8] sm:$0xff]
      %v2327 = vld [vmem:[#allocation13 + $0x10] sm:$0xff]
      %v2328 = vld [vmem:[#allocation13 + $0x18] sm:$0xff]
      %v2329 = vld [vmem:[#allocation13 + $0x20] sm:$0xff]
      %v2330 = vld [vmem:[#allocation13 + $0x28] sm:$0xff]
      %v2331 = vld [vmem:[#allocation13 + $0x30] sm:$0xff]
      %v2332 = vld [vmem:[#allocation13 + $0x38] sm:$0xff]
      %v2333 = vld [vmem:[#allocation13 + $0x40] sm:$0xff]
      %v2334 = vld [vmem:[#allocation13 + $0x48] sm:$0xff]
      %v2335 = vld [vmem:[#allocation13 + $0x50] sm:$0xff]
      %v2336 = vld [vmem:[#allocation13 + $0x58] sm:$0xff]
      %v2337 = vld [vmem:[#allocation13 + $0x60] sm:$0xff]
      %v2338 = vld [vmem:[#allocation13 + $0x68] sm:$0xff]
      %v2339 = vld [vmem:[#allocation13 + $0x70] sm:$0xff]
      %v2340 = vld [vmem:[#allocation13 + $0x78] sm:$0xff]
      %v2341 = vld [vmem:[%s10] sm:$0x3]
      %v2343 = vlaneseq
      %v2344 = vshrl.u32 %v2343, 7
      %v2345 = vsub.s32 0, %v2344
      %v2346 = vrot.slane %v2341, %v2345
      %v2347 = vlaneseq
      %v2348 = vshrl.u32 %v2347, 7
      %v2349 = vsub.s32 1, %v2348
      %v2350 = vrot.slane %v2341, %v2349
      %v2369 = vunpack.c.l.b16 %v2309
      %v2370 = vunpack.c.l.b16 %v2310
      %v2371 = vunpack.c.l.b16 %v2311
      %v2372 = vunpack.c.l.b16 %v2312
      %v2373 = vunpack.c.l.b16 %v2313
      %v2374 = vunpack.c.l.b16 %v2314
      %v2375 = vunpack.c.l.b16 %v2315
      %v2376 = vunpack.c.l.b16 %v2316
      %v2377 = vunpack.c.l.b16 %v2317
      %v2378 = vunpack.c.l.b16 %v2318
      %v2379 = vunpack.c.l.b16 %v2319
      %v2380 = vunpack.c.l.b16 %v2320
      %v2381 = vunpack.c.l.b16 %v2321
      %v2382 = vunpack.c.l.b16 %v2322
      %v2383 = vunpack.c.l.b16 %v2323
      %v2384 = vunpack.c.l.b16 %v2324
      %v2385 = vpack.c.b16 %v2370, %v2369
      %v2386 = vpack.c.b16 %v2372, %v2371
      %v2387 = vpack.c.b16 %v2374, %v2373
      %v2388 = vpack.c.b16 %v2376, %v2375
      %v2389 = vpack.c.b16 %v2378, %v2377
      %v2390 = vpack.c.b16 %v2380, %v2379
      %v2391 = vpack.c.b16 %v2382, %v2381
      %v2392 = vpack.c.b16 %v2384, %v2383
      %v2417 = vunpack.c.l.b16 %v2325
      %v2418 = vunpack.c.h.b16 %v2325
      %v2419 = vunpack.c.l.b16 %v2326
      %v2420 = vunpack.c.h.b16 %v2326
      %v2421 = vunpack.c.l.b16 %v2327
      %v2422 = vunpack.c.h.b16 %v2327
      %v2423 = vunpack.c.l.b16 %v2328
      %v2424 = vunpack.c.h.b16 %v2328
      %v2425 = vunpack.c.l.b16 %v2329
      %v2426 = vunpack.c.h.b16 %v2329
      %v2427 = vunpack.c.l.b16 %v2330
      %v2428 = vunpack.c.h.b16 %v2330
      %v2429 = vunpack.c.l.b16 %v2331
      %v2430 = vunpack.c.h.b16 %v2331
      %v2431 = vunpack.c.l.b16 %v2332
      %v2432 = vunpack.c.h.b16 %v2332
      %v2433 = vunpack.c.l.b16 %v2333
      %v2434 = vunpack.c.h.b16 %v2333
      %v2435 = vunpack.c.l.b16 %v2334
      %v2436 = vunpack.c.h.b16 %v2334
      %v2437 = vunpack.c.l.b16 %v2335
      %v2438 = vunpack.c.h.b16 %v2335
      %v2439 = vunpack.c.l.b16 %v2336
      %v2440 = vunpack.c.h.b16 %v2336
      %v2441 = vunpack.c.l.b16 %v2337
      %v2442 = vunpack.c.h.b16 %v2337
      %v2443 = vunpack.c.l.b16 %v2338
      %v2444 = vunpack.c.h.b16 %v2338
      %v2445 = vunpack.c.l.b16 %v2339
      %v2446 = vunpack.c.h.b16 %v2339
      %v2447 = vunpack.c.l.b16 %v2340
      %v2448 = vunpack.c.h.b16 %v2340
      %v2449 = vpack.c.b16 %v2419, %v2417
      %v2450 = vpack.c.b16 %v2420, %v2418
      %v2451 = vpack.c.b16 %v2423, %v2421
      %v2452 = vpack.c.b16 %v2424, %v2422
      %v2453 = vpack.c.b16 %v2427, %v2425
      %v2454 = vpack.c.b16 %v2428, %v2426
      %v2455 = vpack.c.b16 %v2431, %v2429
      %v2456 = vpack.c.b16 %v2432, %v2430
      %v2457 = vpack.c.b16 %v2435, %v2433
      %v2458 = vpack.c.b16 %v2436, %v2434
      %v2459 = vpack.c.b16 %v2439, %v2437
      %v2460 = vpack.c.b16 %v2440, %v2438
      %v2461 = vpack.c.b16 %v2443, %v2441
      %v2462 = vpack.c.b16 %v2444, %v2442
      %v2463 = vpack.c.b16 %v2447, %v2445
      %v2464 = vpack.c.b16 %v2448, %v2446
      %2481 = vmatprep.subr.bf16.mxu0 %v2450
      %2482 = vmatpush1.bf16.msra.mxu0 %v2449
      %2483 = vmatprep.subr.bf16.mxu0 %v2452
      %2484 = vmatpush1.bf16.msra.mxu0 %v2451
      %2485 = vmatprep.subr.bf16.mxu0 %v2454
      %2486 = vmatpush1.bf16.msra.mxu0 %v2453
      %2487 = vmatprep.subr.bf16.mxu0 %v2456
      %2488 = vmatpush1.bf16.msra.mxu0 %v2455
      %2489 = vmatprep.subr.bf16.mxu0 %v2458
      %2490 = vmatpush1.bf16.msra.mxu0 %v2457
      %2491 = vmatprep.subr.bf16.mxu0 %v2460
      %2492 = vmatpush1.bf16.msra.mxu0 %v2459
      %2493 = vmatprep.subr.bf16.mxu0 %v2462
      %2494 = vmatpush1.bf16.msra.mxu0 %v2461
      %2495 = vmatprep.subr.bf16.mxu0 %v2464
      %2496 = vmatpush1.bf16.msra.mxu0 %v2463
      %2497 = vmatprep.subr.bf16.mxu0 0
      %2498 = vmatpush1.bf16.msra.mxu0 0
      %2499 = vmatprep.subr.bf16.mxu0 0
      %2500 = vmatpush1.bf16.msra.mxu0 0
      %2501 = vmatprep.subr.bf16.mxu0 0
      %2502 = vmatpush1.bf16.msra.mxu0 0
      %2503 = vmatprep.subr.bf16.mxu0 0
      %2504 = vmatpush1.bf16.msra.mxu0 0
      %2505 = vmatprep.subr.bf16.mxu0 0
      %2506 = vmatpush1.bf16.msra.mxu0 0
      %2507 = vmatprep.subr.bf16.mxu0 0
      %2508 = vmatpush1.bf16.msra.mxu0 0
      %2509 = vmatprep.subr.bf16.mxu0 0
      %2510 = vmatpush1.bf16.msra.mxu0 0
      %2511 = vmatprep.subr.bf16.mxu0 0
      %2512 = vmatpush1.bf16.msra.mxu0 0
      %2513 = vmatprep.mubr.bf16.mxu0 0
      %2514 = vmatmul.mubr.bf16.gmra.mrb[0].mxu0 %v2385
      %v2515 = vpop.f32.mrb[0].mxu0
      %v2516 = vadd.f32 %v2346, %v2515
      %v2517 = vpop.f32.mrb[0].mxu0
      %v2518 = vadd.f32 %v2350, %v2517
      %v2519 = vpop.f32.mrb[0].mxu0
      %v2520 = vadd.f32 %v2346, %v2519
      %v2521 = vpop.f32.mrb[0].mxu0
      %v2522 = vadd.f32 %v2350, %v2521
      %2523 = vmatprep.mubr.bf16.mxu0 0
      %2524 = vmatmul.mubr.bf16.gmra.mrb[0].mxu0 %v2386
      %v2525 = vpop.f32.mrb[0].mxu0
      %v2526 = vadd.f32 %v2346, %v2525
      %v2527 = vpop.f32.mrb[0].mxu0
      %v2528 = vadd.f32 %v2350, %v2527
      %v2529 = vpop.f32.mrb[0].mxu0
      %v2530 = vadd.f32 %v2346, %v2529
      %v2531 = vpop.f32.mrb[0].mxu0
      %v2532 = vadd.f32 %v2350, %v2531
      %2533 = vmatprep.mubr.bf16.mxu0 0
      %2534 = vmatmul.mubr.bf16.gmra.mrb[0].mxu0 %v2387
      %v2535 = vpop.f32.mrb[0].mxu0
      %v2536 = vadd.f32 %v2346, %v2535
      %v2537 = vpop.f32.mrb[0].mxu0
      %v2538 = vadd.f32 %v2350, %v2537
      %v2539 = vpop.f32.mrb[0].mxu0
      %v2540 = vadd.f32 %v2346, %v2539
      %v2541 = vpop.f32.mrb[0].mxu0
      %v2542 = vadd.f32 %v2350, %v2541
      %2543 = vmatprep.mubr.bf16.mxu0 0
      %2544 = vmatmul.mubr.bf16.gmra.mrb[0].mxu0 %v2388
      %v2545 = vpop.f32.mrb[0].mxu0
      %v2546 = vadd.f32 %v2346, %v2545
      %v2547 = vpop.f32.mrb[0].mxu0
      %v2548 = vadd.f32 %v2350, %v2547
      %v2549 = vpop.f32.mrb[0].mxu0
      %v2550 = vadd.f32 %v2346, %v2549
      %v2551 = vpop.f32.mrb[0].mxu0
      %v2552 = vadd.f32 %v2350, %v2551
      %2553 = vmatprep.mubr.bf16.mxu0 0
      %2554 = vmatmul.mubr.bf16.gmra.mrb[0].mxu0 %v2389
      %v2555 = vpop.f32.mrb[0].mxu0
      %v2556 = vadd.f32 %v2346, %v2555
      %v2557 = vpop.f32.mrb[0].mxu0
      %v2558 = vadd.f32 %v2350, %v2557
      %v2559 = vpop.f32.mrb[0].mxu0
      %v2560 = vadd.f32 %v2346, %v2559
      %v2561 = vpop.f32.mrb[0].mxu0
      %v2562 = vadd.f32 %v2350, %v2561
      %2563 = vmatprep.mubr.bf16.mxu0 0
      %2564 = vmatmul.mubr.bf16.gmra.mrb[0].mxu0 %v2390
      %v2565 = vpop.f32.mrb[0].mxu0
      %v2566 = vadd.f32 %v2346, %v2565
      %v2567 = vpop.f32.mrb[0].mxu0
      %v2568 = vadd.f32 %v2350, %v2567
      %v2569 = vpop.f32.mrb[0].mxu0
      %v2570 = vadd.f32 %v2346, %v2569
      %v2571 = vpop.f32.mrb[0].mxu0
      %v2572 = vadd.f32 %v2350, %v2571
      %2573 = vmatprep.mubr.bf16.mxu0 0
      %2574 = vmatmul.mubr.bf16.gmra.mrb[0].mxu0 %v2391
      %v2575 = vpop.f32.mrb[0].mxu0
      %v2576 = vadd.f32 %v2346, %v2575
      %v2577 = vpop.f32.mrb[0].mxu0
      %v2578 = vadd.f32 %v2350, %v2577
      %v2579 = vpop.f32.mrb[0].mxu0
      %v2580 = vadd.f32 %v2346, %v2579
      %v2581 = vpop.f32.mrb[0].mxu0
      %v2582 = vadd.f32 %v2350, %v2581
      %2583 = vmatprep.mubr.bf16.mxu0 0
      %2584 = vmatmul.mubr.bf16.gmra.mrb[0].mxu0 %v2392
      %v2585 = vpop.f32.mrb[0].mxu0
      %v2586 = vadd.f32 %v2346, %v2585
      %v2587 = vpop.f32.mrb[0].mxu0
      %v2588 = vadd.f32 %v2350, %v2587
      %v2589 = vpop.f32.mrb[0].mxu0
      %v2590 = vadd.f32 %v2346, %v2589
      %v2591 = vpop.f32.mrb[0].mxu0
      %v2592 = vadd.f32 %v2350, %v2591
      %2593 = vdwg.mxu0
      %v2594 = vmax.f32 %v2516, 0.0
      %v2595 = vmax.f32 %v2518, 0.0
      %v2596 = vmax.f32 %v2520, 0.0
      %v2597 = vmax.f32 %v2522, 0.0
      %v2598 = vmax.f32 %v2526, 0.0
      %v2599 = vmax.f32 %v2528, 0.0
      %v2600 = vmax.f32 %v2530, 0.0
      %v2601 = vmax.f32 %v2532, 0.0
      %v2602 = vmax.f32 %v2536, 0.0
      %v2603 = vmax.f32 %v2538, 0.0
      %v2604 = vmax.f32 %v2540, 0.0
      %v2605 = vmax.f32 %v2542, 0.0
      %v2606 = vmax.f32 %v2546, 0.0
      %v2607 = vmax.f32 %v2548, 0.0
      %v2608 = vmax.f32 %v2550, 0.0
      %v2609 = vmax.f32 %v2552, 0.0
      %v2610 = vmax.f32 %v2556, 0.0
      %v2611 = vmax.f32 %v2558, 0.0
      %v2612 = vmax.f32 %v2560, 0.0
      %v2613 = vmax.f32 %v2562, 0.0
      %v2614 = vmax.f32 %v2566, 0.0
      %v2615 = vmax.f32 %v2568, 0.0
      %v2616 = vmax.f32 %v2570, 0.0
      %v2617 = vmax.f32 %v2572, 0.0
      %v2618 = vmax.f32 %v2576, 0.0
      %v2619 = vmax.f32 %v2578, 0.0
      %v2620 = vmax.f32 %v2580, 0.0
      %v2621 = vmax.f32 %v2582, 0.0
      %v2622 = vmax.f32 %v2586, 0.0
      %v2623 = vmax.f32 %v2588, 0.0
      %v2624 = vmax.f32 %v2590, 0.0
      %v2625 = vmax.f32 %v2592, 0.0
      %v2626 = vpack.c.bf16 %v2596, %v2594
      %v2627 = vpack.c.bf16 %v2597, %v2595
      %v2628 = vpack.c.bf16 %v2600, %v2598
      %v2629 = vpack.c.bf16 %v2601, %v2599
      %v2630 = vpack.c.bf16 %v2604, %v2602
      %v2631 = vpack.c.bf16 %v2605, %v2603
      %v2632 = vpack.c.bf16 %v2608, %v2606
      %v2633 = vpack.c.bf16 %v2609, %v2607
      %v2634 = vpack.c.bf16 %v2612, %v2610
      %v2635 = vpack.c.bf16 %v2613, %v2611
      %v2636 = vpack.c.bf16 %v2616, %v2614
      %v2637 = vpack.c.bf16 %v2617, %v2615
      %v2638 = vpack.c.bf16 %v2620, %v2618
      %v2639 = vpack.c.bf16 %v2621, %v2619
      %v2640 = vpack.c.bf16 %v2624, %v2622
      %v2641 = vpack.c.bf16 %v2625, %v2623
      %v2642 = vld [vmem:[#allocation15] sm:$0xff]
      %v2643 = vld [vmem:[#allocation15 + $0x8] sm:$0xff]
      %v2644 = vld [vmem:[#allocation15 + $0x10] sm:$0xff]
      %v2645 = vld [vmem:[#allocation15 + $0x18] sm:$0xff]
      %v2646 = vld [vmem:[#allocation15 + $0x20] sm:$0xff]
      %v2647 = vld [vmem:[#allocation15 + $0x28] sm:$0xff]
      %v2648 = vld [vmem:[#allocation15 + $0x30] sm:$0xff]
      %v2649 = vld [vmem:[#allocation15 + $0x38] sm:$0xff]
      %v2650 = vld [vmem:[#allocation15 + $0x40] sm:$0xff]
      %v2651 = vld [vmem:[#allocation15 + $0x48] sm:$0xff]
      %v2652 = vld [vmem:[#allocation15 + $0x50] sm:$0xff]
      %v2653 = vld [vmem:[#allocation15 + $0x58] sm:$0xff]
      %v2654 = vld [vmem:[#allocation15 + $0x60] sm:$0xff]
      %v2655 = vld [vmem:[#allocation15 + $0x68] sm:$0xff]
      %v2656 = vld [vmem:[#allocation15 + $0x70] sm:$0xff]
      %v2657 = vld [vmem:[#allocation15 + $0x78] sm:$0xff]
      %v2658 = vld [vmem:[#allocation15 + $0x80] sm:$0xff]
      %v2659 = vld [vmem:[#allocation15 + $0x88] sm:$0xff]
      %v2660 = vld [vmem:[#allocation15 + $0x90] sm:$0xff]
      %v2661 = vld [vmem:[#allocation15 + $0x98] sm:$0xff]
      %v2662 = vld [vmem:[#allocation15 + $0xa0] sm:$0xff]
      %v2663 = vld [vmem:[#allocation15 + $0xa8] sm:$0xff]
      %v2664 = vld [vmem:[#allocation15 + $0xb0] sm:$0xff]
      %v2665 = vld [vmem:[#allocation15 + $0xb8] sm:$0xff]
      %v2666 = vld [vmem:[#allocation15 + $0xc0] sm:$0xff]
      %v2667 = vld [vmem:[#allocation15 + $0xc8] sm:$0xff]
      %v2668 = vld [vmem:[#allocation15 + $0xd0] sm:$0xff]
      %v2669 = vld [vmem:[#allocation15 + $0xd8] sm:$0xff]
      %v2670 = vld [vmem:[#allocation15 + $0xe0] sm:$0xff]
      %v2671 = vld [vmem:[#allocation15 + $0xe8] sm:$0xff]
      %v2672 = vld [vmem:[#allocation15 + $0xf0] sm:$0xff]
      %v2673 = vld [vmem:[#allocation15 + $0xf8] sm:$0xff]
      %v2674 = vld [vmem:[%s12] sm:$0x3]
      %v2676 = vlaneseq
      %v2677 = vshrl.u32 %v2676, 7
      %v2678 = vsub.s32 0, %v2677
      %v2679 = vrot.slane %v2674, %v2678
      %v2680 = vlaneseq
      %v2681 = vshrl.u32 %v2680, 7
      %v2682 = vsub.s32 1, %v2681
      %v2683 = vrot.slane %v2674, %v2682
      %v2718 = vunpack.c.l.b16 %v2642
      %v2719 = vunpack.c.h.b16 %v2642
      %v2720 = vunpack.c.l.b16 %v2643
      %v2721 = vunpack.c.h.b16 %v2643
      %v2722 = vunpack.c.l.b16 %v2644
      %v2723 = vunpack.c.h.b16 %v2644
      %v2724 = vunpack.c.l.b16 %v2645
      %v2725 = vunpack.c.h.b16 %v2645
      %v2726 = vunpack.c.l.b16 %v2646
      %v2727 = vunpack.c.h.b16 %v2646
      %v2728 = vunpack.c.l.b16 %v2647
      %v2729 = vunpack.c.h.b16 %v2647
      %v2730 = vunpack.c.l.b16 %v2648
      %v2731 = vunpack.c.h.b16 %v2648
      %v2732 = vunpack.c.l.b16 %v2649
      %v2733 = vunpack.c.h.b16 %v2649
      %v2734 = vunpack.c.l.b16 %v2650
      %v2735 = vunpack.c.h.b16 %v2650
      %v2736 = vunpack.c.l.b16 %v2651
      %v2737 = vunpack.c.h.b16 %v2651
      %v2738 = vunpack.c.l.b16 %v2652
      %v2739 = vunpack.c.h.b16 %v2652
      %v2740 = vunpack.c.l.b16 %v2653
      %v2741 = vunpack.c.h.b16 %v2653
      %v2742 = vunpack.c.l.b16 %v2654
      %v2743 = vunpack.c.h.b16 %v2654
      %v2744 = vunpack.c.l.b16 %v2655
      %v2745 = vunpack.c.h.b16 %v2655
      %v2746 = vunpack.c.l.b16 %v2656
      %v2747 = vunpack.c.h.b16 %v2656
      %v2748 = vunpack.c.l.b16 %v2657
      %v2749 = vunpack.c.h.b16 %v2657
      %v2750 = vunpack.c.l.b16 %v2658
      %v2751 = vunpack.c.h.b16 %v2658
      %v2752 = vunpack.c.l.b16 %v2659
      %v2753 = vunpack.c.h.b16 %v2659
      %v2754 = vunpack.c.l.b16 %v2660
      %v2755 = vunpack.c.h.b16 %v2660
      %v2756 = vunpack.c.l.b16 %v2661
      %v2757 = vunpack.c.h.b16 %v2661
      %v2758 = vunpack.c.l.b16 %v2662
      %v2759 = vunpack.c.h.b16 %v2662
      %v2760 = vunpack.c.l.b16 %v2663
      %v2761 = vunpack.c.h.b16 %v2663
      %v2762 = vunpack.c.l.b16 %v2664
      %v2763 = vunpack.c.h.b16 %v2664
      %v2764 = vunpack.c.l.b16 %v2665
      %v2765 = vunpack.c.h.b16 %v2665
      %v2766 = vunpack.c.l.b16 %v2666
      %v2767 = vunpack.c.h.b16 %v2666
      %v2768 = vunpack.c.l.b16 %v2667
      %v2769 = vunpack.c.h.b16 %v2667
      %v2770 = vunpack.c.l.b16 %v2668
      %v2771 = vunpack.c.h.b16 %v2668
      %v2772 = vunpack.c.l.b16 %v2669
      %v2773 = vunpack.c.h.b16 %v2669
      %v2774 = vunpack.c.l.b16 %v2670
      %v2775 = vunpack.c.h.b16 %v2670
      %v2776 = vunpack.c.l.b16 %v2671
      %v2777 = vunpack.c.h.b16 %v2671
      %v2778 = vunpack.c.l.b16 %v2672
      %v2779 = vunpack.c.h.b16 %v2672
      %v2780 = vunpack.c.l.b16 %v2673
      %v2781 = vunpack.c.h.b16 %v2673
      %v2782 = vpack.c.b16 %v2720, %v2718
      %v2783 = vpack.c.b16 %v2721, %v2719
      %v2784 = vpack.c.b16 %v2724, %v2722
      %v2785 = vpack.c.b16 %v2725, %v2723
      %v2786 = vpack.c.b16 %v2728, %v2726
      %v2787 = vpack.c.b16 %v2729, %v2727
      %v2788 = vpack.c.b16 %v2732, %v2730
      %v2789 = vpack.c.b16 %v2733, %v2731
      %v2790 = vpack.c.b16 %v2736, %v2734
      %v2791 = vpack.c.b16 %v2737, %v2735
      %v2792 = vpack.c.b16 %v2740, %v2738
      %v2793 = vpack.c.b16 %v2741, %v2739
      %v2794 = vpack.c.b16 %v2744, %v2742
      %v2795 = vpack.c.b16 %v2745, %v2743
      %v2796 = vpack.c.b16 %v2748, %v2746
      %v2797 = vpack.c.b16 %v2749, %v2747
      %v2798 = vpack.c.b16 %v2752, %v2750
      %v2799 = vpack.c.b16 %v2753, %v2751
      %v2800 = vpack.c.b16 %v2756, %v2754
      %v2801 = vpack.c.b16 %v2757, %v2755
      %v2802 = vpack.c.b16 %v2760, %v2758
      %v2803 = vpack.c.b16 %v2761, %v2759
      %v2804 = vpack.c.b16 %v2764, %v2762
      %v2805 = vpack.c.b16 %v2765, %v2763
      %v2806 = vpack.c.b16 %v2768, %v2766
      %v2807 = vpack.c.b16 %v2769, %v2767
      %v2808 = vpack.c.b16 %v2772, %v2770
      %v2809 = vpack.c.b16 %v2773, %v2771
      %v2810 = vpack.c.b16 %v2776, %v2774
      %v2811 = vpack.c.b16 %v2777, %v2775
      %v2812 = vpack.c.b16 %v2780, %v2778
      %v2813 = vpack.c.b16 %v2781, %v2779
      %2846 = vmatprep.subr.bf16.mxu0 %v2783
      %2847 = vmatpush1.bf16.msra.mxu0 %v2782
      %2848 = vmatprep.subr.bf16.mxu0 %v2785
      %2849 = vmatpush1.bf16.msra.mxu0 %v2784
      %2850 = vmatprep.subr.bf16.mxu0 %v2787
      %2851 = vmatpush1.bf16.msra.mxu0 %v2786
      %2852 = vmatprep.subr.bf16.mxu0 %v2789
      %2853 = vmatpush1.bf16.msra.mxu0 %v2788
      %2854 = vmatprep.subr.bf16.mxu0 %v2791
      %2855 = vmatpush1.bf16.msra.mxu0 %v2790
      %2856 = vmatprep.subr.bf16.mxu0 %v2793
      %2857 = vmatpush1.bf16.msra.mxu0 %v2792
      %2858 = vmatprep.subr.bf16.mxu0 %v2795
      %2859 = vmatpush1.bf16.msra.mxu0 %v2794
      %2860 = vmatprep.subr.bf16.mxu0 %v2797
      %2861 = vmatpush1.bf16.msra.mxu0 %v2796
      %2862 = vmatprep.subr.bf16.mxu0 %v2799
      %2863 = vmatpush1.bf16.msra.mxu0 %v2798
      %2864 = vmatprep.subr.bf16.mxu0 %v2801
      %2865 = vmatpush1.bf16.msra.mxu0 %v2800
      %2866 = vmatprep.subr.bf16.mxu0 %v2803
      %2867 = vmatpush1.bf16.msra.mxu0 %v2802
      %2868 = vmatprep.subr.bf16.mxu0 %v2805
      %2869 = vmatpush1.bf16.msra.mxu0 %v2804
      %2870 = vmatprep.subr.bf16.mxu0 %v2807
      %2871 = vmatpush1.bf16.msra.mxu0 %v2806
      %2872 = vmatprep.subr.bf16.mxu0 %v2809
      %2873 = vmatpush1.bf16.msra.mxu0 %v2808
      %2874 = vmatprep.subr.bf16.mxu0 %v2811
      %2875 = vmatpush1.bf16.msra.mxu0 %v2810
      %2876 = vmatprep.subr.bf16.mxu0 %v2813
      %2877 = vmatpush1.bf16.msra.mxu0 %v2812
      %2878 = vmatprep.mubr.bf16.mxu0 %v2627
      %2879 = vmatmul.mubr.bf16.gmra.mrb[0].mxu0 %v2626
      %v2880 = vpop.f32.mrb[0].mxu0
      %v2881 = vadd.f32 %v2679, %v2880
      %v2882 = vpop.f32.mrb[0].mxu0
      %v2883 = vadd.f32 %v2683, %v2882
      %v2884 = vpop.f32.mrb[0].mxu0
      %v2885 = vadd.f32 %v2679, %v2884
      %v2886 = vpop.f32.mrb[0].mxu0
      %v2887 = vadd.f32 %v2683, %v2886
      %2888 = vmatprep.mubr.bf16.mxu0 %v2629
      %2889 = vmatmul.mubr.bf16.gmra.mrb[0].mxu0 %v2628
      %v2890 = vpop.f32.mrb[0].mxu0
      %v2891 = vadd.f32 %v2679, %v2890
      %v2892 = vpop.f32.mrb[0].mxu0
      %v2893 = vadd.f32 %v2683, %v2892
      %v2894 = vpop.f32.mrb[0].mxu0
      %v2895 = vadd.f32 %v2679, %v2894
      %v2896 = vpop.f32.mrb[0].mxu0
      %v2897 = vadd.f32 %v2683, %v2896
      %2898 = vmatprep.mubr.bf16.mxu0 %v2631
      %2899 = vmatmul.mubr.bf16.gmra.mrb[0].mxu0 %v2630
      %v2900 = vpop.f32.mrb[0].mxu0
      %v2901 = vadd.f32 %v2679, %v2900
      %v2902 = vpop.f32.mrb[0].mxu0
      %v2903 = vadd.f32 %v2683, %v2902
      %v2904 = vpop.f32.mrb[0].mxu0
      %v2905 = vadd.f32 %v2679, %v2904
      %v2906 = vpop.f32.mrb[0].mxu0
      %v2907 = vadd.f32 %v2683, %v2906
      %2908 = vmatprep.mubr.bf16.mxu0 %v2633
      %2909 = vmatmul.mubr.bf16.gmra.mrb[0].mxu0 %v2632
      %v2910 = vpop.f32.mrb[0].mxu0
      %v2911 = vadd.f32 %v2679, %v2910
      %v2912 = vpop.f32.mrb[0].mxu0
      %v2913 = vadd.f32 %v2683, %v2912
      %v2914 = vpop.f32.mrb[0].mxu0
      %v2915 = vadd.f32 %v2679, %v2914
      %v2916 = vpop.f32.mrb[0].mxu0
      %v2917 = vadd.f32 %v2683, %v2916
      %2918 = vmatprep.mubr.bf16.mxu0 %v2635
      %2919 = vmatmul.mubr.bf16.gmra.mrb[0].mxu0 %v2634
      %v2920 = vpop.f32.mrb[0].mxu0
      %v2921 = vadd.f32 %v2679, %v2920
      %v2922 = vpop.f32.mrb[0].mxu0
      %v2923 = vadd.f32 %v2683, %v2922
      %v2924 = vpop.f32.mrb[0].mxu0
      %v2925 = vadd.f32 %v2679, %v2924
      %v2926 = vpop.f32.mrb[0].mxu0
      %v2927 = vadd.f32 %v2683, %v2926
      %2928 = vmatprep.mubr.bf16.mxu0 %v2637
      %2929 = vmatmul.mubr.bf16.gmra.mrb[0].mxu0 %v2636
      %v2930 = vpop.f32.mrb[0].mxu0
      %v2931 = vadd.f32 %v2679, %v2930
      %v2932 = vpop.f32.mrb[0].mxu0
      %v2933 = vadd.f32 %v2683, %v2932
      %v2934 = vpop.f32.mrb[0].mxu0
      %v2935 = vadd.f32 %v2679, %v2934
      %v2936 = vpop.f32.mrb[0].mxu0
      %v2937 = vadd.f32 %v2683, %v2936
      %2938 = vmatprep.mubr.bf16.mxu0 %v2639
      %2939 = vmatmul.mubr.bf16.gmra.mrb[0].mxu0 %v2638
      %v2940 = vpop.f32.mrb[0].mxu0
      %v2941 = vadd.f32 %v2679, %v2940
      %v2942 = vpop.f32.mrb[0].mxu0
      %v2943 = vadd.f32 %v2683, %v2942
      %v2944 = vpop.f32.mrb[0].mxu0
      %v2945 = vadd.f32 %v2679, %v2944
      %v2946 = vpop.f32.mrb[0].mxu0
      %v2947 = vadd.f32 %v2683, %v2946
      %2948 = vmatprep.mubr.bf16.mxu0 %v2641
      %2949 = vmatmul.mubr.bf16.gmra.mrb[0].mxu0 %v2640
      %v2950 = vpop.f32.mrb[0].mxu0
      %v2951 = vadd.f32 %v2679, %v2950
      %v2952 = vpop.f32.mrb[0].mxu0
      %v2953 = vadd.f32 %v2683, %v2952
      %v2954 = vpop.f32.mrb[0].mxu0
      %v2955 = vadd.f32 %v2679, %v2954
      %v2956 = vpop.f32.mrb[0].mxu0
      %v2957 = vadd.f32 %v2683, %v2956
      %2958 = vdwg.mxu0
      %v2959 = vmax.f32 %v2881, 0.0
      %v2960 = vmax.f32 %v2883, 0.0
      %v2961 = vmax.f32 %v2885, 0.0
      %v2962 = vmax.f32 %v2887, 0.0
      %v2963 = vmax.f32 %v2891, 0.0
      %v2964 = vmax.f32 %v2893, 0.0
      %v2965 = vmax.f32 %v2895, 0.0
      %v2966 = vmax.f32 %v2897, 0.0
      %v2967 = vmax.f32 %v2901, 0.0
      %v2968 = vmax.f32 %v2903, 0.0
      %v2969 = vmax.f32 %v2905, 0.0
      %v2970 = vmax.f32 %v2907, 0.0
      %v2971 = vmax.f32 %v2911, 0.0
      %v2972 = vmax.f32 %v2913, 0.0
      %v2973 = vmax.f32 %v2915, 0.0
      %v2974 = vmax.f32 %v2917, 0.0
      %v2975 = vmax.f32 %v2921, 0.0
      %v2976 = vmax.f32 %v2923, 0.0
      %v2977 = vmax.f32 %v2925, 0.0
      %v2978 = vmax.f32 %v2927, 0.0
      %v2979 = vmax.f32 %v2931, 0.0
      %v2980 = vmax.f32 %v2933, 0.0
      %v2981 = vmax.f32 %v2935, 0.0
      %v2982 = vmax.f32 %v2937, 0.0
      %v2983 = vmax.f32 %v2941, 0.0
      %v2984 = vmax.f32 %v2943, 0.0
      %v2985 = vmax.f32 %v2945, 0.0
      %v2986 = vmax.f32 %v2947, 0.0
      %v2987 = vmax.f32 %v2951, 0.0
      %v2988 = vmax.f32 %v2953, 0.0
      %v2989 = vmax.f32 %v2955, 0.0
      %v2990 = vmax.f32 %v2957, 0.0
      %v2991 = vpack.c.bf16 %v2961, %v2959
      %v2992 = vpack.c.bf16 %v2962, %v2960
      %v2993 = vpack.c.bf16 %v2965, %v2963
      %v2994 = vpack.c.bf16 %v2966, %v2964
      %v2995 = vpack.c.bf16 %v2969, %v2967
      %v2996 = vpack.c.bf16 %v2970, %v2968
      %v2997 = vpack.c.bf16 %v2973, %v2971
      %v2998 = vpack.c.bf16 %v2974, %v2972
      %v2999 = vpack.c.bf16 %v2977, %v2975
      %v3000 = vpack.c.bf16 %v2978, %v2976
      %v3001 = vpack.c.bf16 %v2981, %v2979
      %v3002 = vpack.c.bf16 %v2982, %v2980
      %v3003 = vpack.c.bf16 %v2985, %v2983
      %v3004 = vpack.c.bf16 %v2986, %v2984
      %v3005 = vpack.c.bf16 %v2989, %v2987
      %v3006 = vpack.c.bf16 %v2990, %v2988
      %v3007 = vld [vmem:[#allocation16] sm:$0xff]
      %v3008 = vld [vmem:[#allocation16 + $0x8] sm:$0xff]
      %v3009 = vld [vmem:[#allocation16 + $0x10] sm:$0xff]
      %v3010 = vld [vmem:[#allocation16 + $0x18] sm:$0xff]
      %v3011 = vld [vmem:[#allocation16 + $0x20] sm:$0xff]
      %v3012 = vld [vmem:[#allocation16 + $0x28] sm:$0xff]
      %v3013 = vld [vmem:[#allocation16 + $0x30] sm:$0xff]
      %v3014 = vld [vmem:[#allocation16 + $0x38] sm:$0xff]
      %v3015 = vld [vmem:[#allocation16 + $0x40] sm:$0xff]
      %v3016 = vld [vmem:[#allocation16 + $0x48] sm:$0xff]
      %v3017 = vld [vmem:[#allocation16 + $0x50] sm:$0xff]
      %v3018 = vld [vmem:[#allocation16 + $0x58] sm:$0xff]
      %v3019 = vld [vmem:[#allocation16 + $0x60] sm:$0xff]
      %v3020 = vld [vmem:[#allocation16 + $0x68] sm:$0xff]
      %v3021 = vld [vmem:[#allocation16 + $0x70] sm:$0xff]
      %v3022 = vld [vmem:[#allocation16 + $0x78] sm:$0xff]
      %v3023 = vld [vmem:[#allocation16 + $0x80] sm:$0xff]
      %v3024 = vld [vmem:[#allocation16 + $0x88] sm:$0xff]
      %v3025 = vld [vmem:[#allocation16 + $0x90] sm:$0xff]
      %v3026 = vld [vmem:[#allocation16 + $0x98] sm:$0xff]
      %v3027 = vld [vmem:[#allocation16 + $0xa0] sm:$0xff]
      %v3028 = vld [vmem:[#allocation16 + $0xa8] sm:$0xff]
      %v3029 = vld [vmem:[#allocation16 + $0xb0] sm:$0xff]
      %v3030 = vld [vmem:[#allocation16 + $0xb8] sm:$0xff]
      %v3031 = vld [vmem:[#allocation16 + $0xc0] sm:$0xff]
      %v3032 = vld [vmem:[#allocation16 + $0xc8] sm:$0xff]
      %v3033 = vld [vmem:[#allocation16 + $0xd0] sm:$0xff]
      %v3034 = vld [vmem:[#allocation16 + $0xd8] sm:$0xff]
      %v3035 = vld [vmem:[#allocation16 + $0xe0] sm:$0xff]
      %v3036 = vld [vmem:[#allocation16 + $0xe8] sm:$0xff]
      %v3037 = vld [vmem:[#allocation16 + $0xf0] sm:$0xff]
      %v3038 = vld [vmem:[#allocation16 + $0xf8] sm:$0xff]
      %v3039 = vld [vmem:[%s14] sm:$0x3]
      %v3041 = vlaneseq
      %v3042 = vshrl.u32 %v3041, 7
      %v3043 = vsub.s32 0, %v3042
      %v3044 = vrot.slane %v3039, %v3043
      %v3045 = vlaneseq
      %v3046 = vshrl.u32 %v3045, 7
      %v3047 = vsub.s32 1, %v3046
      %v3048 = vrot.slane %v3039, %v3047
      %v3083 = vunpack.c.l.b16 %v3007
      %v3084 = vunpack.c.h.b16 %v3007
      %v3085 = vunpack.c.l.b16 %v3008
      %v3086 = vunpack.c.h.b16 %v3008
      %v3087 = vunpack.c.l.b16 %v3009
      %v3088 = vunpack.c.h.b16 %v3009
      %v3089 = vunpack.c.l.b16 %v3010
      %v3090 = vunpack.c.h.b16 %v3010
      %v3091 = vunpack.c.l.b16 %v3011
      %v3092 = vunpack.c.h.b16 %v3011
      %v3093 = vunpack.c.l.b16 %v3012
      %v3094 = vunpack.c.h.b16 %v3012
      %v3095 = vunpack.c.l.b16 %v3013
      %v3096 = vunpack.c.h.b16 %v3013
      %v3097 = vunpack.c.l.b16 %v3014
      %v3098 = vunpack.c.h.b16 %v3014
      %v3099 = vunpack.c.l.b16 %v3015
      %v3100 = vunpack.c.h.b16 %v3015
      %v3101 = vunpack.c.l.b16 %v3016
      %v3102 = vunpack.c.h.b16 %v3016
      %v3103 = vunpack.c.l.b16 %v3017
      %v3104 = vunpack.c.h.b16 %v3017
      %v3105 = vunpack.c.l.b16 %v3018
      %v3106 = vunpack.c.h.b16 %v3018
      %v3107 = vunpack.c.l.b16 %v3019
      %v3108 = vunpack.c.h.b16 %v3019
      %v3109 = vunpack.c.l.b16 %v3020
      %v3110 = vunpack.c.h.b16 %v3020
      %v3111 = vunpack.c.l.b16 %v3021
      %v3112 = vunpack.c.h.b16 %v3021
      %v3113 = vunpack.c.l.b16 %v3022
      %v3114 = vunpack.c.h.b16 %v3022
      %v3115 = vunpack.c.l.b16 %v3023
      %v3116 = vunpack.c.h.b16 %v3023
      %v3117 = vunpack.c.l.b16 %v3024
      %v3118 = vunpack.c.h.b16 %v3024
      %v3119 = vunpack.c.l.b16 %v3025
      %v3120 = vunpack.c.h.b16 %v3025
      %v3121 = vunpack.c.l.b16 %v3026
      %v3122 = vunpack.c.h.b16 %v3026
      %v3123 = vunpack.c.l.b16 %v3027
      %v3124 = vunpack.c.h.b16 %v3027
      %v3125 = vunpack.c.l.b16 %v3028
      %v3126 = vunpack.c.h.b16 %v3028
      %v3127 = vunpack.c.l.b16 %v3029
      %v3128 = vunpack.c.h.b16 %v3029
      %v3129 = vunpack.c.l.b16 %v3030
      %v3130 = vunpack.c.h.b16 %v3030
      %v3131 = vunpack.c.l.b16 %v3031
      %v3132 = vunpack.c.h.b16 %v3031
      %v3133 = vunpack.c.l.b16 %v3032
      %v3134 = vunpack.c.h.b16 %v3032
      %v3135 = vunpack.c.l.b16 %v3033
      %v3136 = vunpack.c.h.b16 %v3033
      %v3137 = vunpack.c.l.b16 %v3034
      %v3138 = vunpack.c.h.b16 %v3034
      %v3139 = vunpack.c.l.b16 %v3035
      %v3140 = vunpack.c.h.b16 %v3035
      %v3141 = vunpack.c.l.b16 %v3036
      %v3142 = vunpack.c.h.b16 %v3036
      %v3143 = vunpack.c.l.b16 %v3037
      %v3144 = vunpack.c.h.b16 %v3037
      %v3145 = vunpack.c.l.b16 %v3038
      %v3146 = vunpack.c.h.b16 %v3038
      %v3147 = vpack.c.b16 %v3085, %v3083
      %v3148 = vpack.c.b16 %v3086, %v3084
      %v3149 = vpack.c.b16 %v3089, %v3087
      %v3150 = vpack.c.b16 %v3090, %v3088
      %v3151 = vpack.c.b16 %v3093, %v3091
      %v3152 = vpack.c.b16 %v3094, %v3092
      %v3153 = vpack.c.b16 %v3097, %v3095
      %v3154 = vpack.c.b16 %v3098, %v3096
      %v3155 = vpack.c.b16 %v3101, %v3099
      %v3156 = vpack.c.b16 %v3102, %v3100
      %v3157 = vpack.c.b16 %v3105, %v3103
      %v3158 = vpack.c.b16 %v3106, %v3104
      %v3159 = vpack.c.b16 %v3109, %v3107
      %v3160 = vpack.c.b16 %v3110, %v3108
      %v3161 = vpack.c.b16 %v3113, %v3111
      %v3162 = vpack.c.b16 %v3114, %v3112
      %v3163 = vpack.c.b16 %v3117, %v3115
      %v3164 = vpack.c.b16 %v3118, %v3116
      %v3165 = vpack.c.b16 %v3121, %v3119
      %v3166 = vpack.c.b16 %v3122, %v3120
      %v3167 = vpack.c.b16 %v3125, %v3123
      %v3168 = vpack.c.b16 %v3126, %v3124
      %v3169 = vpack.c.b16 %v3129, %v3127
      %v3170 = vpack.c.b16 %v3130, %v3128
      %v3171 = vpack.c.b16 %v3133, %v3131
      %v3172 = vpack.c.b16 %v3134, %v3132
      %v3173 = vpack.c.b16 %v3137, %v3135
      %v3174 = vpack.c.b16 %v3138, %v3136
      %v3175 = vpack.c.b16 %v3141, %v3139
      %v3176 = vpack.c.b16 %v3142, %v3140
      %v3177 = vpack.c.b16 %v3145, %v3143
      %v3178 = vpack.c.b16 %v3146, %v3144
      %3211 = vmatprep.subr.bf16.mxu0 %v3148
      %3212 = vmatpush1.bf16.msra.mxu0 %v3147
      %3213 = vmatprep.subr.bf16.mxu0 %v3150
      %3214 = vmatpush1.bf16.msra.mxu0 %v3149
      %3215 = vmatprep.subr.bf16.mxu0 %v3152
      %3216 = vmatpush1.bf16.msra.mxu0 %v3151
      %3217 = vmatprep.subr.bf16.mxu0 %v3154
      %3218 = vmatpush1.bf16.msra.mxu0 %v3153
      %3219 = vmatprep.subr.bf16.mxu0 %v3156
      %3220 = vmatpush1.bf16.msra.mxu0 %v3155
      %3221 = vmatprep.subr.bf16.mxu0 %v3158
      %3222 = vmatpush1.bf16.msra.mxu0 %v3157
      %3223 = vmatprep.subr.bf16.mxu0 %v3160
      %3224 = vmatpush1.bf16.msra.mxu0 %v3159
      %3225 = vmatprep.subr.bf16.mxu0 %v3162
      %3226 = vmatpush1.bf16.msra.mxu0 %v3161
      %3227 = vmatprep.subr.bf16.mxu0 %v3164
      %3228 = vmatpush1.bf16.msra.mxu0 %v3163
      %3229 = vmatprep.subr.bf16.mxu0 %v3166
      %3230 = vmatpush1.bf16.msra.mxu0 %v3165
      %3231 = vmatprep.subr.bf16.mxu0 %v3168
      %3232 = vmatpush1.bf16.msra.mxu0 %v3167
      %3233 = vmatprep.subr.bf16.mxu0 %v3170
      %3234 = vmatpush1.bf16.msra.mxu0 %v3169
      %3235 = vmatprep.subr.bf16.mxu0 %v3172
      %3236 = vmatpush1.bf16.msra.mxu0 %v3171
      %3237 = vmatprep.subr.bf16.mxu0 %v3174
      %3238 = vmatpush1.bf16.msra.mxu0 %v3173
      %3239 = vmatprep.subr.bf16.mxu0 %v3176
      %3240 = vmatpush1.bf16.msra.mxu0 %v3175
      %3241 = vmatprep.subr.bf16.mxu0 %v3178
      %3242 = vmatpush1.bf16.msra.mxu0 %v3177
      %3243 = vmatprep.mubr.bf16.mxu0 %v2992
      %3244 = vmatmul.mubr.bf16.gmra.mrb[0].mxu0 %v2991
      %v3245 = vpop.f32.mrb[0].mxu0
      %v3246 = vadd.f32 %v3044, %v3245
      %v3247 = vpop.f32.mrb[0].mxu0
      %v3248 = vadd.f32 %v3048, %v3247
      %v3249 = vpop.f32.mrb[0].mxu0
      %v3250 = vadd.f32 %v3044, %v3249
      %v3251 = vpop.f32.mrb[0].mxu0
      %v3252 = vadd.f32 %v3048, %v3251
      %3253 = vmatprep.mubr.bf16.mxu0 %v2994
      %3254 = vmatmul.mubr.bf16.gmra.mrb[0].mxu0 %v2993
      %v3255 = vpop.f32.mrb[0].mxu0
      %v3256 = vadd.f32 %v3044, %v3255
      %v3257 = vpop.f32.mrb[0].mxu0
      %v3258 = vadd.f32 %v3048, %v3257
      %v3259 = vpop.f32.mrb[0].mxu0
      %v3260 = vadd.f32 %v3044, %v3259
      %v3261 = vpop.f32.mrb[0].mxu0
      %v3262 = vadd.f32 %v3048, %v3261
      %3263 = vmatprep.mubr.bf16.mxu0 %v2996
      %3264 = vmatmul.mubr.bf16.gmra.mrb[0].mxu0 %v2995
      %v3265 = vpop.f32.mrb[0].mxu0
      %v3266 = vadd.f32 %v3044, %v3265
      %v3267 = vpop.f32.mrb[0].mxu0
      %v3268 = vadd.f32 %v3048, %v3267
      %v3269 = vpop.f32.mrb[0].mxu0
      %v3270 = vadd.f32 %v3044, %v3269
      %v3271 = vpop.f32.mrb[0].mxu0
      %v3272 = vadd.f32 %v3048, %v3271
      %3273 = vmatprep.mubr.bf16.mxu0 %v2998
      %3274 = vmatmul.mubr.bf16.gmra.mrb[0].mxu0 %v2997
      %v3275 = vpop.f32.mrb[0].mxu0
      %v3276 = vadd.f32 %v3044, %v3275
      %v3277 = vpop.f32.mrb[0].mxu0
      %v3278 = vadd.f32 %v3048, %v3277
      %v3279 = vpop.f32.mrb[0].mxu0
      %v3280 = vadd.f32 %v3044, %v3279
      %v3281 = vpop.f32.mrb[0].mxu0
      %v3282 = vadd.f32 %v3048, %v3281
      %3283 = vmatprep.mubr.bf16.mxu0 %v3000
      %3284 = vmatmul.mubr.bf16.gmra.mrb[0].mxu0 %v2999
      %v3285 = vpop.f32.mrb[0].mxu0
      %v3286 = vadd.f32 %v3044, %v3285
      %v3287 = vpop.f32.mrb[0].mxu0
      %v3288 = vadd.f32 %v3048, %v3287
      %v3289 = vpop.f32.mrb[0].mxu0
      %v3290 = vadd.f32 %v3044, %v3289
      %v3291 = vpop.f32.mrb[0].mxu0
      %v3292 = vadd.f32 %v3048, %v3291
      %3293 = vmatprep.mubr.bf16.mxu0 %v3002
      %3294 = vmatmul.mubr.bf16.gmra.mrb[0].mxu0 %v3001
      %v3295 = vpop.f32.mrb[0].mxu0
      %v3296 = vadd.f32 %v3044, %v3295
      %v3297 = vpop.f32.mrb[0].mxu0
      %v3298 = vadd.f32 %v3048, %v3297
      %v3299 = vpop.f32.mrb[0].mxu0
      %v3300 = vadd.f32 %v3044, %v3299
      %v3301 = vpop.f32.mrb[0].mxu0
      %v3302 = vadd.f32 %v3048, %v3301
      %3303 = vmatprep.mubr.bf16.mxu0 %v3004
      %3304 = vmatmul.mubr.bf16.gmra.mrb[0].mxu0 %v3003
      %v3305 = vpop.f32.mrb[0].mxu0
      %v3306 = vadd.f32 %v3044, %v3305
      %v3307 = vpop.f32.mrb[0].mxu0
      %v3308 = vadd.f32 %v3048, %v3307
      %v3309 = vpop.f32.mrb[0].mxu0
      %v3310 = vadd.f32 %v3044, %v3309
      %v3311 = vpop.f32.mrb[0].mxu0
      %v3312 = vadd.f32 %v3048, %v3311
      %3313 = vmatprep.mubr.bf16.mxu0 %v3006
      %3314 = vmatmul.mubr.bf16.gmra.mrb[0].mxu0 %v3005
      %v3315 = vpop.f32.mrb[0].mxu0
      %v3316 = vadd.f32 %v3044, %v3315
      %v3317 = vpop.f32.mrb[0].mxu0
      %v3318 = vadd.f32 %v3048, %v3317
      %v3319 = vpop.f32.mrb[0].mxu0
      %v3320 = vadd.f32 %v3044, %v3319
      %v3321 = vpop.f32.mrb[0].mxu0
      %v3322 = vadd.f32 %v3048, %v3321
      %3323 = vdwg.mxu0
      %v3324 = vmul.f32 %v2231, %v2231
      %v3325 = vmul.f32 %v2233, %v2233
      %v3326 = vmul.f32 %v2235, %v2235
      %v3327 = vmul.f32 %v2237, %v2237
      %v3328 = vmul.f32 %v2241, %v2241
      %v3329 = vmul.f32 %v2243, %v2243
      %v3330 = vmul.f32 %v2245, %v2245
      %v3331 = vmul.f32 %v2247, %v2247
      %v3332 = vmul.f32 %v2251, %v2251
      %v3333 = vmul.f32 %v2253, %v2253
      %v3334 = vmul.f32 %v2255, %v2255
      %v3335 = vmul.f32 %v2257, %v2257
      %v3336 = vmul.f32 %v2261, %v2261
      %v3337 = vmul.f32 %v2263, %v2263
      %v3338 = vmul.f32 %v2265, %v2265
      %v3339 = vmul.f32 %v2267, %v2267
      %v3340 = vmul.f32 %v2271, %v2271
      %v3341 = vmul.f32 %v2273, %v2273
      %v3342 = vmul.f32 %v2275, %v2275
      %v3343 = vmul.f32 %v2277, %v2277
      %v3344 = vmul.f32 %v2281, %v2281
      %v3345 = vmul.f32 %v2283, %v2283
      %v3346 = vmul.f32 %v2285, %v2285
      %v3347 = vmul.f32 %v2287, %v2287
      %v3348 = vmul.f32 %v2291, %v2291
      %v3349 = vmul.f32 %v2293, %v2293
      %v3350 = vmul.f32 %v2295, %v2295
      %v3351 = vmul.f32 %v2297, %v2297
      %v3352 = vmul.f32 %v2301, %v2301
      %v3353 = vmul.f32 %v2303, %v2303
      %v3354 = vmul.f32 %v2305, %v2305
      %v3355 = vmul.f32 %v2307, %v2307
      %v3356 = vadd.f32 %v3324, %v3325
      %3357 = vadd.xlane.f32.xlu0 %v3356
      %v3358 = vpop.xlane.xlu0 %3357
      %v3359 = vadd.f32 %v3326, %v3327
      %3360 = vadd.xlane.f32.xlu0 %v3359
      %v3361 = vpop.xlane.xlu0 %3360
      %v3362 = vadd.f32 %v3328, %v3329
      %3363 = vadd.xlane.f32.xlu0 %v3362
      %v3364 = vpop.xlane.xlu0 %3363
      %v3365 = vadd.f32 %v3330, %v3331
      %3366 = vadd.xlane.f32.xlu0 %v3365
      %v3367 = vpop.xlane.xlu0 %3366
      %v3368 = vadd.f32 %v3332, %v3333
      %3369 = vadd.xlane.f32.xlu0 %v3368
      %v3370 = vpop.xlane.xlu0 %3369
      %v3371 = vadd.f32 %v3334, %v3335
      %3372 = vadd.xlane.f32.xlu0 %v3371
      %v3373 = vpop.xlane.xlu0 %3372
      %v3374 = vadd.f32 %v3336, %v3337
      %3375 = vadd.xlane.f32.xlu0 %v3374
      %v3376 = vpop.xlane.xlu0 %3375
      %v3377 = vadd.f32 %v3338, %v3339
      %3378 = vadd.xlane.f32.xlu0 %v3377
      %v3379 = vpop.xlane.xlu0 %3378
      %v3380 = vadd.f32 %v3340, %v3341
      %3381 = vadd.xlane.f32.xlu0 %v3380
      %v3382 = vpop.xlane.xlu0 %3381
      %v3383 = vadd.f32 %v3342, %v3343
      %3384 = vadd.xlane.f32.xlu0 %v3383
      %v3385 = vpop.xlane.xlu0 %3384
      %v3386 = vadd.f32 %v3344, %v3345
      %3387 = vadd.xlane.f32.xlu0 %v3386
      %v3388 = vpop.xlane.xlu0 %3387
      %v3389 = vadd.f32 %v3346, %v3347
      %3390 = vadd.xlane.f32.xlu0 %v3389
      %v3391 = vpop.xlane.xlu0 %3390
      %v3392 = vadd.f32 %v3348, %v3349
      %3393 = vadd.xlane.f32.xlu0 %v3392
      %v3394 = vpop.xlane.xlu0 %3393
      %v3395 = vadd.f32 %v3350, %v3351
      %3396 = vadd.xlane.f32.xlu0 %v3395
      %v3397 = vpop.xlane.xlu0 %3396
      %v3398 = vadd.f32 %v3352, %v3353
      %3399 = vadd.xlane.f32.xlu0 %v3398
      %v3400 = vpop.xlane.xlu0 %3399
      %v3401 = vadd.f32 %v3354, %v3355
      %3402 = vadd.xlane.f32.xlu0 %v3401
      %v3403 = vpop.xlane.xlu0 %3402
      %v3404 = vmax.f32 %v3358, 1e-24
      %v3405 = vmax.f32 %v3361, 1e-24
      %v3406 = vmax.f32 %v3364, 1e-24
      %v3407 = vmax.f32 %v3367, 1e-24
      %v3408 = vmax.f32 %v3370, 1e-24
      %v3409 = vmax.f32 %v3373, 1e-24
      %v3410 = vmax.f32 %v3376, 1e-24
      %v3411 = vmax.f32 %v3379, 1e-24
      %v3412 = vmax.f32 %v3382, 1e-24
      %v3413 = vmax.f32 %v3385, 1e-24
      %v3414 = vmax.f32 %v3388, 1e-24
      %v3415 = vmax.f32 %v3391, 1e-24
      %v3416 = vmax.f32 %v3394, 1e-24
      %v3417 = vmax.f32 %v3397, 1e-24
      %v3418 = vmax.f32 %v3400, 1e-24
      %v3419 = vmax.f32 %v3403, 1e-24
      %v3420 = vrsqrt.pop %v3404
      %v3421 = vrsqrt.pop %v3405
      %v3422 = vrsqrt.pop %v3406
      %v3423 = vrsqrt.pop %v3407
      %v3424 = vrsqrt.pop %v3408
      %v3425 = vrsqrt.pop %v3409
      %v3426 = vrsqrt.pop %v3410
      %v3427 = vrsqrt.pop %v3411
      %v3428 = vrsqrt.pop %v3412
      %v3429 = vrsqrt.pop %v3413
      %v3430 = vrsqrt.pop %v3414
      %v3431 = vrsqrt.pop %v3415
      %v3432 = vrsqrt.pop %v3416
      %v3433 = vrsqrt.pop %v3417
      %v3434 = vrsqrt.pop %v3418
      %v3435 = vrsqrt.pop %v3419
      %v3436 = vmul.f32 %v2231, %v3420
      %v3437 = vmul.f32 %v2233, %v3420
      %v3438 = vmul.f32 %v2235, %v3421
      %v3439 = vmul.f32 %v2237, %v3421
      %v3440 = vmul.f32 %v2241, %v3422
      %v3441 = vmul.f32 %v2243, %v3422
      %v3442 = vmul.f32 %v2245, %v3423
      %v3443 = vmul.f32 %v2247, %v3423
      %v3444 = vmul.f32 %v2251, %v3424
      %v3445 = vmul.f32 %v2253, %v3424
      %v3446 = vmul.f32 %v2255, %v3425
      %v3447 = vmul.f32 %v2257, %v3425
      %v3448 = vmul.f32 %v2261, %v3426
      %v3449 = vmul.f32 %v2263, %v3426
      %v3450 = vmul.f32 %v2265, %v3427
      %v3451 = vmul.f32 %v2267, %v3427
      %v3452 = vmul.f32 %v2271, %v3428
      %v3453 = vmul.f32 %v2273, %v3428
      %v3454 = vmul.f32 %v2275, %v3429
      %v3455 = vmul.f32 %v2277, %v3429
      %v3456 = vmul.f32 %v2281, %v3430
      %v3457 = vmul.f32 %v2283, %v3430
      %v3458 = vmul.f32 %v2285, %v3431
      %v3459 = vmul.f32 %v2287, %v3431
      %v3460 = vmul.f32 %v2291, %v3432
      %v3461 = vmul.f32 %v2293, %v3432
      %v3462 = vmul.f32 %v2295, %v3433
      %v3463 = vmul.f32 %v2297, %v3433
      %v3464 = vmul.f32 %v2301, %v3434
      %v3465 = vmul.f32 %v2303, %v3434
      %v3466 = vmul.f32 %v2305, %v3435
      %v3467 = vmul.f32 %v2307, %v3435
      %v3468 = vmul.f32 %v3246, %v3246
      %v3469 = vmul.f32 %v3248, %v3248
      %v3470 = vmul.f32 %v3250, %v3250
      %v3471 = vmul.f32 %v3252, %v3252
      %v3472 = vmul.f32 %v3256, %v3256
      %v3473 = vmul.f32 %v3258, %v3258
      %v3474 = vmul.f32 %v3260, %v3260
      %v3475 = vmul.f32 %v3262, %v3262
      %v3476 = vmul.f32 %v3266, %v3266
      %v3477 = vmul.f32 %v3268, %v3268
      %v3478 = vmul.f32 %v3270, %v3270
      %v3479 = vmul.f32 %v3272, %v3272
      %v3480 = vmul.f32 %v3276, %v3276
      %v3481 = vmul.f32 %v3278, %v3278
      %v3482 = vmul.f32 %v3280, %v3280
      %v3483 = vmul.f32 %v3282, %v3282
      %v3484 = vmul.f32 %v3286, %v3286
      %v3485 = vmul.f32 %v3288, %v3288
      %v3486 = vmul.f32 %v3290, %v3290
      %v3487 = vmul.f32 %v3292, %v3292
      %v3488 = vmul.f32 %v3296, %v3296
      %v3489 = vmul.f32 %v3298, %v3298
      %v3490 = vmul.f32 %v3300, %v3300
      %v3491 = vmul.f32 %v3302, %v3302
      %v3492 = vmul.f32 %v3306, %v3306
      %v3493 = vmul.f32 %v3308, %v3308
      %v3494 = vmul.f32 %v3310, %v3310
      %v3495 = vmul.f32 %v3312, %v3312
      %v3496 = vmul.f32 %v3316, %v3316
      %v3497 = vmul.f32 %v3318, %v3318
      %v3498 = vmul.f32 %v3320, %v3320
      %v3499 = vmul.f32 %v3322, %v3322
      %v3500 = vadd.f32 %v3468, %v3469
      %3501 = vadd.xlane.f32.xlu0 %v3500
      %v3502 = vpop.xlane.xlu0 %3501
      %v3503 = vadd.f32 %v3470, %v3471
      %3504 = vadd.xlane.f32.xlu0 %v3503
      %v3505 = vpop.xlane.xlu0 %3504
      %v3506 = vadd.f32 %v3472, %v3473
      %3507 = vadd.xlane.f32.xlu0 %v3506
      %v3508 = vpop.xlane.xlu0 %3507
      %v3509 = vadd.f32 %v3474, %v3475
      %3510 = vadd.xlane.f32.xlu0 %v3509
      %v3511 = vpop.xlane.xlu0 %3510
      %v3512 = vadd.f32 %v3476, %v3477
      %3513 = vadd.xlane.f32.xlu0 %v3512
      %v3514 = vpop.xlane.xlu0 %3513
      %v3515 = vadd.f32 %v3478, %v3479
      %3516 = vadd.xlane.f32.xlu0 %v3515
      %v3517 = vpop.xlane.xlu0 %3516
      %v3518 = vadd.f32 %v3480, %v3481
      %3519 = vadd.xlane.f32.xlu0 %v3518
      %v3520 = vpop.xlane.xlu0 %3519
      %v3521 = vadd.f32 %v3482, %v3483
      %3522 = vadd.xlane.f32.xlu0 %v3521
      %v3523 = vpop.xlane.xlu0 %3522
      %v3524 = vadd.f32 %v3484, %v3485
      %3525 = vadd.xlane.f32.xlu0 %v3524
      %v3526 = vpop.xlane.xlu0 %3525
      %v3527 = vadd.f32 %v3486, %v3487
      %3528 = vadd.xlane.f32.xlu0 %v3527
      %v3529 = vpop.xlane.xlu0 %3528
      %v3530 = vadd.f32 %v3488, %v3489
      %3531 = vadd.xlane.f32.xlu0 %v3530
      %v3532 = vpop.xlane.xlu0 %3531
      %v3533 = vadd.f32 %v3490, %v3491
      %3534 = vadd.xlane.f32.xlu0 %v3533
      %v3535 = vpop.xlane.xlu0 %3534
      %v3536 = vadd.f32 %v3492, %v3493
      %3537 = vadd.xlane.f32.xlu0 %v3536
      %v3538 = vpop.xlane.xlu0 %3537
      %v3539 = vadd.f32 %v3494, %v3495
      %3540 = vadd.xlane.f32.xlu0 %v3539
      %v3541 = vpop.xlane.xlu0 %3540
      %v3542 = vadd.f32 %v3496, %v3497
      %3543 = vadd.xlane.f32.xlu0 %v3542
      %v3544 = vpop.xlane.xlu0 %3543
      %v3545 = vadd.f32 %v3498, %v3499
      %3546 = vadd.xlane.f32.xlu0 %v3545
      %v3547 = vpop.xlane.xlu0 %3546
      %v3548 = vmax.f32 %v3502, 1e-24
      %v3549 = vmax.f32 %v3505, 1e-24
      %v3550 = vmax.f32 %v3508, 1e-24
      %v3551 = vmax.f32 %v3511, 1e-24
      %v3552 = vmax.f32 %v3514, 1e-24
      %v3553 = vmax.f32 %v3517, 1e-24
      %v3554 = vmax.f32 %v3520, 1e-24
      %v3555 = vmax.f32 %v3523, 1e-24
      %v3556 = vmax.f32 %v3526, 1e-24
      %v3557 = vmax.f32 %v3529, 1e-24
      %v3558 = vmax.f32 %v3532, 1e-24
      %v3559 = vmax.f32 %v3535, 1e-24
      %v3560 = vmax.f32 %v3538, 1e-24
      %v3561 = vmax.f32 %v3541, 1e-24
      %v3562 = vmax.f32 %v3544, 1e-24
      %v3563 = vmax.f32 %v3547, 1e-24
      %v3564 = vrsqrt.pop %v3548
      %v3565 = vrsqrt.pop %v3549
      %v3566 = vrsqrt.pop %v3550
      %v3567 = vrsqrt.pop %v3551
      %v3568 = vrsqrt.pop %v3552
      %v3569 = vrsqrt.pop %v3553
      %v3570 = vrsqrt.pop %v3554
      %v3571 = vrsqrt.pop %v3555
      %v3572 = vrsqrt.pop %v3556
      %v3573 = vrsqrt.pop %v3557
      %v3574 = vrsqrt.pop %v3558
      %v3575 = vrsqrt.pop %v3559
      %v3576 = vrsqrt.pop %v3560
      %v3577 = vrsqrt.pop %v3561
      %v3578 = vrsqrt.pop %v3562
      %v3579 = vrsqrt.pop %v3563
      %v3580 = vmul.f32 %v3246, %v3564
      %v3581 = vmul.f32 %v3248, %v3564
      %v3582 = vmul.f32 %v3250, %v3565
      %v3583 = vmul.f32 %v3252, %v3565
      %v3584 = vmul.f32 %v3256, %v3566
      %v3585 = vmul.f32 %v3258, %v3566
      %v3586 = vmul.f32 %v3260, %v3567
      %v3587 = vmul.f32 %v3262, %v3567
      %v3588 = vmul.f32 %v3266, %v3568
      %v3589 = vmul.f32 %v3268, %v3568
      %v3590 = vmul.f32 %v3270, %v3569
      %v3591 = vmul.f32 %v3272, %v3569
      %v3592 = vmul.f32 %v3276, %v3570
      %v3593 = vmul.f32 %v3278, %v3570
      %v3594 = vmul.f32 %v3280, %v3571
      %v3595 = vmul.f32 %v3282, %v3571
      %v3596 = vmul.f32 %v3286, %v3572
      %v3597 = vmul.f32 %v3288, %v3572
      %v3598 = vmul.f32 %v3290, %v3573
      %v3599 = vmul.f32 %v3292, %v3573
      %v3600 = vmul.f32 %v3296, %v3574
      %v3601 = vmul.f32 %v3298, %v3574
      %v3602 = vmul.f32 %v3300, %v3575
      %v3603 = vmul.f32 %v3302, %v3575
      %v3604 = vmul.f32 %v3306, %v3576
      %v3605 = vmul.f32 %v3308, %v3576
      %v3606 = vmul.f32 %v3310, %v3577
      %v3607 = vmul.f32 %v3312, %v3577
      %v3608 = vmul.f32 %v3316, %v3578
      %v3609 = vmul.f32 %v3318, %v3578
      %v3610 = vmul.f32 %v3320, %v3579
      %v3611 = vmul.f32 %v3322, %v3579
      %v3612 = vpack.c.bf16 %v3438, %v3436
      %v3613 = vpack.c.bf16 %v3439, %v3437
      %v3614 = vpack.c.bf16 %v3442, %v3440
      %v3615 = vpack.c.bf16 %v3443, %v3441
      %v3616 = vpack.c.bf16 %v3446, %v3444
      %v3617 = vpack.c.bf16 %v3447, %v3445
      %v3618 = vpack.c.bf16 %v3450, %v3448
      %v3619 = vpack.c.bf16 %v3451, %v3449
      %v3620 = vpack.c.bf16 %v3454, %v3452
      %v3621 = vpack.c.bf16 %v3455, %v3453
      %v3622 = vpack.c.bf16 %v3458, %v3456
      %v3623 = vpack.c.bf16 %v3459, %v3457
      %v3624 = vpack.c.bf16 %v3462, %v3460
      %v3625 = vpack.c.bf16 %v3463, %v3461
      %v3626 = vpack.c.bf16 %v3466, %v3464
      %v3627 = vpack.c.bf16 %v3467, %v3465
      %v3644 = vunpack.c.l.b16 %v3612
      %v3645 = vunpack.c.l.b16 %v3613
      %v3646 = vunpack.c.h.b16 %v3612
      %v3647 = vunpack.c.h.b16 %v3613
      %v3648 = vunpack.c.l.b16 %v3614
      %v3649 = vunpack.c.l.b16 %v3615
      %v3650 = vunpack.c.h.b16 %v3614
      %v3651 = vunpack.c.h.b16 %v3615
      %v3652 = vunpack.c.l.b16 %v3616
      %v3653 = vunpack.c.l.b16 %v3617
      %v3654 = vunpack.c.h.b16 %v3616
      %v3655 = vunpack.c.h.b16 %v3617
      %v3656 = vunpack.c.l.b16 %v3618
      %v3657 = vunpack.c.l.b16 %v3619
      %v3658 = vunpack.c.h.b16 %v3618
      %v3659 = vunpack.c.h.b16 %v3619
      %v3660 = vunpack.c.l.b16 %v3620
      %v3661 = vunpack.c.l.b16 %v3621
      %v3662 = vunpack.c.h.b16 %v3620
      %v3663 = vunpack.c.h.b16 %v3621
      %v3664 = vunpack.c.l.b16 %v3622
      %v3665 = vunpack.c.l.b16 %v3623
      %v3666 = vunpack.c.h.b16 %v3622
      %v3667 = vunpack.c.h.b16 %v3623
      %v3668 = vunpack.c.l.b16 %v3624
      %v3669 = vunpack.c.l.b16 %v3625
      %v3670 = vunpack.c.h.b16 %v3624
      %v3671 = vunpack.c.h.b16 %v3625
      %v3672 = vunpack.c.l.b16 %v3626
      %v3673 = vunpack.c.l.b16 %v3627
      %v3674 = vunpack.c.h.b16 %v3626
      %v3675 = vunpack.c.h.b16 %v3627
      %v3676 = vpack.c.b16 %v3645, %v3644
      %v3677 = vpack.c.b16 %v3647, %v3646
      %v3678 = vpack.c.b16 %v3649, %v3648
      %v3679 = vpack.c.b16 %v3651, %v3650
      %v3680 = vpack.c.b16 %v3653, %v3652
      %v3681 = vpack.c.b16 %v3655, %v3654
      %v3682 = vpack.c.b16 %v3657, %v3656
      %v3683 = vpack.c.b16 %v3659, %v3658
      %v3684 = vpack.c.b16 %v3661, %v3660
      %v3685 = vpack.c.b16 %v3663, %v3662
      %v3686 = vpack.c.b16 %v3665, %v3664
      %v3687 = vpack.c.b16 %v3667, %v3666
      %v3688 = vpack.c.b16 %v3669, %v3668
      %v3689 = vpack.c.b16 %v3671, %v3670
      %v3690 = vpack.c.b16 %v3673, %v3672
      %v3691 = vpack.c.b16 %v3675, %v3674
      %3708 = vst [vmem:[#allocation18] sm:$0xff] %v3676
      %3709 = vst [vmem:[#allocation18 + $0x8] sm:$0xff] %v3677
      %3710 = vst [vmem:[#allocation18 + $0x10] sm:$0xff] %v3678
      %3711 = vst [vmem:[#allocation18 + $0x18] sm:$0xff] %v3679
      %3712 = vst [vmem:[#allocation18 + $0x20] sm:$0xff] %v3680
      %3713 = vst [vmem:[#allocation18 + $0x28] sm:$0xff] %v3681
      %3714 = vst [vmem:[#allocation18 + $0x30] sm:$0xff] %v3682
      %3715 = vst [vmem:[#allocation18 + $0x38] sm:$0xff] %v3683
      %3716 = vst [vmem:[#allocation18 + $0x40] sm:$0xff] %v3684
      %3717 = vst [vmem:[#allocation18 + $0x48] sm:$0xff] %v3685
      %3718 = vst [vmem:[#allocation18 + $0x50] sm:$0xff] %v3686
      %3719 = vst [vmem:[#allocation18 + $0x58] sm:$0xff] %v3687
      %3720 = vst [vmem:[#allocation18 + $0x60] sm:$0xff] %v3688
      %3721 = vst [vmem:[#allocation18 + $0x68] sm:$0xff] %v3689
      %3722 = vst [vmem:[#allocation18 + $0x70] sm:$0xff] %v3690
      %3723 = vst [vmem:[#allocation18 + $0x78] sm:$0xff] %v3691
      %s3724 = sld [smem:[#allocation3]]
      %v3725 = vstv %s3724
      %v3726 = vmul.f32 %v3580, %v3725
      %v3727 = vmul.f32 %v3581, %v3725
      %v3728 = vmul.f32 %v3582, %v3725
      %v3729 = vmul.f32 %v3583, %v3725
      %v3730 = vmul.f32 %v3584, %v3725
      %v3731 = vmul.f32 %v3585, %v3725
      %v3732 = vmul.f32 %v3586, %v3725
      %v3733 = vmul.f32 %v3587, %v3725
      %v3734 = vmul.f32 %v3588, %v3725
      %v3735 = vmul.f32 %v3589, %v3725
      %v3736 = vmul.f32 %v3590, %v3725
      %v3737 = vmul.f32 %v3591, %v3725
      %v3738 = vmul.f32 %v3592, %v3725
      %v3739 = vmul.f32 %v3593, %v3725
      %v3740 = vmul.f32 %v3594, %v3725
      %v3741 = vmul.f32 %v3595, %v3725
      %v3742 = vmul.f32 %v3596, %v3725
      %v3743 = vmul.f32 %v3597, %v3725
      %v3744 = vmul.f32 %v3598, %v3725
      %v3745 = vmul.f32 %v3599, %v3725
      %v3746 = vmul.f32 %v3600, %v3725
      %v3747 = vmul.f32 %v3601, %v3725
      %v3748 = vmul.f32 %v3602, %v3725
      %v3749 = vmul.f32 %v3603, %v3725
      %v3750 = vmul.f32 %v3604, %v3725
      %v3751 = vmul.f32 %v3605, %v3725
      %v3752 = vmul.f32 %v3606, %v3725
      %v3753 = vmul.f32 %v3607, %v3725
      %v3754 = vmul.f32 %v3608, %v3725
      %v3755 = vmul.f32 %v3609, %v3725
      %v3756 = vmul.f32 %v3610, %v3725
      %v3757 = vmul.f32 %v3611, %v3725
      %3758 = vxpose.xlu0.b32.start [1/16] %v3726, 128
      %3759 = vxpose.xlu0.b32.cont [2/16] %v3728, 128
      %3760 = vxpose.xlu0.b32.cont [3/16] %v3730, 128
      %3761 = vxpose.xlu0.b32.cont [4/16] %v3732, 128
      %3762 = vxpose.xlu0.b32.cont [5/16] %v3734, 128
      %3763 = vxpose.xlu0.b32.cont [6/16] %v3736, 128
      %3764 = vxpose.xlu0.b32.cont [7/16] %v3738, 128
      %3765 = vxpose.xlu0.b32.cont [8/16] %v3740, 128
      %3766 = vxpose.xlu0.b32.cont [9/16] %v3742, 128
      %3767 = vxpose.xlu0.b32.cont [10/16] %v3744, 128
      %3768 = vxpose.xlu0.b32.cont [11/16] %v3746, 128
      %3769 = vxpose.xlu0.b32.cont [12/16] %v3748, 128
      %3770 = vxpose.xlu0.b32.cont [13/16] %v3750, 128
      %3771 = vxpose.xlu0.b32.cont [14/16] %v3752, 128
      %3772 = vxpose.xlu0.b32.cont [15/16] %v3754, 128
      %3773 = vxpose.xlu0.b32.end [16/16] %v3756, 128
      %v3774 = vpop.trf.xlu0
      %v3775 = vpop.trf.xlu0
      %v3776 = vpop.trf.xlu0
      %v3777 = vpop.trf.xlu0
      %v3778 = vpop.trf.xlu0
      %v3779 = vpop.trf.xlu0
      %v3780 = vpop.trf.xlu0
      %v3781 = vpop.trf.xlu0
      %v3782 = vpop.trf.xlu0
      %v3783 = vpop.trf.xlu0
      %v3784 = vpop.trf.xlu0
      %v3785 = vpop.trf.xlu0
      %v3786 = vpop.trf.xlu0
      %v3787 = vpop.trf.xlu0
      %v3788 = vpop.trf.xlu0
      %v3789 = vpop.trf.xlu0
      %3790 = vxpose.xlu0.b32.start [1/16] %v3727, 128
      %3791 = vxpose.xlu0.b32.cont [2/16] %v3729, 128
      %3792 = vxpose.xlu0.b32.cont [3/16] %v3731, 128
      %3793 = vxpose.xlu0.b32.cont [4/16] %v3733, 128
      %3794 = vxpose.xlu0.b32.cont [5/16] %v3735, 128
      %3795 = vxpose.xlu0.b32.cont [6/16] %v3737, 128
      %3796 = vxpose.xlu0.b32.cont [7/16] %v3739, 128
      %3797 = vxpose.xlu0.b32.cont [8/16] %v3741, 128
      %3798 = vxpose.xlu0.b32.cont [9/16] %v3743, 128
      %3799 = vxpose.xlu0.b32.cont [10/16] %v3745, 128
      %3800 = vxpose.xlu0.b32.cont [11/16] %v3747, 128
      %3801 = vxpose.xlu0.b32.cont [12/16] %v3749, 128
      %3802 = vxpose.xlu0.b32.cont [13/16] %v3751, 128
      %3803 = vxpose.xlu0.b32.cont [14/16] %v3753, 128
      %3804 = vxpose.xlu0.b32.cont [15/16] %v3755, 128
      %3805 = vxpose.xlu0.b32.end [16/16] %v3757, 128
      %v3806 = vpop.trf.xlu0
      %v3807 = vpop.trf.xlu0
      %v3808 = vpop.trf.xlu0
      %v3809 = vpop.trf.xlu0
      %v3810 = vpop.trf.xlu0
      %v3811 = vpop.trf.xlu0
      %v3812 = vpop.trf.xlu0
      %v3813 = vpop.trf.xlu0
      %v3814 = vpop.trf.xlu0
      %v3815 = vpop.trf.xlu0
      %v3816 = vpop.trf.xlu0
      %v3817 = vpop.trf.xlu0
      %v3818 = vpop.trf.xlu0
      %v3819 = vpop.trf.xlu0
      %v3820 = vpop.trf.xlu0
      %v3821 = vpop.trf.xlu0
      %v3822 = vpack.c.bf16 %v3775, %v3774
      %v3823 = vpack.c.bf16 %v3777, %v3776
      %v3824 = vpack.c.bf16 %v3779, %v3778
      %v3825 = vpack.c.bf16 %v3781, %v3780
      %v3826 = vpack.c.bf16 %v3783, %v3782
      %v3827 = vpack.c.bf16 %v3785, %v3784
      %v3828 = vpack.c.bf16 %v3787, %v3786
      %v3829 = vpack.c.bf16 %v3789, %v3788
      %v3830 = vpack.c.bf16 %v3807, %v3806
      %v3831 = vpack.c.bf16 %v3809, %v3808
      %v3832 = vpack.c.bf16 %v3811, %v3810
      %v3833 = vpack.c.bf16 %v3813, %v3812
      %v3834 = vpack.c.bf16 %v3815, %v3814
      %v3835 = vpack.c.bf16 %v3817, %v3816
      %v3836 = vpack.c.bf16 %v3819, %v3818
      %v3837 = vpack.c.bf16 %v3821, %v3820
      %v3854 = vunpack.c.l.b16 %v3822
      %v3855 = vunpack.c.h.b16 %v3822
      %v3856 = vunpack.c.l.b16 %v3823
      %v3857 = vunpack.c.h.b16 %v3823
      %v3858 = vunpack.c.l.b16 %v3824
      %v3859 = vunpack.c.h.b16 %v3824
      %v3860 = vunpack.c.l.b16 %v3825
      %v3861 = vunpack.c.h.b16 %v3825
      %v3862 = vunpack.c.l.b16 %v3826
      %v3863 = vunpack.c.h.b16 %v3826
      %v3864 = vunpack.c.l.b16 %v3827
      %v3865 = vunpack.c.h.b16 %v3827
      %v3866 = vunpack.c.l.b16 %v3828
      %v3867 = vunpack.c.h.b16 %v3828
      %v3868 = vunpack.c.l.b16 %v3829
      %v3869 = vunpack.c.h.b16 %v3829
      %v3870 = vunpack.c.l.b16 %v3830
      %v3871 = vunpack.c.h.b16 %v3830
      %v3872 = vunpack.c.l.b16 %v3831
      %v3873 = vunpack.c.h.b16 %v3831
      %v3874 = vunpack.c.l.b16 %v3832
      %v3875 = vunpack.c.h.b16 %v3832
      %v3876 = vunpack.c.l.b16 %v3833
      %v3877 = vunpack.c.h.b16 %v3833
      %v3878 = vunpack.c.l.b16 %v3834
      %v3879 = vunpack.c.h.b16 %v3834
      %v3880 = vunpack.c.l.b16 %v3835
      %v3881 = vunpack.c.h.b16 %v3835
      %v3882 = vunpack.c.l.b16 %v3836
      %v3883 = vunpack.c.h.b16 %v3836
      %v3884 = vunpack.c.l.b16 %v3837
      %v3885 = vunpack.c.h.b16 %v3837
      %v3886 = vpack.c.b16 %v3854, %v3854
      %v3887 = vpack.c.b16 %v3855, %v3855
      %v3888 = vpack.c.b16 %v3856, %v3856
      %v3889 = vpack.c.b16 %v3857, %v3857
      %v3890 = vpack.c.b16 %v3858, %v3858
      %v3891 = vpack.c.b16 %v3859, %v3859
      %v3892 = vpack.c.b16 %v3860, %v3860
      %v3893 = vpack.c.b16 %v3861, %v3861
      %v3894 = vpack.c.b16 %v3862, %v3862
      %v3895 = vpack.c.b16 %v3863, %v3863
      %v3896 = vpack.c.b16 %v3864, %v3864
      %v3897 = vpack.c.b16 %v3865, %v3865
      %v3898 = vpack.c.b16 %v3866, %v3866
      %v3899 = vpack.c.b16 %v3867, %v3867
      %v3900 = vpack.c.b16 %v3868, %v3868
      %v3901 = vpack.c.b16 %v3869, %v3869
      %v3902 = vpack.c.b16 %v3870, %v3870
      %v3903 = vpack.c.b16 %v3871, %v3871
      %v3904 = vpack.c.b16 %v3872, %v3872
      %v3905 = vpack.c.b16 %v3873, %v3873
      %v3906 = vpack.c.b16 %v3874, %v3874
      %v3907 = vpack.c.b16 %v3875, %v3875
      %v3908 = vpack.c.b16 %v3876, %v3876
      %v3909 = vpack.c.b16 %v3877, %v3877
      %v3910 = vpack.c.b16 %v3878, %v3878
      %v3911 = vpack.c.b16 %v3879, %v3879
      %v3912 = vpack.c.b16 %v3880, %v3880
      %v3913 = vpack.c.b16 %v3881, %v3881
      %v3914 = vpack.c.b16 %v3882, %v3882
      %v3915 = vpack.c.b16 %v3883, %v3883
      %v3916 = vpack.c.b16 %v3884, %v3884
      %v3917 = vpack.c.b16 %v3885, %v3885
      %3950 = vst [vmem:[#allocation19] sm:$0xf] %v3886
      %3951 = vst [vmem:[#allocation19 + $0x4] sm:$0xf] %v3887
      %3952 = vst [vmem:[#allocation19 + $0x8] sm:$0xf] %v3888
      %3953 = vst [vmem:[#allocation19 + $0xc] sm:$0xf] %v3889
      %3954 = vst [vmem:[#allocation19 + $0x10] sm:$0xf] %v3890
      %3955 = vst [vmem:[#allocation19 + $0x14] sm:$0xf] %v3891
      %3956 = vst [vmem:[#allocation19 + $0x18] sm:$0xf] %v3892
      %3957 = vst [vmem:[#allocation19 + $0x1c] sm:$0xf] %v3893
      %3958 = vst [vmem:[#allocation19 + $0x20] sm:$0xf] %v3894
      %3959 = vst [vmem:[#allocation19 + $0x24] sm:$0xf] %v3895
      %3960 = vst [vmem:[#allocation19 + $0x28] sm:$0xf] %v3896
      %3961 = vst [vmem:[#allocation19 + $0x2c] sm:$0xf] %v3897
      %3962 = vst [vmem:[#allocation19 + $0x30] sm:$0xf] %v3898
      %3963 = vst [vmem:[#allocation19 + $0x34] sm:$0xf] %v3899
      %3964 = vst [vmem:[#allocation19 + $0x38] sm:$0xf] %v3900
      %3965 = vst [vmem:[#allocation19 + $0x3c] sm:$0xf] %v3901
      %3966 = vst [vmem:[#allocation19 + $0x40] sm:$0xf] %v3902
      %3967 = vst [vmem:[#allocation19 + $0x44] sm:$0xf] %v3903
      %3968 = vst [vmem:[#allocation19 + $0x48] sm:$0xf] %v3904
      %3969 = vst [vmem:[#allocation19 + $0x4c] sm:$0xf] %v3905
      %3970 = vst [vmem:[#allocation19 + $0x50] sm:$0xf] %v3906
      %3971 = vst [vmem:[#allocation19 + $0x54] sm:$0xf] %v3907
      %3972 = vst [vmem:[#allocation19 + $0x58] sm:$0xf] %v3908
      %3973 = vst [vmem:[#allocation19 + $0x5c] sm:$0xf] %v3909
      %3974 = vst [vmem:[#allocation19 + $0x60] sm:$0xf] %v3910
      %3975 = vst [vmem:[#allocation19 + $0x64] sm:$0xf] %v3911
      %3976 = vst [vmem:[#allocation19 + $0x68] sm:$0xf] %v3912
      %3977 = vst [vmem:[#allocation19 + $0x6c] sm:$0xf] %v3913
      %3978 = vst [vmem:[#allocation19 + $0x70] sm:$0xf] %v3914
      %3979 = vst [vmem:[#allocation19 + $0x74] sm:$0xf] %v3915
      %3980 = vst [vmem:[#allocation19 + $0x78] sm:$0xf] %v3916
      %3981 = vst [vmem:[#allocation19 + $0x7c] sm:$0xf] %v3917
    $region101: #{tpu_custom_call.1} parent=1 // pred_fallthru
      _
    // Predicated region
    $region102: #{tpu_custom_call.1} parent=1 // pred_check
      _
    $region103: #{tpu_custom_call.1} parent=1 // pred_check_branch
      %3983 = sbr.rel (0) target = $region105
    $region104: #{tpu_custom_call.1} parent=1 // pred_region
      %s3985 = ssub.s32 2048, 2048
      %3986 = vsyncadd [#allocation6], %s3985
      %s3987 = sshll.u32 [#allocation18], 4
      %s3988 = int_to_ptr.vmem [resolvable:$true] %s3987
      %3993 = dma.vmem_to_hbm [thread:$0]  %s3988, 2048, %s15, [#allocation6], 128, 128, 8
    $region105: #{tpu_custom_call.1} parent=1 // pred_fallthru
      _
    // Predicated region
    $region106: #{tpu_custom_call.1} parent=1 // pred_check
      _
    $region107: #{tpu_custom_call.1} parent=1 // pred_check_branch
      %3995 = sbr.rel (0) target = $region109
    $region108: #{tpu_custom_call.1} parent=1 // pred_region
      %s3997 = ssub.s32 2048, 2048
      %3998 = vsyncadd [#allocation20], %s3997
      %s3999 = sshll.u32 [#allocation19], 4
      %s4000 = int_to_ptr.vmem [resolvable:$true] %s3999
      %4005 = dma.vmem_to_hbm [thread:$0]  %s4000, 2048, %s16, [#allocation20], 64, 64, 4
    $region109: #{tpu_custom_call.1} parent=1 // pred_fallthru
      _
    // Predicated region
    $region110: #{tpu_custom_call.1} parent=1 // pred_check
      _
    $region111: #{tpu_custom_call.1} parent=1 // pred_check_branch
      %4007 = sbr.rel (0) target = $region113
    $region112: #{tpu_custom_call.1} parent=1 // pred_region
      %4008 = dma.done [#allocation6], 2048
    $region113: #{tpu_custom_call.1} parent=1 // pred_fallthru
      _
    // Predicated region
    $region114: #{tpu_custom_call.1} parent=1 // pred_check
      _
    $region115: #{tpu_custom_call.1} parent=1 // pred_check_branch
      %4010 = sbr.rel (0) target = $region117
    $region116: #{tpu_custom_call.1} parent=1 // pred_region
      %4011 = dma.done [#allocation20], 2048
    $region117: #{tpu_custom_call.1} parent=1 // pred_fallthru
      _
    %4012 = vsyncpa [#allocation5], 1
    %4013 = vsyncpa [#allocation8], 1
    %4014 = vsyncpa [#allocation11], 1
    %4015 = vsyncpa [#allocation14], 1
    %4016 = vsyncpa [#allocation17], 1
    %4017 = vsyncpa [#allocation6], 1
    %4018 = vsyncpa [#allocation20], 1

// kernel: tpu_custom_call.1
$region0: #{tpu_custom_call.1}
  #allocation0 [shape = 'u32[]', space=smem, size = 0x4, offset = 0x4, fixed_abs, tag = 'smem constant byte address 0x4 - core index']
  #allocation1 [shape = 'u32[144,128]{1,0:T(1,128)}', space=vmem, size = 0x12000, scoped, tag = 'internal scratch']
  #allocation2 [shape = 'f32[128,256]{1,0:T(8,128)}', space=vmem, size = 0x20000, scoped, tag = 'scratch operand']
  #allocation3 [shape = 'f32[1]{0:T(128)S(6)}', space=smem, size = 0x200, scoped, tag = 'scoped memory for tpu_custom_call.1']
  %s0 = inlined_call_operand.<no memory space> [shape: f32[1], index: 0, kind: input, shape index: {}]
  %s1 = inlined_call_operand.hbm [shape: bf16[128,768], index: 1, kind: input, shape index: {}]
  %s2 = inlined_call_operand.hbm [shape: bf16[128,128], index: 2, kind: input, shape index: {}]
  %s3 = inlined_call_operand.hbm [shape: bf16[768,256], index: 3, kind: input, shape index: {}]
  %s4 = inlined_call_operand.vmem [shape: f32[1,256], index: 4, kind: input, shape index: {}]
  %s5 = inlined_call_operand.hbm [shape: bf16[256,256], index: 5, kind: input, shape index: {}]
  %s6 = inlined_call_operand.vmem [shape: f32[1,256], index: 6, kind: input, shape index: {}]
  %s7 = inlined_call_operand.hbm [shape: bf16[256,256], index: 7, kind: input, shape index: {}]
  %s8 = inlined_call_operand.vmem [shape: f32[1,256], index: 8, kind: input, shape index: {}]
  %s9 = inlined_call_operand.hbm [shape: bf16[128,256], index: 9, kind: input, shape index: {}]
  %s10 = inlined_call_operand.vmem [shape: f32[1,256], index: 10, kind: input, shape index: {}]
  %s11 = inlined_call_operand.hbm [shape: bf16[256,256], index: 11, kind: input, shape index: {}]
  %s12 = inlined_call_operand.vmem [shape: f32[1,256], index: 12, kind: input, shape index: {}]
  %s13 = inlined_call_operand.hbm [shape: bf16[256,256], index: 13, kind: input, shape index: {}]
  %s14 = inlined_call_operand.vmem [shape: f32[1,256], index: 14, kind: input, shape index: {}]
  %s15 = inlined_call_operand.hbm [shape: bf16[128,256], index: 15, kind: output, shape index: {0}]
  %s16 = inlined_call_operand.hbm [shape: bf16[256,128], index: 16, kind: output, shape index: {1}]
  %17 = xla_tuple %s15, %s16
  %s18 = sld [smem:[#allocation0]]
  $region118: #{tpu_custom_call.1} parent=0
    _
  %s20 = ssub.s32 1, %s18
  %s21 = scalar_select 0, %s20, %s18
  %22 = sst [smem:[#allocation3]] %s0
  $region1: #{tpu_custom_call.1} parent=0
    #allocation4 [shape = 'u8[196608]{0}', space=vmem, size = 0x30000, scoped, tag = 'input window, operand 1, single buffered']
    #allocation5 [shape = 's32[1]{0}', space=sflag, size = 0x4, scoped, tag = 'scoped memory for tpu_custom_call.1']
    #allocation6 [shape = 's32[1]{0}', space=sflag, size = 0x4, scoped, tag = 'scoped memory for tpu_custom_call.1']
    #allocation7 [shape = 'u8[32768]{0}', space=vmem, size = 0x8000, scoped, tag = 'input window, operand 2, single buffered']
    #allocation8 [shape = 's32[1]{0}', space=sflag, size = 0x4, scoped, tag = 'scoped memory for tpu_custom_call.1']
    #allocation9 [shape = 'u8[393216]{0}', space=vmem, size = 0x60000, scoped, tag = 'input window, operand 3, single buffered']
    #allocation10 [shape = 'u8[131072]{0}', space=vmem, size = 0x20000, scoped, tag = 'input window, operand 5, single buffered']
    #allocation11 [shape = 's32[1]{0}', space=sflag, size = 0x4, scoped, tag = 'scoped memory for tpu_custom_call.1']
    #allocation12 [shape = 'u8[131072]{0}', space=vmem, size = 0x20000, scoped, tag = 'input window, operand 7, single buffered']
    #allocation13 [shape = 'u8[65536]{0}', space=vmem, size = 0x10000, scoped, tag = 'input window, operand 9, single buffered']
    #allocation14 [shape = 's32[1]{0}', space=sflag, size = 0x4, scoped, tag = 'scoped memory for tpu_custom_call.1']
    #allocation15 [shape = 'u8[131072]{0}', space=vmem, size = 0x20000, scoped, tag = 'input window, operand 11, single buffered']
    #allocation16 [shape = 'u8[131072]{0}', space=vmem, size = 0x20000, scoped, tag = 'input window, operand 13, single buffered']
    #allocation17 [shape = 's32[1]{0}', space=sflag, size = 0x4, scoped, tag = 'scoped memory for tpu_custom_call.1']
    #allocation18 [shape = 'u8[65536]{0}', space=vmem, size = 0x10000, scoped, tag = 'output window, operand 0, single buffered']
    #allocation19 [shape = 'u8[65536]{0}', space=vmem, size = 0x10000, scoped, tag = 'output window, operand 1, single buffered']
    #allocation20 [shape = 's32[1]{0}', space=sflag, size = 0x4, scoped, tag = 'scoped memory for tpu_custom_call.1']
    %23 = vsyncpa [#allocation5], 0
    %24 = vsyncpa [#allocation8], 0
    %25 = vsyncpa [#allocation11], 0
    %26 = vsyncpa [#allocation14], 0
    %27 = vsyncpa [#allocation17], 0
    %28 = vsyncpa [#allocation6], 0
    %29 = vsyncpa [#allocation20], 0
    // Predicated region
    $region2: #{tpu_custom_call.1} parent=1 // pred_check
      _
    $region3: #{tpu_custom_call.1} parent=1 // pred_check_branch
      %31 = sbr.rel (0) target = $region5
    $region4: #{tpu_custom_call.1} parent=1 // pred_region
      _
    $region5: #{tpu_custom_call.1} parent=1 // pred_fallthru
      _
    // Predicated region
    $region6: #{tpu_custom_call.1} parent=1 // pred_check
      _
    $region7: #{tpu_custom_call.1} parent=1 // pred_check_branch
      %33 = sbr.rel (0) target = $region9
    $region8: #{tpu_custom_call.1} parent=1 // pred_region
      %s35 = ssub.s32 6144, 6144
      %36 = vsyncadd [#allocation5], %s35
      %s37 = sshll.u32 [#allocation4], 4
      %s38 = int_to_ptr.vmem [resolvable:$true] %s37
      %43 = dma.hbm_to_vmem [thread:$0]  %s1, 6144, %s38, [#allocation5], 384, 384, 24
    $region9: #{tpu_custom_call.1} parent=1 // pred_fallthru
      _
    // Predicated region
    $region10: #{tpu_custom_call.1} parent=1 // pred_check
      _
    $region11: #{tpu_custom_call.1} parent=1 // pred_check_branch
      %45 = sbr.rel (0) target = $region13
    $region12: #{tpu_custom_call.1} parent=1 // pred_region
      %s47 = ssub.s32 1024, 1024
      %48 = vsyncadd [#allocation8], %s47
      %s49 = sshll.u32 [#allocation7], 4
      %s50 = int_to_ptr.vmem [resolvable:$true] %s49
      %55 = dma.hbm_to_vmem [thread:$0]  %s2, 1024, %s50, [#allocation8], 64, 64, 4
    $region13: #{tpu_custom_call.1} parent=1 // pred_fallthru
      _
    // Predicated region
    $region14: #{tpu_custom_call.1} parent=1 // pred_check
      _
    $region15: #{tpu_custom_call.1} parent=1 // pred_check_branch
      %57 = sbr.rel (0) target = $region17
    $region16: #{tpu_custom_call.1} parent=1 // pred_region
      %s59 = ssub.s32 12288, 12288
      %60 = vsyncadd [#allocation8], %s59
      %s61 = sshll.u32 [#allocation9], 4
      %s62 = int_to_ptr.vmem [resolvable:$true] %s61
      %67 = dma.hbm_to_vmem [thread:$0]  %s3, 12288, %s62, [#allocation8], 128, 128, 8
    $region17: #{tpu_custom_call.1} parent=1 // pred_fallthru
      _
    // Predicated region
    $region18: #{tpu_custom_call.1} parent=1 // pred_check
      _
    $region19: #{tpu_custom_call.1} parent=1 // pred_check_branch
      %69 = sbr.rel (0) target = $region21
    $region20: #{tpu_custom_call.1} parent=1 // pred_region
      _
    $region21: #{tpu_custom_call.1} parent=1 // pred_fallthru
      _
    // Predicated region
    $region22: #{tpu_custom_call.1} parent=1 // pred_check
      _
    $region23: #{tpu_custom_call.1} parent=1 // pred_check_branch
      %71 = sbr.rel (0) target = $region25
    $region24: #{tpu_custom_call.1} parent=1 // pred_region
      %s73 = ssub.s32 4096, 4096
      %74 = vsyncadd [#allocation11], %s73
      %s75 = sshll.u32 [#allocation10], 4
      %s76 = int_to_ptr.vmem [resolvable:$true] %s75
      %81 = dma.hbm_to_vmem [thread:$0]  %s5, 4096, %s76, [#allocation11], 128, 128, 8
    $region25: #{tpu_custom_call.1} parent=1 // pred_fallthru
      _
    // Predicated region
    $region26: #{tpu_custom_call.1} parent=1 // pred_check
      _
    $region27: #{tpu_custom_call.1} parent=1 // pred_check_branch
      %83 = sbr.rel (0) target = $region29
    $region28: #{tpu_custom_call.1} parent=1 // pred_region
      _
    $region29: #{tpu_custom_call.1} parent=1 // pred_fallthru
      _
    // Predicated region
    $region30: #{tpu_custom_call.1} parent=1 // pred_check
      _
    $region31: #{tpu_custom_call.1} parent=1 // pred_check_branch
      %85 = sbr.rel (0) target = $region33
    $region32: #{tpu_custom_call.1} parent=1 // pred_region
      %s87 = ssub.s32 4096, 4096
      %88 = vsyncadd [#allocation11], %s87
      %s89 = sshll.u32 [#allocation12], 4
      %s90 = int_to_ptr.vmem [resolvable:$true] %s89
      %95 = dma.hbm_to_vmem [thread:$0]  %s7, 4096, %s90, [#allocation11], 128, 128, 8
    $region33: #{tpu_custom_call.1} parent=1 // pred_fallthru
      _
    // Predicated region
    $region34: #{tpu_custom_call.1} parent=1 // pred_check
      _
    $region35: #{tpu_custom_call.1} parent=1 // pred_check_branch
      %97 = sbr.rel (0) target = $region37
    $region36: #{tpu_custom_call.1} parent=1 // pred_region
      _
    $region37: #{tpu_custom_call.1} parent=1 // pred_fallthru
      _
    // Predicated region
    $region38: #{tpu_custom_call.1} parent=1 // pred_check
      _
    $region39: #{tpu_custom_call.1} parent=1 // pred_check_branch
      %99 = sbr.rel (0) target = $region41
    $region40: #{tpu_custom_call.1} parent=1 // pred_region
      %s101 = ssub.s32 2048, 2048
      %102 = vsyncadd [#allocation14], %s101
      %s103 = sshll.u32 [#allocation13], 4
      %s104 = int_to_ptr.vmem [resolvable:$true] %s103
      %109 = dma.hbm_to_vmem [thread:$0]  %s9, 2048, %s104, [#allocation14], 128, 128, 8
    $region41: #{tpu_custom_call.1} parent=1 // pred_fallthru
      _
    // Predicated region
    $region42: #{tpu_custom_call.1} parent=1 // pred_check
      _
    $region43: #{tpu_custom_call.1} parent=1 // pred_check_branch
      %111 = sbr.rel (0) target = $region45
    $region44: #{tpu_custom_call.1} parent=1 // pred_region
      _
    $region45: #{tpu_custom_call.1} parent=1 // pred_fallthru
      _
    // Predicated region
    $region46: #{tpu_custom_call.1} parent=1 // pred_check
      _
    $region47: #{tpu_custom_call.1} parent=1 // pred_check_branch
      %113 = sbr.rel (0) target = $region49
    $region48: #{tpu_custom_call.1} parent=1 // pred_region
      %s115 = ssub.s32 4096, 4096
      %116 = vsyncadd [#allocation14], %s115
      %s117 = sshll.u32 [#allocation15], 4
      %s118 = int_to_ptr.vmem [resolvable:$true] %s117
      %123 = dma.hbm_to_vmem [thread:$0]  %s11, 4096, %s118, [#allocation14], 128, 128, 8
    $region49: #{tpu_custom_call.1} parent=1 // pred_fallthru
      _
    // Predicated region
    $region50: #{tpu_custom_call.1} parent=1 // pred_check
      _
    $region51: #{tpu_custom_call.1} parent=1 // pred_check_branch
      %125 = sbr.rel (0) target = $region53
    $region52: #{tpu_custom_call.1} parent=1 // pred_region
      _
    $region53: #{tpu_custom_call.1} parent=1 // pred_fallthru
      _
    // Predicated region
    $region54: #{tpu_custom_call.1} parent=1 // pred_check
      _
    $region55: #{tpu_custom_call.1} parent=1 // pred_check_branch
      %127 = sbr.rel (0) target = $region57
    $region56: #{tpu_custom_call.1} parent=1 // pred_region
      %s129 = ssub.s32 4096, 4096
      %130 = vsyncadd [#allocation17], %s129
      %s131 = sshll.u32 [#allocation16], 4
      %s132 = int_to_ptr.vmem [resolvable:$true] %s131
      %137 = dma.hbm_to_vmem [thread:$0]  %s13, 4096, %s132, [#allocation17], 128, 128, 8
    $region57: #{tpu_custom_call.1} parent=1 // pred_fallthru
      _
    // Predicated region
    $region58: #{tpu_custom_call.1} parent=1 // pred_check
      _
    $region59: #{tpu_custom_call.1} parent=1 // pred_check_branch
      %139 = sbr.rel (0) target = $region61
    $region60: #{tpu_custom_call.1} parent=1 // pred_region
      _
    $region61: #{tpu_custom_call.1} parent=1 // pred_fallthru
      _
    // Predicated region
    $region62: #{tpu_custom_call.1} parent=1 // pred_check
      _
    $region63: #{tpu_custom_call.1} parent=1 // pred_check_branch
      %141 = sbr.rel (0) target = $region65
    $region64: #{tpu_custom_call.1} parent=1 // pred_region
      %142 = dma.done [#allocation5], 6144
    $region65: #{tpu_custom_call.1} parent=1 // pred_fallthru
      _
    // Predicated region
    $region66: #{tpu_custom_call.1} parent=1 // pred_check
      _
    $region67: #{tpu_custom_call.1} parent=1 // pred_check_branch
      %144 = sbr.rel (0) target = $region69
    $region68: #{tpu_custom_call.1} parent=1 // pred_region
      %145 = dma.done [#allocation8], 1024
    $region69: #{tpu_custom_call.1} parent=1 // pred_fallthru
      _
    // Predicated region
    $region70: #{tpu_custom_call.1} parent=1 // pred_check
      _
    $region71: #{tpu_custom_call.1} parent=1 // pred_check_branch
      %147 = sbr.rel (0) target = $region73
    $region72: #{tpu_custom_call.1} parent=1 // pred_region
      %148 = dma.done [#allocation8], 12288
    $region73: #{tpu_custom_call.1} parent=1 // pred_fallthru
      _
    // Predicated region
    $region74: #{tpu_custom_call.1} parent=1 // pred_check
      _
    $region75: #{tpu_custom_call.1} parent=1 // pred_check_branch
      %150 = sbr.rel (0) target = $region77
    $region76: #{tpu_custom_call.1} parent=1 // pred_region
      %151 = dma.done [#allocation11], 4096
    $region77: #{tpu_custom_call.1} parent=1 // pred_fallthru
      _
    // Predicated region
    $region78: #{tpu_custom_call.1} parent=1 // pred_check
      _
    $region79: #{tpu_custom_call.1} parent=1 // pred_check_branch
      %153 = sbr.rel (0) target = $region81
    $region80: #{tpu_custom_call.1} parent=1 // pred_region
      %154 = dma.done [#allocation11], 4096
    $region81: #{tpu_custom_call.1} parent=1 // pred_fallthru
      _
    // Predicated region
    $region82: #{tpu_custom_call.1} parent=1 // pred_check
      _
    $region83: #{tpu_custom_call.1} parent=1 // pred_check_branch
      %156 = sbr.rel (0) target = $region85
    $region84: #{tpu_custom_call.1} parent=1 // pred_region
      %157 = dma.done [#allocation14], 2048
    $region85: #{tpu_custom_call.1} parent=1 // pred_fallthru
      _
    // Predicated region
    $region86: #{tpu_custom_call.1} parent=1 // pred_check
      _
    $region87: #{tpu_custom_call.1} parent=1 // pred_check_branch
      %159 = sbr.rel (0) target = $region89
    $region88: #{tpu_custom_call.1} parent=1 // pred_region
      %160 = dma.done [#allocation14], 4096
    $region89: #{tpu_custom_call.1} parent=1 // pred_fallthru
      _
    // Predicated region
    $region90: #{tpu_custom_call.1} parent=1 // pred_check
      _
    $region91: #{tpu_custom_call.1} parent=1 // pred_check_branch
      %162 = sbr.rel (0) target = $region93
    $region92: #{tpu_custom_call.1} parent=1 // pred_region
      %163 = dma.done [#allocation17], 4096
    $region93: #{tpu_custom_call.1} parent=1 // pred_fallthru
      _
    %p165 = scmp.eq.s32.totalorder 0, 0
    // Predicated region
    $region94: #{tpu_custom_call.1} parent=1 // pred_check
      %p166 = pneg %p165
    $region95: #{tpu_custom_call.1} parent=1 // pred_check_branch
      %168 = sbr.rel (%p166) target = $region97
    $region96: #{tpu_custom_call.1} parent=1 // pred_region
      %169 = vst [vmem:[#allocation2] sm:$0xff] 0.0
      %170 = vst [vmem:[#allocation2 + $0x8] sm:$0xff] 0.0
      %171 = vst [vmem:[#allocation2 + $0x10] sm:$0xff] 0.0
      %172 = vst [vmem:[#allocation2 + $0x18] sm:$0xff] 0.0
      %173 = vst [vmem:[#allocation2 + $0x20] sm:$0xff] 0.0
      %174 = vst [vmem:[#allocation2 + $0x28] sm:$0xff] 0.0
      %175 = vst [vmem:[#allocation2 + $0x30] sm:$0xff] 0.0
      %176 = vst [vmem:[#allocation2 + $0x38] sm:$0xff] 0.0
      %177 = vst [vmem:[#allocation2 + $0x40] sm:$0xff] 0.0
      %178 = vst [vmem:[#allocation2 + $0x48] sm:$0xff] 0.0
      %179 = vst [vmem:[#allocation2 + $0x50] sm:$0xff] 0.0
      %180 = vst [vmem:[#allocation2 + $0x58] sm:$0xff] 0.0
      %181 = vst [vmem:[#allocation2 + $0x60] sm:$0xff] 0.0
      %182 = vst [vmem:[#allocation2 + $0x68] sm:$0xff] 0.0
      %183 = vst [vmem:[#allocation2 + $0x70] sm:$0xff] 0.0
      %184 = vst [vmem:[#allocation2 + $0x78] sm:$0xff] 0.0
      %185 = vst [vmem:[#allocation2 + $0x80] sm:$0xff] 0.0
      %186 = vst [vmem:[#allocation2 + $0x88] sm:$0xff] 0.0
      %187 = vst [vmem:[#allocation2 + $0x90] sm:$0xff] 0.0
      %188 = vst [vmem:[#allocation2 + $0x98] sm:$0xff] 0.0
      %189 = vst [vmem:[#allocation2 + $0xa0] sm:$0xff] 0.0
      %190 = vst [vmem:[#allocation2 + $0xa8] sm:$0xff] 0.0
      %191 = vst [vmem:[#allocation2 + $0xb0] sm:$0xff] 0.0
      %192 = vst [vmem:[#allocation2 + $0xb8] sm:$0xff] 0.0
      %193 = vst [vmem:[#allocation2 + $0xc0] sm:$0xff] 0.0
      %194 = vst [vmem:[#allocation2 + $0xc8] sm:$0xff] 0.0
      %195 = vst [vmem:[#allocation2 + $0xd0] sm:$0xff] 0.0
      %196 = vst [vmem:[#allocation2 + $0xd8] sm:$0xff] 0.0
      %197 = vst [vmem:[#allocation2 + $0xe0] sm:$0xff] 0.0
      %198 = vst [vmem:[#allocation2 + $0xe8] sm:$0xff] 0.0
      %199 = vst [vmem:[#allocation2 + $0xf0] sm:$0xff] 0.0
      %200 = vst [vmem:[#allocation2 + $0xf8] sm:$0xff] 0.0
    $region97: #{tpu_custom_call.1} parent=1 // pred_fallthru
      _
    %v201 = vld [vmem:[#allocation2] sm:$0xff]
    %v202 = vld [vmem:[#allocation2 + $0x8] sm:$0xff]
    %v203 = vld [vmem:[#allocation2 + $0x10] sm:$0xff]
    %v204 = vld [vmem:[#allocation2 + $0x18] sm:$0xff]
    %v205 = vld [vmem:[#allocation2 + $0x20] sm:$0xff]
    %v206 = vld [vmem:[#allocation2 + $0x28] sm:$0xff]
    %v207 = vld [vmem:[#allocation2 + $0x30] sm:$0xff]
    %v208 = vld [vmem:[#allocation2 + $0x38] sm:$0xff]
    %v209 = vld [vmem:[#allocation2 + $0x40] sm:$0xff]
    %v210 = vld [vmem:[#allocation2 + $0x48] sm:$0xff]
    %v211 = vld [vmem:[#allocation2 + $0x50] sm:$0xff]
    %v212 = vld [vmem:[#allocation2 + $0x58] sm:$0xff]
    %v213 = vld [vmem:[#allocation2 + $0x60] sm:$0xff]
    %v214 = vld [vmem:[#allocation2 + $0x68] sm:$0xff]
    %v215 = vld [vmem:[#allocation2 + $0x70] sm:$0xff]
    %v216 = vld [vmem:[#allocation2 + $0x78] sm:$0xff]
    %v217 = vld [vmem:[#allocation2 + $0x80] sm:$0xff]
    %v218 = vld [vmem:[#allocation2 + $0x88] sm:$0xff]
    %v219 = vld [vmem:[#allocation2 + $0x90] sm:$0xff]
    %v220 = vld [vmem:[#allocation2 + $0x98] sm:$0xff]
    %v221 = vld [vmem:[#allocation2 + $0xa0] sm:$0xff]
    %v222 = vld [vmem:[#allocation2 + $0xa8] sm:$0xff]
    %v223 = vld [vmem:[#allocation2 + $0xb0] sm:$0xff]
    %v224 = vld [vmem:[#allocation2 + $0xb8] sm:$0xff]
    %v225 = vld [vmem:[#allocation2 + $0xc0] sm:$0xff]
    %v226 = vld [vmem:[#allocation2 + $0xc8] sm:$0xff]
    %v227 = vld [vmem:[#allocation2 + $0xd0] sm:$0xff]
    %v228 = vld [vmem:[#allocation2 + $0xd8] sm:$0xff]
    %v229 = vld [vmem:[#allocation2 + $0xe0] sm:$0xff]
    %v230 = vld [vmem:[#allocation2 + $0xe8] sm:$0xff]
    %v231 = vld [vmem:[#allocation2 + $0xf0] sm:$0xff]
    %v232 = vld [vmem:[#allocation2 + $0xf8] sm:$0xff]
    %v233 = vld [vmem:[#allocation4] sm:$0xff]
    %v234 = vld [vmem:[#allocation4 + $0x8] sm:$0xff]
    %v235 = vld [vmem:[#allocation4 + $0x10] sm:$0xff]
    %v236 = vld [vmem:[#allocation4 + $0x18] sm:$0xff]
    %v237 = vld [vmem:[#allocation4 + $0x20] sm:$0xff]
    %v238 = vld [vmem:[#allocation4 + $0x28] sm:$0xff]
    %v239 = vld [vmem:[#allocation4 + $0x30] sm:$0xff]
    %v240 = vld [vmem:[#allocation4 + $0x38] sm:$0xff]
    %v241 = vld [vmem:[#allocation4 + $0x40] sm:$0xff]
    %v242 = vld [vmem:[#allocation4 + $0x48] sm:$0xff]
    %v243 = vld [vmem:[#allocation4 + $0x50] sm:$0xff]
    %v244 = vld [vmem:[#allocation4 + $0x58] sm:$0xff]
    %v245 = vld [vmem:[#allocation4 + $0x60] sm:$0xff]
    %v246 = vld [vmem:[#allocation4 + $0x68] sm:$0xff]
    %v247 = vld [vmem:[#allocation4 + $0x70] sm:$0xff]
    %v248 = vld [vmem:[#allocation4 + $0x78] sm:$0xff]
    %v249 = vld [vmem:[#allocation4 + $0x80] sm:$0xff]
    %v250 = vld [vmem:[#allocation4 + $0x88] sm:$0xff]
    %v251 = vld [vmem:[#allocation4 + $0x90] sm:$0xff]
    %v252 = vld [vmem:[#allocation4 + $0x98] sm:$0xff]
    %v253 = vld [vmem:[#allocation4 + $0xa0] sm:$0xff]
    %v254 = vld [vmem:[#allocation4 + $0xa8] sm:$0xff]
    %v255 = vld [vmem:[#allocation4 + $0xb0] sm:$0xff]
    %v256 = vld [vmem:[#allocation4 + $0xb8] sm:$0xff]
    %v257 = vld [vmem:[#allocation4 + $0xc0] sm:$0xff]
    %v258 = vld [vmem:[#allocation4 + $0xc8] sm:$0xff]
    %v259 = vld [vmem:[#allocation4 + $0xd0] sm:$0xff]
    %v260 = vld [vmem:[#allocation4 + $0xd8] sm:$0xff]
    %v261 = vld [vmem:[#allocation4 + $0xe0] sm:$0xff]
    %v262 = vld [vmem:[#allocation4 + $0xe8] sm:$0xff]
    %v263 = vld [vmem:[#allocation4 + $0xf0] sm:$0xff]
    %v264 = vld [vmem:[#allocation4 + $0xf8] sm:$0xff]
    %v265 = vld [vmem:[#allocation4 + $0x100] sm:$0xff]
    %v266 = vld [vmem:[#allocation4 + $0x108] sm:$0xff]
    %v267 = vld [vmem:[#allocation4 + $0x110] sm:$0xff]
    %v268 = vld [vmem:[#allocation4 + $0x118] sm:$0xff]
    %v269 = vld [vmem:[#allocation4 + $0x120] sm:$0xff]
    %v270 = vld [vmem:[#allocation4 + $0x128] sm:$0xff]
    %v271 = vld [vmem:[#allocation4 + $0x130] sm:$0xff]
    %v272 = vld [vmem:[#allocation4 + $0x138] sm:$0xff]
    %v273 = vld [vmem:[#allocation4 + $0x140] sm:$0xff]
    %v274 = vld [vmem:[#allocation4 + $0x148] sm:$0xff]
    %v275 = vld [vmem:[#allocation4 + $0x150] sm:$0xff]
    %v276 = vld [vmem:[#allocation4 + $0x158] sm:$0xff]
    %v277 = vld [vmem:[#allocation4 + $0x160] sm:$0xff]
    %v278 = vld [vmem:[#allocation4 + $0x168] sm:$0xff]
    %v279 = vld [vmem:[#allocation4 + $0x170] sm:$0xff]
    %v280 = vld [vmem:[#allocation4 + $0x178] sm:$0xff]
    %v281 = vld [vmem:[#allocation9] sm:$0xff]
    %v282 = vld [vmem:[#allocation9 + $0x8] sm:$0xff]
    %v283 = vld [vmem:[#allocation9 + $0x10] sm:$0xff]
    %v284 = vld [vmem:[#allocation9 + $0x18] sm:$0xff]
    %v285 = vld [vmem:[#allocation9 + $0x20] sm:$0xff]
    %v286 = vld [vmem:[#allocation9 + $0x28] sm:$0xff]
    %v287 = vld [vmem:[#allocation9 + $0x30] sm:$0xff]
    %v288 = vld [vmem:[#allocation9 + $0x38] sm:$0xff]
    %v289 = vld [vmem:[#allocation9 + $0x40] sm:$0xff]
    %v290 = vld [vmem:[#allocation9 + $0x48] sm:$0xff]
    %v291 = vld [vmem:[#allocation9 + $0x50] sm:$0xff]
    %v292 = vld [vmem:[#allocation9 + $0x58] sm:$0xff]
    %v293 = vld [vmem:[#allocation9 + $0x60] sm:$0xff]
    %v294 = vld [vmem:[#allocation9 + $0x68] sm:$0xff]
    %v295 = vld [vmem:[#allocation9 + $0x70] sm:$0xff]
    %v296 = vld [vmem:[#allocation9 + $0x78] sm:$0xff]
    %v297 = vld [vmem:[#allocation9 + $0x80] sm:$0xff]
    %v298 = vld [vmem:[#allocation9 + $0x88] sm:$0xff]
    %v299 = vld [vmem:[#allocation9 + $0x90] sm:$0xff]
    %v300 = vld [vmem:[#allocation9 + $0x98] sm:$0xff]
    %v301 = vld [vmem:[#allocation9 + $0xa0] sm:$0xff]
    %v302 = vld [vmem:[#allocation9 + $0xa8] sm:$0xff]
    %v303 = vld [vmem:[#allocation9 + $0xb0] sm:$0xff]
    %v304 = vld [vmem:[#allocation9 + $0xb8] sm:$0xff]
    %v305 = vld [vmem:[#allocation9 + $0xc0] sm:$0xff]
    %v306 = vld [vmem:[#allocation9 + $0xc8] sm:$0xff]
    %v307 = vld [vmem:[#allocation9 + $0xd0] sm:$0xff]
    %v308 = vld [vmem:[#allocation9 + $0xd8] sm:$0xff]
    %v309 = vld [vmem:[#allocation9 + $0xe0] sm:$0xff]
    %v310 = vld [vmem:[#allocation9 + $0xe8] sm:$0xff]
    %v311 = vld [vmem:[#allocation9 + $0xf0] sm:$0xff]
    %v312 = vld [vmem:[#allocation9 + $0xf8] sm:$0xff]
    %v313 = vld [vmem:[#allocation9 + $0x100] sm:$0xff]
    %v314 = vld [vmem:[#allocation9 + $0x108] sm:$0xff]
    %v315 = vld [vmem:[#allocation9 + $0x110] sm:$0xff]
    %v316 = vld [vmem:[#allocation9 + $0x118] sm:$0xff]
    %v317 = vld [vmem:[#allocation9 + $0x120] sm:$0xff]
    %v318 = vld [vmem:[#allocation9 + $0x128] sm:$0xff]
    %v319 = vld [vmem:[#allocation9 + $0x130] sm:$0xff]
    %v320 = vld [vmem:[#allocation9 + $0x138] sm:$0xff]
    %v321 = vld [vmem:[#allocation9 + $0x140] sm:$0xff]
    %v322 = vld [vmem:[#allocation9 + $0x148] sm:$0xff]
    %v323 = vld [vmem:[#allocation9 + $0x150] sm:$0xff]
    %v324 = vld [vmem:[#allocation9 + $0x158] sm:$0xff]
    %v325 = vld [vmem:[#allocation9 + $0x160] sm:$0xff]
    %v326 = vld [vmem:[#allocation9 + $0x168] sm:$0xff]
    %v327 = vld [vmem:[#allocation9 + $0x170] sm:$0xff]
    %v328 = vld [vmem:[#allocation9 + $0x178] sm:$0xff]
    %v329 = vld [vmem:[#allocation9 + $0x180] sm:$0xff]
    %v330 = vld [vmem:[#allocation9 + $0x188] sm:$0xff]
    %v331 = vld [vmem:[#allocation9 + $0x190] sm:$0xff]
    %v332 = vld [vmem:[#allocation9 + $0x198] sm:$0xff]
    %v333 = vld [vmem:[#allocation9 + $0x1a0] sm:$0xff]
    %v334 = vld [vmem:[#allocation9 + $0x1a8] sm:$0xff]
    %v335 = vld [vmem:[#allocation9 + $0x1b0] sm:$0xff]
    %v336 = vld [vmem:[#allocation9 + $0x1b8] sm:$0xff]
    %v337 = vld [vmem:[#allocation9 + $0x1c0] sm:$0xff]
    %v338 = vld [vmem:[#allocation9 + $0x1c8] sm:$0xff]
    %v339 = vld [vmem:[#allocation9 + $0x1d0] sm:$0xff]
    %v340 = vld [vmem:[#allocation9 + $0x1d8] sm:$0xff]
    %v341 = vld [vmem:[#allocation9 + $0x1e0] sm:$0xff]
    %v342 = vld [vmem:[#allocation9 + $0x1e8] sm:$0xff]
    %v343 = vld [vmem:[#allocation9 + $0x1f0] sm:$0xff]
    %v344 = vld [vmem:[#allocation9 + $0x1f8] sm:$0xff]
    %v345 = vld [vmem:[#allocation9 + $0x200] sm:$0xff]
    %v346 = vld [vmem:[#allocation9 + $0x208] sm:$0xff]
    %v347 = vld [vmem:[#allocation9 + $0x210] sm:$0xff]
    %v348 = vld [vmem:[#allocation9 + $0x218] sm:$0xff]
    %v349 = vld [vmem:[#allocation9 + $0x220] sm:$0xff]
    %v350 = vld [vmem:[#allocation9 + $0x228] sm:$0xff]
    %v351 = vld [vmem:[#allocation9 + $0x230] sm:$0xff]
    %v352 = vld [vmem:[#allocation9 + $0x238] sm:$0xff]
    %v353 = vld [vmem:[#allocation9 + $0x240] sm:$0xff]
    %v354 = vld [vmem:[#allocation9 + $0x248] sm:$0xff]
    %v355 = vld [vmem:[#allocation9 + $0x250] sm:$0xff]
    %v356 = vld [vmem:[#allocation9 + $0x258] sm:$0xff]
    %v357 = vld [vmem:[#allocation9 + $0x260] sm:$0xff]
    %v358 = vld [vmem:[#allocation9 + $0x268] sm:$0xff]
    %v359 = vld [vmem:[#allocation9 + $0x270] sm:$0xff]
    %v360 = vld [vmem:[#allocation9 + $0x278] sm:$0xff]
    %v361 = vld [vmem:[#allocation9 + $0x280] sm:$0xff]
    %v362 = vld [vmem:[#allocation9 + $0x288] sm:$0xff]
    %v363 = vld [vmem:[#allocation9 + $0x290] sm:$0xff]
    %v364 = vld [vmem:[#allocation9 + $0x298] sm:$0xff]
    %v365 = vld [vmem:[#allocation9 + $0x2a0] sm:$0xff]
    %v366 = vld [vmem:[#allocation9 + $0x2a8] sm:$0xff]
    %v367 = vld [vmem:[#allocation9 + $0x2b0] sm:$0xff]
    %v368 = vld [vmem:[#allocation9 + $0x2b8] sm:$0xff]
    %v369 = vld [vmem:[#allocation9 + $0x2c0] sm:$0xff]
    %v370 = vld [vmem:[#allocation9 + $0x2c8] sm:$0xff]
    %v371 = vld [vmem:[#allocation9 + $0x2d0] sm:$0xff]
    %v372 = vld [vmem:[#allocation9 + $0x2d8] sm:$0xff]
    %v373 = vld [vmem:[#allocation9 + $0x2e0] sm:$0xff]
    %v374 = vld [vmem:[#allocation9 + $0x2e8] sm:$0xff]
    %v375 = vld [vmem:[#allocation9 + $0x2f0] sm:$0xff]
    %v376 = vld [vmem:[#allocation9 + $0x2f8] sm:$0xff]
    %v425 = vunpack.c.l.b16 %v233
    %v426 = vunpack.c.h.b16 %v233
    %v427 = vunpack.c.l.b16 %v234
    %v428 = vunpack.c.h.b16 %v234
    %v429 = vunpack.c.l.b16 %v235
    %v430 = vunpack.c.h.b16 %v235
    %v431 = vunpack.c.l.b16 %v236
    %v432 = vunpack.c.h.b16 %v236
    %v433 = vunpack.c.l.b16 %v237
    %v434 = vunpack.c.h.b16 %v237
    %v435 = vunpack.c.l.b16 %v238
    %v436 = vunpack.c.h.b16 %v238
    %v437 = vunpack.c.l.b16 %v239
    %v438 = vunpack.c.h.b16 %v239
    %v439 = vunpack.c.l.b16 %v240
    %v440 = vunpack.c.h.b16 %v240
    %v441 = vunpack.c.l.b16 %v241
    %v442 = vunpack.c.h.b16 %v241
    %v443 = vunpack.c.l.b16 %v242
    %v444 = vunpack.c.h.b16 %v242
    %v445 = vunpack.c.l.b16 %v243
    %v446 = vunpack.c.h.b16 %v243
    %v447 = vunpack.c.l.b16 %v244
    %v448 = vunpack.c.h.b16 %v244
    %v449 = vunpack.c.l.b16 %v245
    %v450 = vunpack.c.h.b16 %v245
    %v451 = vunpack.c.l.b16 %v246
    %v452 = vunpack.c.h.b16 %v246
    %v453 = vunpack.c.l.b16 %v247
    %v454 = vunpack.c.h.b16 %v247
    %v455 = vunpack.c.l.b16 %v248
    %v456 = vunpack.c.h.b16 %v248
    %v457 = vunpack.c.l.b16 %v249
    %v458 = vunpack.c.h.b16 %v249
    %v459 = vunpack.c.l.b16 %v250
    %v460 = vunpack.c.h.b16 %v250
    %v461 = vunpack.c.l.b16 %v251
    %v462 = vunpack.c.h.b16 %v251
    %v463 = vunpack.c.l.b16 %v252
    %v464 = vunpack.c.h.b16 %v252
    %v465 = vunpack.c.l.b16 %v253
    %v466 = vunpack.c.h.b16 %v253
    %v467 = vunpack.c.l.b16 %v254
    %v468 = vunpack.c.h.b16 %v254
    %v469 = vunpack.c.l.b16 %v255
    %v470 = vunpack.c.h.b16 %v255
    %v471 = vunpack.c.l.b16 %v256
    %v472 = vunpack.c.h.b16 %v256
    %v473 = vunpack.c.l.b16 %v257
    %v474 = vunpack.c.h.b16 %v257
    %v475 = vunpack.c.l.b16 %v258
    %v476 = vunpack.c.h.b16 %v258
    %v477 = vunpack.c.l.b16 %v259
    %v478 = vunpack.c.h.b16 %v259
    %v479 = vunpack.c.l.b16 %v260
    %v480 = vunpack.c.h.b16 %v260
    %v481 = vunpack.c.l.b16 %v261
    %v482 = vunpack.c.h.b16 %v261
    %v483 = vunpack.c.l.b16 %v262
    %v484 = vunpack.c.h.b16 %v262
    %v485 = vunpack.c.l.b16 %v263
    %v486 = vunpack.c.h.b16 %v263
    %v487 = vunpack.c.l.b16 %v264
    %v488 = vunpack.c.h.b16 %v264
    %v489 = vunpack.c.l.b16 %v265
    %v490 = vunpack.c.h.b16 %v265
    %v491 = vunpack.c.l.b16 %v266
    %v492 = vunpack.c.h.b16 %v266
    %v493 = vunpack.c.l.b16 %v267
    %v494 = vunpack.c.h.b16 %v267
    %v495 = vunpack.c.l.b16 %v268
    %v496 = vunpack.c.h.b16 %v268
    %v497 = vunpack.c.l.b16 %v269
    %v498 = vunpack.c.h.b16 %v269
    %v499 = vunpack.c.l.b16 %v270
    %v500 = vunpack.c.h.b16 %v270
    %v501 = vunpack.c.l.b16 %v271
    %v502 = vunpack.c.h.b16 %v271
    %v503 = vunpack.c.l.b16 %v272
    %v504 = vunpack.c.h.b16 %v272
    %v505 = vunpack.c.l.b16 %v273
    %v506 = vunpack.c.h.b16 %v273
    %v507 = vunpack.c.l.b16 %v274
    %v508 = vunpack.c.h.b16 %v274
    %v509 = vunpack.c.l.b16 %v275
    %v510 = vunpack.c.h.b16 %v275
    %v511 = vunpack.c.l.b16 %v276
    %v512 = vunpack.c.h.b16 %v276
    %v513 = vunpack.c.l.b16 %v277
    %v514 = vunpack.c.h.b16 %v277
    %v515 = vunpack.c.l.b16 %v278
    %v516 = vunpack.c.h.b16 %v278
    %v517 = vunpack.c.l.b16 %v279
    %v518 = vunpack.c.h.b16 %v279
    %v519 = vunpack.c.l.b16 %v280
    %v520 = vunpack.c.h.b16 %v280
    %v521 = vpack.c.b16 %v431, %v425
    %v522 = vpack.c.b16 %v432, %v426
    %v523 = vpack.c.b16 %v433, %v427
    %v524 = vpack.c.b16 %v434, %v428
    %v525 = vpack.c.b16 %v435, %v429
    %v526 = vpack.c.b16 %v436, %v430
    %v527 = vpack.c.b16 %v443, %v437
    %v528 = vpack.c.b16 %v444, %v438
    %v529 = vpack.c.b16 %v445, %v439
    %v530 = vpack.c.b16 %v446, %v440
    %v531 = vpack.c.b16 %v447, %v441
    %v532 = vpack.c.b16 %v448, %v442
    %v533 = vpack.c.b16 %v455, %v449
    %v534 = vpack.c.b16 %v456, %v450
    %v535 = vpack.c.b16 %v457, %v451
    %v536 = vpack.c.b16 %v458, %v452
    %v537 = vpack.c.b16 %v459, %v453
    %v538 = vpack.c.b16 %v460, %v454
    %v539 = vpack.c.b16 %v467, %v461
    %v540 = vpack.c.b16 %v468, %v462
    %v541 = vpack.c.b16 %v469, %v463
    %v542 = vpack.c.b16 %v470, %v464
    %v543 = vpack.c.b16 %v471, %v465
    %v544 = vpack.c.b16 %v472, %v466
    %v545 = vpack.c.b16 %v479, %v473
    %v546 = vpack.c.b16 %v480, %v474
    %v547 = vpack.c.b16 %v481, %v475
    %v548 = vpack.c.b16 %v482, %v476
    %v549 = vpack.c.b16 %v483, %v477
    %v550 = vpack.c.b16 %v484, %v478
    %v551 = vpack.c.b16 %v491, %v485
    %v552 = vpack.c.b16 %v492, %v486
    %v553 = vpack.c.b16 %v493, %v487
    %v554 = vpack.c.b16 %v494, %v488
    %v555 = vpack.c.b16 %v495, %v489
    %v556 = vpack.c.b16 %v496, %v490
    %v557 = vpack.c.b16 %v503, %v497
    %v558 = vpack.c.b16 %v504, %v498
    %v559 = vpack.c.b16 %v505, %v499
    %v560 = vpack.c.b16 %v506, %v500
    %v561 = vpack.c.b16 %v507, %v501
    %v562 = vpack.c.b16 %v508, %v502
    %v563 = vpack.c.b16 %v515, %v509
    %v564 = vpack.c.b16 %v516, %v510
    %v565 = vpack.c.b16 %v517, %v511
    %v566 = vpack.c.b16 %v518, %v512
    %v567 = vpack.c.b16 %v519, %v513
    %v568 = vpack.c.b16 %v520, %v514
    %v713 = vunpack.c.l.b16 %v281
    %v714 = vunpack.c.h.b16 %v281
    %v715 = vunpack.c.l.b16 %v282
    %v716 = vunpack.c.h.b16 %v282
    %v717 = vunpack.c.l.b16 %v283
    %v718 = vunpack.c.h.b16 %v283
    %v719 = vunpack.c.l.b16 %v284
    %v720 = vunpack.c.h.b16 %v284
    %v721 = vunpack.c.l.b16 %v285
    %v722 = vunpack.c.h.b16 %v285
    %v723 = vunpack.c.l.b16 %v286
    %v724 = vunpack.c.h.b16 %v286
    %v725 = vunpack.c.l.b16 %v287
    %v726 = vunpack.c.h.b16 %v287
    %v727 = vunpack.c.l.b16 %v288
    %v728 = vunpack.c.h.b16 %v288
    %v729 = vunpack.c.l.b16 %v289
    %v730 = vunpack.c.h.b16 %v289
    %v731 = vunpack.c.l.b16 %v290
    %v732 = vunpack.c.h.b16 %v290
    %v733 = vunpack.c.l.b16 %v291
    %v734 = vunpack.c.h.b16 %v291
    %v735 = vunpack.c.l.b16 %v292
    %v736 = vunpack.c.h.b16 %v292
    %v737 = vunpack.c.l.b16 %v293
    %v738 = vunpack.c.h.b16 %v293
    %v739 = vunpack.c.l.b16 %v294
    %v740 = vunpack.c.h.b16 %v294
    %v741 = vunpack.c.l.b16 %v295
    %v742 = vunpack.c.h.b16 %v295
    %v743 = vunpack.c.l.b16 %v296
    %v744 = vunpack.c.h.b16 %v296
    %v745 = vunpack.c.l.b16 %v297
    %v746 = vunpack.c.h.b16 %v297
    %v747 = vunpack.c.l.b16 %v298
    %v748 = vunpack.c.h.b16 %v298
    %v749 = vunpack.c.l.b16 %v299
    %v750 = vunpack.c.h.b16 %v299
    %v751 = vunpack.c.l.b16 %v300
    %v752 = vunpack.c.h.b16 %v300
    %v753 = vunpack.c.l.b16 %v301
    %v754 = vunpack.c.h.b16 %v301
    %v755 = vunpack.c.l.b16 %v302
    %v756 = vunpack.c.h.b16 %v302
    %v757 = vunpack.c.l.b16 %v303
    %v758 = vunpack.c.h.b16 %v303
    %v759 = vunpack.c.l.b16 %v304
    %v760 = vunpack.c.h.b16 %v304
    %v761 = vunpack.c.l.b16 %v305
    %v762 = vunpack.c.h.b16 %v305
    %v763 = vunpack.c.l.b16 %v306
    %v764 = vunpack.c.h.b16 %v306
    %v765 = vunpack.c.l.b16 %v307
    %v766 = vunpack.c.h.b16 %v307
    %v767 = vunpack.c.l.b16 %v308
    %v768 = vunpack.c.h.b16 %v308
    %v769 = vunpack.c.l.b16 %v309
    %v770 = vunpack.c.h.b16 %v309
    %v771 = vunpack.c.l.b16 %v310
    %v772 = vunpack.c.h.b16 %v310
    %v773 = vunpack.c.l.b16 %v311
    %v774 = vunpack.c.h.b16 %v311
    %v775 = vunpack.c.l.b16 %v312
    %v776 = vunpack.c.h.b16 %v312
    %v777 = vunpack.c.l.b16 %v313
    %v778 = vunpack.c.h.b16 %v313
    %v779 = vunpack.c.l.b16 %v314
    %v780 = vunpack.c.h.b16 %v314
    %v781 = vunpack.c.l.b16 %v315
    %v782 = vunpack.c.h.b16 %v315
    %v783 = vunpack.c.l.b16 %v316
    %v784 = vunpack.c.h.b16 %v316
    %v785 = vunpack.c.l.b16 %v317
    %v786 = vunpack.c.h.b16 %v317
    %v787 = vunpack.c.l.b16 %v318
    %v788 = vunpack.c.h.b16 %v318
    %v789 = vunpack.c.l.b16 %v319
    %v790 = vunpack.c.h.b16 %v319
    %v791 = vunpack.c.l.b16 %v320
    %v792 = vunpack.c.h.b16 %v320
    %v793 = vunpack.c.l.b16 %v321
    %v794 = vunpack.c.h.b16 %v321
    %v795 = vunpack.c.l.b16 %v322
    %v796 = vunpack.c.h.b16 %v322
    %v797 = vunpack.c.l.b16 %v323
    %v798 = vunpack.c.h.b16 %v323
    %v799 = vunpack.c.l.b16 %v324
    %v800 = vunpack.c.h.b16 %v324
    %v801 = vunpack.c.l.b16 %v325
    %v802 = vunpack.c.h.b16 %v325
    %v803 = vunpack.c.l.b16 %v326
    %v804 = vunpack.c.h.b16 %v326
    %v805 = vunpack.c.l.b16 %v327
    %v806 = vunpack.c.h.b16 %v327
    %v807 = vunpack.c.l.b16 %v328
    %v808 = vunpack.c.h.b16 %v328
    %v809 = vunpack.c.l.b16 %v329
    %v810 = vunpack.c.h.b16 %v329
    %v811 = vunpack.c.l.b16 %v330
    %v812 = vunpack.c.h.b16 %v330
    %v813 = vunpack.c.l.b16 %v331
    %v814 = vunpack.c.h.b16 %v331
    %v815 = vunpack.c.l.b16 %v332
    %v816 = vunpack.c.h.b16 %v332
    %v817 = vunpack.c.l.b16 %v333
    %v818 = vunpack.c.h.b16 %v333
    %v819 = vunpack.c.l.b16 %v334
    %v820 = vunpack.c.h.b16 %v334
    %v821 = vunpack.c.l.b16 %v335
    %v822 = vunpack.c.h.b16 %v335
    %v823 = vunpack.c.l.b16 %v336
    %v824 = vunpack.c.h.b16 %v336
    %v825 = vunpack.c.l.b16 %v337
    %v826 = vunpack.c.h.b16 %v337
    %v827 = vunpack.c.l.b16 %v338
    %v828 = vunpack.c.h.b16 %v338
    %v829 = vunpack.c.l.b16 %v339
    %v830 = vunpack.c.h.b16 %v339
    %v831 = vunpack.c.l.b16 %v340
    %v832 = vunpack.c.h.b16 %v340
    %v833 = vunpack.c.l.b16 %v341
    %v834 = vunpack.c.h.b16 %v341
    %v835 = vunpack.c.l.b16 %v342
    %v836 = vunpack.c.h.b16 %v342
    %v837 = vunpack.c.l.b16 %v343
    %v838 = vunpack.c.h.b16 %v343
    %v839 = vunpack.c.l.b16 %v344
    %v840 = vunpack.c.h.b16 %v344
    %v841 = vunpack.c.l.b16 %v345
    %v842 = vunpack.c.h.b16 %v345
    %v843 = vunpack.c.l.b16 %v346
    %v844 = vunpack.c.h.b16 %v346
    %v845 = vunpack.c.l.b16 %v347
    %v846 = vunpack.c.h.b16 %v347
    %v847 = vunpack.c.l.b16 %v348
    %v848 = vunpack.c.h.b16 %v348
    %v849 = vunpack.c.l.b16 %v349
    %v850 = vunpack.c.h.b16 %v349
    %v851 = vunpack.c.l.b16 %v350
    %v852 = vunpack.c.h.b16 %v350
    %v853 = vunpack.c.l.b16 %v351
    %v854 = vunpack.c.h.b16 %v351
    %v855 = vunpack.c.l.b16 %v352
    %v856 = vunpack.c.h.b16 %v352
    %v857 = vunpack.c.l.b16 %v353
    %v858 = vunpack.c.h.b16 %v353
    %v859 = vunpack.c.l.b16 %v354
    %v860 = vunpack.c.h.b16 %v354
    %v861 = vunpack.c.l.b16 %v355
    %v862 = vunpack.c.h.b16 %v355
    %v863 = vunpack.c.l.b16 %v356
    %v864 = vunpack.c.h.b16 %v356
    %v865 = vunpack.c.l.b16 %v357
    %v866 = vunpack.c.h.b16 %v357
    %v867 = vunpack.c.l.b16 %v358
    %v868 = vunpack.c.h.b16 %v358
    %v869 = vunpack.c.l.b16 %v359
    %v870 = vunpack.c.h.b16 %v359
    %v871 = vunpack.c.l.b16 %v360
    %v872 = vunpack.c.h.b16 %v360
    %v873 = vunpack.c.l.b16 %v361
    %v874 = vunpack.c.h.b16 %v361
    %v875 = vunpack.c.l.b16 %v362
    %v876 = vunpack.c.h.b16 %v362
    %v877 = vunpack.c.l.b16 %v363
    %v878 = vunpack.c.h.b16 %v363
    %v879 = vunpack.c.l.b16 %v364
    %v880 = vunpack.c.h.b16 %v364
    %v881 = vunpack.c.l.b16 %v365
    %v882 = vunpack.c.h.b16 %v365
    %v883 = vunpack.c.l.b16 %v366
    %v884 = vunpack.c.h.b16 %v366
    %v885 = vunpack.c.l.b16 %v367
    %v886 = vunpack.c.h.b16 %v367
    %v887 = vunpack.c.l.b16 %v368
    %v888 = vunpack.c.h.b16 %v368
    %v889 = vunpack.c.l.b16 %v369
    %v890 = vunpack.c.h.b16 %v369
    %v891 = vunpack.c.l.b16 %v370
    %v892 = vunpack.c.h.b16 %v370
    %v893 = vunpack.c.l.b16 %v371
    %v894 = vunpack.c.h.b16 %v371
    %v895 = vunpack.c.l.b16 %v372
    %v896 = vunpack.c.h.b16 %v372
    %v897 = vunpack.c.l.b16 %v373
    %v898 = vunpack.c.h.b16 %v373
    %v899 = vunpack.c.l.b16 %v374
    %v900 = vunpack.c.h.b16 %v374
    %v901 = vunpack.c.l.b16 %v375
    %v902 = vunpack.c.h.b16 %v375
    %v903 = vunpack.c.l.b16 %v376
    %v904 = vunpack.c.h.b16 %v376
    %v905 = vpack.c.b16 %v715, %v713
    %v906 = vpack.c.b16 %v716, %v714
    %v907 = vpack.c.b16 %v719, %v717
    %v908 = vpack.c.b16 %v720, %v718
    %v909 = vpack.c.b16 %v723, %v721
    %v910 = vpack.c.b16 %v724, %v722
    %v911 = vpack.c.b16 %v727, %v725
    %v912 = vpack.c.b16 %v728, %v726
    %v913 = vpack.c.b16 %v731, %v729
    %v914 = vpack.c.b16 %v732, %v730
    %v915 = vpack.c.b16 %v735, %v733
    %v916 = vpack.c.b16 %v736, %v734
    %v917 = vpack.c.b16 %v739, %v737
    %v918 = vpack.c.b16 %v740, %v738
    %v919 = vpack.c.b16 %v743, %v741
    %v920 = vpack.c.b16 %v744, %v742
    %v921 = vpack.c.b16 %v747, %v745
    %v922 = vpack.c.b16 %v748, %v746
    %v923 = vpack.c.b16 %v751, %v749
    %v924 = vpack.c.b16 %v752, %v750
    %v925 = vpack.c.b16 %v755, %v753
    %v926 = vpack.c.b16 %v756, %v754
    %v927 = vpack.c.b16 %v759, %v757
    %v928 = vpack.c.b16 %v760, %v758
    %v929 = vpack.c.b16 %v763, %v761
    %v930 = vpack.c.b16 %v764, %v762
    %v931 = vpack.c.b16 %v767, %v765
    %v932 = vpack.c.b16 %v768, %v766
    %v933 = vpack.c.b16 %v771, %v769
    %v934 = vpack.c.b16 %v772, %v770
    %v935 = vpack.c.b16 %v775, %v773
    %v936 = vpack.c.b16 %v776, %v774
    %v937 = vpack.c.b16 %v779, %v777
    %v938 = vpack.c.b16 %v780, %v778
    %v939 = vpack.c.b16 %v783, %v781
    %v940 = vpack.c.b16 %v784, %v782
    %v941 = vpack.c.b16 %v787, %v785
    %v942 = vpack.c.b16 %v788, %v786
    %v943 = vpack.c.b16 %v791, %v789
    %v944 = vpack.c.b16 %v792, %v790
    %v945 = vpack.c.b16 %v795, %v793
    %v946 = vpack.c.b16 %v796, %v794
    %v947 = vpack.c.b16 %v799, %v797
    %v948 = vpack.c.b16 %v800, %v798
    %v949 = vpack.c.b16 %v803, %v801
    %v950 = vpack.c.b16 %v804, %v802
    %v951 = vpack.c.b16 %v807, %v805
    %v952 = vpack.c.b16 %v808, %v806
    %v953 = vpack.c.b16 %v811, %v809
    %v954 = vpack.c.b16 %v812, %v810
    %v955 = vpack.c.b16 %v815, %v813
    %v956 = vpack.c.b16 %v816, %v814
    %v957 = vpack.c.b16 %v819, %v817
    %v958 = vpack.c.b16 %v820, %v818
    %v959 = vpack.c.b16 %v823, %v821
    %v960 = vpack.c.b16 %v824, %v822
    %v961 = vpack.c.b16 %v827, %v825
    %v962 = vpack.c.b16 %v828, %v826
    %v963 = vpack.c.b16 %v831, %v829
    %v964 = vpack.c.b16 %v832, %v830
    %v965 = vpack.c.b16 %v835, %v833
    %v966 = vpack.c.b16 %v836, %v834
    %v967 = vpack.c.b16 %v839, %v837
    %v968 = vpack.c.b16 %v840, %v838
    %v969 = vpack.c.b16 %v843, %v841
    %v970 = vpack.c.b16 %v844, %v842
    %v971 = vpack.c.b16 %v847, %v845
    %v972 = vpack.c.b16 %v848, %v846
    %v973 = vpack.c.b16 %v851, %v849
    %v974 = vpack.c.b16 %v852, %v850
    %v975 = vpack.c.b16 %v855, %v853
    %v976 = vpack.c.b16 %v856, %v854
    %v977 = vpack.c.b16 %v859, %v857
    %v978 = vpack.c.b16 %v860, %v858
    %v979 = vpack.c.b16 %v863, %v861
    %v980 = vpack.c.b16 %v864, %v862
    %v981 = vpack.c.b16 %v867, %v865
    %v982 = vpack.c.b16 %v868, %v866
    %v983 = vpack.c.b16 %v871, %v869
    %v984 = vpack.c.b16 %v872, %v870
    %v985 = vpack.c.b16 %v875, %v873
    %v986 = vpack.c.b16 %v876, %v874
    %v987 = vpack.c.b16 %v879, %v877
    %v988 = vpack.c.b16 %v880, %v878
    %v989 = vpack.c.b16 %v883, %v881
    %v990 = vpack.c.b16 %v884, %v882
    %v991 = vpack.c.b16 %v887, %v885
    %v992 = vpack.c.b16 %v888, %v886
    %v993 = vpack.c.b16 %v891, %v889
    %v994 = vpack.c.b16 %v892, %v890
    %v995 = vpack.c.b16 %v895, %v893
    %v996 = vpack.c.b16 %v896, %v894
    %v997 = vpack.c.b16 %v899, %v897
    %v998 = vpack.c.b16 %v900, %v898
    %v999 = vpack.c.b16 %v903, %v901
    %v1000 = vpack.c.b16 %v904, %v902
    %1097 = vmatprep.subr.bf16.mxu0 %v906
    %1098 = vmatpush1.bf16.msra.mxu0 %v905
    %1099 = vmatprep.subr.bf16.mxu0 %v908
    %1100 = vmatpush1.bf16.msra.mxu0 %v907
    %1101 = vmatprep.subr.bf16.mxu0 %v910
    %1102 = vmatpush1.bf16.msra.mxu0 %v909
    %1103 = vmatprep.subr.bf16.mxu0 %v912
    %1104 = vmatpush1.bf16.msra.mxu0 %v911
    %1105 = vmatprep.subr.bf16.mxu0 %v914
    %1106 = vmatpush1.bf16.msra.mxu0 %v913
    %1107 = vmatprep.subr.bf16.mxu0 %v916
    %1108 = vmatpush1.bf16.msra.mxu0 %v915
    %1109 = vmatprep.subr.bf16.mxu0 %v918
    %1110 = vmatpush1.bf16.msra.mxu0 %v917
    %1111 = vmatprep.subr.bf16.mxu0 %v920
    %1112 = vmatpush1.bf16.msra.mxu0 %v919
    %1113 = vmatprep.subr.bf16.mxu0 %v922
    %1114 = vmatpush1.bf16.msra.mxu0 %v921
    %1115 = vmatprep.subr.bf16.mxu0 %v924
    %1116 = vmatpush1.bf16.msra.mxu0 %v923
    %1117 = vmatprep.subr.bf16.mxu0 %v926
    %1118 = vmatpush1.bf16.msra.mxu0 %v925
    %1119 = vmatprep.subr.bf16.mxu0 %v928
    %1120 = vmatpush1.bf16.msra.mxu0 %v927
    %1121 = vmatprep.subr.bf16.mxu0 %v930
    %1122 = vmatpush1.bf16.msra.mxu0 %v929
    %1123 = vmatprep.subr.bf16.mxu0 %v932
    %1124 = vmatpush1.bf16.msra.mxu0 %v931
    %1125 = vmatprep.subr.bf16.mxu0 %v934
    %1126 = vmatpush1.bf16.msra.mxu0 %v933
    %1127 = vmatprep.subr.bf16.mxu0 %v936
    %1128 = vmatpush1.bf16.msra.mxu0 %v935
    %1129 = vmatprep.mubr.bf16.mxu0 %v522
    %1130 = vmatmul.mubr.bf16.gmra.mrb[0].mxu0 %v521
    %v1131 = vpop.f32.mrb[0].mxu0
    %v1132 = vadd.f32 0.0, %v1131
    %v1133 = vpop.f32.mrb[0].mxu0
    %v1134 = vadd.f32 0.0, %v1133
    %v1135 = vpop.f32.mrb[0].mxu0
    %v1136 = vadd.f32 0.0, %v1135
    %v1137 = vpop.f32.mrb[0].mxu0
    %v1138 = vadd.f32 0.0, %v1137
    %1139 = vmatprep.mubr.bf16.mxu0 %v528
    %1140 = vmatmul.mubr.bf16.gmra.mrb[0].mxu0 %v527
    %v1141 = vpop.f32.mrb[0].mxu0
    %v1142 = vadd.f32 0.0, %v1141
    %v1143 = vpop.f32.mrb[0].mxu0
    %v1144 = vadd.f32 0.0, %v1143
    %v1145 = vpop.f32.mrb[0].mxu0
    %v1146 = vadd.f32 0.0, %v1145
    %v1147 = vpop.f32.mrb[0].mxu0
    %v1148 = vadd.f32 0.0, %v1147
    %1149 = vmatprep.mubr.bf16.mxu0 %v534
    %1150 = vmatmul.mubr.bf16.gmra.mrb[0].mxu0 %v533
    %v1151 = vpop.f32.mrb[0].mxu0
    %v1152 = vadd.f32 0.0, %v1151
    %v1153 = vpop.f32.mrb[0].mxu0
    %v1154 = vadd.f32 0.0, %v1153
    %v1155 = vpop.f32.mrb[0].mxu0
    %v1156 = vadd.f32 0.0, %v1155
    %v1157 = vpop.f32.mrb[0].mxu0
    %v1158 = vadd.f32 0.0, %v1157
    %1159 = vmatprep.mubr.bf16.mxu0 %v540
    %1160 = vmatmul.mubr.bf16.gmra.mrb[0].mxu0 %v539
    %v1161 = vpop.f32.mrb[0].mxu0
    %v1162 = vadd.f32 0.0, %v1161
    %v1163 = vpop.f32.mrb[0].mxu0
    %v1164 = vadd.f32 0.0, %v1163
    %v1165 = vpop.f32.mrb[0].mxu0
    %v1166 = vadd.f32 0.0, %v1165
    %v1167 = vpop.f32.mrb[0].mxu0
    %v1168 = vadd.f32 0.0, %v1167
    %1169 = vmatprep.mubr.bf16.mxu0 %v546
    %1170 = vmatmul.mubr.bf16.gmra.mrb[0].mxu0 %v545
    %v1171 = vpop.f32.mrb[0].mxu0
    %v1172 = vadd.f32 0.0, %v1171
    %v1173 = vpop.f32.mrb[0].mxu0
    %v1174 = vadd.f32 0.0, %v1173
    %v1175 = vpop.f32.mrb[0].mxu0
    %v1176 = vadd.f32 0.0, %v1175
    %v1177 = vpop.f32.mrb[0].mxu0
    %v1178 = vadd.f32 0.0, %v1177
    %1179 = vmatprep.mubr.bf16.mxu0 %v552
    %1180 = vmatmul.mubr.bf16.gmra.mrb[0].mxu0 %v551
    %v1181 = vpop.f32.mrb[0].mxu0
    %v1182 = vadd.f32 0.0, %v1181
    %v1183 = vpop.f32.mrb[0].mxu0
    %v1184 = vadd.f32 0.0, %v1183
    %v1185 = vpop.f32.mrb[0].mxu0
    %v1186 = vadd.f32 0.0, %v1185
    %v1187 = vpop.f32.mrb[0].mxu0
    %v1188 = vadd.f32 0.0, %v1187
    %1189 = vmatprep.mubr.bf16.mxu0 %v558
    %1190 = vmatmul.mubr.bf16.gmra.mrb[0].mxu0 %v557
    %v1191 = vpop.f32.mrb[0].mxu0
    %v1192 = vadd.f32 0.0, %v1191
    %v1193 = vpop.f32.mrb[0].mxu0
    %v1194 = vadd.f32 0.0, %v1193
    %v1195 = vpop.f32.mrb[0].mxu0
    %v1196 = vadd.f32 0.0, %v1195
    %v1197 = vpop.f32.mrb[0].mxu0
    %v1198 = vadd.f32 0.0, %v1197
    %1199 = vmatprep.mubr.bf16.mxu0 %v564
    %1200 = vmatmul.mubr.bf16.gmra.mrb[0].mxu0 %v563
    %v1201 = vpop.f32.mrb[0].mxu0
    %v1202 = vadd.f32 0.0, %v1201
    %v1203 = vpop.f32.mrb[0].mxu0
    %v1204 = vadd.f32 0.0, %v1203
    %v1205 = vpop.f32.mrb[0].mxu0
    %v1206 = vadd.f32 0.0, %v1205
    %v1207 = vpop.f32.mrb[0].mxu0
    %v1208 = vadd.f32 0.0, %v1207
    %1209 = vdwg.mxu0
    %1210 = vmatprep.subr.bf16.mxu0 %v938
    %1211 = vmatpush1.bf16.msra.mxu0 %v937
    %1212 = vmatprep.subr.bf16.mxu0 %v940
    %1213 = vmatpush1.bf16.msra.mxu0 %v939
    %1214 = vmatprep.subr.bf16.mxu0 %v942
    %1215 = vmatpush1.bf16.msra.mxu0 %v941
    %1216 = vmatprep.subr.bf16.mxu0 %v944
    %1217 = vmatpush1.bf16.msra.mxu0 %v943
    %1218 = vmatprep.subr.bf16.mxu0 %v946
    %1219 = vmatpush1.bf16.msra.mxu0 %v945
    %1220 = vmatprep.subr.bf16.mxu0 %v948
    %1221 = vmatpush1.bf16.msra.mxu0 %v947
    %1222 = vmatprep.subr.bf16.mxu0 %v950
    %1223 = vmatpush1.bf16.msra.mxu0 %v949
    %1224 = vmatprep.subr.bf16.mxu0 %v952
    %1225 = vmatpush1.bf16.msra.mxu0 %v951
    %1226 = vmatprep.subr.bf16.mxu0 %v954
    %1227 = vmatpush1.bf16.msra.mxu0 %v953
    %1228 = vmatprep.subr.bf16.mxu0 %v956
    %1229 = vmatpush1.bf16.msra.mxu0 %v955
    %1230 = vmatprep.subr.bf16.mxu0 %v958
    %1231 = vmatpush1.bf16.msra.mxu0 %v957
    %1232 = vmatprep.subr.bf16.mxu0 %v960
    %1233 = vmatpush1.bf16.msra.mxu0 %v959
    %1234 = vmatprep.subr.bf16.mxu0 %v962
    %1235 = vmatpush1.bf16.msra.mxu0 %v961
    %1236 = vmatprep.subr.bf16.mxu0 %v964
    %1237 = vmatpush1.bf16.msra.mxu0 %v963
    %1238 = vmatprep.subr.bf16.mxu0 %v966
    %1239 = vmatpush1.bf16.msra.mxu0 %v965
    %1240 = vmatprep.subr.bf16.mxu0 %v968
    %1241 = vmatpush1.bf16.msra.mxu0 %v967
    %1242 = vmatprep.mubr.bf16.mxu0 %v524
    %1243 = vmatmul.mubr.bf16.gmra.mrb[0].mxu0 %v523
    %v1244 = vpop.f32.mrb[0].mxu0
    %v1245 = vadd.f32 %v1132, %v1244
    %v1246 = vpop.f32.mrb[0].mxu0
    %v1247 = vadd.f32 %v1134, %v1246
    %v1248 = vpop.f32.mrb[0].mxu0
    %v1249 = vadd.f32 %v1136, %v1248
    %v1250 = vpop.f32.mrb[0].mxu0
    %v1251 = vadd.f32 %v1138, %v1250
    %1252 = vmatprep.mubr.bf16.mxu0 %v530
    %1253 = vmatmul.mubr.bf16.gmra.mrb[0].mxu0 %v529
    %v1254 = vpop.f32.mrb[0].mxu0
    %v1255 = vadd.f32 %v1142, %v1254
    %v1256 = vpop.f32.mrb[0].mxu0
    %v1257 = vadd.f32 %v1144, %v1256
    %v1258 = vpop.f32.mrb[0].mxu0
    %v1259 = vadd.f32 %v1146, %v1258
    %v1260 = vpop.f32.mrb[0].mxu0
    %v1261 = vadd.f32 %v1148, %v1260
    %1262 = vmatprep.mubr.bf16.mxu0 %v536
    %1263 = vmatmul.mubr.bf16.gmra.mrb[0].mxu0 %v535
    %v1264 = vpop.f32.mrb[0].mxu0
    %v1265 = vadd.f32 %v1152, %v1264
    %v1266 = vpop.f32.mrb[0].mxu0
    %v1267 = vadd.f32 %v1154, %v1266
    %v1268 = vpop.f32.mrb[0].mxu0
    %v1269 = vadd.f32 %v1156, %v1268
    %v1270 = vpop.f32.mrb[0].mxu0
    %v1271 = vadd.f32 %v1158, %v1270
    %1272 = vmatprep.mubr.bf16.mxu0 %v542
    %1273 = vmatmul.mubr.bf16.gmra.mrb[0].mxu0 %v541
    %v1274 = vpop.f32.mrb[0].mxu0
    %v1275 = vadd.f32 %v1162, %v1274
    %v1276 = vpop.f32.mrb[0].mxu0
    %v1277 = vadd.f32 %v1164, %v1276
    %v1278 = vpop.f32.mrb[0].mxu0
    %v1279 = vadd.f32 %v1166, %v1278
    %v1280 = vpop.f32.mrb[0].mxu0
    %v1281 = vadd.f32 %v1168, %v1280
    %1282 = vmatprep.mubr.bf16.mxu0 %v548
    %1283 = vmatmul.mubr.bf16.gmra.mrb[0].mxu0 %v547
    %v1284 = vpop.f32.mrb[0].mxu0
    %v1285 = vadd.f32 %v1172, %v1284
    %v1286 = vpop.f32.mrb[0].mxu0
    %v1287 = vadd.f32 %v1174, %v1286
    %v1288 = vpop.f32.mrb[0].mxu0
    %v1289 = vadd.f32 %v1176, %v1288
    %v1290 = vpop.f32.mrb[0].mxu0
    %v1291 = vadd.f32 %v1178, %v1290
    %1292 = vmatprep.mubr.bf16.mxu0 %v554
    %1293 = vmatmul.mubr.bf16.gmra.mrb[0].mxu0 %v553
    %v1294 = vpop.f32.mrb[0].mxu0
    %v1295 = vadd.f32 %v1182, %v1294
    %v1296 = vpop.f32.mrb[0].mxu0
    %v1297 = vadd.f32 %v1184, %v1296
    %v1298 = vpop.f32.mrb[0].mxu0
    %v1299 = vadd.f32 %v1186, %v1298
    %v1300 = vpop.f32.mrb[0].mxu0
    %v1301 = vadd.f32 %v1188, %v1300
    %1302 = vmatprep.mubr.bf16.mxu0 %v560
    %1303 = vmatmul.mubr.bf16.gmra.mrb[0].mxu0 %v559
    %v1304 = vpop.f32.mrb[0].mxu0
    %v1305 = vadd.f32 %v1192, %v1304
    %v1306 = vpop.f32.mrb[0].mxu0
    %v1307 = vadd.f32 %v1194, %v1306
    %v1308 = vpop.f32.mrb[0].mxu0
    %v1309 = vadd.f32 %v1196, %v1308
    %v1310 = vpop.f32.mrb[0].mxu0
    %v1311 = vadd.f32 %v1198, %v1310
    %1312 = vmatprep.mubr.bf16.mxu0 %v566
    %1313 = vmatmul.mubr.bf16.gmra.mrb[0].mxu0 %v565
    %v1314 = vpop.f32.mrb[0].mxu0
    %v1315 = vadd.f32 %v1202, %v1314
    %v1316 = vpop.f32.mrb[0].mxu0
    %v1317 = vadd.f32 %v1204, %v1316
    %v1318 = vpop.f32.mrb[0].mxu0
    %v1319 = vadd.f32 %v1206, %v1318
    %v1320 = vpop.f32.mrb[0].mxu0
    %v1321 = vadd.f32 %v1208, %v1320
    %1322 = vdwg.mxu0
    %1323 = vmatprep.subr.bf16.mxu0 %v970
    %1324 = vmatpush1.bf16.msra.mxu0 %v969
    %1325 = vmatprep.subr.bf16.mxu0 %v972
    %1326 = vmatpush1.bf16.msra.mxu0 %v971
    %1327 = vmatprep.subr.bf16.mxu0 %v974
    %1328 = vmatpush1.bf16.msra.mxu0 %v973
    %1329 = vmatprep.subr.bf16.mxu0 %v976
    %1330 = vmatpush1.bf16.msra.mxu0 %v975
    %1331 = vmatprep.subr.bf16.mxu0 %v978
    %1332 = vmatpush1.bf16.msra.mxu0 %v977
    %1333 = vmatprep.subr.bf16.mxu0 %v980
    %1334 = vmatpush1.bf16.msra.mxu0 %v979
    %1335 = vmatprep.subr.bf16.mxu0 %v982
    %1336 = vmatpush1.bf16.msra.mxu0 %v981
    %1337 = vmatprep.subr.bf16.mxu0 %v984
    %1338 = vmatpush1.bf16.msra.mxu0 %v983
    %1339 = vmatprep.subr.bf16.mxu0 %v986
    %1340 = vmatpush1.bf16.msra.mxu0 %v985
    %1341 = vmatprep.subr.bf16.mxu0 %v988
    %1342 = vmatpush1.bf16.msra.mxu0 %v987
    %1343 = vmatprep.subr.bf16.mxu0 %v990
    %1344 = vmatpush1.bf16.msra.mxu0 %v989
    %1345 = vmatprep.subr.bf16.mxu0 %v992
    %1346 = vmatpush1.bf16.msra.mxu0 %v991
    %1347 = vmatprep.subr.bf16.mxu0 %v994
    %1348 = vmatpush1.bf16.msra.mxu0 %v993
    %1349 = vmatprep.subr.bf16.mxu0 %v996
    %1350 = vmatpush1.bf16.msra.mxu0 %v995
    %1351 = vmatprep.subr.bf16.mxu0 %v998
    %1352 = vmatpush1.bf16.msra.mxu0 %v997
    %1353 = vmatprep.subr.bf16.mxu0 %v1000
    %1354 = vmatpush1.bf16.msra.mxu0 %v999
    %1355 = vmatprep.mubr.bf16.mxu0 %v526
    %1356 = vmatmul.mubr.bf16.gmra.mrb[0].mxu0 %v525
    %v1357 = vpop.f32.mrb[0].mxu0
    %v1358 = vadd.f32 %v1245, %v1357
    %v1359 = vpop.f32.mrb[0].mxu0
    %v1360 = vadd.f32 %v1247, %v1359
    %v1361 = vpop.f32.mrb[0].mxu0
    %v1362 = vadd.f32 %v1249, %v1361
    %v1363 = vpop.f32.mrb[0].mxu0
    %v1364 = vadd.f32 %v1251, %v1363
    %1365 = vmatprep.mubr.bf16.mxu0 %v532
    %1366 = vmatmul.mubr.bf16.gmra.mrb[0].mxu0 %v531
    %v1367 = vpop.f32.mrb[0].mxu0
    %v1368 = vadd.f32 %v1255, %v1367
    %v1369 = vpop.f32.mrb[0].mxu0
    %v1370 = vadd.f32 %v1257, %v1369
    %v1371 = vpop.f32.mrb[0].mxu0
    %v1372 = vadd.f32 %v1259, %v1371
    %v1373 = vpop.f32.mrb[0].mxu0
    %v1374 = vadd.f32 %v1261, %v1373
    %1375 = vmatprep.mubr.bf16.mxu0 %v538
    %1376 = vmatmul.mubr.bf16.gmra.mrb[0].mxu0 %v537
    %v1377 = vpop.f32.mrb[0].mxu0
    %v1378 = vadd.f32 %v1265, %v1377
    %v1379 = vpop.f32.mrb[0].mxu0
    %v1380 = vadd.f32 %v1267, %v1379
    %v1381 = vpop.f32.mrb[0].mxu0
    %v1382 = vadd.f32 %v1269, %v1381
    %v1383 = vpop.f32.mrb[0].mxu0
    %v1384 = vadd.f32 %v1271, %v1383
    %1385 = vmatprep.mubr.bf16.mxu0 %v544
    %1386 = vmatmul.mubr.bf16.gmra.mrb[0].mxu0 %v543
    %v1387 = vpop.f32.mrb[0].mxu0
    %v1388 = vadd.f32 %v1275, %v1387
    %v1389 = vpop.f32.mrb[0].mxu0
    %v1390 = vadd.f32 %v1277, %v1389
    %v1391 = vpop.f32.mrb[0].mxu0
    %v1392 = vadd.f32 %v1279, %v1391
    %v1393 = vpop.f32.mrb[0].mxu0
    %v1394 = vadd.f32 %v1281, %v1393
    %1395 = vmatprep.mubr.bf16.mxu0 %v550
    %1396 = vmatmul.mubr.bf16.gmra.mrb[0].mxu0 %v549
    %v1397 = vpop.f32.mrb[0].mxu0
    %v1398 = vadd.f32 %v1285, %v1397
    %v1399 = vpop.f32.mrb[0].mxu0
    %v1400 = vadd.f32 %v1287, %v1399
    %v1401 = vpop.f32.mrb[0].mxu0
    %v1402 = vadd.f32 %v1289, %v1401
    %v1403 = vpop.f32.mrb[0].mxu0
    %v1404 = vadd.f32 %v1291, %v1403
    %1405 = vmatprep.mubr.bf16.mxu0 %v556
    %1406 = vmatmul.mubr.bf16.gmra.mrb[0].mxu0 %v555
    %v1407 = vpop.f32.mrb[0].mxu0
    %v1408 = vadd.f32 %v1295, %v1407
    %v1409 = vpop.f32.mrb[0].mxu0
    %v1410 = vadd.f32 %v1297, %v1409
    %v1411 = vpop.f32.mrb[0].mxu0
    %v1412 = vadd.f32 %v1299, %v1411
    %v1413 = vpop.f32.mrb[0].mxu0
    %v1414 = vadd.f32 %v1301, %v1413
    %1415 = vmatprep.mubr.bf16.mxu0 %v562
    %1416 = vmatmul.mubr.bf16.gmra.mrb[0].mxu0 %v561
    %v1417 = vpop.f32.mrb[0].mxu0
    %v1418 = vadd.f32 %v1305, %v1417
    %v1419 = vpop.f32.mrb[0].mxu0
    %v1420 = vadd.f32 %v1307, %v1419
    %v1421 = vpop.f32.mrb[0].mxu0
    %v1422 = vadd.f32 %v1309, %v1421
    %v1423 = vpop.f32.mrb[0].mxu0
    %v1424 = vadd.f32 %v1311, %v1423
    %1425 = vmatprep.mubr.bf16.mxu0 %v568
    %1426 = vmatmul.mubr.bf16.gmra.mrb[0].mxu0 %v567
    %v1427 = vpop.f32.mrb[0].mxu0
    %v1428 = vadd.f32 %v1315, %v1427
    %v1429 = vpop.f32.mrb[0].mxu0
    %v1430 = vadd.f32 %v1317, %v1429
    %v1431 = vpop.f32.mrb[0].mxu0
    %v1432 = vadd.f32 %v1319, %v1431
    %v1433 = vpop.f32.mrb[0].mxu0
    %v1434 = vadd.f32 %v1321, %v1433
    %1435 = vdwg.mxu0
    %v1436 = vadd.f32 %v201, %v1358
    %v1437 = vadd.f32 %v202, %v1360
    %v1438 = vadd.f32 %v203, %v1362
    %v1439 = vadd.f32 %v204, %v1364
    %v1440 = vadd.f32 %v205, %v1368
    %v1441 = vadd.f32 %v206, %v1370
    %v1442 = vadd.f32 %v207, %v1372
    %v1443 = vadd.f32 %v208, %v1374
    %v1444 = vadd.f32 %v209, %v1378
    %v1445 = vadd.f32 %v210, %v1380
    %v1446 = vadd.f32 %v211, %v1382
    %v1447 = vadd.f32 %v212, %v1384
    %v1448 = vadd.f32 %v213, %v1388
    %v1449 = vadd.f32 %v214, %v1390
    %v1450 = vadd.f32 %v215, %v1392
    %v1451 = vadd.f32 %v216, %v1394
    %v1452 = vadd.f32 %v217, %v1398
    %v1453 = vadd.f32 %v218, %v1400
    %v1454 = vadd.f32 %v219, %v1402
    %v1455 = vadd.f32 %v220, %v1404
    %v1456 = vadd.f32 %v221, %v1408
    %v1457 = vadd.f32 %v222, %v1410
    %v1458 = vadd.f32 %v223, %v1412
    %v1459 = vadd.f32 %v224, %v1414
    %v1460 = vadd.f32 %v225, %v1418
    %v1461 = vadd.f32 %v226, %v1420
    %v1462 = vadd.f32 %v227, %v1422
    %v1463 = vadd.f32 %v228, %v1424
    %v1464 = vadd.f32 %v229, %v1428
    %v1465 = vadd.f32 %v230, %v1430
    %v1466 = vadd.f32 %v231, %v1432
    %v1467 = vadd.f32 %v232, %v1434
    %1468 = vst [vmem:[#allocation2] sm:$0xff] %v1436
    %1469 = vst [vmem:[#allocation2 + $0x8] sm:$0xff] %v1437
    %1470 = vst [vmem:[#allocation2 + $0x10] sm:$0xff] %v1438
    %1471 = vst [vmem:[#allocation2 + $0x18] sm:$0xff] %v1439
    %1472 = vst [vmem:[#allocation2 + $0x20] sm:$0xff] %v1440
    %1473 = vst [vmem:[#allocation2 + $0x28] sm:$0xff] %v1441
    %1474 = vst [vmem:[#allocation2 + $0x30] sm:$0xff] %v1442
    %1475 = vst [vmem:[#allocation2 + $0x38] sm:$0xff] %v1443
    %1476 = vst [vmem:[#allocation2 + $0x40] sm:$0xff] %v1444
    %1477 = vst [vmem:[#allocation2 + $0x48] sm:$0xff] %v1445
    %1478 = vst [vmem:[#allocation2 + $0x50] sm:$0xff] %v1446
    %1479 = vst [vmem:[#allocation2 + $0x58] sm:$0xff] %v1447
    %1480 = vst [vmem:[#allocation2 + $0x60] sm:$0xff] %v1448
    %1481 = vst [vmem:[#allocation2 + $0x68] sm:$0xff] %v1449
    %1482 = vst [vmem:[#allocation2 + $0x70] sm:$0xff] %v1450
    %1483 = vst [vmem:[#allocation2 + $0x78] sm:$0xff] %v1451
    %1484 = vst [vmem:[#allocation2 + $0x80] sm:$0xff] %v1452
    %1485 = vst [vmem:[#allocation2 + $0x88] sm:$0xff] %v1453
    %1486 = vst [vmem:[#allocation2 + $0x90] sm:$0xff] %v1454
    %1487 = vst [vmem:[#allocation2 + $0x98] sm:$0xff] %v1455
    %1488 = vst [vmem:[#allocation2 + $0xa0] sm:$0xff] %v1456
    %1489 = vst [vmem:[#allocation2 + $0xa8] sm:$0xff] %v1457
    %1490 = vst [vmem:[#allocation2 + $0xb0] sm:$0xff] %v1458
    %1491 = vst [vmem:[#allocation2 + $0xb8] sm:$0xff] %v1459
    %1492 = vst [vmem:[#allocation2 + $0xc0] sm:$0xff] %v1460
    %1493 = vst [vmem:[#allocation2 + $0xc8] sm:$0xff] %v1461
    %1494 = vst [vmem:[#allocation2 + $0xd0] sm:$0xff] %v1462
    %1495 = vst [vmem:[#allocation2 + $0xd8] sm:$0xff] %v1463
    %1496 = vst [vmem:[#allocation2 + $0xe0] sm:$0xff] %v1464
    %1497 = vst [vmem:[#allocation2 + $0xe8] sm:$0xff] %v1465
    %1498 = vst [vmem:[#allocation2 + $0xf0] sm:$0xff] %v1466
    %1499 = vst [vmem:[#allocation2 + $0xf8] sm:$0xff] %v1467
    // Predicated region
    $region98: #{tpu_custom_call.1} parent=1 // pred_check
      %p1500 = pneg %p165
    $region99: #{tpu_custom_call.1} parent=1 // pred_check_branch
      %1502 = sbr.rel (%p1500) target = $region101
    $region100: #{tpu_custom_call.1} parent=1 // pred_region
      %v1503 = vld [vmem:[#allocation2] sm:$0xff]
      %v1504 = vld [vmem:[#allocation2 + $0x8] sm:$0xff]
      %v1505 = vld [vmem:[#allocation2 + $0x10] sm:$0xff]
      %v1506 = vld [vmem:[#allocation2 + $0x18] sm:$0xff]
      %v1507 = vld [vmem:[#allocation2 + $0x20] sm:$0xff]
      %v1508 = vld [vmem:[#allocation2 + $0x28] sm:$0xff]
      %v1509 = vld [vmem:[#allocation2 + $0x30] sm:$0xff]
      %v1510 = vld [vmem:[#allocation2 + $0x38] sm:$0xff]
      %v1511 = vld [vmem:[#allocation2 + $0x40] sm:$0xff]
      %v1512 = vld [vmem:[#allocation2 + $0x48] sm:$0xff]
      %v1513 = vld [vmem:[#allocation2 + $0x50] sm:$0xff]
      %v1514 = vld [vmem:[#allocation2 + $0x58] sm:$0xff]
      %v1515 = vld [vmem:[#allocation2 + $0x60] sm:$0xff]
      %v1516 = vld [vmem:[#allocation2 + $0x68] sm:$0xff]
      %v1517 = vld [vmem:[#allocation2 + $0x70] sm:$0xff]
      %v1518 = vld [vmem:[#allocation2 + $0x78] sm:$0xff]
      %v1519 = vld [vmem:[#allocation2 + $0x80] sm:$0xff]
      %v1520 = vld [vmem:[#allocation2 + $0x88] sm:$0xff]
      %v1521 = vld [vmem:[#allocation2 + $0x90] sm:$0xff]
      %v1522 = vld [vmem:[#allocation2 + $0x98] sm:$0xff]
      %v1523 = vld [vmem:[#allocation2 + $0xa0] sm:$0xff]
      %v1524 = vld [vmem:[#allocation2 + $0xa8] sm:$0xff]
      %v1525 = vld [vmem:[#allocation2 + $0xb0] sm:$0xff]
      %v1526 = vld [vmem:[#allocation2 + $0xb8] sm:$0xff]
      %v1527 = vld [vmem:[#allocation2 + $0xc0] sm:$0xff]
      %v1528 = vld [vmem:[#allocation2 + $0xc8] sm:$0xff]
      %v1529 = vld [vmem:[#allocation2 + $0xd0] sm:$0xff]
      %v1530 = vld [vmem:[#allocation2 + $0xd8] sm:$0xff]
      %v1531 = vld [vmem:[#allocation2 + $0xe0] sm:$0xff]
      %v1532 = vld [vmem:[#allocation2 + $0xe8] sm:$0xff]
      %v1533 = vld [vmem:[#allocation2 + $0xf0] sm:$0xff]
      %v1534 = vld [vmem:[#allocation2 + $0xf8] sm:$0xff]
      %v1535 = vld [vmem:[%s4] sm:$0x3]
      %v1537 = vlaneseq
      %v1538 = vshrl.u32 %v1537, 7
      %v1539 = vsub.s32 0, %v1538
      %v1540 = vrot.slane %v1535, %v1539
      %v1541 = vlaneseq
      %v1542 = vshrl.u32 %v1541, 7
      %v1543 = vsub.s32 1, %v1542
      %v1544 = vrot.slane %v1535, %v1543
      %v1547 = vadd.f32 %v1503, %v1540
      %v1548 = vadd.f32 %v1504, %v1544
      %v1549 = vadd.f32 %v1505, %v1540
      %v1550 = vadd.f32 %v1506, %v1544
      %v1551 = vadd.f32 %v1507, %v1540
      %v1552 = vadd.f32 %v1508, %v1544
      %v1553 = vadd.f32 %v1509, %v1540
      %v1554 = vadd.f32 %v1510, %v1544
      %v1555 = vadd.f32 %v1511, %v1540
      %v1556 = vadd.f32 %v1512, %v1544
      %v1557 = vadd.f32 %v1513, %v1540
      %v1558 = vadd.f32 %v1514, %v1544
      %v1559 = vadd.f32 %v1515, %v1540
      %v1560 = vadd.f32 %v1516, %v1544
      %v1561 = vadd.f32 %v1517, %v1540
      %v1562 = vadd.f32 %v1518, %v1544
      %v1563 = vadd.f32 %v1519, %v1540
      %v1564 = vadd.f32 %v1520, %v1544
      %v1565 = vadd.f32 %v1521, %v1540
      %v1566 = vadd.f32 %v1522, %v1544
      %v1567 = vadd.f32 %v1523, %v1540
      %v1568 = vadd.f32 %v1524, %v1544
      %v1569 = vadd.f32 %v1525, %v1540
      %v1570 = vadd.f32 %v1526, %v1544
      %v1571 = vadd.f32 %v1527, %v1540
      %v1572 = vadd.f32 %v1528, %v1544
      %v1573 = vadd.f32 %v1529, %v1540
      %v1574 = vadd.f32 %v1530, %v1544
      %v1575 = vadd.f32 %v1531, %v1540
      %v1576 = vadd.f32 %v1532, %v1544
      %v1577 = vadd.f32 %v1533, %v1540
      %v1578 = vadd.f32 %v1534, %v1544
      %v1579 = vmax.f32 %v1547, 0.0
      %v1580 = vmax.f32 %v1548, 0.0
      %v1581 = vmax.f32 %v1549, 0.0
      %v1582 = vmax.f32 %v1550, 0.0
      %v1583 = vmax.f32 %v1551, 0.0
      %v1584 = vmax.f32 %v1552, 0.0
      %v1585 = vmax.f32 %v1553, 0.0
      %v1586 = vmax.f32 %v1554, 0.0
      %v1587 = vmax.f32 %v1555, 0.0
      %v1588 = vmax.f32 %v1556, 0.0
      %v1589 = vmax.f32 %v1557, 0.0
      %v1590 = vmax.f32 %v1558, 0.0
      %v1591 = vmax.f32 %v1559, 0.0
      %v1592 = vmax.f32 %v1560, 0.0
      %v1593 = vmax.f32 %v1561, 0.0
      %v1594 = vmax.f32 %v1562, 0.0
      %v1595 = vmax.f32 %v1563, 0.0
      %v1596 = vmax.f32 %v1564, 0.0
      %v1597 = vmax.f32 %v1565, 0.0
      %v1598 = vmax.f32 %v1566, 0.0
      %v1599 = vmax.f32 %v1567, 0.0
      %v1600 = vmax.f32 %v1568, 0.0
      %v1601 = vmax.f32 %v1569, 0.0
      %v1602 = vmax.f32 %v1570, 0.0
      %v1603 = vmax.f32 %v1571, 0.0
      %v1604 = vmax.f32 %v1572, 0.0
      %v1605 = vmax.f32 %v1573, 0.0
      %v1606 = vmax.f32 %v1574, 0.0
      %v1607 = vmax.f32 %v1575, 0.0
      %v1608 = vmax.f32 %v1576, 0.0
      %v1609 = vmax.f32 %v1577, 0.0
      %v1610 = vmax.f32 %v1578, 0.0
      %v1611 = vpack.c.bf16 %v1581, %v1579
      %v1612 = vpack.c.bf16 %v1582, %v1580
      %v1613 = vpack.c.bf16 %v1585, %v1583
      %v1614 = vpack.c.bf16 %v1586, %v1584
      %v1615 = vpack.c.bf16 %v1589, %v1587
      %v1616 = vpack.c.bf16 %v1590, %v1588
      %v1617 = vpack.c.bf16 %v1593, %v1591
      %v1618 = vpack.c.bf16 %v1594, %v1592
      %v1619 = vpack.c.bf16 %v1597, %v1595
      %v1620 = vpack.c.bf16 %v1598, %v1596
      %v1621 = vpack.c.bf16 %v1601, %v1599
      %v1622 = vpack.c.bf16 %v1602, %v1600
      %v1623 = vpack.c.bf16 %v1605, %v1603
      %v1624 = vpack.c.bf16 %v1606, %v1604
      %v1625 = vpack.c.bf16 %v1609, %v1607
      %v1626 = vpack.c.bf16 %v1610, %v1608
      %v1627 = vld [vmem:[#allocation10] sm:$0xff]
      %v1628 = vld [vmem:[#allocation10 + $0x8] sm:$0xff]
      %v1629 = vld [vmem:[#allocation10 + $0x10] sm:$0xff]
      %v1630 = vld [vmem:[#allocation10 + $0x18] sm:$0xff]
      %v1631 = vld [vmem:[#allocation10 + $0x20] sm:$0xff]
      %v1632 = vld [vmem:[#allocation10 + $0x28] sm:$0xff]
      %v1633 = vld [vmem:[#allocation10 + $0x30] sm:$0xff]
      %v1634 = vld [vmem:[#allocation10 + $0x38] sm:$0xff]
      %v1635 = vld [vmem:[#allocation10 + $0x40] sm:$0xff]
      %v1636 = vld [vmem:[#allocation10 + $0x48] sm:$0xff]
      %v1637 = vld [vmem:[#allocation10 + $0x50] sm:$0xff]
      %v1638 = vld [vmem:[#allocation10 + $0x58] sm:$0xff]
      %v1639 = vld [vmem:[#allocation10 + $0x60] sm:$0xff]
      %v1640 = vld [vmem:[#allocation10 + $0x68] sm:$0xff]
      %v1641 = vld [vmem:[#allocation10 + $0x70] sm:$0xff]
      %v1642 = vld [vmem:[#allocation10 + $0x78] sm:$0xff]
      %v1643 = vld [vmem:[#allocation10 + $0x80] sm:$0xff]
      %v1644 = vld [vmem:[#allocation10 + $0x88] sm:$0xff]
      %v1645 = vld [vmem:[#allocation10 + $0x90] sm:$0xff]
      %v1646 = vld [vmem:[#allocation10 + $0x98] sm:$0xff]
      %v1647 = vld [vmem:[#allocation10 + $0xa0] sm:$0xff]
      %v1648 = vld [vmem:[#allocation10 + $0xa8] sm:$0xff]
      %v1649 = vld [vmem:[#allocation10 + $0xb0] sm:$0xff]
      %v1650 = vld [vmem:[#allocation10 + $0xb8] sm:$0xff]
      %v1651 = vld [vmem:[#allocation10 + $0xc0] sm:$0xff]
      %v1652 = vld [vmem:[#allocation10 + $0xc8] sm:$0xff]
      %v1653 = vld [vmem:[#allocation10 + $0xd0] sm:$0xff]
      %v1654 = vld [vmem:[#allocation10 + $0xd8] sm:$0xff]
      %v1655 = vld [vmem:[#allocation10 + $0xe0] sm:$0xff]
      %v1656 = vld [vmem:[#allocation10 + $0xe8] sm:$0xff]
      %v1657 = vld [vmem:[#allocation10 + $0xf0] sm:$0xff]
      %v1658 = vld [vmem:[#allocation10 + $0xf8] sm:$0xff]
      %v1659 = vld [vmem:[%s6] sm:$0x3]
      %v1661 = vlaneseq
      %v1662 = vshrl.u32 %v1661, 7
      %v1663 = vsub.s32 0, %v1662
      %v1664 = vrot.slane %v1659, %v1663
      %v1665 = vlaneseq
      %v1666 = vshrl.u32 %v1665, 7
      %v1667 = vsub.s32 1, %v1666
      %v1668 = vrot.slane %v1659, %v1667
      %v1703 = vunpack.c.l.b16 %v1627
      %v1704 = vunpack.c.h.b16 %v1627
      %v1705 = vunpack.c.l.b16 %v1628
      %v1706 = vunpack.c.h.b16 %v1628
      %v1707 = vunpack.c.l.b16 %v1629
      %v1708 = vunpack.c.h.b16 %v1629
      %v1709 = vunpack.c.l.b16 %v1630
      %v1710 = vunpack.c.h.b16 %v1630
      %v1711 = vunpack.c.l.b16 %v1631
      %v1712 = vunpack.c.h.b16 %v1631
      %v1713 = vunpack.c.l.b16 %v1632
      %v1714 = vunpack.c.h.b16 %v1632
      %v1715 = vunpack.c.l.b16 %v1633
      %v1716 = vunpack.c.h.b16 %v1633
      %v1717 = vunpack.c.l.b16 %v1634
      %v1718 = vunpack.c.h.b16 %v1634
      %v1719 = vunpack.c.l.b16 %v1635
      %v1720 = vunpack.c.h.b16 %v1635
      %v1721 = vunpack.c.l.b16 %v1636
      %v1722 = vunpack.c.h.b16 %v1636
      %v1723 = vunpack.c.l.b16 %v1637
      %v1724 = vunpack.c.h.b16 %v1637
      %v1725 = vunpack.c.l.b16 %v1638
      %v1726 = vunpack.c.h.b16 %v1638
      %v1727 = vunpack.c.l.b16 %v1639
      %v1728 = vunpack.c.h.b16 %v1639
      %v1729 = vunpack.c.l.b16 %v1640
      %v1730 = vunpack.c.h.b16 %v1640
      %v1731 = vunpack.c.l.b16 %v1641
      %v1732 = vunpack.c.h.b16 %v1641
      %v1733 = vunpack.c.l.b16 %v1642
      %v1734 = vunpack.c.h.b16 %v1642
      %v1735 = vunpack.c.l.b16 %v1643
      %v1736 = vunpack.c.h.b16 %v1643
      %v1737 = vunpack.c.l.b16 %v1644
      %v1738 = vunpack.c.h.b16 %v1644
      %v1739 = vunpack.c.l.b16 %v1645
      %v1740 = vunpack.c.h.b16 %v1645
      %v1741 = vunpack.c.l.b16 %v1646
      %v1742 = vunpack.c.h.b16 %v1646
      %v1743 = vunpack.c.l.b16 %v1647
      %v1744 = vunpack.c.h.b16 %v1647
      %v1745 = vunpack.c.l.b16 %v1648
      %v1746 = vunpack.c.h.b16 %v1648
      %v1747 = vunpack.c.l.b16 %v1649
      %v1748 = vunpack.c.h.b16 %v1649
      %v1749 = vunpack.c.l.b16 %v1650
      %v1750 = vunpack.c.h.b16 %v1650
      %v1751 = vunpack.c.l.b16 %v1651
      %v1752 = vunpack.c.h.b16 %v1651
      %v1753 = vunpack.c.l.b16 %v1652
      %v1754 = vunpack.c.h.b16 %v1652
      %v1755 = vunpack.c.l.b16 %v1653
      %v1756 = vunpack.c.h.b16 %v1653
      %v1757 = vunpack.c.l.b16 %v1654
      %v1758 = vunpack.c.h.b16 %v1654
      %v1759 = vunpack.c.l.b16 %v1655
      %v1760 = vunpack.c.h.b16 %v1655
      %v1761 = vunpack.c.l.b16 %v1656
      %v1762 = vunpack.c.h.b16 %v1656
      %v1763 = vunpack.c.l.b16 %v1657
      %v1764 = vunpack.c.h.b16 %v1657
      %v1765 = vunpack.c.l.b16 %v1658
      %v1766 = vunpack.c.h.b16 %v1658
      %v1767 = vpack.c.b16 %v1705, %v1703
      %v1768 = vpack.c.b16 %v1706, %v1704
      %v1769 = vpack.c.b16 %v1709, %v1707
      %v1770 = vpack.c.b16 %v1710, %v1708
      %v1771 = vpack.c.b16 %v1713, %v1711
      %v1772 = vpack.c.b16 %v1714, %v1712
      %v1773 = vpack.c.b16 %v1717, %v1715
      %v1774 = vpack.c.b16 %v1718, %v1716
      %v1775 = vpack.c.b16 %v1721, %v1719
      %v1776 = vpack.c.b16 %v1722, %v1720
      %v1777 = vpack.c.b16 %v1725, %v1723
      %v1778 = vpack.c.b16 %v1726, %v1724
      %v1779 = vpack.c.b16 %v1729, %v1727
      %v1780 = vpack.c.b16 %v1730, %v1728
      %v1781 = vpack.c.b16 %v1733, %v1731
      %v1782 = vpack.c.b16 %v1734, %v1732
      %v1783 = vpack.c.b16 %v1737, %v1735
      %v1784 = vpack.c.b16 %v1738, %v1736
      %v1785 = vpack.c.b16 %v1741, %v1739
      %v1786 = vpack.c.b16 %v1742, %v1740
      %v1787 = vpack.c.b16 %v1745, %v1743
      %v1788 = vpack.c.b16 %v1746, %v1744
      %v1789 = vpack.c.b16 %v1749, %v1747
      %v1790 = vpack.c.b16 %v1750, %v1748
      %v1791 = vpack.c.b16 %v1753, %v1751
      %v1792 = vpack.c.b16 %v1754, %v1752
      %v1793 = vpack.c.b16 %v1757, %v1755
      %v1794 = vpack.c.b16 %v1758, %v1756
      %v1795 = vpack.c.b16 %v1761, %v1759
      %v1796 = vpack.c.b16 %v1762, %v1760
      %v1797 = vpack.c.b16 %v1765, %v1763
      %v1798 = vpack.c.b16 %v1766, %v1764
      %1831 = vmatprep.subr.bf16.mxu0 %v1768
      %1832 = vmatpush1.bf16.msra.mxu0 %v1767
      %1833 = vmatprep.subr.bf16.mxu0 %v1770
      %1834 = vmatpush1.bf16.msra.mxu0 %v1769
      %1835 = vmatprep.subr.bf16.mxu0 %v1772
      %1836 = vmatpush1.bf16.msra.mxu0 %v1771
      %1837 = vmatprep.subr.bf16.mxu0 %v1774
      %1838 = vmatpush1.bf16.msra.mxu0 %v1773
      %1839 = vmatprep.subr.bf16.mxu0 %v1776
      %1840 = vmatpush1.bf16.msra.mxu0 %v1775
      %1841 = vmatprep.subr.bf16.mxu0 %v1778
      %1842 = vmatpush1.bf16.msra.mxu0 %v1777
      %1843 = vmatprep.subr.bf16.mxu0 %v1780
      %1844 = vmatpush1.bf16.msra.mxu0 %v1779
      %1845 = vmatprep.subr.bf16.mxu0 %v1782
      %1846 = vmatpush1.bf16.msra.mxu0 %v1781
      %1847 = vmatprep.subr.bf16.mxu0 %v1784
      %1848 = vmatpush1.bf16.msra.mxu0 %v1783
      %1849 = vmatprep.subr.bf16.mxu0 %v1786
      %1850 = vmatpush1.bf16.msra.mxu0 %v1785
      %1851 = vmatprep.subr.bf16.mxu0 %v1788
      %1852 = vmatpush1.bf16.msra.mxu0 %v1787
      %1853 = vmatprep.subr.bf16.mxu0 %v1790
      %1854 = vmatpush1.bf16.msra.mxu0 %v1789
      %1855 = vmatprep.subr.bf16.mxu0 %v1792
      %1856 = vmatpush1.bf16.msra.mxu0 %v1791
      %1857 = vmatprep.subr.bf16.mxu0 %v1794
      %1858 = vmatpush1.bf16.msra.mxu0 %v1793
      %1859 = vmatprep.subr.bf16.mxu0 %v1796
      %1860 = vmatpush1.bf16.msra.mxu0 %v1795
      %1861 = vmatprep.subr.bf16.mxu0 %v1798
      %1862 = vmatpush1.bf16.msra.mxu0 %v1797
      %1863 = vmatprep.mubr.bf16.mxu0 %v1612
      %1864 = vmatmul.mubr.bf16.gmra.mrb[0].mxu0 %v1611
      %v1865 = vpop.f32.mrb[0].mxu0
      %v1866 = vadd.f32 %v1664, %v1865
      %v1867 = vpop.f32.mrb[0].mxu0
      %v1868 = vadd.f32 %v1668, %v1867
      %v1869 = vpop.f32.mrb[0].mxu0
      %v1870 = vadd.f32 %v1664, %v1869
      %v1871 = vpop.f32.mrb[0].mxu0
      %v1872 = vadd.f32 %v1668, %v1871
      %1873 = vmatprep.mubr.bf16.mxu0 %v1614
      %1874 = vmatmul.mubr.bf16.gmra.mrb[0].mxu0 %v1613
      %v1875 = vpop.f32.mrb[0].mxu0
      %v1876 = vadd.f32 %v1664, %v1875
      %v1877 = vpop.f32.mrb[0].mxu0
      %v1878 = vadd.f32 %v1668, %v1877
      %v1879 = vpop.f32.mrb[0].mxu0
      %v1880 = vadd.f32 %v1664, %v1879
      %v1881 = vpop.f32.mrb[0].mxu0
      %v1882 = vadd.f32 %v1668, %v1881
      %1883 = vmatprep.mubr.bf16.mxu0 %v1616
      %1884 = vmatmul.mubr.bf16.gmra.mrb[0].mxu0 %v1615
      %v1885 = vpop.f32.mrb[0].mxu0
      %v1886 = vadd.f32 %v1664, %v1885
      %v1887 = vpop.f32.mrb[0].mxu0
      %v1888 = vadd.f32 %v1668, %v1887
      %v1889 = vpop.f32.mrb[0].mxu0
      %v1890 = vadd.f32 %v1664, %v1889
      %v1891 = vpop.f32.mrb[0].mxu0
      %v1892 = vadd.f32 %v1668, %v1891
      %1893 = vmatprep.mubr.bf16.mxu0 %v1618
      %1894 = vmatmul.mubr.bf16.gmra.mrb[0].mxu0 %v1617
      %v1895 = vpop.f32.mrb[0].mxu0
      %v1896 = vadd.f32 %v1664, %v1895
      %v1897 = vpop.f32.mrb[0].mxu0
      %v1898 = vadd.f32 %v1668, %v1897
      %v1899 = vpop.f32.mrb[0].mxu0
      %v1900 = vadd.f32 %v1664, %v1899
      %v1901 = vpop.f32.mrb[0].mxu0
      %v1902 = vadd.f32 %v1668, %v1901
      %1903 = vmatprep.mubr.bf16.mxu0 %v1620
      %1904 = vmatmul.mubr.bf16.gmra.mrb[0].mxu0 %v1619
      %v1905 = vpop.f32.mrb[0].mxu0
      %v1906 = vadd.f32 %v1664, %v1905
      %v1907 = vpop.f32.mrb[0].mxu0
      %v1908 = vadd.f32 %v1668, %v1907
      %v1909 = vpop.f32.mrb[0].mxu0
      %v1910 = vadd.f32 %v1664, %v1909
      %v1911 = vpop.f32.mrb[0].mxu0
      %v1912 = vadd.f32 %v1668, %v1911
      %1913 = vmatprep.mubr.bf16.mxu0 %v1622
      %1914 = vmatmul.mubr.bf16.gmra.mrb[0].mxu0 %v1621
      %v1915 = vpop.f32.mrb[0].mxu0
      %v1916 = vadd.f32 %v1664, %v1915
      %v1917 = vpop.f32.mrb[0].mxu0
      %v1918 = vadd.f32 %v1668, %v1917
      %v1919 = vpop.f32.mrb[0].mxu0
      %v1920 = vadd.f32 %v1664, %v1919
      %v1921 = vpop.f32.mrb[0].mxu0
      %v1922 = vadd.f32 %v1668, %v1921
      %1923 = vmatprep.mubr.bf16.mxu0 %v1624
      %1924 = vmatmul.mubr.bf16.gmra.mrb[0].mxu0 %v1623
      %v1925 = vpop.f32.mrb[0].mxu0
      %v1926 = vadd.f32 %v1664, %v1925
      %v1927 = vpop.f32.mrb[0].mxu0
      %v1928 = vadd.f32 %v1668, %v1927
      %v1929 = vpop.f32.mrb[0].mxu0
      %v1930 = vadd.f32 %v1664, %v1929
      %v1931 = vpop.f32.mrb[0].mxu0
      %v1932 = vadd.f32 %v1668, %v1931
      %1933 = vmatprep.mubr.bf16.mxu0 %v1626
      %1934 = vmatmul.mubr.bf16.gmra.mrb[0].mxu0 %v1625
      %v1935 = vpop.f32.mrb[0].mxu0
      %v1936 = vadd.f32 %v1664, %v1935
      %v1937 = vpop.f32.mrb[0].mxu0
      %v1938 = vadd.f32 %v1668, %v1937
      %v1939 = vpop.f32.mrb[0].mxu0
      %v1940 = vadd.f32 %v1664, %v1939
      %v1941 = vpop.f32.mrb[0].mxu0
      %v1942 = vadd.f32 %v1668, %v1941
      %1943 = vdwg.mxu0
      %v1944 = vmax.f32 %v1866, 0.0
      %v1945 = vmax.f32 %v1868, 0.0
      %v1946 = vmax.f32 %v1870, 0.0
      %v1947 = vmax.f32 %v1872, 0.0
      %v1948 = vmax.f32 %v1876, 0.0
      %v1949 = vmax.f32 %v1878, 0.0
      %v1950 = vmax.f32 %v1880, 0.0
      %v1951 = vmax.f32 %v1882, 0.0
      %v1952 = vmax.f32 %v1886, 0.0
      %v1953 = vmax.f32 %v1888, 0.0
      %v1954 = vmax.f32 %v1890, 0.0
      %v1955 = vmax.f32 %v1892, 0.0
      %v1956 = vmax.f32 %v1896, 0.0
      %v1957 = vmax.f32 %v1898, 0.0
      %v1958 = vmax.f32 %v1900, 0.0
      %v1959 = vmax.f32 %v1902, 0.0
      %v1960 = vmax.f32 %v1906, 0.0
      %v1961 = vmax.f32 %v1908, 0.0
      %v1962 = vmax.f32 %v1910, 0.0
      %v1963 = vmax.f32 %v1912, 0.0
      %v1964 = vmax.f32 %v1916, 0.0
      %v1965 = vmax.f32 %v1918, 0.0
      %v1966 = vmax.f32 %v1920, 0.0
      %v1967 = vmax.f32 %v1922, 0.0
      %v1968 = vmax.f32 %v1926, 0.0
      %v1969 = vmax.f32 %v1928, 0.0
      %v1970 = vmax.f32 %v1930, 0.0
      %v1971 = vmax.f32 %v1932, 0.0
      %v1972 = vmax.f32 %v1936, 0.0
      %v1973 = vmax.f32 %v1938, 0.0
      %v1974 = vmax.f32 %v1940, 0.0
      %v1975 = vmax.f32 %v1942, 0.0
      %v1976 = vpack.c.bf16 %v1946, %v1944
      %v1977 = vpack.c.bf16 %v1947, %v1945
      %v1978 = vpack.c.bf16 %v1950, %v1948
      %v1979 = vpack.c.bf16 %v1951, %v1949
      %v1980 = vpack.c.bf16 %v1954, %v1952
      %v1981 = vpack.c.bf16 %v1955, %v1953
      %v1982 = vpack.c.bf16 %v1958, %v1956
      %v1983 = vpack.c.bf16 %v1959, %v1957
      %v1984 = vpack.c.bf16 %v1962, %v1960
      %v1985 = vpack.c.bf16 %v1963, %v1961
      %v1986 = vpack.c.bf16 %v1966, %v1964
      %v1987 = vpack.c.bf16 %v1967, %v1965
      %v1988 = vpack.c.bf16 %v1970, %v1968
      %v1989 = vpack.c.bf16 %v1971, %v1969
      %v1990 = vpack.c.bf16 %v1974, %v1972
      %v1991 = vpack.c.bf16 %v1975, %v1973
      %v1992 = vld [vmem:[#allocation12] sm:$0xff]
      %v1993 = vld [vmem:[#allocation12 + $0x8] sm:$0xff]
      %v1994 = vld [vmem:[#allocation12 + $0x10] sm:$0xff]
      %v1995 = vld [vmem:[#allocation12 + $0x18] sm:$0xff]
      %v1996 = vld [vmem:[#allocation12 + $0x20] sm:$0xff]
      %v1997 = vld [vmem:[#allocation12 + $0x28] sm:$0xff]
      %v1998 = vld [vmem:[#allocation12 + $0x30] sm:$0xff]
      %v1999 = vld [vmem:[#allocation12 + $0x38] sm:$0xff]
      %v2000 = vld [vmem:[#allocation12 + $0x40] sm:$0xff]
      %v2001 = vld [vmem:[#allocation12 + $0x48] sm:$0xff]
      %v2002 = vld [vmem:[#allocation12 + $0x50] sm:$0xff]
      %v2003 = vld [vmem:[#allocation12 + $0x58] sm:$0xff]
      %v2004 = vld [vmem:[#allocation12 + $0x60] sm:$0xff]
      %v2005 = vld [vmem:[#allocation12 + $0x68] sm:$0xff]
      %v2006 = vld [vmem:[#allocation12 + $0x70] sm:$0xff]
      %v2007 = vld [vmem:[#allocation12 + $0x78] sm:$0xff]
      %v2008 = vld [vmem:[#allocation12 + $0x80] sm:$0xff]
      %v2009 = vld [vmem:[#allocation12 + $0x88] sm:$0xff]
      %v2010 = vld [vmem:[#allocation12 + $0x90] sm:$0xff]
      %v2011 = vld [vmem:[#allocation12 + $0x98] sm:$0xff]
      %v2012 = vld [vmem:[#allocation12 + $0xa0] sm:$0xff]
      %v2013 = vld [vmem:[#allocation12 + $0xa8] sm:$0xff]
      %v2014 = vld [vmem:[#allocation12 + $0xb0] sm:$0xff]
      %v2015 = vld [vmem:[#allocation12 + $0xb8] sm:$0xff]
      %v2016 = vld [vmem:[#allocation12 + $0xc0] sm:$0xff]
      %v2017 = vld [vmem:[#allocation12 + $0xc8] sm:$0xff]
      %v2018 = vld [vmem:[#allocation12 + $0xd0] sm:$0xff]
      %v2019 = vld [vmem:[#allocation12 + $0xd8] sm:$0xff]
      %v2020 = vld [vmem:[#allocation12 + $0xe0] sm:$0xff]
      %v2021 = vld [vmem:[#allocation12 + $0xe8] sm:$0xff]
      %v2022 = vld [vmem:[#allocation12 + $0xf0] sm:$0xff]
      %v2023 = vld [vmem:[#allocation12 + $0xf8] sm:$0xff]
      %v2024 = vld [vmem:[%s8] sm:$0x3]
      %v2026 = vlaneseq
      %v2027 = vshrl.u32 %v2026, 7
      %v2028 = vsub.s32 0, %v2027
      %v2029 = vrot.slane %v2024, %v2028
      %v2030 = vlaneseq
      %v2031 = vshrl.u32 %v2030, 7
      %v2032 = vsub.s32 1, %v2031
      %v2033 = vrot.slane %v2024, %v2032
      %v2068 = vunpack.c.l.b16 %v1992
      %v2069 = vunpack.c.h.b16 %v1992
      %v2070 = vunpack.c.l.b16 %v1993
      %v2071 = vunpack.c.h.b16 %v1993
      %v2072 = vunpack.c.l.b16 %v1994
      %v2073 = vunpack.c.h.b16 %v1994
      %v2074 = vunpack.c.l.b16 %v1995
      %v2075 = vunpack.c.h.b16 %v1995
      %v2076 = vunpack.c.l.b16 %v1996
      %v2077 = vunpack.c.h.b16 %v1996
      %v2078 = vunpack.c.l.b16 %v1997
      %v2079 = vunpack.c.h.b16 %v1997
      %v2080 = vunpack.c.l.b16 %v1998
      %v2081 = vunpack.c.h.b16 %v1998
      %v2082 = vunpack.c.l.b16 %v1999
      %v2083 = vunpack.c.h.b16 %v1999
      %v2084 = vunpack.c.l.b16 %v2000
      %v2085 = vunpack.c.h.b16 %v2000
      %v2086 = vunpack.c.l.b16 %v2001
      %v2087 = vunpack.c.h.b16 %v2001
      %v2088 = vunpack.c.l.b16 %v2002
      %v2089 = vunpack.c.h.b16 %v2002
      %v2090 = vunpack.c.l.b16 %v2003
      %v2091 = vunpack.c.h.b16 %v2003
      %v2092 = vunpack.c.l.b16 %v2004
      %v2093 = vunpack.c.h.b16 %v2004
      %v2094 = vunpack.c.l.b16 %v2005
      %v2095 = vunpack.c.h.b16 %v2005
      %v2096 = vunpack.c.l.b16 %v2006
      %v2097 = vunpack.c.h.b16 %v2006
      %v2098 = vunpack.c.l.b16 %v2007
      %v2099 = vunpack.c.h.b16 %v2007
      %v2100 = vunpack.c.l.b16 %v2008
      %v2101 = vunpack.c.h.b16 %v2008
      %v2102 = vunpack.c.l.b16 %v2009
      %v2103 = vunpack.c.h.b16 %v2009
      %v2104 = vunpack.c.l.b16 %v2010
      %v2105 = vunpack.c.h.b16 %v2010
      %v2106 = vunpack.c.l.b16 %v2011
      %v2107 = vunpack.c.h.b16 %v2011
      %v2108 = vunpack.c.l.b16 %v2012
      %v2109 = vunpack.c.h.b16 %v2012
      %v2110 = vunpack.c.l.b16 %v2013
      %v2111 = vunpack.c.h.b16 %v2013
      %v2112 = vunpack.c.l.b16 %v2014
      %v2113 = vunpack.c.h.b16 %v2014
      %v2114 = vunpack.c.l.b16 %v2015
      %v2115 = vunpack.c.h.b16 %v2015
      %v2116 = vunpack.c.l.b16 %v2016
      %v2117 = vunpack.c.h.b16 %v2016
      %v2118 = vunpack.c.l.b16 %v2017
      %v2119 = vunpack.c.h.b16 %v2017
      %v2120 = vunpack.c.l.b16 %v2018
      %v2121 = vunpack.c.h.b16 %v2018
      %v2122 = vunpack.c.l.b16 %v2019
      %v2123 = vunpack.c.h.b16 %v2019
      %v2124 = vunpack.c.l.b16 %v2020
      %v2125 = vunpack.c.h.b16 %v2020
      %v2126 = vunpack.c.l.b16 %v2021
      %v2127 = vunpack.c.h.b16 %v2021
      %v2128 = vunpack.c.l.b16 %v2022
      %v2129 = vunpack.c.h.b16 %v2022
      %v2130 = vunpack.c.l.b16 %v2023
      %v2131 = vunpack.c.h.b16 %v2023
      %v2132 = vpack.c.b16 %v2070, %v2068
      %v2133 = vpack.c.b16 %v2071, %v2069
      %v2134 = vpack.c.b16 %v2074, %v2072
      %v2135 = vpack.c.b16 %v2075, %v2073
      %v2136 = vpack.c.b16 %v2078, %v2076
      %v2137 = vpack.c.b16 %v2079, %v2077
      %v2138 = vpack.c.b16 %v2082, %v2080
      %v2139 = vpack.c.b16 %v2083, %v2081
      %v2140 = vpack.c.b16 %v2086, %v2084
      %v2141 = vpack.c.b16 %v2087, %v2085
      %v2142 = vpack.c.b16 %v2090, %v2088
      %v2143 = vpack.c.b16 %v2091, %v2089
      %v2144 = vpack.c.b16 %v2094, %v2092
      %v2145 = vpack.c.b16 %v2095, %v2093
      %v2146 = vpack.c.b16 %v2098, %v2096
      %v2147 = vpack.c.b16 %v2099, %v2097
      %v2148 = vpack.c.b16 %v2102, %v2100
      %v2149 = vpack.c.b16 %v2103, %v2101
      %v2150 = vpack.c.b16 %v2106, %v2104
      %v2151 = vpack.c.b16 %v2107, %v2105
      %v2152 = vpack.c.b16 %v2110, %v2108
      %v2153 = vpack.c.b16 %v2111, %v2109
      %v2154 = vpack.c.b16 %v2114, %v2112
      %v2155 = vpack.c.b16 %v2115, %v2113
      %v2156 = vpack.c.b16 %v2118, %v2116
      %v2157 = vpack.c.b16 %v2119, %v2117
      %v2158 = vpack.c.b16 %v2122, %v2120
      %v2159 = vpack.c.b16 %v2123, %v2121
      %v2160 = vpack.c.b16 %v2126, %v2124
      %v2161 = vpack.c.b16 %v2127, %v2125
      %v2162 = vpack.c.b16 %v2130, %v2128
      %v2163 = vpack.c.b16 %v2131, %v2129
      %2196 = vmatprep.subr.bf16.mxu0 %v2133
      %2197 = vmatpush1.bf16.msra.mxu0 %v2132
      %2198 = vmatprep.subr.bf16.mxu0 %v2135
      %2199 = vmatpush1.bf16.msra.mxu0 %v2134
      %2200 = vmatprep.subr.bf16.mxu0 %v2137
      %2201 = vmatpush1.bf16.msra.mxu0 %v2136
      %2202 = vmatprep.subr.bf16.mxu0 %v2139
      %2203 = vmatpush1.bf16.msra.mxu0 %v2138
      %2204 = vmatprep.subr.bf16.mxu0 %v2141
      %2205 = vmatpush1.bf16.msra.mxu0 %v2140
      %2206 = vmatprep.subr.bf16.mxu0 %v2143
      %2207 = vmatpush1.bf16.msra.mxu0 %v2142
      %2208 = vmatprep.subr.bf16.mxu0 %v2145
      %2209 = vmatpush1.bf16.msra.mxu0 %v2144
      %2210 = vmatprep.subr.bf16.mxu0 %v2147
      %2211 = vmatpush1.bf16.msra.mxu0 %v2146
      %2212 = vmatprep.subr.bf16.mxu0 %v2149
      %2213 = vmatpush1.bf16.msra.mxu0 %v2148
      %2214 = vmatprep.subr.bf16.mxu0 %v2151
      %2215 = vmatpush1.bf16.msra.mxu0 %v2150
      %2216 = vmatprep.subr.bf16.mxu0 %v2153
      %2217 = vmatpush1.bf16.msra.mxu0 %v2152
      %2218 = vmatprep.subr.bf16.mxu0 %v2155
      %2219 = vmatpush1.bf16.msra.mxu0 %v2154
      %2220 = vmatprep.subr.bf16.mxu0 %v2157
      %2221 = vmatpush1.bf16.msra.mxu0 %v2156
      %2222 = vmatprep.subr.bf16.mxu0 %v2159
      %2223 = vmatpush1.bf16.msra.mxu0 %v2158
      %2224 = vmatprep.subr.bf16.mxu0 %v2161
      %2225 = vmatpush1.bf16.msra.mxu0 %v2160
      %2226 = vmatprep.subr.bf16.mxu0 %v2163
      %2227 = vmatpush1.bf16.msra.mxu0 %v2162
      %2228 = vmatprep.mubr.bf16.mxu0 %v1977
      %2229 = vmatmul.mubr.bf16.gmra.mrb[0].mxu0 %v1976
      %v2230 = vpop.f32.mrb[0].mxu0
      %v2231 = vadd.f32 %v2029, %v2230
      %v2232 = vpop.f32.mrb[0].mxu0
      %v2233 = vadd.f32 %v2033, %v2232
      %v2234 = vpop.f32.mrb[0].mxu0
      %v2235 = vadd.f32 %v2029, %v2234
      %v2236 = vpop.f32.mrb[0].mxu0
      %v2237 = vadd.f32 %v2033, %v2236
      %2238 = vmatprep.mubr.bf16.mxu0 %v1979
      %2239 = vmatmul.mubr.bf16.gmra.mrb[0].mxu0 %v1978
      %v2240 = vpop.f32.mrb[0].mxu0
      %v2241 = vadd.f32 %v2029, %v2240
      %v2242 = vpop.f32.mrb[0].mxu0
      %v2243 = vadd.f32 %v2033, %v2242
      %v2244 = vpop.f32.mrb[0].mxu0
      %v2245 = vadd.f32 %v2029, %v2244
      %v2246 = vpop.f32.mrb[0].mxu0
      %v2247 = vadd.f32 %v2033, %v2246
      %2248 = vmatprep.mubr.bf16.mxu0 %v1981
      %2249 = vmatmul.mubr.bf16.gmra.mrb[0].mxu0 %v1980
      %v2250 = vpop.f32.mrb[0].mxu0
      %v2251 = vadd.f32 %v2029, %v2250
      %v2252 = vpop.f32.mrb[0].mxu0
      %v2253 = vadd.f32 %v2033, %v2252
      %v2254 = vpop.f32.mrb[0].mxu0
      %v2255 = vadd.f32 %v2029, %v2254
      %v2256 = vpop.f32.mrb[0].mxu0
      %v2257 = vadd.f32 %v2033, %v2256
      %2258 = vmatprep.mubr.bf16.mxu0 %v1983
      %2259 = vmatmul.mubr.bf16.gmra.mrb[0].mxu0 %v1982
      %v2260 = vpop.f32.mrb[0].mxu0
      %v2261 = vadd.f32 %v2029, %v2260
      %v2262 = vpop.f32.mrb[0].mxu0
      %v2263 = vadd.f32 %v2033, %v2262
      %v2264 = vpop.f32.mrb[0].mxu0
      %v2265 = vadd.f32 %v2029, %v2264
      %v2266 = vpop.f32.mrb[0].mxu0
      %v2267 = vadd.f32 %v2033, %v2266
      %2268 = vmatprep.mubr.bf16.mxu0 %v1985
      %2269 = vmatmul.mubr.bf16.gmra.mrb[0].mxu0 %v1984
      %v2270 = vpop.f32.mrb[0].mxu0
      %v2271 = vadd.f32 %v2029, %v2270
      %v2272 = vpop.f32.mrb[0].mxu0
      %v2273 = vadd.f32 %v2033, %v2272
      %v2274 = vpop.f32.mrb[0].mxu0
      %v2275 = vadd.f32 %v2029, %v2274
      %v2276 = vpop.f32.mrb[0].mxu0
      %v2277 = vadd.f32 %v2033, %v2276
      %2278 = vmatprep.mubr.bf16.mxu0 %v1987
      %2279 = vmatmul.mubr.bf16.gmra.mrb[0].mxu0 %v1986
      %v2280 = vpop.f32.mrb[0].mxu0
      %v2281 = vadd.f32 %v2029, %v2280
      %v2282 = vpop.f32.mrb[0].mxu0
      %v2283 = vadd.f32 %v2033, %v2282
      %v2284 = vpop.f32.mrb[0].mxu0
      %v2285 = vadd.f32 %v2029, %v2284
      %v2286 = vpop.f32.mrb[0].mxu0
      %v2287 = vadd.f32 %v2033, %v2286
      %2288 = vmatprep.mubr.bf16.mxu0 %v1989
      %2289 = vmatmul.mubr.bf16.gmra.mrb[0].mxu0 %v1988
      %v2290 = vpop.f32.mrb[0].mxu0
      %v2291 = vadd.f32 %v2029, %v2290
      %v2292 = vpop.f32.mrb[0].mxu0
      %v2293 = vadd.f32 %v2033, %v2292
      %v2294 = vpop.f32.mrb[0].mxu0
      %v2295 = vadd.f32 %v2029, %v2294
      %v2296 = vpop.f32.mrb[0].mxu0
      %v2297 = vadd.f32 %v2033, %v2296
      %2298 = vmatprep.mubr.bf16.mxu0 %v1991
      %2299 = vmatmul.mubr.bf16.gmra.mrb[0].mxu0 %v1990
      %v2300 = vpop.f32.mrb[0].mxu0
      %v2301 = vadd.f32 %v2029, %v2300
      %v2302 = vpop.f32.mrb[0].mxu0
      %v2303 = vadd.f32 %v2033, %v2302
      %v2304 = vpop.f32.mrb[0].mxu0
      %v2305 = vadd.f32 %v2029, %v2304
      %v2306 = vpop.f32.mrb[0].mxu0
      %v2307 = vadd.f32 %v2033, %v2306
      %2308 = vdwg.mxu0
      %v2309 = vld [vmem:[#allocation7] sm:$0xf]
      %v2310 = vld [vmem:[#allocation7 + $0x4] sm:$0xf]
      %v2311 = vld [vmem:[#allocation7 + $0x8] sm:$0xf]
      %v2312 = vld [vmem:[#allocation7 + $0xc] sm:$0xf]
      %v2313 = vld [vmem:[#allocation7 + $0x10] sm:$0xf]
      %v2314 = vld [vmem:[#allocation7 + $0x14] sm:$0xf]
      %v2315 = vld [vmem:[#allocation7 + $0x18] sm:$0xf]
      %v2316 = vld [vmem:[#allocation7 + $0x1c] sm:$0xf]
      %v2317 = vld [vmem:[#allocation7 + $0x20] sm:$0xf]
      %v2318 = vld [vmem:[#allocation7 + $0x24] sm:$0xf]
      %v2319 = vld [vmem:[#allocation7 + $0x28] sm:$0xf]
      %v2320 = vld [vmem:[#allocation7 + $0x2c] sm:$0xf]
      %v2321 = vld [vmem:[#allocation7 + $0x30] sm:$0xf]
      %v2322 = vld [vmem:[#allocation7 + $0x34] sm:$0xf]
      %v2323 = vld [vmem:[#allocation7 + $0x38] sm:$0xf]
      %v2324 = vld [vmem:[#allocation7 + $0x3c] sm:$0xf]
      %v2325 = vld [vmem:[#allocation13] sm:$0xff]
      %v2326 = vld [vmem:[#allocation13 + $0x8] sm:$0xff]
      %v2327 = vld [vmem:[#allocation13 + $0x10] sm:$0xff]
      %v2328 = vld [vmem:[#allocation13 + $0x18] sm:$0xff]
      %v2329 = vld [vmem:[#allocation13 + $0x20] sm:$0xff]
      %v2330 = vld [vmem:[#allocation13 + $0x28] sm:$0xff]
      %v2331 = vld [vmem:[#allocation13 + $0x30] sm:$0xff]
      %v2332 = vld [vmem:[#allocation13 + $0x38] sm:$0xff]
      %v2333 = vld [vmem:[#allocation13 + $0x40] sm:$0xff]
      %v2334 = vld [vmem:[#allocation13 + $0x48] sm:$0xff]
      %v2335 = vld [vmem:[#allocation13 + $0x50] sm:$0xff]
      %v2336 = vld [vmem:[#allocation13 + $0x58] sm:$0xff]
      %v2337 = vld [vmem:[#allocation13 + $0x60] sm:$0xff]
      %v2338 = vld [vmem:[#allocation13 + $0x68] sm:$0xff]
      %v2339 = vld [vmem:[#allocation13 + $0x70] sm:$0xff]
      %v2340 = vld [vmem:[#allocation13 + $0x78] sm:$0xff]
      %v2341 = vld [vmem:[%s10] sm:$0x3]
      %v2343 = vlaneseq
      %v2344 = vshrl.u32 %v2343, 7
      %v2345 = vsub.s32 0, %v2344
      %v2346 = vrot.slane %v2341, %v2345
      %v2347 = vlaneseq
      %v2348 = vshrl.u32 %v2347, 7
      %v2349 = vsub.s32 1, %v2348
      %v2350 = vrot.slane %v2341, %v2349
      %v2369 = vunpack.c.l.b16 %v2309
      %v2370 = vunpack.c.l.b16 %v2310
      %v2371 = vunpack.c.l.b16 %v2311
      %v2372 = vunpack.c.l.b16 %v2312
      %v2373 = vunpack.c.l.b16 %v2313
      %v2374 = vunpack.c.l.b16 %v2314
      %v2375 = vunpack.c.l.b16 %v2315
      %v2376 = vunpack.c.l.b16 %v2316
      %v2377 = vunpack.c.l.b16 %v2317
      %v2378 = vunpack.c.l.b16 %v2318
      %v2379 = vunpack.c.l.b16 %v2319
      %v2380 = vunpack.c.l.b16 %v2320
      %v2381 = vunpack.c.l.b16 %v2321
      %v2382 = vunpack.c.l.b16 %v2322
      %v2383 = vunpack.c.l.b16 %v2323
      %v2384 = vunpack.c.l.b16 %v2324
      %v2385 = vpack.c.b16 %v2370, %v2369
      %v2386 = vpack.c.b16 %v2372, %v2371
      %v2387 = vpack.c.b16 %v2374, %v2373
      %v2388 = vpack.c.b16 %v2376, %v2375
      %v2389 = vpack.c.b16 %v2378, %v2377
      %v2390 = vpack.c.b16 %v2380, %v2379
      %v2391 = vpack.c.b16 %v2382, %v2381
      %v2392 = vpack.c.b16 %v2384, %v2383
      %v2417 = vunpack.c.l.b16 %v2325
      %v2418 = vunpack.c.h.b16 %v2325
      %v2419 = vunpack.c.l.b16 %v2326
      %v2420 = vunpack.c.h.b16 %v2326
      %v2421 = vunpack.c.l.b16 %v2327
      %v2422 = vunpack.c.h.b16 %v2327
      %v2423 = vunpack.c.l.b16 %v2328
      %v2424 = vunpack.c.h.b16 %v2328
      %v2425 = vunpack.c.l.b16 %v2329
      %v2426 = vunpack.c.h.b16 %v2329
      %v2427 = vunpack.c.l.b16 %v2330
      %v2428 = vunpack.c.h.b16 %v2330
      %v2429 = vunpack.c.l.b16 %v2331
      %v2430 = vunpack.c.h.b16 %v2331
      %v2431 = vunpack.c.l.b16 %v2332
      %v2432 = vunpack.c.h.b16 %v2332
      %v2433 = vunpack.c.l.b16 %v2333
      %v2434 = vunpack.c.h.b16 %v2333
      %v2435 = vunpack.c.l.b16 %v2334
      %v2436 = vunpack.c.h.b16 %v2334
      %v2437 = vunpack.c.l.b16 %v2335
      %v2438 = vunpack.c.h.b16 %v2335
      %v2439 = vunpack.c.l.b16 %v2336
      %v2440 = vunpack.c.h.b16 %v2336
      %v2441 = vunpack.c.l.b16 %v2337
      %v2442 = vunpack.c.h.b16 %v2337
      %v2443 = vunpack.c.l.b16 %v2338
      %v2444 = vunpack.c.h.b16 %v2338
      %v2445 = vunpack.c.l.b16 %v2339
      %v2446 = vunpack.c.h.b16 %v2339
      %v2447 = vunpack.c.l.b16 %v2340
      %v2448 = vunpack.c.h.b16 %v2340
      %v2449 = vpack.c.b16 %v2419, %v2417
      %v2450 = vpack.c.b16 %v2420, %v2418
      %v2451 = vpack.c.b16 %v2423, %v2421
      %v2452 = vpack.c.b16 %v2424, %v2422
      %v2453 = vpack.c.b16 %v2427, %v2425
      %v2454 = vpack.c.b16 %v2428, %v2426
      %v2455 = vpack.c.b16 %v2431, %v2429
      %v2456 = vpack.c.b16 %v2432, %v2430
      %v2457 = vpack.c.b16 %v2435, %v2433
      %v2458 = vpack.c.b16 %v2436, %v2434
      %v2459 = vpack.c.b16 %v2439, %v2437
      %v2460 = vpack.c.b16 %v2440, %v2438
      %v2461 = vpack.c.b16 %v2443, %v2441
      %v2462 = vpack.c.b16 %v2444, %v2442
      %v2463 = vpack.c.b16 %v2447, %v2445
      %v2464 = vpack.c.b16 %v2448, %v2446
      %2481 = vmatprep.subr.bf16.mxu0 %v2450
      %2482 = vmatpush1.bf16.msra.mxu0 %v2449
      %2483 = vmatprep.subr.bf16.mxu0 %v2452
      %2484 = vmatpush1.bf16.msra.mxu0 %v2451
      %2485 = vmatprep.subr.bf16.mxu0 %v2454
      %2486 = vmatpush1.bf16.msra.mxu0 %v2453
      %2487 = vmatprep.subr.bf16.mxu0 %v2456
      %2488 = vmatpush1.bf16.msra.mxu0 %v2455
      %2489 = vmatprep.subr.bf16.mxu0 %v2458
      %2490 = vmatpush1.bf16.msra.mxu0 %v2457
      %2491 = vmatprep.subr.bf16.mxu0 %v2460
      %2492 = vmatpush1.bf16.msra.mxu0 %v2459
      %2493 = vmatprep.subr.bf16.mxu0 %v2462
      %2494 = vmatpush1.bf16.msra.mxu0 %v2461
      %2495 = vmatprep.subr.bf16.mxu0 %v2464
      %2496 = vmatpush1.bf16.msra.mxu0 %v2463
      %2497 = vmatprep.subr.bf16.mxu0 0
      %2498 = vmatpush1.bf16.msra.mxu0 0
      %2499 = vmatprep.subr.bf16.mxu0 0
      %2500 = vmatpush1.bf16.msra.mxu0 0
      %2501 = vmatprep.subr.bf16.mxu0 0
      %2502 = vmatpush1.bf16.msra.mxu0 0
      %2503 = vmatprep.subr.bf16.mxu0 0
      %2504 = vmatpush1.bf16.msra.mxu0 0
      %2505 = vmatprep.subr.bf16.mxu0 0
      %2506 = vmatpush1.bf16.msra.mxu0 0
      %2507 = vmatprep.subr.bf16.mxu0 0
      %2508 = vmatpush1.bf16.msra.mxu0 0
      %2509 = vmatprep.subr.bf16.mxu0 0
      %2510 = vmatpush1.bf16.msra.mxu0 0
      %2511 = vmatprep.subr.bf16.mxu0 0
      %2512 = vmatpush1.bf16.msra.mxu0 0
      %2513 = vmatprep.mubr.bf16.mxu0 0
      %2514 = vmatmul.mubr.bf16.gmra.mrb[0].mxu0 %v2385
      %v2515 = vpop.f32.mrb[0].mxu0
      %v2516 = vadd.f32 %v2346, %v2515
      %v2517 = vpop.f32.mrb[0].mxu0
      %v2518 = vadd.f32 %v2350, %v2517
      %v2519 = vpop.f32.mrb[0].mxu0
      %v2520 = vadd.f32 %v2346, %v2519
      %v2521 = vpop.f32.mrb[0].mxu0
      %v2522 = vadd.f32 %v2350, %v2521
      %2523 = vmatprep.mubr.bf16.mxu0 0
      %2524 = vmatmul.mubr.bf16.gmra.mrb[0].mxu0 %v2386
      %v2525 = vpop.f32.mrb[0].mxu0
      %v2526 = vadd.f32 %v2346, %v2525
      %v2527 = vpop.f32.mrb[0].mxu0
      %v2528 = vadd.f32 %v2350, %v2527
      %v2529 = vpop.f32.mrb[0].mxu0
      %v2530 = vadd.f32 %v2346, %v2529
      %v2531 = vpop.f32.mrb[0].mxu0
      %v2532 = vadd.f32 %v2350, %v2531
      %2533 = vmatprep.mubr.bf16.mxu0 0
      %2534 = vmatmul.mubr.bf16.gmra.mrb[0].mxu0 %v2387
      %v2535 = vpop.f32.mrb[0].mxu0
      %v2536 = vadd.f32 %v2346, %v2535
      %v2537 = vpop.f32.mrb[0].mxu0
      %v2538 = vadd.f32 %v2350, %v2537
      %v2539 = vpop.f32.mrb[0].mxu0
      %v2540 = vadd.f32 %v2346, %v2539
      %v2541 = vpop.f32.mrb[0].mxu0
      %v2542 = vadd.f32 %v2350, %v2541
      %2543 = vmatprep.mubr.bf16.mxu0 0
      %2544 = vmatmul.mubr.bf16.gmra.mrb[0].mxu0 %v2388
      %v2545 = vpop.f32.mrb[0].mxu0
      %v2546 = vadd.f32 %v2346, %v2545
      %v2547 = vpop.f32.mrb[0].mxu0
      %v2548 = vadd.f32 %v2350, %v2547
      %v2549 = vpop.f32.mrb[0].mxu0
      %v2550 = vadd.f32 %v2346, %v2549
      %v2551 = vpop.f32.mrb[0].mxu0
      %v2552 = vadd.f32 %v2350, %v2551
      %2553 = vmatprep.mubr.bf16.mxu0 0
      %2554 = vmatmul.mubr.bf16.gmra.mrb[0].mxu0 %v2389
      %v2555 = vpop.f32.mrb[0].mxu0
      %v2556 = vadd.f32 %v2346, %v2555
      %v2557 = vpop.f32.mrb[0].mxu0
      %v2558 = vadd.f32 %v2350, %v2557
      %v2559 = vpop.f32.mrb[0].mxu0
      %v2560 = vadd.f32 %v2346, %v2559
      %v2561 = vpop.f32.mrb[0].mxu0
      %v2562 = vadd.f32 %v2350, %v2561
      %2563 = vmatprep.mubr.bf16.mxu0 0
      %2564 = vmatmul.mubr.bf16.gmra.mrb[0].mxu0 %v2390
      %v2565 = vpop.f32.mrb[0].mxu0
      %v2566 = vadd.f32 %v2346, %v2565
      %v2567 = vpop.f32.mrb[0].mxu0
      %v2568 = vadd.f32 %v2350, %v2567
      %v2569 = vpop.f32.mrb[0].mxu0
      %v2570 = vadd.f32 %v2346, %v2569
      %v2571 = vpop.f32.mrb[0].mxu0
      %v2572 = vadd.f32 %v2350, %v2571
      %2573 = vmatprep.mubr.bf16.mxu0 0
      %2574 = vmatmul.mubr.bf16.gmra.mrb[0].mxu0 %v2391
      %v2575 = vpop.f32.mrb[0].mxu0
      %v2576 = vadd.f32 %v2346, %v2575
      %v2577 = vpop.f32.mrb[0].mxu0
      %v2578 = vadd.f32 %v2350, %v2577
      %v2579 = vpop.f32.mrb[0].mxu0
      %v2580 = vadd.f32 %v2346, %v2579
      %v2581 = vpop.f32.mrb[0].mxu0
      %v2582 = vadd.f32 %v2350, %v2581
      %2583 = vmatprep.mubr.bf16.mxu0 0
      %2584 = vmatmul.mubr.bf16.gmra.mrb[0].mxu0 %v2392
      %v2585 = vpop.f32.mrb[0].mxu0
      %v2586 = vadd.f32 %v2346, %v2585
      %v2587 = vpop.f32.mrb[0].mxu0
      %v2588 = vadd.f32 %v2350, %v2587
      %v2589 = vpop.f32.mrb[0].mxu0
      %v2590 = vadd.f32 %v2346, %v2589
      %v2591 = vpop.f32.mrb[0].mxu0
      %v2592 = vadd.f32 %v2350, %v2591
      %2593 = vdwg.mxu0
      %v2594 = vmax.f32 %v2516, 0.0
      %v2595 = vmax.f32 %v2518, 0.0
      %v2596 = vmax.f32 %v2520, 0.0
      %v2597 = vmax.f32 %v2522, 0.0
      %v2598 = vmax.f32 %v2526, 0.0
      %v2599 = vmax.f32 %v2528, 0.0
      %v2600 = vmax.f32 %v2530, 0.0
      %v2601 = vmax.f32 %v2532, 0.0
      %v2602 = vmax.f32 %v2536, 0.0
      %v2603 = vmax.f32 %v2538, 0.0
      %v2604 = vmax.f32 %v2540, 0.0
      %v2605 = vmax.f32 %v2542, 0.0
      %v2606 = vmax.f32 %v2546, 0.0
      %v2607 = vmax.f32 %v2548, 0.0
      %v2608 = vmax.f32 %v2550, 0.0
      %v2609 = vmax.f32 %v2552, 0.0
      %v2610 = vmax.f32 %v2556, 0.0
      %v2611 = vmax.f32 %v2558, 0.0
      %v2612 = vmax.f32 %v2560, 0.0
      %v2613 = vmax.f32 %v2562, 0.0
      %v2614 = vmax.f32 %v2566, 0.0
      %v2615 = vmax.f32 %v2568, 0.0
      %v2616 = vmax.f32 %v2570, 0.0
      %v2617 = vmax.f32 %v2572, 0.0
      %v2618 = vmax.f32 %v2576, 0.0
      %v2619 = vmax.f32 %v2578, 0.0
      %v2620 = vmax.f32 %v2580, 0.0
      %v2621 = vmax.f32 %v2582, 0.0
      %v2622 = vmax.f32 %v2586, 0.0
      %v2623 = vmax.f32 %v2588, 0.0
      %v2624 = vmax.f32 %v2590, 0.0
      %v2625 = vmax.f32 %v2592, 0.0
      %v2626 = vpack.c.bf16 %v2596, %v2594
      %v2627 = vpack.c.bf16 %v2597, %v2595
      %v2628 = vpack.c.bf16 %v2600, %v2598
      %v2629 = vpack.c.bf16 %v2601, %v2599
      %v2630 = vpack.c.bf16 %v2604, %v2602
      %v2631 = vpack.c.bf16 %v2605, %v2603
      %v2632 = vpack.c.bf16 %v2608, %v2606
      %v2633 = vpack.c.bf16 %v2609, %v2607
      %v2634 = vpack.c.bf16 %v2612, %v2610
      %v2635 = vpack.c.bf16 %v2613, %v2611
      %v2636 = vpack.c.bf16 %v2616, %v2614
      %v2637 = vpack.c.bf16 %v2617, %v2615
      %v2638 = vpack.c.bf16 %v2620, %v2618
      %v2639 = vpack.c.bf16 %v2621, %v2619
      %v2640 = vpack.c.bf16 %v2624, %v2622
      %v2641 = vpack.c.bf16 %v2625, %v2623
      %v2642 = vld [vmem:[#allocation15] sm:$0xff]
      %v2643 = vld [vmem:[#allocation15 + $0x8] sm:$0xff]
      %v2644 = vld [vmem:[#allocation15 + $0x10] sm:$0xff]
      %v2645 = vld [vmem:[#allocation15 + $0x18] sm:$0xff]
      %v2646 = vld [vmem:[#allocation15 + $0x20] sm:$0xff]
      %v2647 = vld [vmem:[#allocation15 + $0x28] sm:$0xff]
      %v2648 = vld [vmem:[#allocation15 + $0x30] sm:$0xff]
      %v2649 = vld [vmem:[#allocation15 + $0x38] sm:$0xff]
      %v2650 = vld [vmem:[#allocation15 + $0x40] sm:$0xff]
      %v2651 = vld [vmem:[#allocation15 + $0x48] sm:$0xff]
      %v2652 = vld [vmem:[#allocation15 + $0x50] sm:$0xff]
      %v2653 = vld [vmem:[#allocation15 + $0x58] sm:$0xff]
      %v2654 = vld [vmem:[#allocation15 + $0x60] sm:$0xff]
      %v2655 = vld [vmem:[#allocation15 + $0x68] sm:$0xff]
      %v2656 = vld [vmem:[#allocation15 + $0x70] sm:$0xff]
      %v2657 = vld [vmem:[#allocation15 + $0x78] sm:$0xff]
      %v2658 = vld [vmem:[#allocation15 + $0x80] sm:$0xff]
      %v2659 = vld [vmem:[#allocation15 + $0x88] sm:$0xff]
      %v2660 = vld [vmem:[#allocation15 + $0x90] sm:$0xff]
      %v2661 = vld [vmem:[#allocation15 + $0x98] sm:$0xff]
      %v2662 = vld [vmem:[#allocation15 + $0xa0] sm:$0xff]
      %v2663 = vld [vmem:[#allocation15 + $0xa8] sm:$0xff]
      %v2664 = vld [vmem:[#allocation15 + $0xb0] sm:$0xff]
      %v2665 = vld [vmem:[#allocation15 + $0xb8] sm:$0xff]
      %v2666 = vld [vmem:[#allocation15 + $0xc0] sm:$0xff]
      %v2667 = vld [vmem:[#allocation15 + $0xc8] sm:$0xff]
      %v2668 = vld [vmem:[#allocation15 + $0xd0] sm:$0xff]
      %v2669 = vld [vmem:[#allocation15 + $0xd8] sm:$0xff]
      %v2670 = vld [vmem:[#allocation15 + $0xe0] sm:$0xff]
      %v2671 = vld [vmem:[#allocation15 + $0xe8] sm:$0xff]
      %v2672 = vld [vmem:[#allocation15 + $0xf0] sm:$0xff]
      %v2673 = vld [vmem:[#allocation15 + $0xf8] sm:$0xff]
      %v2674 = vld [vmem:[%s12] sm:$0x3]
      %v2676 = vlaneseq
      %v2677 = vshrl.u32 %v2676, 7
      %v2678 = vsub.s32 0, %v2677
      %v2679 = vrot.slane %v2674, %v2678
      %v2680 = vlaneseq
      %v2681 = vshrl.u32 %v2680, 7
      %v2682 = vsub.s32 1, %v2681
      %v2683 = vrot.slane %v2674, %v2682
      %v2718 = vunpack.c.l.b16 %v2642
      %v2719 = vunpack.c.h.b16 %v2642
      %v2720 = vunpack.c.l.b16 %v2643
      %v2721 = vunpack.c.h.b16 %v2643
      %v2722 = vunpack.c.l.b16 %v2644
      %v2723 = vunpack.c.h.b16 %v2644
      %v2724 = vunpack.c.l.b16 %v2645
      %v2725 = vunpack.c.h.b16 %v2645
      %v2726 = vunpack.c.l.b16 %v2646
      %v2727 = vunpack.c.h.b16 %v2646
      %v2728 = vunpack.c.l.b16 %v2647
      %v2729 = vunpack.c.h.b16 %v2647
      %v2730 = vunpack.c.l.b16 %v2648
      %v2731 = vunpack.c.h.b16 %v2648
      %v2732 = vunpack.c.l.b16 %v2649
      %v2733 = vunpack.c.h.b16 %v2649
      %v2734 = vunpack.c.l.b16 %v2650
      %v2735 = vunpack.c.h.b16 %v2650
      %v2736 = vunpack.c.l.b16 %v2651
      %v2737 = vunpack.c.h.b16 %v2651
      %v2738 = vunpack.c.l.b16 %v2652
      %v2739 = vunpack.c.h.b16 %v2652
      %v2740 = vunpack.c.l.b16 %v2653
      %v2741 = vunpack.c.h.b16 %v2653
      %v2742 = vunpack.c.l.b16 %v2654
      %v2743 = vunpack.c.h.b16 %v2654
      %v2744 = vunpack.c.l.b16 %v2655
      %v2745 = vunpack.c.h.b16 %v2655
      %v2746 = vunpack.c.l.b16 %v2656
      %v2747 = vunpack.c.h.b16 %v2656
      %v2748 = vunpack.c.l.b16 %v2657
      %v2749 = vunpack.c.h.b16 %v2657
      %v2750 = vunpack.c.l.b16 %v2658
      %v2751 = vunpack.c.h.b16 %v2658
      %v2752 = vunpack.c.l.b16 %v2659
      %v2753 = vunpack.c.h.b16 %v2659
      %v2754 = vunpack.c.l.b16 %v2660
      %v2755 = vunpack.c.h.b16 %v2660
      %v2756 = vunpack.c.l.b16 %v2661
      %v2757 = vunpack.c.h.b16 %v2661
      %v2758 = vunpack.c.l.b16 %v2662
      %v2759 = vunpack.c.h.b16 %v2662
      %v2760 = vunpack.c.l.b16 %v2663
      %v2761 = vunpack.c.h.b16 %v2663
      %v2762 = vunpack.c.l.b16 %v2664
      %v2763 = vunpack.c.h.b16 %v2664
      %v2764 = vunpack.c.l.b16 %v2665
      %v2765 = vunpack.c.h.b16 %v2665
      %v2766 = vunpack.c.l.b16 %v2666
      %v2767 = vunpack.c.h.b16 %v2666
      %v2768 = vunpack.c.l.b16 %v2667
      %v2769 = vunpack.c.h.b16 %v2667
      %v2770 = vunpack.c.l.b16 %v2668
      %v2771 = vunpack.c.h.b16 %v2668
      %v2772 = vunpack.c.l.b16 %v2669
      %v2773 = vunpack.c.h.b16 %v2669
      %v2774 = vunpack.c.l.b16 %v2670
      %v2775 = vunpack.c.h.b16 %v2670
      %v2776 = vunpack.c.l.b16 %v2671
      %v2777 = vunpack.c.h.b16 %v2671
      %v2778 = vunpack.c.l.b16 %v2672
      %v2779 = vunpack.c.h.b16 %v2672
      %v2780 = vunpack.c.l.b16 %v2673
      %v2781 = vunpack.c.h.b16 %v2673
      %v2782 = vpack.c.b16 %v2720, %v2718
      %v2783 = vpack.c.b16 %v2721, %v2719
      %v2784 = vpack.c.b16 %v2724, %v2722
      %v2785 = vpack.c.b16 %v2725, %v2723
      %v2786 = vpack.c.b16 %v2728, %v2726
      %v2787 = vpack.c.b16 %v2729, %v2727
      %v2788 = vpack.c.b16 %v2732, %v2730
      %v2789 = vpack.c.b16 %v2733, %v2731
      %v2790 = vpack.c.b16 %v2736, %v2734
      %v2791 = vpack.c.b16 %v2737, %v2735
      %v2792 = vpack.c.b16 %v2740, %v2738
      %v2793 = vpack.c.b16 %v2741, %v2739
      %v2794 = vpack.c.b16 %v2744, %v2742
      %v2795 = vpack.c.b16 %v2745, %v2743
      %v2796 = vpack.c.b16 %v2748, %v2746
      %v2797 = vpack.c.b16 %v2749, %v2747
      %v2798 = vpack.c.b16 %v2752, %v2750
      %v2799 = vpack.c.b16 %v2753, %v2751
      %v2800 = vpack.c.b16 %v2756, %v2754
      %v2801 = vpack.c.b16 %v2757, %v2755
      %v2802 = vpack.c.b16 %v2760, %v2758
      %v2803 = vpack.c.b16 %v2761, %v2759
      %v2804 = vpack.c.b16 %v2764, %v2762
      %v2805 = vpack.c.b16 %v2765, %v2763
      %v2806 = vpack.c.b16 %v2768, %v2766
      %v2807 = vpack.c.b16 %v2769, %v2767
      %v2808 = vpack.c.b16 %v2772, %v2770
      %v2809 = vpack.c.b16 %v2773, %v2771
      %v2810 = vpack.c.b16 %v2776, %v2774
      %v2811 = vpack.c.b16 %v2777, %v2775
      %v2812 = vpack.c.b16 %v2780, %v2778
      %v2813 = vpack.c.b16 %v2781, %v2779
      %2846 = vmatprep.subr.bf16.mxu0 %v2783
      %2847 = vmatpush1.bf16.msra.mxu0 %v2782
      %2848 = vmatprep.subr.bf16.mxu0 %v2785
      %2849 = vmatpush1.bf16.msra.mxu0 %v2784
      %2850 = vmatprep.subr.bf16.mxu0 %v2787
      %2851 = vmatpush1.bf16.msra.mxu0 %v2786
      %2852 = vmatprep.subr.bf16.mxu0 %v2789
      %2853 = vmatpush1.bf16.msra.mxu0 %v2788
      %2854 = vmatprep.subr.bf16.mxu0 %v2791
      %2855 = vmatpush1.bf16.msra.mxu0 %v2790
      %2856 = vmatprep.subr.bf16.mxu0 %v2793
      %2857 = vmatpush1.bf16.msra.mxu0 %v2792
      %2858 = vmatprep.subr.bf16.mxu0 %v2795
      %2859 = vmatpush1.bf16.msra.mxu0 %v2794
      %2860 = vmatprep.subr.bf16.mxu0 %v2797
      %2861 = vmatpush1.bf16.msra.mxu0 %v2796
      %2862 = vmatprep.subr.bf16.mxu0 %v2799
      %2863 = vmatpush1.bf16.msra.mxu0 %v2798
      %2864 = vmatprep.subr.bf16.mxu0 %v2801
      %2865 = vmatpush1.bf16.msra.mxu0 %v2800
      %2866 = vmatprep.subr.bf16.mxu0 %v2803
      %2867 = vmatpush1.bf16.msra.mxu0 %v2802
      %2868 = vmatprep.subr.bf16.mxu0 %v2805
      %2869 = vmatpush1.bf16.msra.mxu0 %v2804
      %2870 = vmatprep.subr.bf16.mxu0 %v2807
      %2871 = vmatpush1.bf16.msra.mxu0 %v2806
      %2872 = vmatprep.subr.bf16.mxu0 %v2809
      %2873 = vmatpush1.bf16.msra.mxu0 %v2808
      %2874 = vmatprep.subr.bf16.mxu0 %v2811
      %2875 = vmatpush1.bf16.msra.mxu0 %v2810
      %2876 = vmatprep.subr.bf16.mxu0 %v2813
      %2877 = vmatpush1.bf16.msra.mxu0 %v2812
      %2878 = vmatprep.mubr.bf16.mxu0 %v2627
      %2879 = vmatmul.mubr.bf16.gmra.mrb[0].mxu0 %v2626
      %v2880 = vpop.f32.mrb[0].mxu0
      %v2881 = vadd.f32 %v2679, %v2880
      %v2882 = vpop.f32.mrb[0].mxu0
      %v2883 = vadd.f32 %v2683, %v2882
      %v2884 = vpop.f32.mrb[0].mxu0
      %v2885 = vadd.f32 %v2679, %v2884
      %v2886 = vpop.f32.mrb[0].mxu0
      %v2887 = vadd.f32 %v2683, %v2886
      %2888 = vmatprep.mubr.bf16.mxu0 %v2629
      %2889 = vmatmul.mubr.bf16.gmra.mrb[0].mxu0 %v2628
      %v2890 = vpop.f32.mrb[0].mxu0
      %v2891 = vadd.f32 %v2679, %v2890
      %v2892 = vpop.f32.mrb[0].mxu0
      %v2893 = vadd.f32 %v2683, %v2892
      %v2894 = vpop.f32.mrb[0].mxu0
      %v2895 = vadd.f32 %v2679, %v2894
      %v2896 = vpop.f32.mrb[0].mxu0
      %v2897 = vadd.f32 %v2683, %v2896
      %2898 = vmatprep.mubr.bf16.mxu0 %v2631
      %2899 = vmatmul.mubr.bf16.gmra.mrb[0].mxu0 %v2630
      %v2900 = vpop.f32.mrb[0].mxu0
      %v2901 = vadd.f32 %v2679, %v2900
      %v2902 = vpop.f32.mrb[0].mxu0
      %v2903 = vadd.f32 %v2683, %v2902
      %v2904 = vpop.f32.mrb[0].mxu0
      %v2905 = vadd.f32 %v2679, %v2904
      %v2906 = vpop.f32.mrb[0].mxu0
      %v2907 = vadd.f32 %v2683, %v2906
      %2908 = vmatprep.mubr.bf16.mxu0 %v2633
      %2909 = vmatmul.mubr.bf16.gmra.mrb[0].mxu0 %v2632
      %v2910 = vpop.f32.mrb[0].mxu0
      %v2911 = vadd.f32 %v2679, %v2910
      %v2912 = vpop.f32.mrb[0].mxu0
      %v2913 = vadd.f32 %v2683, %v2912
      %v2914 = vpop.f32.mrb[0].mxu0
      %v2915 = vadd.f32 %v2679, %v2914
      %v2916 = vpop.f32.mrb[0].mxu0
      %v2917 = vadd.f32 %v2683, %v2916
      %2918 = vmatprep.mubr.bf16.mxu0 %v2635
      %2919 = vmatmul.mubr.bf16.gmra.mrb[0].mxu0 %v2634
      %v2920 = vpop.f32.mrb[0].mxu0
      %v2921 = vadd.f32 %v2679, %v2920
      %v2922 = vpop.f32.mrb[0].mxu0
      %v2923 = vadd.f32 %v2683, %v2922
      %v2924 = vpop.f32.mrb[0].mxu0
      %v2925 = vadd.f32 %v2679, %v2924
      %v2926 = vpop.f32.mrb[0].mxu0
      %v2927 = vadd.f32 %v2683, %v2926
      %2928 = vmatprep.mubr.bf16.mxu0 %v2637
      %2929 = vmatmul.mubr.bf16.gmra.mrb[0].mxu0 %v2636
      %v2930 = vpop.f32.mrb[0].mxu0
      %v2931 = vadd.f32 %v2679, %v2930
      %v2932 = vpop.f32.mrb[0].mxu0
      %v2933 = vadd.f32 %v2683, %v2932
      %v2934 = vpop.f32.mrb[0].mxu0
      %v2935 = vadd.f32 %v2679, %v2934
      %v2936 = vpop.f32.mrb[0].mxu0
      %v2937 = vadd.f32 %v2683, %v2936
      %2938 = vmatprep.mubr.bf16.mxu0 %v2639
      %2939 = vmatmul.mubr.bf16.gmra.mrb[0].mxu0 %v2638
      %v2940 = vpop.f32.mrb[0].mxu0
      %v2941 = vadd.f32 %v2679, %v2940
      %v2942 = vpop.f32.mrb[0].mxu0
      %v2943 = vadd.f32 %v2683, %v2942
      %v2944 = vpop.f32.mrb[0].mxu0
      %v2945 = vadd.f32 %v2679, %v2944
      %v2946 = vpop.f32.mrb[0].mxu0
      %v2947 = vadd.f32 %v2683, %v2946
      %2948 = vmatprep.mubr.bf16.mxu0 %v2641
      %2949 = vmatmul.mubr.bf16.gmra.mrb[0].mxu0 %v2640
      %v2950 = vpop.f32.mrb[0].mxu0
      %v2951 = vadd.f32 %v2679, %v2950
      %v2952 = vpop.f32.mrb[0].mxu0
      %v2953 = vadd.f32 %v2683, %v2952
      %v2954 = vpop.f32.mrb[0].mxu0
      %v2955 = vadd.f32 %v2679, %v2954
      %v2956 = vpop.f32.mrb[0].mxu0
      %v2957 = vadd.f32 %v2683, %v2956
      %2958 = vdwg.mxu0
      %v2959 = vmax.f32 %v2881, 0.0
      %v2960 = vmax.f32 %v2883, 0.0
      %v2961 = vmax.f32 %v2885, 0.0
      %v2962 = vmax.f32 %v2887, 0.0
      %v2963 = vmax.f32 %v2891, 0.0
      %v2964 = vmax.f32 %v2893, 0.0
      %v2965 = vmax.f32 %v2895, 0.0
      %v2966 = vmax.f32 %v2897, 0.0
      %v2967 = vmax.f32 %v2901, 0.0
      %v2968 = vmax.f32 %v2903, 0.0
      %v2969 = vmax.f32 %v2905, 0.0
      %v2970 = vmax.f32 %v2907, 0.0
      %v2971 = vmax.f32 %v2911, 0.0
      %v2972 = vmax.f32 %v2913, 0.0
      %v2973 = vmax.f32 %v2915, 0.0
      %v2974 = vmax.f32 %v2917, 0.0
      %v2975 = vmax.f32 %v2921, 0.0
      %v2976 = vmax.f32 %v2923, 0.0
      %v2977 = vmax.f32 %v2925, 0.0
      %v2978 = vmax.f32 %v2927, 0.0
      %v2979 = vmax.f32 %v2931, 0.0
      %v2980 = vmax.f32 %v2933, 0.0
      %v2981 = vmax.f32 %v2935, 0.0
      %v2982 = vmax.f32 %v2937, 0.0
      %v2983 = vmax.f32 %v2941, 0.0
      %v2984 = vmax.f32 %v2943, 0.0
      %v2985 = vmax.f32 %v2945, 0.0
      %v2986 = vmax.f32 %v2947, 0.0
      %v2987 = vmax.f32 %v2951, 0.0
      %v2988 = vmax.f32 %v2953, 0.0
      %v2989 = vmax.f32 %v2955, 0.0
      %v2990 = vmax.f32 %v2957, 0.0
      %v2991 = vpack.c.bf16 %v2961, %v2959
      %v2992 = vpack.c.bf16 %v2962, %v2960
      %v2993 = vpack.c.bf16 %v2965, %v2963
      %v2994 = vpack.c.bf16 %v2966, %v2964
      %v2995 = vpack.c.bf16 %v2969, %v2967
      %v2996 = vpack.c.bf16 %v2970, %v2968
      %v2997 = vpack.c.bf16 %v2973, %v2971
      %v2998 = vpack.c.bf16 %v2974, %v2972
      %v2999 = vpack.c.bf16 %v2977, %v2975
      %v3000 = vpack.c.bf16 %v2978, %v2976
      %v3001 = vpack.c.bf16 %v2981, %v2979
      %v3002 = vpack.c.bf16 %v2982, %v2980
      %v3003 = vpack.c.bf16 %v2985, %v2983
      %v3004 = vpack.c.bf16 %v2986, %v2984
      %v3005 = vpack.c.bf16 %v2989, %v2987
      %v3006 = vpack.c.bf16 %v2990, %v2988
      %v3007 = vld [vmem:[#allocation16] sm:$0xff]
      %v3008 = vld [vmem:[#allocation16 + $0x8] sm:$0xff]
      %v3009 = vld [vmem:[#allocation16 + $0x10] sm:$0xff]
      %v3010 = vld [vmem:[#allocation16 + $0x18] sm:$0xff]
      %v3011 = vld [vmem:[#allocation16 + $0x20] sm:$0xff]
      %v3012 = vld [vmem:[#allocation16 + $0x28] sm:$0xff]
      %v3013 = vld [vmem:[#allocation16 + $0x30] sm:$0xff]
      %v3014 = vld [vmem:[#allocation16 + $0x38] sm:$0xff]
      %v3015 = vld [vmem:[#allocation16 + $0x40] sm:$0xff]
      %v3016 = vld [vmem:[#allocation16 + $0x48] sm:$0xff]
      %v3017 = vld [vmem:[#allocation16 + $0x50] sm:$0xff]
      %v3018 = vld [vmem:[#allocation16 + $0x58] sm:$0xff]
      %v3019 = vld [vmem:[#allocation16 + $0x60] sm:$0xff]
      %v3020 = vld [vmem:[#allocation16 + $0x68] sm:$0xff]
      %v3021 = vld [vmem:[#allocation16 + $0x70] sm:$0xff]
      %v3022 = vld [vmem:[#allocation16 + $0x78] sm:$0xff]
      %v3023 = vld [vmem:[#allocation16 + $0x80] sm:$0xff]
      %v3024 = vld [vmem:[#allocation16 + $0x88] sm:$0xff]
      %v3025 = vld [vmem:[#allocation16 + $0x90] sm:$0xff]
      %v3026 = vld [vmem:[#allocation16 + $0x98] sm:$0xff]
      %v3027 = vld [vmem:[#allocation16 + $0xa0] sm:$0xff]
      %v3028 = vld [vmem:[#allocation16 + $0xa8] sm:$0xff]
      %v3029 = vld [vmem:[#allocation16 + $0xb0] sm:$0xff]
      %v3030 = vld [vmem:[#allocation16 + $0xb8] sm:$0xff]
      %v3031 = vld [vmem:[#allocation16 + $0xc0] sm:$0xff]
      %v3032 = vld [vmem:[#allocation16 + $0xc8] sm:$0xff]
      %v3033 = vld [vmem:[#allocation16 + $0xd0] sm:$0xff]
      %v3034 = vld [vmem:[#allocation16 + $0xd8] sm:$0xff]
      %v3035 = vld [vmem:[#allocation16 + $0xe0] sm:$0xff]
      %v3036 = vld [vmem:[#allocation16 + $0xe8] sm:$0xff]
      %v3037 = vld [vmem:[#allocation16 + $0xf0] sm:$0xff]
      %v3038 = vld [vmem:[#allocation16 + $0xf8] sm:$0xff]
      %v3039 = vld [vmem:[%s14] sm:$0x3]
      %v3041 = vlaneseq
      %v3042 = vshrl.u32 %v3041, 7
      %v3043 = vsub.s32 0, %v3042
      %v3044 = vrot.slane %v3039, %v3043
      %v3045 = vlaneseq
      %v3046 = vshrl.u32 %v3045, 7
      %v3047 = vsub.s32 1, %v3046
      %v3048 = vrot.slane %v3039, %v3047
      %v3083 = vunpack.c.l.b16 %v3007
      %v3084 = vunpack.c.h.b16 %v3007
      %v3085 = vunpack.c.l.b16 %v3008
      %v3086 = vunpack.c.h.b16 %v3008
      %v3087 = vunpack.c.l.b16 %v3009
      %v3088 = vunpack.c.h.b16 %v3009
      %v3089 = vunpack.c.l.b16 %v3010
      %v3090 = vunpack.c.h.b16 %v3010
      %v3091 = vunpack.c.l.b16 %v3011
      %v3092 = vunpack.c.h.b16 %v3011
      %v3093 = vunpack.c.l.b16 %v3012
      %v3094 = vunpack.c.h.b16 %v3012
      %v3095 = vunpack.c.l.b16 %v3013
      %v3096 = vunpack.c.h.b16 %v3013
      %v3097 = vunpack.c.l.b16 %v3014
      %v3098 = vunpack.c.h.b16 %v3014
      %v3099 = vunpack.c.l.b16 %v3015
      %v3100 = vunpack.c.h.b16 %v3015
      %v3101 = vunpack.c.l.b16 %v3016
      %v3102 = vunpack.c.h.b16 %v3016
      %v3103 = vunpack.c.l.b16 %v3017
      %v3104 = vunpack.c.h.b16 %v3017
      %v3105 = vunpack.c.l.b16 %v3018
      %v3106 = vunpack.c.h.b16 %v3018
      %v3107 = vunpack.c.l.b16 %v3019
      %v3108 = vunpack.c.h.b16 %v3019
      %v3109 = vunpack.c.l.b16 %v3020
      %v3110 = vunpack.c.h.b16 %v3020
      %v3111 = vunpack.c.l.b16 %v3021
      %v3112 = vunpack.c.h.b16 %v3021
      %v3113 = vunpack.c.l.b16 %v3022
      %v3114 = vunpack.c.h.b16 %v3022
      %v3115 = vunpack.c.l.b16 %v3023
      %v3116 = vunpack.c.h.b16 %v3023
      %v3117 = vunpack.c.l.b16 %v3024
      %v3118 = vunpack.c.h.b16 %v3024
      %v3119 = vunpack.c.l.b16 %v3025
      %v3120 = vunpack.c.h.b16 %v3025
      %v3121 = vunpack.c.l.b16 %v3026
      %v3122 = vunpack.c.h.b16 %v3026
      %v3123 = vunpack.c.l.b16 %v3027
      %v3124 = vunpack.c.h.b16 %v3027
      %v3125 = vunpack.c.l.b16 %v3028
      %v3126 = vunpack.c.h.b16 %v3028
      %v3127 = vunpack.c.l.b16 %v3029
      %v3128 = vunpack.c.h.b16 %v3029
      %v3129 = vunpack.c.l.b16 %v3030
      %v3130 = vunpack.c.h.b16 %v3030
      %v3131 = vunpack.c.l.b16 %v3031
      %v3132 = vunpack.c.h.b16 %v3031
      %v3133 = vunpack.c.l.b16 %v3032
      %v3134 = vunpack.c.h.b16 %v3032
      %v3135 = vunpack.c.l.b16 %v3033
      %v3136 = vunpack.c.h.b16 %v3033
      %v3137 = vunpack.c.l.b16 %v3034
      %v3138 = vunpack.c.h.b16 %v3034
      %v3139 = vunpack.c.l.b16 %v3035
      %v3140 = vunpack.c.h.b16 %v3035
      %v3141 = vunpack.c.l.b16 %v3036
      %v3142 = vunpack.c.h.b16 %v3036
      %v3143 = vunpack.c.l.b16 %v3037
      %v3144 = vunpack.c.h.b16 %v3037
      %v3145 = vunpack.c.l.b16 %v3038
      %v3146 = vunpack.c.h.b16 %v3038
      %v3147 = vpack.c.b16 %v3085, %v3083
      %v3148 = vpack.c.b16 %v3086, %v3084
      %v3149 = vpack.c.b16 %v3089, %v3087
      %v3150 = vpack.c.b16 %v3090, %v3088
      %v3151 = vpack.c.b16 %v3093, %v3091
      %v3152 = vpack.c.b16 %v3094, %v3092
      %v3153 = vpack.c.b16 %v3097, %v3095
      %v3154 = vpack.c.b16 %v3098, %v3096
      %v3155 = vpack.c.b16 %v3101, %v3099
      %v3156 = vpack.c.b16 %v3102, %v3100
      %v3157 = vpack.c.b16 %v3105, %v3103
      %v3158 = vpack.c.b16 %v3106, %v3104
      %v3159 = vpack.c.b16 %v3109, %v3107
      %v3160 = vpack.c.b16 %v3110, %v3108
      %v3161 = vpack.c.b16 %v3113, %v3111
      %v3162 = vpack.c.b16 %v3114, %v3112
      %v3163 = vpack.c.b16 %v3117, %v3115
      %v3164 = vpack.c.b16 %v3118, %v3116
      %v3165 = vpack.c.b16 %v3121, %v3119
      %v3166 = vpack.c.b16 %v3122, %v3120
      %v3167 = vpack.c.b16 %v3125, %v3123
      %v3168 = vpack.c.b16 %v3126, %v3124
      %v3169 = vpack.c.b16 %v3129, %v3127
      %v3170 = vpack.c.b16 %v3130, %v3128
      %v3171 = vpack.c.b16 %v3133, %v3131
      %v3172 = vpack.c.b16 %v3134, %v3132
      %v3173 = vpack.c.b16 %v3137, %v3135
      %v3174 = vpack.c.b16 %v3138, %v3136
      %v3175 = vpack.c.b16 %v3141, %v3139
      %v3176 = vpack.c.b16 %v3142, %v3140
      %v3177 = vpack.c.b16 %v3145, %v3143
      %v3178 = vpack.c.b16 %v3146, %v3144
      %3211 = vmatprep.subr.bf16.mxu0 %v3148
      %3212 = vmatpush1.bf16.msra.mxu0 %v3147
      %3213 = vmatprep.subr.bf16.mxu0 %v3150
      %3214 = vmatpush1.bf16.msra.mxu0 %v3149
      %3215 = vmatprep.subr.bf16.mxu0 %v3152
      %3216 = vmatpush1.bf16.msra.mxu0 %v3151
      %3217 = vmatprep.subr.bf16.mxu0 %v3154
      %3218 = vmatpush1.bf16.msra.mxu0 %v3153
      %3219 = vmatprep.subr.bf16.mxu0 %v3156
      %3220 = vmatpush1.bf16.msra.mxu0 %v3155
      %3221 = vmatprep.subr.bf16.mxu0 %v3158
      %3222 = vmatpush1.bf16.msra.mxu0 %v3157
      %3223 = vmatprep.subr.bf16.mxu0 %v3160
      %3224 = vmatpush1.bf16.msra.mxu0 %v3159
      %3225 = vmatprep.subr.bf16.mxu0 %v3162
      %3226 = vmatpush1.bf16.msra.mxu0 %v3161
      %3227 = vmatprep.subr.bf16.mxu0 %v3164
      %3228 = vmatpush1.bf16.msra.mxu0 %v3163
      %3229 = vmatprep.subr.bf16.mxu0 %v3166
      %3230 = vmatpush1.bf16.msra.mxu0 %v3165
      %3231 = vmatprep.subr.bf16.mxu0 %v3168
      %3232 = vmatpush1.bf16.msra.mxu0 %v3167
      %3233 = vmatprep.subr.bf16.mxu0 %v3170
      %3234 = vmatpush1.bf16.msra.mxu0 %v3169
      %3235 = vmatprep.subr.bf16.mxu0 %v3172
      %3236 = vmatpush1.bf16.msra.mxu0 %v3171
      %3237 = vmatprep.subr.bf16.mxu0 %v3174
      %3238 = vmatpush1.bf16.msra.mxu0 %v3173
      %3239 = vmatprep.subr.bf16.mxu0 %v3176
      %3240 = vmatpush1.bf16.msra.mxu0 %v3175
      %3241 = vmatprep.subr.bf16.mxu0 %v3178
      %3242 = vmatpush1.bf16.msra.mxu0 %v3177
      %3243 = vmatprep.mubr.bf16.mxu0 %v2992
      %3244 = vmatmul.mubr.bf16.gmra.mrb[0].mxu0 %v2991
      %v3245 = vpop.f32.mrb[0].mxu0
      %v3246 = vadd.f32 %v3044, %v3245
      %v3247 = vpop.f32.mrb[0].mxu0
      %v3248 = vadd.f32 %v3048, %v3247
      %v3249 = vpop.f32.mrb[0].mxu0
      %v3250 = vadd.f32 %v3044, %v3249
      %v3251 = vpop.f32.mrb[0].mxu0
      %v3252 = vadd.f32 %v3048, %v3251
      %3253 = vmatprep.mubr.bf16.mxu0 %v2994
      %3254 = vmatmul.mubr.bf16.gmra.mrb[0].mxu0 %v2993
      %v3255 = vpop.f32.mrb[0].mxu0
      %v3256 = vadd.f32 %v3044, %v3255
      %v3257 = vpop.f32.mrb[0].mxu0
      %v3258 = vadd.f32 %v3048, %v3257
      %v3259 = vpop.f32.mrb[0].mxu0
      %v3260 = vadd.f32 %v3044, %v3259
      %v3261 = vpop.f32.mrb[0].mxu0
      %v3262 = vadd.f32 %v3048, %v3261
      %3263 = vmatprep.mubr.bf16.mxu0 %v2996
      %3264 = vmatmul.mubr.bf16.gmra.mrb[0].mxu0 %v2995
      %v3265 = vpop.f32.mrb[0].mxu0
      %v3266 = vadd.f32 %v3044, %v3265
      %v3267 = vpop.f32.mrb[0].mxu0
      %v3268 = vadd.f32 %v3048, %v3267
      %v3269 = vpop.f32.mrb[0].mxu0
      %v3270 = vadd.f32 %v3044, %v3269
      %v3271 = vpop.f32.mrb[0].mxu0
      %v3272 = vadd.f32 %v3048, %v3271
      %3273 = vmatprep.mubr.bf16.mxu0 %v2998
      %3274 = vmatmul.mubr.bf16.gmra.mrb[0].mxu0 %v2997
      %v3275 = vpop.f32.mrb[0].mxu0
      %v3276 = vadd.f32 %v3044, %v3275
      %v3277 = vpop.f32.mrb[0].mxu0
      %v3278 = vadd.f32 %v3048, %v3277
      %v3279 = vpop.f32.mrb[0].mxu0
      %v3280 = vadd.f32 %v3044, %v3279
      %v3281 = vpop.f32.mrb[0].mxu0
      %v3282 = vadd.f32 %v3048, %v3281
      %3283 = vmatprep.mubr.bf16.mxu0 %v3000
      %3284 = vmatmul.mubr.bf16.gmra.mrb[0].mxu0 %v2999
      %v3285 = vpop.f32.mrb[0].mxu0
      %v3286 = vadd.f32 %v3044, %v3285
      %v3287 = vpop.f32.mrb[0].mxu0
      %v3288 = vadd.f32 %v3048, %v3287
      %v3289 = vpop.f32.mrb[0].mxu0
      %v3290 = vadd.f32 %v3044, %v3289
      %v3291 = vpop.f32.mrb[0].mxu0
      %v3292 = vadd.f32 %v3048, %v3291
      %3293 = vmatprep.mubr.bf16.mxu0 %v3002
      %3294 = vmatmul.mubr.bf16.gmra.mrb[0].mxu0 %v3001
      %v3295 = vpop.f32.mrb[0].mxu0
      %v3296 = vadd.f32 %v3044, %v3295
      %v3297 = vpop.f32.mrb[0].mxu0
      %v3298 = vadd.f32 %v3048, %v3297
      %v3299 = vpop.f32.mrb[0].mxu0
      %v3300 = vadd.f32 %v3044, %v3299
      %v3301 = vpop.f32.mrb[0].mxu0
      %v3302 = vadd.f32 %v3048, %v3301
      %3303 = vmatprep.mubr.bf16.mxu0 %v3004
      %3304 = vmatmul.mubr.bf16.gmra.mrb[0].mxu0 %v3003
      %v3305 = vpop.f32.mrb[0].mxu0
      %v3306 = vadd.f32 %v3044, %v3305
      %v3307 = vpop.f32.mrb[0].mxu0
      %v3308 = vadd.f32 %v3048, %v3307
      %v3309 = vpop.f32.mrb[0].mxu0
      %v3310 = vadd.f32 %v3044, %v3309
      %v3311 = vpop.f32.mrb[0].mxu0
      %v3312 = vadd.f32 %v3048, %v3311
      %3313 = vmatprep.mubr.bf16.mxu0 %v3006
      %3314 = vmatmul.mubr.bf16.gmra.mrb[0].mxu0 %v3005
      %v3315 = vpop.f32.mrb[0].mxu0
      %v3316 = vadd.f32 %v3044, %v3315
      %v3317 = vpop.f32.mrb[0].mxu0
      %v3318 = vadd.f32 %v3048, %v3317
      %v3319 = vpop.f32.mrb[0].mxu0
      %v3320 = vadd.f32 %v3044, %v3319
      %v3321 = vpop.f32.mrb[0].mxu0
      %v3322 = vadd.f32 %v3048, %v3321
      %3323 = vdwg.mxu0
      %v3324 = vmul.f32 %v2231, %v2231
      %v3325 = vmul.f32 %v2233, %v2233
      %v3326 = vmul.f32 %v2235, %v2235
      %v3327 = vmul.f32 %v2237, %v2237
      %v3328 = vmul.f32 %v2241, %v2241
      %v3329 = vmul.f32 %v2243, %v2243
      %v3330 = vmul.f32 %v2245, %v2245
      %v3331 = vmul.f32 %v2247, %v2247
      %v3332 = vmul.f32 %v2251, %v2251
      %v3333 = vmul.f32 %v2253, %v2253
      %v3334 = vmul.f32 %v2255, %v2255
      %v3335 = vmul.f32 %v2257, %v2257
      %v3336 = vmul.f32 %v2261, %v2261
      %v3337 = vmul.f32 %v2263, %v2263
      %v3338 = vmul.f32 %v2265, %v2265
      %v3339 = vmul.f32 %v2267, %v2267
      %v3340 = vmul.f32 %v2271, %v2271
      %v3341 = vmul.f32 %v2273, %v2273
      %v3342 = vmul.f32 %v2275, %v2275
      %v3343 = vmul.f32 %v2277, %v2277
      %v3344 = vmul.f32 %v2281, %v2281
      %v3345 = vmul.f32 %v2283, %v2283
      %v3346 = vmul.f32 %v2285, %v2285
      %v3347 = vmul.f32 %v2287, %v2287
      %v3348 = vmul.f32 %v2291, %v2291
      %v3349 = vmul.f32 %v2293, %v2293
      %v3350 = vmul.f32 %v2295, %v2295
      %v3351 = vmul.f32 %v2297, %v2297
      %v3352 = vmul.f32 %v2301, %v2301
      %v3353 = vmul.f32 %v2303, %v2303
      %v3354 = vmul.f32 %v2305, %v2305
      %v3355 = vmul.f32 %v2307, %v2307
      %v3356 = vadd.f32 %v3324, %v3325
      %3357 = vadd.xlane.f32.xlu0 %v3356
      %v3358 = vpop.xlane.xlu0 %3357
      %v3359 = vadd.f32 %v3326, %v3327
      %3360 = vadd.xlane.f32.xlu0 %v3359
      %v3361 = vpop.xlane.xlu0 %3360
      %v3362 = vadd.f32 %v3328, %v3329
      %3363 = vadd.xlane.f32.xlu0 %v3362
      %v3364 = vpop.xlane.xlu0 %3363
      %v3365 = vadd.f32 %v3330, %v3331
      %3366 = vadd.xlane.f32.xlu0 %v3365
      %v3367 = vpop.xlane.xlu0 %3366
      %v3368 = vadd.f32 %v3332, %v3333
      %3369 = vadd.xlane.f32.xlu0 %v3368
      %v3370 = vpop.xlane.xlu0 %3369
      %v3371 = vadd.f32 %v3334, %v3335
      %3372 = vadd.xlane.f32.xlu0 %v3371
      %v3373 = vpop.xlane.xlu0 %3372
      %v3374 = vadd.f32 %v3336, %v3337
      %3375 = vadd.xlane.f32.xlu0 %v3374
      %v3376 = vpop.xlane.xlu0 %3375
      %v3377 = vadd.f32 %v3338, %v3339
      %3378 = vadd.xlane.f32.xlu0 %v3377
      %v3379 = vpop.xlane.xlu0 %3378
      %v3380 = vadd.f32 %v3340, %v3341
      %3381 = vadd.xlane.f32.xlu0 %v3380
      %v3382 = vpop.xlane.xlu0 %3381
      %v3383 = vadd.f32 %v3342, %v3343
      %3384 = vadd.xlane.f32.xlu0 %v3383
      %v3385 = vpop.xlane.xlu0 %3384
      %v3386 = vadd.f32 %v3344, %v3345
      %3387 = vadd.xlane.f32.xlu0 %v3386
      %v3388 = vpop.xlane.xlu0 %3387
      %v3389 = vadd.f32 %v3346, %v3347
      %3390 = vadd.xlane.f32.xlu0 %v3389
      %v3391 = vpop.xlane.xlu0 %3390
      %v3392 = vadd.f32 %v3348, %v3349
      %3393 = vadd.xlane.f32.xlu0 %v3392
      %v3394 = vpop.xlane.xlu0 %3393
      %v3395 = vadd.f32 %v3350, %v3351
      %3396 = vadd.xlane.f32.xlu0 %v3395
      %v3397 = vpop.xlane.xlu0 %3396
      %v3398 = vadd.f32 %v3352, %v3353
      %3399 = vadd.xlane.f32.xlu0 %v3398
      %v3400 = vpop.xlane.xlu0 %3399
      %v3401 = vadd.f32 %v3354, %v3355
      %3402 = vadd.xlane.f32.xlu0 %v3401
      %v3403 = vpop.xlane.xlu0 %3402
      %v3404 = vmax.f32 %v3358, 1e-24
      %v3405 = vmax.f32 %v3361, 1e-24
      %v3406 = vmax.f32 %v3364, 1e-24
      %v3407 = vmax.f32 %v3367, 1e-24
      %v3408 = vmax.f32 %v3370, 1e-24
      %v3409 = vmax.f32 %v3373, 1e-24
      %v3410 = vmax.f32 %v3376, 1e-24
      %v3411 = vmax.f32 %v3379, 1e-24
      %v3412 = vmax.f32 %v3382, 1e-24
      %v3413 = vmax.f32 %v3385, 1e-24
      %v3414 = vmax.f32 %v3388, 1e-24
      %v3415 = vmax.f32 %v3391, 1e-24
      %v3416 = vmax.f32 %v3394, 1e-24
      %v3417 = vmax.f32 %v3397, 1e-24
      %v3418 = vmax.f32 %v3400, 1e-24
      %v3419 = vmax.f32 %v3403, 1e-24
      %v3420 = vrsqrt.pop %v3404
      %v3421 = vrsqrt.pop %v3405
      %v3422 = vrsqrt.pop %v3406
      %v3423 = vrsqrt.pop %v3407
      %v3424 = vrsqrt.pop %v3408
      %v3425 = vrsqrt.pop %v3409
      %v3426 = vrsqrt.pop %v3410
      %v3427 = vrsqrt.pop %v3411
      %v3428 = vrsqrt.pop %v3412
      %v3429 = vrsqrt.pop %v3413
      %v3430 = vrsqrt.pop %v3414
      %v3431 = vrsqrt.pop %v3415
      %v3432 = vrsqrt.pop %v3416
      %v3433 = vrsqrt.pop %v3417
      %v3434 = vrsqrt.pop %v3418
      %v3435 = vrsqrt.pop %v3419
      %v3436 = vmul.f32 %v2231, %v3420
      %v3437 = vmul.f32 %v2233, %v3420
      %v3438 = vmul.f32 %v2235, %v3421
      %v3439 = vmul.f32 %v2237, %v3421
      %v3440 = vmul.f32 %v2241, %v3422
      %v3441 = vmul.f32 %v2243, %v3422
      %v3442 = vmul.f32 %v2245, %v3423
      %v3443 = vmul.f32 %v2247, %v3423
      %v3444 = vmul.f32 %v2251, %v3424
      %v3445 = vmul.f32 %v2253, %v3424
      %v3446 = vmul.f32 %v2255, %v3425
      %v3447 = vmul.f32 %v2257, %v3425
      %v3448 = vmul.f32 %v2261, %v3426
      %v3449 = vmul.f32 %v2263, %v3426
      %v3450 = vmul.f32 %v2265, %v3427
      %v3451 = vmul.f32 %v2267, %v3427
      %v3452 = vmul.f32 %v2271, %v3428
      %v3453 = vmul.f32 %v2273, %v3428
      %v3454 = vmul.f32 %v2275, %v3429
      %v3455 = vmul.f32 %v2277, %v3429
      %v3456 = vmul.f32 %v2281, %v3430
      %v3457 = vmul.f32 %v2283, %v3430
      %v3458 = vmul.f32 %v2285, %v3431
      %v3459 = vmul.f32 %v2287, %v3431
      %v3460 = vmul.f32 %v2291, %v3432
      %v3461 = vmul.f32 %v2293, %v3432
      %v3462 = vmul.f32 %v2295, %v3433
      %v3463 = vmul.f32 %v2297, %v3433
      %v3464 = vmul.f32 %v2301, %v3434
      %v3465 = vmul.f32 %v2303, %v3434
      %v3466 = vmul.f32 %v2305, %v3435
      %v3467 = vmul.f32 %v2307, %v3435
      %v3468 = vmul.f32 %v3246, %v3246
      %v3469 = vmul.f32 %v3248, %v3248
      %v3470 = vmul.f32 %v3250, %v3250
      %v3471 = vmul.f32 %v3252, %v3252
      %v3472 = vmul.f32 %v3256, %v3256
      %v3473 = vmul.f32 %v3258, %v3258
      %v3474 = vmul.f32 %v3260, %v3260
      %v3475 = vmul.f32 %v3262, %v3262
      %v3476 = vmul.f32 %v3266, %v3266
      %v3477 = vmul.f32 %v3268, %v3268
      %v3478 = vmul.f32 %v3270, %v3270
      %v3479 = vmul.f32 %v3272, %v3272
      %v3480 = vmul.f32 %v3276, %v3276
      %v3481 = vmul.f32 %v3278, %v3278
      %v3482 = vmul.f32 %v3280, %v3280
      %v3483 = vmul.f32 %v3282, %v3282
      %v3484 = vmul.f32 %v3286, %v3286
      %v3485 = vmul.f32 %v3288, %v3288
      %v3486 = vmul.f32 %v3290, %v3290
      %v3487 = vmul.f32 %v3292, %v3292
      %v3488 = vmul.f32 %v3296, %v3296
      %v3489 = vmul.f32 %v3298, %v3298
      %v3490 = vmul.f32 %v3300, %v3300
      %v3491 = vmul.f32 %v3302, %v3302
      %v3492 = vmul.f32 %v3306, %v3306
      %v3493 = vmul.f32 %v3308, %v3308
      %v3494 = vmul.f32 %v3310, %v3310
      %v3495 = vmul.f32 %v3312, %v3312
      %v3496 = vmul.f32 %v3316, %v3316
      %v3497 = vmul.f32 %v3318, %v3318
      %v3498 = vmul.f32 %v3320, %v3320
      %v3499 = vmul.f32 %v3322, %v3322
      %v3500 = vadd.f32 %v3468, %v3469
      %3501 = vadd.xlane.f32.xlu0 %v3500
      %v3502 = vpop.xlane.xlu0 %3501
      %v3503 = vadd.f32 %v3470, %v3471
      %3504 = vadd.xlane.f32.xlu0 %v3503
      %v3505 = vpop.xlane.xlu0 %3504
      %v3506 = vadd.f32 %v3472, %v3473
      %3507 = vadd.xlane.f32.xlu0 %v3506
      %v3508 = vpop.xlane.xlu0 %3507
      %v3509 = vadd.f32 %v3474, %v3475
      %3510 = vadd.xlane.f32.xlu0 %v3509
      %v3511 = vpop.xlane.xlu0 %3510
      %v3512 = vadd.f32 %v3476, %v3477
      %3513 = vadd.xlane.f32.xlu0 %v3512
      %v3514 = vpop.xlane.xlu0 %3513
      %v3515 = vadd.f32 %v3478, %v3479
      %3516 = vadd.xlane.f32.xlu0 %v3515
      %v3517 = vpop.xlane.xlu0 %3516
      %v3518 = vadd.f32 %v3480, %v3481
      %3519 = vadd.xlane.f32.xlu0 %v3518
      %v3520 = vpop.xlane.xlu0 %3519
      %v3521 = vadd.f32 %v3482, %v3483
      %3522 = vadd.xlane.f32.xlu0 %v3521
      %v3523 = vpop.xlane.xlu0 %3522
      %v3524 = vadd.f32 %v3484, %v3485
      %3525 = vadd.xlane.f32.xlu0 %v3524
      %v3526 = vpop.xlane.xlu0 %3525
      %v3527 = vadd.f32 %v3486, %v3487
      %3528 = vadd.xlane.f32.xlu0 %v3527
      %v3529 = vpop.xlane.xlu0 %3528
      %v3530 = vadd.f32 %v3488, %v3489
      %3531 = vadd.xlane.f32.xlu0 %v3530
      %v3532 = vpop.xlane.xlu0 %3531
      %v3533 = vadd.f32 %v3490, %v3491
      %3534 = vadd.xlane.f32.xlu0 %v3533
      %v3535 = vpop.xlane.xlu0 %3534
      %v3536 = vadd.f32 %v3492, %v3493
      %3537 = vadd.xlane.f32.xlu0 %v3536
      %v3538 = vpop.xlane.xlu0 %3537
      %v3539 = vadd.f32 %v3494, %v3495
      %3540 = vadd.xlane.f32.xlu0 %v3539
      %v3541 = vpop.xlane.xlu0 %3540
      %v3542 = vadd.f32 %v3496, %v3497
      %3543 = vadd.xlane.f32.xlu0 %v3542
      %v3544 = vpop.xlane.xlu0 %3543
      %v3545 = vadd.f32 %v3498, %v3499
      %3546 = vadd.xlane.f32.xlu0 %v3545
      %v3547 = vpop.xlane.xlu0 %3546
      %v3548 = vmax.f32 %v3502, 1e-24
      %v3549 = vmax.f32 %v3505, 1e-24
      %v3550 = vmax.f32 %v3508, 1e-24
      %v3551 = vmax.f32 %v3511, 1e-24
      %v3552 = vmax.f32 %v3514, 1e-24
      %v3553 = vmax.f32 %v3517, 1e-24
      %v3554 = vmax.f32 %v3520, 1e-24
      %v3555 = vmax.f32 %v3523, 1e-24
      %v3556 = vmax.f32 %v3526, 1e-24
      %v3557 = vmax.f32 %v3529, 1e-24
      %v3558 = vmax.f32 %v3532, 1e-24
      %v3559 = vmax.f32 %v3535, 1e-24
      %v3560 = vmax.f32 %v3538, 1e-24
      %v3561 = vmax.f32 %v3541, 1e-24
      %v3562 = vmax.f32 %v3544, 1e-24
      %v3563 = vmax.f32 %v3547, 1e-24
      %v3564 = vrsqrt.pop %v3548
      %v3565 = vrsqrt.pop %v3549
      %v3566 = vrsqrt.pop %v3550
      %v3567 = vrsqrt.pop %v3551
      %v3568 = vrsqrt.pop %v3552
      %v3569 = vrsqrt.pop %v3553
      %v3570 = vrsqrt.pop %v3554
      %v3571 = vrsqrt.pop %v3555
      %v3572 = vrsqrt.pop %v3556
      %v3573 = vrsqrt.pop %v3557
      %v3574 = vrsqrt.pop %v3558
      %v3575 = vrsqrt.pop %v3559
      %v3576 = vrsqrt.pop %v3560
      %v3577 = vrsqrt.pop %v3561
      %v3578 = vrsqrt.pop %v3562
      %v3579 = vrsqrt.pop %v3563
      %v3580 = vmul.f32 %v3246, %v3564
      %v3581 = vmul.f32 %v3248, %v3564
      %v3582 = vmul.f32 %v3250, %v3565
      %v3583 = vmul.f32 %v3252, %v3565
      %v3584 = vmul.f32 %v3256, %v3566
      %v3585 = vmul.f32 %v3258, %v3566
      %v3586 = vmul.f32 %v3260, %v3567
      %v3587 = vmul.f32 %v3262, %v3567
      %v3588 = vmul.f32 %v3266, %v3568
      %v3589 = vmul.f32 %v3268, %v3568
      %v3590 = vmul.f32 %v3270, %v3569
      %v3591 = vmul.f32 %v3272, %v3569
      %v3592 = vmul.f32 %v3276, %v3570
      %v3593 = vmul.f32 %v3278, %v3570
      %v3594 = vmul.f32 %v3280, %v3571
      %v3595 = vmul.f32 %v3282, %v3571
      %v3596 = vmul.f32 %v3286, %v3572
      %v3597 = vmul.f32 %v3288, %v3572
      %v3598 = vmul.f32 %v3290, %v3573
      %v3599 = vmul.f32 %v3292, %v3573
      %v3600 = vmul.f32 %v3296, %v3574
      %v3601 = vmul.f32 %v3298, %v3574
      %v3602 = vmul.f32 %v3300, %v3575
      %v3603 = vmul.f32 %v3302, %v3575
      %v3604 = vmul.f32 %v3306, %v3576
      %v3605 = vmul.f32 %v3308, %v3576
      %v3606 = vmul.f32 %v3310, %v3577
      %v3607 = vmul.f32 %v3312, %v3577
      %v3608 = vmul.f32 %v3316, %v3578
      %v3609 = vmul.f32 %v3318, %v3578
      %v3610 = vmul.f32 %v3320, %v3579
      %v3611 = vmul.f32 %v3322, %v3579
      %v3612 = vpack.c.bf16 %v3438, %v3436
      %v3613 = vpack.c.bf16 %v3439, %v3437
      %v3614 = vpack.c.bf16 %v3442, %v3440
      %v3615 = vpack.c.bf16 %v3443, %v3441
      %v3616 = vpack.c.bf16 %v3446, %v3444
      %v3617 = vpack.c.bf16 %v3447, %v3445
      %v3618 = vpack.c.bf16 %v3450, %v3448
      %v3619 = vpack.c.bf16 %v3451, %v3449
      %v3620 = vpack.c.bf16 %v3454, %v3452
      %v3621 = vpack.c.bf16 %v3455, %v3453
      %v3622 = vpack.c.bf16 %v3458, %v3456
      %v3623 = vpack.c.bf16 %v3459, %v3457
      %v3624 = vpack.c.bf16 %v3462, %v3460
      %v3625 = vpack.c.bf16 %v3463, %v3461
      %v3626 = vpack.c.bf16 %v3466, %v3464
      %v3627 = vpack.c.bf16 %v3467, %v3465
      %v3644 = vunpack.c.l.b16 %v3612
      %v3645 = vunpack.c.l.b16 %v3613
      %v3646 = vunpack.c.h.b16 %v3612
      %v3647 = vunpack.c.h.b16 %v3613
      %v3648 = vunpack.c.l.b16 %v3614
      %v3649 = vunpack.c.l.b16 %v3615
      %v3650 = vunpack.c.h.b16 %v3614
      %v3651 = vunpack.c.h.b16 %v3615
      %v3652 = vunpack.c.l.b16 %v3616
      %v3653 = vunpack.c.l.b16 %v3617
      %v3654 = vunpack.c.h.b16 %v3616
      %v3655 = vunpack.c.h.b16 %v3617
      %v3656 = vunpack.c.l.b16 %v3618
      %v3657 = vunpack.c.l.b16 %v3619
      %v3658 = vunpack.c.h.b16 %v3618
      %v3659 = vunpack.c.h.b16 %v3619
      %v3660 = vunpack.c.l.b16 %v3620
      %v3661 = vunpack.c.l.b16 %v3621
      %v3662 = vunpack.c.h.b16 %v3620
      %v3663 = vunpack.c.h.b16 %v3621
      %v3664 = vunpack.c.l.b16 %v3622
      %v3665 = vunpack.c.l.b16 %v3623
      %v3666 = vunpack.c.h.b16 %v3622
      %v3667 = vunpack.c.h.b16 %v3623
      %v3668 = vunpack.c.l.b16 %v3624
      %v3669 = vunpack.c.l.b16 %v3625
      %v3670 = vunpack.c.h.b16 %v3624
      %v3671 = vunpack.c.h.b16 %v3625
      %v3672 = vunpack.c.l.b16 %v3626
      %v3673 = vunpack.c.l.b16 %v3627
      %v3674 = vunpack.c.h.b16 %v3626
      %v3675 = vunpack.c.h.b16 %v3627
      %v3676 = vpack.c.b16 %v3645, %v3644
      %v3677 = vpack.c.b16 %v3647, %v3646
      %v3678 = vpack.c.b16 %v3649, %v3648
      %v3679 = vpack.c.b16 %v3651, %v3650
      %v3680 = vpack.c.b16 %v3653, %v3652
      %v3681 = vpack.c.b16 %v3655, %v3654
      %v3682 = vpack.c.b16 %v3657, %v3656
      %v3683 = vpack.c.b16 %v3659, %v3658
      %v3684 = vpack.c.b16 %v3661, %v3660
      %v3685 = vpack.c.b16 %v3663, %v3662
      %v3686 = vpack.c.b16 %v3665, %v3664
      %v3687 = vpack.c.b16 %v3667, %v3666
      %v3688 = vpack.c.b16 %v3669, %v3668
      %v3689 = vpack.c.b16 %v3671, %v3670
      %v3690 = vpack.c.b16 %v3673, %v3672
      %v3691 = vpack.c.b16 %v3675, %v3674
      %3708 = vst [vmem:[#allocation18] sm:$0xff] %v3676
      %3709 = vst [vmem:[#allocation18 + $0x8] sm:$0xff] %v3677
      %3710 = vst [vmem:[#allocation18 + $0x10] sm:$0xff] %v3678
      %3711 = vst [vmem:[#allocation18 + $0x18] sm:$0xff] %v3679
      %3712 = vst [vmem:[#allocation18 + $0x20] sm:$0xff] %v3680
      %3713 = vst [vmem:[#allocation18 + $0x28] sm:$0xff] %v3681
      %3714 = vst [vmem:[#allocation18 + $0x30] sm:$0xff] %v3682
      %3715 = vst [vmem:[#allocation18 + $0x38] sm:$0xff] %v3683
      %3716 = vst [vmem:[#allocation18 + $0x40] sm:$0xff] %v3684
      %3717 = vst [vmem:[#allocation18 + $0x48] sm:$0xff] %v3685
      %3718 = vst [vmem:[#allocation18 + $0x50] sm:$0xff] %v3686
      %3719 = vst [vmem:[#allocation18 + $0x58] sm:$0xff] %v3687
      %3720 = vst [vmem:[#allocation18 + $0x60] sm:$0xff] %v3688
      %3721 = vst [vmem:[#allocation18 + $0x68] sm:$0xff] %v3689
      %3722 = vst [vmem:[#allocation18 + $0x70] sm:$0xff] %v3690
      %3723 = vst [vmem:[#allocation18 + $0x78] sm:$0xff] %v3691
      %s3724 = sld [smem:[#allocation3]]
      %v3725 = vstv %s3724
      %v3726 = vmul.f32 %v3580, %v3725
      %v3727 = vmul.f32 %v3581, %v3725
      %v3728 = vmul.f32 %v3582, %v3725
      %v3729 = vmul.f32 %v3583, %v3725
      %v3730 = vmul.f32 %v3584, %v3725
      %v3731 = vmul.f32 %v3585, %v3725
      %v3732 = vmul.f32 %v3586, %v3725
      %v3733 = vmul.f32 %v3587, %v3725
      %v3734 = vmul.f32 %v3588, %v3725
      %v3735 = vmul.f32 %v3589, %v3725
      %v3736 = vmul.f32 %v3590, %v3725
      %v3737 = vmul.f32 %v3591, %v3725
      %v3738 = vmul.f32 %v3592, %v3725
      %v3739 = vmul.f32 %v3593, %v3725
      %v3740 = vmul.f32 %v3594, %v3725
      %v3741 = vmul.f32 %v3595, %v3725
      %v3742 = vmul.f32 %v3596, %v3725
      %v3743 = vmul.f32 %v3597, %v3725
      %v3744 = vmul.f32 %v3598, %v3725
      %v3745 = vmul.f32 %v3599, %v3725
      %v3746 = vmul.f32 %v3600, %v3725
      %v3747 = vmul.f32 %v3601, %v3725
      %v3748 = vmul.f32 %v3602, %v3725
      %v3749 = vmul.f32 %v3603, %v3725
      %v3750 = vmul.f32 %v3604, %v3725
      %v3751 = vmul.f32 %v3605, %v3725
      %v3752 = vmul.f32 %v3606, %v3725
      %v3753 = vmul.f32 %v3607, %v3725
      %v3754 = vmul.f32 %v3608, %v3725
      %v3755 = vmul.f32 %v3609, %v3725
      %v3756 = vmul.f32 %v3610, %v3725
      %v3757 = vmul.f32 %v3611, %v3725
      %3758 = vxpose.xlu0.b32.start [1/16] %v3726, 128
      %3759 = vxpose.xlu0.b32.cont [2/16] %v3728, 128
      %3760 = vxpose.xlu0.b32.cont [3/16] %v3730, 128
      %3761 = vxpose.xlu0.b32.cont [4/16] %v3732, 128
      %3762 = vxpose.xlu0.b32.cont [5/16] %v3734, 128
      %3763 = vxpose.xlu0.b32.cont [6/16] %v3736, 128
      %3764 = vxpose.xlu0.b32.cont [7/16] %v3738, 128
      %3765 = vxpose.xlu0.b32.cont [8/16] %v3740, 128
      %3766 = vxpose.xlu0.b32.cont [9/16] %v3742, 128
      %3767 = vxpose.xlu0.b32.cont [10/16] %v3744, 128
      %3768 = vxpose.xlu0.b32.cont [11/16] %v3746, 128
      %3769 = vxpose.xlu0.b32.cont [12/16] %v3748, 128
      %3770 = vxpose.xlu0.b32.cont [13/16] %v3750, 128
      %3771 = vxpose.xlu0.b32.cont [14/16] %v3752, 128
      %3772 = vxpose.xlu0.b32.cont [15/16] %v3754, 128
      %3773 = vxpose.xlu0.b32.end [16/16] %v3756, 128
      %v3774 = vpop.trf.xlu0
      %v3775 = vpop.trf.xlu0
      %v3776 = vpop.trf.xlu0
      %v3777 = vpop.trf.xlu0
      %v3778 = vpop.trf.xlu0
      %v3779 = vpop.trf.xlu0
      %v3780 = vpop.trf.xlu0
      %v3781 = vpop.trf.xlu0
      %v3782 = vpop.trf.xlu0
      %v3783 = vpop.trf.xlu0
      %v3784 = vpop.trf.xlu0
      %v3785 = vpop.trf.xlu0
      %v3786 = vpop.trf.xlu0
      %v3787 = vpop.trf.xlu0
      %v3788 = vpop.trf.xlu0
      %v3789 = vpop.trf.xlu0
      %3790 = vxpose.xlu0.b32.start [1/16] %v3727, 128
      %3791 = vxpose.xlu0.b32.cont [2/16] %v3729, 128
      %3792 = vxpose.xlu0.b32.cont [3/16] %v3731, 128
      %3793 = vxpose.xlu0.b32.cont [4/16] %v3733, 128
      %3794 = vxpose.xlu0.b32.cont [5/16] %v3735, 128
      %3795 = vxpose.xlu0.b32.cont [6/16] %v3737, 128
      %3796 = vxpose.xlu0.b32.cont [7/16] %v3739, 128
      %3797 = vxpose.xlu0.b32.cont [8/16] %v3741, 128
      %3798 = vxpose.xlu0.b32.cont [9/16] %v3743, 128
      %3799 = vxpose.xlu0.b32.cont [10/16] %v3745, 128
      %3800 = vxpose.xlu0.b32.cont [11/16] %v3747, 128
      %3801 = vxpose.xlu0.b32.cont [12/16] %v3749, 128
      %3802 = vxpose.xlu0.b32.cont [13/16] %v3751, 128
      %3803 = vxpose.xlu0.b32.cont [14/16] %v3753, 128
      %3804 = vxpose.xlu0.b32.cont [15/16] %v3755, 128
      %3805 = vxpose.xlu0.b32.end [16/16] %v3757, 128
      %v3806 = vpop.trf.xlu0
      %v3807 = vpop.trf.xlu0
      %v3808 = vpop.trf.xlu0
      %v3809 = vpop.trf.xlu0
      %v3810 = vpop.trf.xlu0
      %v3811 = vpop.trf.xlu0
      %v3812 = vpop.trf.xlu0
      %v3813 = vpop.trf.xlu0
      %v3814 = vpop.trf.xlu0
      %v3815 = vpop.trf.xlu0
      %v3816 = vpop.trf.xlu0
      %v3817 = vpop.trf.xlu0
      %v3818 = vpop.trf.xlu0
      %v3819 = vpop.trf.xlu0
      %v3820 = vpop.trf.xlu0
      %v3821 = vpop.trf.xlu0
      %v3822 = vpack.c.bf16 %v3775, %v3774
      %v3823 = vpack.c.bf16 %v3777, %v3776
      %v3824 = vpack.c.bf16 %v3779, %v3778
      %v3825 = vpack.c.bf16 %v3781, %v3780
      %v3826 = vpack.c.bf16 %v3783, %v3782
      %v3827 = vpack.c.bf16 %v3785, %v3784
      %v3828 = vpack.c.bf16 %v3787, %v3786
      %v3829 = vpack.c.bf16 %v3789, %v3788
      %v3830 = vpack.c.bf16 %v3807, %v3806
      %v3831 = vpack.c.bf16 %v3809, %v3808
      %v3832 = vpack.c.bf16 %v3811, %v3810
      %v3833 = vpack.c.bf16 %v3813, %v3812
      %v3834 = vpack.c.bf16 %v3815, %v3814
      %v3835 = vpack.c.bf16 %v3817, %v3816
      %v3836 = vpack.c.bf16 %v3819, %v3818
      %v3837 = vpack.c.bf16 %v3821, %v3820
      %v3854 = vunpack.c.l.b16 %v3822
      %v3855 = vunpack.c.h.b16 %v3822
      %v3856 = vunpack.c.l.b16 %v3823
      %v3857 = vunpack.c.h.b16 %v3823
      %v3858 = vunpack.c.l.b16 %v3824
      %v3859 = vunpack.c.h.b16 %v3824
      %v3860 = vunpack.c.l.b16 %v3825
      %v3861 = vunpack.c.h.b16 %v3825
      %v3862 = vunpack.c.l.b16 %v3826
      %v3863 = vunpack.c.h.b16 %v3826
      %v3864 = vunpack.c.l.b16 %v3827
      %v3865 = vunpack.c.h.b16 %v3827
      %v3866 = vunpack.c.l.b16 %v3828
      %v3867 = vunpack.c.h.b16 %v3828
      %v3868 = vunpack.c.l.b16 %v3829
      %v3869 = vunpack.c.h.b16 %v3829
      %v3870 = vunpack.c.l.b16 %v3830
      %v3871 = vunpack.c.h.b16 %v3830
      %v3872 = vunpack.c.l.b16 %v3831
      %v3873 = vunpack.c.h.b16 %v3831
      %v3874 = vunpack.c.l.b16 %v3832
      %v3875 = vunpack.c.h.b16 %v3832
      %v3876 = vunpack.c.l.b16 %v3833
      %v3877 = vunpack.c.h.b16 %v3833
      %v3878 = vunpack.c.l.b16 %v3834
      %v3879 = vunpack.c.h.b16 %v3834
      %v3880 = vunpack.c.l.b16 %v3835
      %v3881 = vunpack.c.h.b16 %v3835
      %v3882 = vunpack.c.l.b16 %v3836
      %v3883 = vunpack.c.h.b16 %v3836
      %v3884 = vunpack.c.l.b16 %v3837
      %v3885 = vunpack.c.h.b16 %v3837
      %v3886 = vpack.c.b16 %v3854, %v3854
      %v3887 = vpack.c.b16 %v3855, %v3855
      %v3888 = vpack.c.b16 %v3856, %v3856
      %v3889 = vpack.c.b16 %v3857, %v3857
      %v3890 = vpack.c.b16 %v3858, %v3858
      %v3891 = vpack.c.b16 %v3859, %v3859
      %v3892 = vpack.c.b16 %v3860, %v3860
      %v3893 = vpack.c.b16 %v3861, %v3861
      %v3894 = vpack.c.b16 %v3862, %v3862
      %v3895 = vpack.c.b16 %v3863, %v3863
      %v3896 = vpack.c.b16 %v3864, %v3864
      %v3897 = vpack.c.b16 %v3865, %v3865
      %v3898 = vpack.c.b16 %v3866, %v3866
      %v3899 = vpack.c.b16 %v3867, %v3867
      %v3900 = vpack.c.b16 %v3868, %v3868
      %v3901 = vpack.c.b16 %v3869, %v3869
      %v3902 = vpack.c.b16 %v3870, %v3870
      %v3903 = vpack.c.b16 %v3871, %v3871
      %v3904 = vpack.c.b16 %v3872, %v3872
      %v3905 = vpack.c.b16 %v3873, %v3873
      %v3906 = vpack.c.b16 %v3874, %v3874
      %v3907 = vpack.c.b16 %v3875, %v3875
      %v3908 = vpack.c.b16 %v3876, %v3876
      %v3909 = vpack.c.b16 %v3877, %v3877
      %v3910 = vpack.c.b16 %v3878, %v3878
      %v3911 = vpack.c.b16 %v3879, %v3879
      %v3912 = vpack.c.b16 %v3880, %v3880
      %v3913 = vpack.c.b16 %v3881, %v3881
      %v3914 = vpack.c.b16 %v3882, %v3882
      %v3915 = vpack.c.b16 %v3883, %v3883
      %v3916 = vpack.c.b16 %v3884, %v3884
      %v3917 = vpack.c.b16 %v3885, %v3885
      %3950 = vst [vmem:[#allocation19] sm:$0xf] %v3886
      %3951 = vst [vmem:[#allocation19 + $0x4] sm:$0xf] %v3887
      %3952 = vst [vmem:[#allocation19 + $0x8] sm:$0xf] %v3888
      %3953 = vst [vmem:[#allocation19 + $0xc] sm:$0xf] %v3889
      %3954 = vst [vmem:[#allocation19 + $0x10] sm:$0xf] %v3890
      %3955 = vst [vmem:[#allocation19 + $0x14] sm:$0xf] %v3891
      %3956 = vst [vmem:[#allocation19 + $0x18] sm:$0xf] %v3892
      %3957 = vst [vmem:[#allocation19 + $0x1c] sm:$0xf] %v3893
      %3958 = vst [vmem:[#allocation19 + $0x20] sm:$0xf] %v3894
      %3959 = vst [vmem:[#allocation19 + $0x24] sm:$0xf] %v3895
      %3960 = vst [vmem:[#allocation19 + $0x28] sm:$0xf] %v3896
      %3961 = vst [vmem:[#allocation19 + $0x2c] sm:$0xf] %v3897
      %3962 = vst [vmem:[#allocation19 + $0x30] sm:$0xf] %v3898
      %3963 = vst [vmem:[#allocation19 + $0x34] sm:$0xf] %v3899
      %3964 = vst [vmem:[#allocation19 + $0x38] sm:$0xf] %v3900
      %3965 = vst [vmem:[#allocation19 + $0x3c] sm:$0xf] %v3901
      %3966 = vst [vmem:[#allocation19 + $0x40] sm:$0xf] %v3902
      %3967 = vst [vmem:[#allocation19 + $0x44] sm:$0xf] %v3903
      %3968 = vst [vmem:[#allocation19 + $0x48] sm:$0xf] %v3904
      %3969 = vst [vmem:[#allocation19 + $0x4c] sm:$0xf] %v3905
      %3970 = vst [vmem:[#allocation19 + $0x50] sm:$0xf] %v3906
      %3971 = vst [vmem:[#allocation19 + $0x54] sm:$0xf] %v3907
      %3972 = vst [vmem:[#allocation19 + $0x58] sm:$0xf] %v3908
      %3973 = vst [vmem:[#allocation19 + $0x5c] sm:$0xf] %v3909
      %3974 = vst [vmem:[#allocation19 + $0x60] sm:$0xf] %v3910
      %3975 = vst [vmem:[#allocation19 + $0x64] sm:$0xf] %v3911
      %3976 = vst [vmem:[#allocation19 + $0x68] sm:$0xf] %v3912
      %3977 = vst [vmem:[#allocation19 + $0x6c] sm:$0xf] %v3913
      %3978 = vst [vmem:[#allocation19 + $0x70] sm:$0xf] %v3914
      %3979 = vst [vmem:[#allocation19 + $0x74] sm:$0xf] %v3915
      %3980 = vst [vmem:[#allocation19 + $0x78] sm:$0xf] %v3916
      %3981 = vst [vmem:[#allocation19 + $0x7c] sm:$0xf] %v3917
    $region101: #{tpu_custom_call.1} parent=1 // pred_fallthru
      _
    // Predicated region
    $region102: #{tpu_custom_call.1} parent=1 // pred_check
      _
    $region103: #{tpu_custom_call.1} parent=1 // pred_check_branch
      %3983 = sbr.rel (0) target = $region105
    $region104: #{tpu_custom_call.1} parent=1 // pred_region
      %s3985 = ssub.s32 2048, 2048
      %3986 = vsyncadd [#allocation6], %s3985
      %s3987 = sshll.u32 [#allocation18], 4
      %s3988 = int_to_ptr.vmem [resolvable:$true] %s3987
      %3993 = dma.vmem_to_hbm [thread:$0]  %s3988, 2048, %s15, [#allocation6], 128, 128, 8
    $region105: #{tpu_custom_call.1} parent=1 // pred_fallthru
      _
    // Predicated region
    $region106: #{tpu_custom_call.1} parent=1 // pred_check
      _
    $region107: #{tpu_custom_call.1} parent=1 // pred_check_branch
      %3995 = sbr.rel (0) target = $region109
    $region108: #{tpu_custom_call.1} parent=1 // pred_region
      %s3997 = ssub.s32 2048, 2048
      %3998 = vsyncadd [#allocation20], %s3997
      %s3999 = sshll.u32 [#allocation19], 4
      %s4000 = int_to_ptr.vmem [resolvable:$true] %s3999
      %4005 = dma.vmem_to_hbm [thread:$0]  %s4000, 2048, %s16, [#allocation20], 64, 64, 4
    $region109: #{tpu_custom_call.1} parent=1 // pred_fallthru
      _
    // Predicated region
    $region110: #{tpu_custom_call.1} parent=1 // pred_check
      _
    $region111: #{tpu_custom_call.1} parent=1 // pred_check_branch
      %4007 = sbr.rel (0) target = $region113
    $region112: #{tpu_custom_call.1} parent=1 // pred_region
      %4008 = dma.done [#allocation6], 2048
    $region113: #{tpu_custom_call.1} parent=1 // pred_fallthru
      _
    // Predicated region
    $region114: #{tpu_custom_call.1} parent=1 // pred_check
      _
    $region115: #{tpu_custom_call.1} parent=1 // pred_check_branch
      %4010 = sbr.rel (0) target = $region117
    $region116: #{tpu_custom_call.1} parent=1 // pred_region
      %4011 = dma.done [#allocation20], 2048
    $region117: #{tpu_custom_call.1} parent=1 // pred_fallthru
      _
    %4012 = vsyncpa [#allocation5], 1
    %4013 = vsyncpa [#allocation8], 1
    %4014 = vsyncpa [#allocation11], 1
    %4015 = vsyncpa [#allocation14], 1
    %4016 = vsyncpa [#allocation17], 1
    %4017 = vsyncpa [#allocation6], 1
    %4018 = vsyncpa [#allocation20], 1

</llo_original>
